<compile_context>
chip_gen: v7x
topology: tpu7x:2x2x1
jax: 0.10.0
libtpu: 0.0.40
codegen_flags: <defaults>
</compile_context>

<pallas_src>
import functools

import jax
import jax.numpy as jnp
from jax.experimental import pallas as pl
from jax.experimental.pallas import tpu as pltpu

_LANE = 128
_SUBLANE = 8
_ENC_UNROLL = 16          # timesteps per encoder grid step (multiple of 16 so
                          # the bf16 (B, U, H) output block is tile-aligned)


def _ceil_to(x, m):
    return ((x + m - 1) // m) * m


def _pick_tile(total, max_tile, quantum):
    """Largest multiple of `quantum` that divides `total` and is <= max_tile."""
    best = quantum
    t = quantum
    cap = min(total, max_tile)
    while t <= cap:
        if total % t == 0:
            best = t
        t += quantum
    return best


# --------------------------- tiled matmul + bias -----------------------------

def _matmul_bias_kernel(x_ref, w_ref, b_ref, o_ref):
    acc = jnp.dot(x_ref[...].astype(w_ref.dtype), w_ref[...],
                  preferred_element_type=jnp.float32)
    o_ref[...] = (acc + b_ref[...].astype(jnp.float32)).astype(o_ref.dtype)


def matmul_bias(x, w, b, *, out_dtype=jnp.float32, tile_m=512, tile_n=512):
    M, K = x.shape
    N = w.shape[-1]
    tm = min(tile_m, M)
    tn = min(tile_n, N)
    return pl.pallas_call(
        _matmul_bias_kernel,
        out_shape=jax.ShapeDtypeStruct((M, N), out_dtype),
        grid=(pl.cdiv(M, tm), pl.cdiv(N, tn)),
        in_specs=[
            pl.BlockSpec((tm, K), lambda i, j: (i, 0)),
            pl.BlockSpec((K, tn), lambda i, j: (0, j)),
            pl.BlockSpec((1, tn), lambda i, j: (0, j)),
        ],
        out_specs=pl.BlockSpec((tm, tn), lambda i, j: (i, j)),
        compiler_params=pltpu.CompilerParams(
            dimension_semantics=("parallel", "parallel")),
    )(x, w, b)


# ------------------------------ encoder GRU ----------------------------------

def _encoder_gru_kernel(gi_ref, valid_ref, whh_ref, bhh_ref,
                        enc_out_ref, h_ref, acc_scr, *, unroll):
    # gi_ref:      (U, B, 3H) bf16  precomputed x_t @ W_ih + b_ih
    # valid_ref:   (U, B, 1)  f32   1.0 where t < length (pack_padded emulation)
    # whh_ref:     (H, 3H) bf16 resident; bhh_ref: (1, 3H) f32 resident
    # enc_out_ref: (B, U, H) bf16   per-block output (batch-major layout)
    # h_ref:       (B, H) f32       constant-index output block == hidden carry
    @pl.when(pl.program_id(0) == 0)
    def _():
        h_ref[...] = jnp.zeros_like(h_ref)

    h = h_ref[...]
    H = h.shape[-1]
    for u in range(unroll):                      # unrolled timestep loop
        gi = gi_ref[u].astype(jnp.float32)       # (B, 3H)
        valid = valid_ref[u]                     # (B, 1)
        gh = (jnp.dot(h.astype(jnp.bfloat16), whh_ref[...],
                      preferred_element_type=jnp.float32) + bhh_ref[...])
        r = jax.nn.sigmoid(gi[:, :H] + gh[:, :H])
        z = jax.nn.sigmoid(gi[:, H:2 * H] + gh[:, H:2 * H])
        n = jnp.tanh(gi[:, 2 * H:] + r * gh[:, 2 * H:])
        h_new = (1.0 - z) * n + z * h
        h = valid * h_new + (1.0 - valid) * h    # freeze hidden past each length
        acc_scr[:, u, :] = h
    h_ref[...] = h
    enc_out_ref[...] = acc_scr[...].astype(enc_out_ref.dtype)


def encoder_rnn(gi_all, valid, whh_t, bhh, *, unroll):
    S, B, G3 = gi_all.shape
    H = whh_t.shape[0]
    assert S % unroll == 0
    kernel = functools.partial(_encoder_gru_kernel, unroll=unroll)
    # TODO(synk): on v7x add a leading "parallel" batch-tile grid axis so the
    # sequential time loop is sharded across the two TensorCores.
    return pl.pallas_call(
        kernel,
        out_shape=(jax.ShapeDtypeStruct((B, S, H), jnp.bfloat16),
                   jax.ShapeDtypeStruct((B, H), jnp.float32)),
        grid=(S // unroll,),
        in_specs=[
            pl.BlockSpec((unroll, B, G3), lambda s: (s, 0, 0)),
            pl.BlockSpec((unroll, B, 1), lambda s: (s, 0, 0)),
            pl.BlockSpec((H, G3), lambda s: (0, 0),
                         pipeline_mode=pl.Buffered(1)),
            pl.BlockSpec((1, G3), lambda s: (0, 0),
                         pipeline_mode=pl.Buffered(1)),
        ],
        out_specs=(
            pl.BlockSpec((B, unroll, H), lambda s: (0, s, 0)),
            pl.BlockSpec((B, H), lambda s: (0, 0)),
        ),
        scratch_shapes=[pltpu.VMEM((B, unroll, H), jnp.float32)],
        compiler_params=pltpu.CompilerParams(
            dimension_semantics=("arbitrary",)),
    )(gi_all, valid, whh_t, bhh)


# --------------------- fused decoder (attention + GRU) -----------------------

def _decoder_step_kernel(tf_ref,                         # scalar prefetch (SMEM)
                         ids_ref, h0_ref, enc_ref, encproj_ref, mask_ref,
                         emb_tab_ref, wa_h_ref, av_ref,
                         w_ih_e_ref, w_ih_c_ref, bih_ref, whh_ref, bhh_ref,
                         w_out_h_ref, w_out_c_ref, w_out_e_ref, b_out_ref,
                         logits_ref,                     # output
                         h_scr, emb_scr, ctx_scr, tok_scr, bv_scr, bi_scr,
                         *, trg_vocab):
    t = pl.program_id(0)               # decoder timestep (0 .. T-2)
    vt = pl.program_id(1)              # vocab tile
    n_vt = pl.num_programs(1)
    B, H = h_scr.shape
    Vp = emb_tab_ref.shape[0]
    VT = b_out_ref.shape[-1]

    # ------- once per timestep (first vocab tile): attention + GRU cell -----
    @pl.when(vt == 0)
    def _step_setup():
        @pl.when(t == 0)
        def _init():
            h_scr[...] = h0_ref[...]
            tok_scr[...] = ids_ref[0]          # first decoder input is trg[:, 0]

        hidden = h_scr[...]                    # (B, H) f32

        # Embedding lookup = in-kernel one-hot(token) @ resident bf16 table.
        # TODO(synk): at large vocab replace with a per-row HBM DMA gather keyed
        # by SMEM token ids (drops the B x V x E matmul and the table residency).
        onehot = (jax.lax.broadcasted_iota(jnp.int32, (B, Vp), 1)
                  == tok_scr[...]).astype(jnp.bfloat16)
        emb = jnp.dot(onehot, emb_tab_ref[...],
                      preferred_element_type=jnp.float32)          # (B, E) f32
        emb_b = emb.astype(jnp.bfloat16)
        emb_scr[...] = emb_b

        # --------- attention (enc @ Wa_e + b_a precomputed, bf16 resident) ---
        hid_part = jnp.dot(hidden.astype(jnp.bfloat16), wa_h_ref[...],
                           preferred_element_type=jnp.float32)     # (B, A)
        energy = jnp.tanh(encproj_ref[...].astype(jnp.float32)
                          + hid_part[:, None, :])                  # (B, S, A)
        scores = jnp.sum(energy * av_ref[...][None, :, :], axis=-1)  # (B, S)
        scores = jnp.where(mask_ref[...] > 0.5, scores, -1e10)
        m = jnp.max(scores, axis=-1, keepdims=True)
        e = jnp.exp(scores - m)
        attn = e * pl.reciprocal(jnp.sum(e, axis=-1, keepdims=True),
                                 approx=True)                      # (B, S)
        # context on the MXU: (B,1,S) x (B,S,H) -> (B,1,H)
        ctx = jnp.einsum('bqs,bsh->bqh',
                         attn[:, None, :].astype(jnp.bfloat16), enc_ref[...],
                         preferred_element_type=jnp.float32)[:, 0, :]

        # --------- GRU cell with split input weights (no concat) -------------
        ctx_b = ctx.astype(jnp.bfloat16)
        gi = (jnp.dot(emb_b, w_ih_e_ref[...],
                      preferred_element_type=jnp.float32)
              + jnp.dot(ctx_b, w_ih_c_ref[...],
                        preferred_element_type=jnp.float32)
              + bih_ref[...])
        gh = (jnp.dot(hidden.astype(jnp.bfloat16), whh_ref[...],
                      preferred_element_type=jnp.float32) + bhh_ref[...])
        r = jax.nn.sigmoid(gi[:, :H] + gh[:, :H])
        z = jax.nn.sigmoid(gi[:, H:2 * H] + gh[:, H:2 * H])
        n = jnp.tanh(gi[:, 2 * H:] + r * gh[:, 2 * H:])
        h_scr[...] = (1.0 - z) * n + z * hidden
        ctx_scr[...] = ctx_b
        bv_scr[...] = jnp.full_like(bv_scr, -jnp.inf)
        bi_scr[...] = jnp.zeros_like(bi_scr)

    # ------- every vocab tile: output projection + running argmax -----------
    h_b = h_scr[...].astype(jnp.bfloat16)
    logits = (jnp.dot(h_b, w_out_h_ref[...],
                      preferred_element_type=jnp.float32)
              + jnp.dot(ctx_scr[...], w_out_c_ref[...],
                        preferred_element_type=jnp.float32)
              + jnp.dot(emb_scr[...], w_out_e_ref[...],
                        preferred_element_type=jnp.float32)
              + b_out_ref[...])                                    # (B, VT)
    logits_ref[0] = logits

    col = jax.lax.broadcasted_iota(jnp.int32, (B, VT), 1) + vt * VT
    masked = jnp.where(col < trg_vocab, logits, -jnp.inf)          # hide V pad
    tmax = jnp.max(masked, axis=-1, keepdims=True)
    targ = jnp.min(jnp.where(masked >= tmax, col, jnp.int32(2 ** 30)),
                   axis=-1, keepdims=True)                         # first max
    better = tmax > bv_scr[...]
    bi_scr[...] = jnp.where(better, targ, bi_scr[...])
    bv_scr[...] = jnp.maximum(tmax, bv_scr[...])

    # ------- last vocab tile: teacher forcing vs greedy next token ----------
    @pl.when(vt == n_vt - 1)
    def _select_next():
        tf = tf_ref[t]
        nxt_tf = ids_ref[pl.ds(t + 1, 1)][0]       # (B, 1) trg[:, t+1]
        tok_scr[...] = jnp.where(tf > 0, nxt_tf, bi_scr[...])


def decoder_run(tf_flags, trg_ids, h0, enc, enc_proj, mask, pp,
                *, n_steps, trg_vocab, vt_size):
    B, H = h0.shape
    S = enc.shape[1]
    A = enc_proj.shape[-1]
    T = trg_ids.shape[0]
    Vp, E = pp['dec_emb'].shape
    G3 = pp['dec_bih'].shape[-1]
    n_vt = Vp // vt_size

    def const_spec(shape):
        zeros = (0,) * len(shape)
        return pl.BlockSpec(shape, lambda t, v, tf: zeros,
                            pipeline_mode=pl.Buffered(1))   # single-buffered

    def vocab_spec(rows):
        return pl.BlockSpec((rows, vt_size), lambda t, v, tf: (0, v))

    grid_spec = pltpu.PrefetchScalarGridSpec(
        num_scalar_prefetch=1,                 # teacher-forcing flags in SMEM
        grid=(n_steps, n_vt),
        in_specs=[
            const_spec((T, B, 1)),     # target token ids (tiny int32 resident)
            const_spec((B, H)),        # h0
            const_spec((B, S, H)),     # encoder outputs (bf16)
            const_spec((B, S, A)),     # enc @ Wa_e + b_a (bf16, loop invariant)
            const_spec((B, S)),        # attention mask
            const_spec((Vp, E)),       # decoder embedding table (bf16)
            const_spec((H, A)),        # Wa_h
            const_spec((1, A)),        # v (attention scoring vector)
            const_spec((E, G3)),       # W_ih (embedding rows)
            const_spec((H, G3)),       # W_ih (context rows)
            const_spec((1, G3)),       # b_ih
            const_spec((H, G3)),       # W_hh
            const_spec((1, G3)),       # b_hh
            vocab_spec(H),             # W_out (hidden rows)    - vocab tiled
            vocab_spec(H),             # W_out (context rows)   - vocab tiled
            vocab_spec(E),             # W_out (embedding rows) - vocab tiled
            vocab_spec(1),             # b_out                  - vocab tiled
        ],
        out_specs=pl.BlockSpec((1, B, vt_size), lambda t, v, tf: (t, 0, v)),
        scratch_shapes=[pltpu.VMEM((B, H), jnp.float32),    # hidden carry
                        pltpu.VMEM((B, E), jnp.bfloat16),   # current input emb
                        pltpu.VMEM((B, H), jnp.bfloat16),   # current context
                        pltpu.VMEM((B, 1), jnp.int32),      # current token id
                        pltpu.VMEM((B, 1), jnp.float32),    # running max
                        pltpu.VMEM((B, 1), jnp.int32)],     # running argmax
    )
    kernel = functools.partial(_decoder_step_kernel, trg_vocab=trg_vocab)
    # TODO(synk): on v7x add a leading "parallel" batch-tile grid axis to use
    # the second TensorCore (batch rows are independent through the recurrence).
    return pl.pallas_call(
        kernel,
        grid_spec=grid_spec,
        out_shape=jax.ShapeDtypeStruct((n_steps, B, Vp), jnp.float32),
        compiler_params=pltpu.CompilerParams(
            dimension_semantics=("arbitrary", "arbitrary"),
            vmem_limit_bytes=64 * 1024 * 1024),
    )(tf_flags, trg_ids, h0, enc, enc_proj, mask,
      pp['dec_emb'], pp['attn_wa_h'], pp['attn_v'],
      pp['dec_w_ih_emb'], pp['dec_w_ih_ctx'], pp['dec_bih'],
      pp['dec_whh_t'], pp['dec_bhh'],
      pp['out_w_h'], pp['out_w_c'], pp['out_w_e'], pp['out_b'])


# ------------------------------ parameters ----------------------------------

def init_params(key, src_vocab, trg_vocab, emb_dim, hid_dim, attn_dim):
    ks = jax.random.split(key, 16)
    s = 0.1

    def rnd(k, shape):
        return (s * jax.random.normal(k, shape)).astype(jnp.float32)

    return dict(
        enc_emb=rnd(ks[0], (src_vocab, emb_dim)),
        enc_wih_t=rnd(ks[1], (emb_dim, 3 * hid_dim)),
        enc_whh_t=rnd(ks[2], (hid_dim, 3 * hid_dim)),
        enc_bih=rnd(ks[3], (1, 3 * hid_dim)),
        enc_bhh=rnd(ks[4], (1, 3 * hid_dim)),
        attn_wa_h=rnd(ks[5], (hid_dim, attn_dim)),
        attn_wa_e=rnd(ks[6], (hid_dim, attn_dim)),
        attn_ba=rnd(ks[7], (1, attn_dim)),
        attn_v=rnd(ks[8], (1, attn_dim)),
        dec_emb=rnd(ks[9], (trg_vocab, emb_dim)),
        dec_wih_t=rnd(ks[10], (emb_dim + hid_dim, 3 * hid_dim)),
        dec_whh_t=rnd(ks[11], (hid_dim, 3 * hid_dim)),
        dec_bih=rnd(ks[12], (1, 3 * hid_dim)),
        dec_bhh=rnd(ks[13], (1, 3 * hid_dim)),
        out_w_t=rnd(ks[14], (2 * hid_dim + emb_dim, trg_vocab)),
        out_b=rnd(ks[15], (1, trg_vocab)),
    )


def pad_params(p, emb_dim, hid_dim, attn_dim, trg_vocab):
    """Zero-pad all weights to lane/sublane-friendly shapes; matmul weights bf16.

    Padded rows/columns are exactly zero, so the results in the real (unpadded)
    slice match the unpadded computation.
    """
    E, H, A, V = emb_dim, hid_dim, attn_dim, trg_vocab
    EP, HP, AP, VP = (_ceil_to(E, _LANE), _ceil_to(H, _LANE),
                      _ceil_to(A, _LANE), _ceil_to(V, _LANE))
    bf = jnp.bfloat16

    def pad2(x, rows, cols):
        return jnp.pad(x, ((0, rows - x.shape[0]), (0, cols - x.shape[1])))

    def pad_gate_cols(w):
        # [..., 3H] -> [..., 3*HP], zero-padding each r/z/n gate block separately
        parts = [w[:, i * H:(i + 1) * H] for i in range(3)]
        parts = [jnp.pad(q, ((0, 0), (0, HP - H))) for q in parts]
        return jnp.concatenate(parts, axis=-1)

    dec_wih = p['dec_wih_t']      # rows: [0:E] embedding, [E:E+H] context
    out_w = p['out_w_t']          # rows: [0:H] hidden, [H:2H] ctx, [2H:] emb

    return dict(
        # encoder
        enc_emb=jnp.pad(p['enc_emb'], ((0, 0), (0, EP - E))).astype(bf),
        enc_wih_t=pad2(pad_gate_cols(p['enc_wih_t']), EP, 3 * HP).astype(bf),
        enc_whh_t=pad2(pad_gate_cols(p['enc_whh_t']), HP, 3 * HP).astype(bf),
        enc_bih=pad_gate_cols(p['enc_bih']),
        enc_bhh=pad_gate_cols(p['enc_bhh']),
        # attention
        attn_wa_h=pad2(p['attn_wa_h'], HP, AP).astype(bf),
        attn_wa_e=pad2(p['attn_wa_e'], HP, AP).astype(bf),
        attn_ba=jnp.pad(p['attn_ba'], ((0, 0), (0, AP - A))),
        attn_v=jnp.pad(p['attn_v'], ((0, 0), (0, AP - A))),
        # decoder GRU (input weights split into embedding / context rows)
        dec_emb=pad2(p['dec_emb'], VP, EP).astype(bf),
        dec_w_ih_emb=pad2(pad_gate_cols(dec_wih[:E]), EP, 3 * HP).astype(bf),
        dec_w_ih_ctx=pad2(pad_gate_cols(dec_wih[E:]), HP, 3 * HP).astype(bf),
        dec_whh_t=pad2(pad_gate_cols(p['dec_whh_t']), HP, 3 * HP).astype(bf),
        dec_bih=pad_gate_cols(p['dec_bih']),
        dec_bhh=pad_gate_cols(p['dec_bhh']),
        # output projection (rows split into hidden / context / embedding)
        out_w_h=pad2(out_w[:H], HP, VP).astype(bf),
        out_w_c=pad2(out_w[H:2 * H], HP, VP).astype(bf),
        out_w_e=pad2(out_w[2 * H:], EP, VP).astype(bf),
        out_b=jnp.pad(p['out_b'], ((0, 0), (0, VP - V))),
    )


# ------------------------------- forward ------------------------------------

def seq2seq_forward(pp, src, src_lengths, trg, rng_key, *,
                    src_pad_idx, trg_vocab, teacher_forcing_ratio=0.5):
    B, S = src.shape
    T = trg.shape[1]
    BP = _ceil_to(max(B, _SUBLANE), _SUBLANE)
    SP = _ceil_to(S, _ENC_UNROLL)
    EP = pp['enc_emb'].shape[1]
    HP = pp['enc_whh_t'].shape[0]
    AP = pp['attn_wa_h'].shape[1]
    VP = pp['out_b'].shape[1]
    G3 = pp['enc_bih'].shape[-1]

    # pad batch to a sublane multiple and src length to the unroll granularity;
    # padded positions hold PAD tokens with length 0 -> masked everywhere
    src_p = jnp.pad(src, ((0, BP - B), (0, SP - S)),
                    constant_values=src_pad_idx)
    trg_p = jnp.pad(trg, ((0, BP - B), (0, 0)))
    len_p = jnp.pad(src_lengths, (0, BP - B))

    # ------------------------------ encoder ---------------------------------
    # embeddings gathered directly in (S, B, E) order (no big HBM transpose);
    # the input-gate matmul for ALL timesteps is hoisted into one tiled matmul.
    emb_src = jnp.take(pp['enc_emb'], src_p.T, axis=0)        # (SP, BP, EP) bf16
    gi_all = matmul_bias(emb_src.reshape(SP * BP, EP), pp['enc_wih_t'],
                         pp['enc_bih'],
                         out_dtype=jnp.bfloat16).reshape(SP, BP, G3)
    # TODO(synk): pack_padded_sequence is emulated by freezing the hidden state
    # past each sequence length (matches the packed GRU's final hidden state).
    valid = (jnp.arange(SP)[:, None] < len_p[None, :]
             ).astype(jnp.float32)[:, :, None]                # (SP, BP, 1)
    enc, h_enc = encoder_rnn(gi_all, valid, pp['enc_whh_t'], pp['enc_bhh'],
                             unroll=_ENC_UNROLL)
    # enc is produced by the kernel directly in (BP, SP, HP) bf16 layout.

    # loop-invariant attention projection enc @ Wa_e + b_a (tiled matmul, bf16)
    enc_proj = matmul_bias(enc.reshape(BP * SP, HP), pp['attn_wa_e'],
                           pp['attn_ba'],
                           out_dtype=jnp.bfloat16).reshape(BP, SP, AP)
    mask = (src_p != src_pad_idx).astype(jnp.float32)         # (BP, SP)

    # ------------------------------ decoder ---------------------------------
    # TODO(synk): Python random.random() teacher forcing replaced by a seeded
    # jax.random draw passed to the kernel as prefetched SMEM scalars.
    tf_flags = (jax.random.uniform(rng_key, (T - 1,))
                < teacher_forcing_ratio).astype(jnp.int32)
    trg_ids = trg_p.T[:, :, None].astype(jnp.int32)           # (T, BP, 1)
    vt_size = _pick_tile(VP, 2048, _LANE)
    logits = decoder_run(tf_flags, trg_ids, h_enc, enc, enc_proj, mask, pp,
                         n_steps=T - 1, trg_vocab=trg_vocab, vt_size=vt_size)
    # outputs[0] stays zero, exactly like the PyTorch module
    outputs = jnp.concatenate(
        [jnp.zeros((1, B, trg_vocab), jnp.float32),
         logits[:, :B, :trg_vocab]], axis=0)
    return outputs


# --------------------------------- main --------------------------------------

if __name__ == "__main__":
    B, S, T = 2, 8, 6
    SRC_VOCAB, TRG_VOCAB = 20, 24
    EMB, HID, ATTN = 16, 32, 32
    PAD = 0

    key = jax.random.PRNGKey(0)
    k_p, k_src, k_trg, k_tf = jax.random.split(key, 4)
    params = init_params(k_p, SRC_VOCAB, TRG_VOCAB, EMB, HID, ATTN)
    padded = pad_params(params, EMB, HID, ATTN, TRG_VOCAB)

    src = jax.random.randint(k_src, (B, S), 1, SRC_VOCAB).astype(jnp.int32)
    src = src.at[1, 5:].set(PAD)          # padded tail exercises mask + lengths
    src_lengths = jnp.array([S, 5], dtype=jnp.int32)
    trg = jax.random.randint(k_trg, (B, T), 1, TRG_VOCAB).astype(jnp.int32)

    fwd = jax.jit(functools.partial(seq2seq_forward, src_pad_idx=PAD,
                                    trg_vocab=TRG_VOCAB,
                                    teacher_forcing_ratio=0.5))
    outputs = fwd(padded, src, src_lengths, trg, k_tf)
    outputs = jax.block_until_ready(outputs)
    assert outputs.shape == (T, B, TRG_VOCAB)
    assert bool(jnp.all(jnp.isfinite(outputs)))
    print("KERNEL_OK")
</pallas_src>

<mosaic_0001>
module attributes {stable_mosaic.version = 11 : i64} {
  func.func @_matmul_bias_kernel(%arg0: i32, %arg1: i32, %arg2: memref<128x128xbf16, #tpu.memory_space<vmem>>, %arg3: memref<128x384xbf16, #tpu.memory_space<vmem>>, %arg4: memref<1x384xf32, #tpu.memory_space<vmem>>, %arg5: memref<128x384xbf16, #tpu.memory_space<vmem>>) attributes {dimension_semantics = [#tpu.dimension_semantics<parallel>, #tpu.dimension_semantics<parallel>], iteration_bounds = array<i64: 1, 1>, scalar_prefetch = 0 : i64, scratch_operands = 0 : i64, tpu.core_type = #tpu.core_type<tc>, window_params = [{transform_indices = @transform_0, window_bounds = array<i64: 128, 128>}, {transform_indices = @transform_1, window_bounds = array<i64: 128, 384>}, {transform_indices = @transform_2, window_bounds = array<i64: 1, 384>}, {transform_indices = @transform_3, window_bounds = array<i64: 128, 384>}]} {
    %c0 = arith.constant 0 : index
    %c0_0 = arith.constant 0 : index
    %0 = vector.load %arg2[%c0, %c0_0] : memref<128x128xbf16, #tpu.memory_space<vmem>>, vector<128x128xbf16>
    %c0_1 = arith.constant 0 : index
    %c0_2 = arith.constant 0 : index
    %1 = vector.load %arg3[%c0_1, %c0_2] : memref<128x384xbf16, #tpu.memory_space<vmem>>, vector<128x384xbf16>
    %cst = arith.constant dense<0.000000e+00> : vector<128x384xf32>
    %2 = tpu.matmul %0, %1, %cst {dimension_numbers = #tpu.dot_dimension_numbers<[1], [0], [0], [1], [0, 0, 1, 1], [], []>} : vector<128x128xbf16>, vector<128x384xbf16>, vector<128x384xf32> -> vector<128x384xf32>
    %c0_3 = arith.constant 0 : index
    %c0_4 = arith.constant 0 : index
    %3 = vector.load %arg4[%c0_3, %c0_4] : memref<1x384xf32, #tpu.memory_space<vmem>>, vector<1x384xf32>
    %4 = vector.broadcast %3 : vector<1x384xf32> to vector<128x384xf32>
    %5 = arith.addf %2, %4 : vector<128x384xf32>
    %6 = arith.truncf %5 : vector<128x384xf32> to vector<128x384xbf16>
    %c0_5 = arith.constant 0 : index
    %c0_6 = arith.constant 0 : index
    %7 = vector.load %arg5[%c0_5, %c0_6] : memref<128x384xbf16, #tpu.memory_space<vmem>>, vector<128x384xbf16>
    tpu.vector_store %arg5[%c0_5, %c0_6], %6 {strides = array<i32>} : memref<128x384xbf16, #tpu.memory_space<vmem>>, vector<128x384xbf16>,
    return
  }
  func.func @transform_0(%arg0: i32, %arg1: i32) -> (i32, i32) {
    %c0_i32 = arith.constant 0 : i32
    %c0_i32_0 = arith.constant 0 : i32
    return %arg0, %c0_i32 : i32, i32
  }
  func.func @transform_1(%arg0: i32, %arg1: i32) -> (i32, i32) {
    %c0_i32 = arith.constant 0 : i32
    %c0_i32_0 = arith.constant 0 : i32
    return %c0_i32, %arg1 : i32, i32
  }
  func.func @transform_2(%arg0: i32, %arg1: i32) -> (i32, i32) {
    %c0_i32 = arith.constant 0 : i32
    %c0_i32_0 = arith.constant 0 : i32
    return %c0_i32, %arg1 : i32, i32
  }
  func.func @transform_3(%arg0: i32, %arg1: i32) -> (i32, i32) {
    %c0_i32 = arith.constant 0 : i32
    return %arg0, %arg1 : i32, i32
  }
}

module attributes {stable_mosaic.version = 11 : i64} {
  func.func @_matmul_bias_kernel(%arg0: i32, %arg1: i32, %arg2: memref<128x128xbf16, #tpu.memory_space<vmem>>, %arg3: memref<128x128xbf16, #tpu.memory_space<vmem>>, %arg4: memref<1x128xf32, #tpu.memory_space<vmem>>, %arg5: memref<128x128xbf16, #tpu.memory_space<vmem>>) attributes {dimension_semantics = [#tpu.dimension_semantics<parallel>, #tpu.dimension_semantics<parallel>], iteration_bounds = array<i64: 1, 1>, scalar_prefetch = 0 : i64, scratch_operands = 0 : i64, tpu.core_type = #tpu.core_type<tc>, window_params = [{transform_indices = @transform_0, window_bounds = array<i64: 128, 128>}, {transform_indices = @transform_1, window_bounds = array<i64: 128, 128>}, {transform_indices = @transform_2, window_bounds = array<i64: 1, 128>}, {transform_indices = @transform_3, window_bounds = array<i64: 128, 128>}]} {
    %c0 = arith.constant 0 : index
    %c0_0 = arith.constant 0 : index
    %0 = vector.load %arg2[%c0, %c0_0] : memref<128x128xbf16, #tpu.memory_space<vmem>>, vector<128x128xbf16>
    %c0_1 = arith.constant 0 : index
    %c0_2 = arith.constant 0 : index
    %1 = vector.load %arg3[%c0_1, %c0_2] : memref<128x128xbf16, #tpu.memory_space<vmem>>, vector<128x128xbf16>
    %cst = arith.constant dense<0.000000e+00> : vector<128x128xf32>
    %2 = tpu.matmul %0, %1, %cst {dimension_numbers = #tpu.dot_dimension_numbers<[1], [0], [0], [1], [0, 0, 1, 1], [], []>} : vector<128x128xbf16>, vector<128x128xbf16>, vector<128x128xf32> -> vector<128x128xf32>
    %c0_3 = arith.constant 0 : index
    %c0_4 = arith.constant 0 : index
    %3 = vector.load %arg4[%c0_3, %c0_4] : memref<1x128xf32, #tpu.memory_space<vmem>>, vector<1x128xf32>
    %4 = vector.broadcast %3 : vector<1x128xf32> to vector<128x128xf32>
    %5 = arith.addf %2, %4 : vector<128x128xf32>
    %6 = arith.truncf %5 : vector<128x128xf32> to vector<128x128xbf16>
    %c0_5 = arith.constant 0 : index
    %c0_6 = arith.constant 0 : index
    %7 = vector.load %arg5[%c0_5, %c0_6] : memref<128x128xbf16, #tpu.memory_space<vmem>>, vector<128x128xbf16>
    tpu.vector_store %arg5[%c0_5, %c0_6], %6 {strides = array<i32>} : memref<128x128xbf16, #tpu.memory_space<vmem>>, vector<128x128xbf16>,
    return
  }
  func.func @transform_0(%arg0: i32, %arg1: i32) -> (i32, i32) {
    %c0_i32 = arith.constant 0 : i32
    %c0_i32_0 = arith.constant 0 : i32
    return %arg0, %c0_i32 : i32, i32
  }
  func.func @transform_1(%arg0: i32, %arg1: i32) -> (i32, i32) {
    %c0_i32 = arith.constant 0 : i32
    %c0_i32_0 = arith.constant 0 : i32
    return %c0_i32, %arg1 : i32, i32
  }
  func.func @transform_2(%arg0: i32, %arg1: i32) -> (i32, i32) {
    %c0_i32 = arith.constant 0 : i32
    %c0_i32_0 = arith.constant 0 : i32
    return %c0_i32, %arg1 : i32, i32
  }
  func.func @transform_3(%arg0: i32, %arg1: i32) -> (i32, i32) {
    %c0_i32 = arith.constant 0 : i32
    return %arg0, %arg1 : i32, i32
  }
}

module attributes {stable_mosaic.version = 11 : i64} {
  func.func @_decoder_step_kernel(%arg0: i32, %arg1: i32, %arg2: memref<5xi32, #tpu.memory_space<smem>>, %arg3: memref<6x8x1xi32, #tpu.memory_space<vmem>>, %arg4: memref<8x128xf32, #tpu.memory_space<vmem>>, %arg5: memref<8x16x128xbf16, #tpu.memory_space<vmem>>, %arg6: memref<8x16x128xbf16, #tpu.memory_space<vmem>>, %arg7: memref<8x16xf32, #tpu.memory_space<vmem>>, %arg8: memref<128x128xbf16, #tpu.memory_space<vmem>>, %arg9: memref<128x128xbf16, #tpu.memory_space<vmem>>, %arg10: memref<1x128xf32, #tpu.memory_space<vmem>>, %arg11: memref<128x384xbf16, #tpu.memory_space<vmem>>, %arg12: memref<128x384xbf16, #tpu.memory_space<vmem>>, %arg13: memref<1x384xf32, #tpu.memory_space<vmem>>, %arg14: memref<128x384xbf16, #tpu.memory_space<vmem>>, %arg15: memref<1x384xf32, #tpu.memory_space<vmem>>, %arg16: memref<128x128xbf16, #tpu.memory_space<vmem>>, %arg17: memref<128x128xbf16, #tpu.memory_space<vmem>>, %arg18: memref<128x128xbf16, #tpu.memory_space<vmem>>, %arg19: memref<1x128xf32, #tpu.memory_space<vmem>>, %arg20: memref<1x8x128xf32, #tpu.memory_space<vmem>>, %arg21: memref<8x128xf32, #tpu.memory_space<vmem>>, %arg22: memref<8x128xbf16, #tpu.memory_space<vmem>>, %arg23: memref<8x128xbf16, #tpu.memory_space<vmem>>, %arg24: memref<8x1xi32, #tpu.memory_space<vmem>>, %arg25: memref<8x1xf32, #tpu.memory_space<vmem>>, %arg26: memref<8x1xi32, #tpu.memory_space<vmem>>) attributes {dimension_semantics = [#tpu.dimension_semantics<arbitrary>, #tpu.dimension_semantics<arbitrary>], iteration_bounds = array<i64: 5, 1>, scalar_prefetch = 1 : i64, scratch_operands = 6 : i64, tpu.core_type = #tpu.core_type<tc>, window_params = [{pipeline_mode = #tpu.pipeline_mode<synchronous>, transform_indices = @transform_0, window_bounds = array<i64: 6, 8, 1>}, {pipeline_mode = #tpu.pipeline_mode<synchronous>, transform_indices = @transform_1, window_bounds = array<i64: 8, 128>}, {pipeline_mode = #tpu.pipeline_mode<synchronous>, transform_indices = @transform_2, window_bounds = array<i64: 8, 16, 128>}, {pipeline_mode = #tpu.pipeline_mode<synchronous>, transform_indices = @transform_3, window_bounds = array<i64: 8, 16, 128>}, {pipeline_mode = #tpu.pipeline_mode<synchronous>, transform_indices = @transform_4, window_bounds = array<i64: 8, 16>}, {pipeline_mode = #tpu.pipeline_mode<synchronous>, transform_indices = @transform_5, window_bounds = array<i64: 128, 128>}, {pipeline_mode = #tpu.pipeline_mode<synchronous>, transform_indices = @transform_6, window_bounds = array<i64: 128, 128>}, {pipeline_mode = #tpu.pipeline_mode<synchronous>, transform_indices = @transform_7, window_bounds = array<i64: 1, 128>}, {pipeline_mode = #tpu.pipeline_mode<synchronous>, transform_indices = @transform_8, window_bounds = array<i64: 128, 384>}, {pipeline_mode = #tpu.pipeline_mode<synchronous>, transform_indices = @transform_9, window_bounds = array<i64: 128, 384>}, {pipeline_mode = #tpu.pipeline_mode<synchronous>, transform_indices = @transform_10, window_bounds = array<i64: 1, 384>}, {pipeline_mode = #tpu.pipeline_mode<synchronous>, transform_indices = @transform_11, window_bounds = array<i64: 128, 384>}, {pipeline_mode = #tpu.pipeline_mode<synchronous>, transform_indices = @transform_12, window_bounds = array<i64: 1, 384>}, {transform_indices = @transform_13, window_bounds = array<i64: 128, 128>}, {transform_indices = @transform_14, window_bounds = array<i64: 128, 128>}, {transform_indices = @transform_15, window_bounds = array<i64: 128, 128>}, {transform_indices = @transform_16, window_bounds = array<i64: 1, 128>}, {transform_indices = @transform_17, window_bounds = array<i64: 1, 8, 128>}]} {
    %c0_i32 = arith.constant 0 : i32
    %0 = arith.cmpi eq, %arg1, %c0_i32 : i32
    %1 = arith.extui %0 : i1 to i32
    %c0_i32_0 = arith.constant 0 : i32
    %2 = arith.cmpi ne, %1, %c0_i32_0 : i32
    scf.if %2 {
      %c0_i32_34 = arith.constant 0 : i32
      %48 = arith.cmpi eq, %arg0, %c0_i32_34 : i32
      %49 = arith.extui %48 : i1 to i32
      %c0_i32_35 = arith.constant 0 : i32
      %50 = arith.cmpi ne, %49, %c0_i32_35 : i32
      scf.if %50 {
        %c0_90 = arith.constant 0 : index
        %c0_91 = arith.constant 0 : index
        %144 = vector.load %arg4[%c0_90, %c0_91] : memref<8x128xf32, #tpu.memory_space<vmem>>, vector<8x128xf32>
        %c0_92 = arith.constant 0 : index
        %c0_93 = arith.constant 0 : index
        %145 = vector.load %arg21[%c0_92, %c0_93] : memref<8x128xf32, #tpu.memory_space<vmem>>, vector<8x128xf32>
        tpu.vector_store %arg21[%c0_92, %c0_93], %144 {strides = array<i32>} : memref<8x128xf32, #tpu.memory_space<vmem>>, vector<8x128xf32>,
        %c0_94 = arith.constant 0 : index
        %c0_95 = arith.constant 0 : index
        %c0_96 = arith.constant 0 : index
        %146 = vector.load %arg3[%c0_94, %c0_95, %c0_96] : memref<6x8x1xi32, #tpu.memory_space<vmem>>, vector<1x8x1xi32>
        %147 = vector.shape_cast %146 : vector<1x8x1xi32> to vector<8x1xi32>
        %c0_97 = arith.constant 0 : index
        %c0_98 = arith.constant 0 : index
        %148 = vector.load %arg24[%c0_97, %c0_98] : memref<8x1xi32, #tpu.memory_space<vmem>>, vector<8x1xi32>
        tpu.vector_store %arg24[%c0_97, %c0_98], %147 {strides = array<i32>} : memref<8x1xi32, #tpu.memory_space<vmem>>, vector<8x1xi32>,
      } else {
      }
      %c0_36 = arith.constant 0 : index
      %c0_37 = arith.constant 0 : index
      %51 = vector.load %arg21[%c0_36, %c0_37] : memref<8x128xf32, #tpu.memory_space<vmem>>, vector<8x128xf32>
      %52 = tpu.iota {dimensions = array<i32: 1>} : vector<8x128xi32>
      %c0_38 = arith.constant 0 : index
      %c0_39 = arith.constant 0 : index
      %53 = vector.load %arg24[%c0_38, %c0_39] : memref<8x1xi32, #tpu.memory_space<vmem>>, vector<8x1xi32>
      %54 = vector.broadcast %53 : vector<8x1xi32> to vector<8x128xi32>
      %55 = arith.cmpi eq, %52, %54 : vector<8x128xi32>
      %56 = arith.extui %55 : vector<8x128xi1> to vector<8x128xi32>
      %57 = arith.sitofp %56 : vector<8x128xi32> to vector<8x128xf32>
      %58 = arith.truncf %57 : vector<8x128xf32> to vector<8x128xbf16>
      %c0_40 = arith.constant 0 : index
      %c0_41 = arith.constant 0 : index
      %59 = vector.load %arg8[%c0_40, %c0_41] : memref<128x128xbf16, #tpu.memory_space<vmem>>, vector<128x128xbf16>
      %cst_42 = arith.constant dense<0.000000e+00> : vector<8x128xf32>
      %60 = tpu.matmul %58, %59, %cst_42 {dimension_numbers = #tpu.dot_dimension_numbers<[1], [0], [0], [1], [0, 0, 1, 1], [], []>} : vector<8x128xbf16>, vector<128x128xbf16>, vector<8x128xf32> -> vector<8x128xf32>
      %61 = arith.truncf %60 : vector<8x128xf32> to vector<8x128xbf16>
      %c0_43 = arith.constant 0 : index
      %c0_44 = arith.constant 0 : index
      %62 = vector.load %arg22[%c0_43, %c0_44] : memref<8x128xbf16, #tpu.memory_space<vmem>>, vector<8x128xbf16>
      tpu.vector_store %arg22[%c0_43, %c0_44], %61 {strides = array<i32>} : memref<8x128xbf16, #tpu.memory_space<vmem>>, vector<8x128xbf16>,
      %63 = arith.truncf %51 : vector<8x128xf32> to vector<8x128xbf16>
      %c0_45 = arith.constant 0 : index
      %c0_46 = arith.constant 0 : index
      %64 = vector.load %arg9[%c0_45, %c0_46] : memref<128x128xbf16, #tpu.memory_space<vmem>>, vector<128x128xbf16>
      %cst_47 = arith.constant dense<0.000000e+00> : vector<8x128xf32>
      %65 = tpu.matmul %63, %64, %cst_47 {dimension_numbers = #tpu.dot_dimension_numbers<[1], [0], [0], [1], [0, 0, 1, 1], [], []>} : vector<8x128xbf16>, vector<128x128xbf16>, vector<8x128xf32> -> vector<8x128xf32>
      %c0_48 = arith.constant 0 : index
      %c0_49 = arith.constant 0 : index
      %c0_50 = arith.constant 0 : index
      %66 = vector.load %arg6[%c0_48, %c0_49, %c0_50] : memref<8x16x128xbf16, #tpu.memory_space<vmem>>, vector<8x16x128xbf16>
      %67 = arith.extf %66 : vector<8x16x128xbf16> to vector<8x16x128xf32>
      %68 = vector.shape_cast %65 : vector<8x128xf32> to vector<8x1x128xf32>
      %69 = vector.broadcast %68 : vector<8x1x128xf32> to vector<8x16x128xf32>
      %70 = arith.addf %67, %69 : vector<8x16x128xf32>
      %71 = math.tanh %70 : vector<8x16x128xf32>
      %c0_51 = arith.constant 0 : index
      %c0_52 = arith.constant 0 : index
      %72 = vector.load %arg10[%c0_51, %c0_52] : memref<1x128xf32, #tpu.memory_space<vmem>>, vector<1x128xf32>
      %73 = vector.shape_cast %72 : vector<1x128xf32> to vector<1x1x128xf32>
      %74 = vector.broadcast %73 : vector<1x1x128xf32> to vector<8x16x128xf32>
      %75 = arith.mulf %71, %74 : vector<8x16x128xf32>
      %cst_53 = arith.constant dense<0.000000e+00> : vector<8x16xf32>
      %76 = vector.multi_reduction <add>, %75, %cst_53 [2] : vector<8x16x128xf32> to vector<8x16xf32>
      %c0_54 = arith.constant 0 : index
      %c0_55 = arith.constant 0 : index
      %77 = vector.load %arg7[%c0_54, %c0_55] : memref<8x16xf32, #tpu.memory_space<vmem>>, vector<8x16xf32>
      %cst_56 = arith.constant 5.000000e-01 : f32
      %78 = vector.broadcast %cst_56 : f32 to vector<8x16xf32>
      %79 = arith.cmpf ogt, %77, %78 : vector<8x16xf32>
      %cst_57 = arith.constant -1.000000e+10 : f32
      %80 = vector.broadcast %cst_57 : f32 to vector<8x16xf32>
      %81 = arith.select %79, %76, %80 : vector<8x16xi1>, vector<8x16xf32>
      %cst_58 = arith.constant dense<0xFF800000> : vector<8xf32>
      %82 = vector.multi_reduction <maximumf>, %81, %cst_58 [1] : vector<8x16xf32> to vector<8xf32>
      %83 = vector.shape_cast %82 : vector<8xf32> to vector<8x1xf32>
      %84 = vector.broadcast %83 : vector<8x1xf32> to vector<8x16xf32>
      %85 = arith.subf %81, %84 : vector<8x16xf32>
      %86 = math.exp %85 : vector<8x16xf32>
      %cst_59 = arith.constant dense<0.000000e+00> : vector<8xf32>
      %87 = vector.multi_reduction <add>, %86, %cst_59 [1] : vector<8x16xf32> to vector<8xf32>
      %88 = vector.shape_cast %87 : vector<8xf32> to vector<8x1xf32>
      %89 = tpu.reciprocal %88 {approx = true} : vector<8x1xf32> -> vector<8x1xf32>
      %90 = vector.broadcast %89 : vector<8x1xf32> to vector<8x16xf32>
      %91 = arith.mulf %86, %90 : vector<8x16xf32>
      %92 = vector.shape_cast %91 : vector<8x16xf32> to vector<8x1x16xf32>
      %93 = arith.truncf %92 : vector<8x1x16xf32> to vector<8x1x16xbf16>
      %c0_60 = arith.constant 0 : index
      %c0_61 = arith.constant 0 : index
      %c0_62 = arith.constant 0 : index
      %94 = vector.load %arg5[%c0_60, %c0_61, %c0_62] : memref<8x16x128xbf16, #tpu.memory_space<vmem>>, vector<8x16x128xbf16>
      "tpu.trace_start"() <{level = 10 : i32, message = "bqs,bsh->bqh"}> : () -> ()
      %cst_63 = arith.constant dense<0.000000e+00> : vector<8x1x128xf32>
      %95 = tpu.matmul %93, %94, %cst_63 {dimension_numbers = #tpu.dot_dimension_numbers<[2], [1], [1], [2], [0, 0, 0, 1, 1, 2], [0], [0]>} : vector<8x1x16xbf16>, vector<8x16x128xbf16>, vector<8x1x128xf32> -> vector<8x1x128xf32>
      "tpu.trace_stop"() : () -> ()
      %96 = vector.shape_cast %95 : vector<8x1x128xf32> to vector<8x128xf32>
      %97 = arith.truncf %96 : vector<8x128xf32> to vector<8x128xbf16>
      %c0_64 = arith.constant 0 : index
      %c0_65 = arith.constant 0 : index
      %98 = vector.load %arg11[%c0_64, %c0_65] : memref<128x384xbf16, #tpu.memory_space<vmem>>, vector<128x384xbf16>
      %cst_66 = arith.constant dense<0.000000e+00> : vector<8x384xf32>
      %99 = tpu.matmul %61, %98, %cst_66 {dimension_numbers = #tpu.dot_dimension_numbers<[1], [0], [0], [1], [0, 0, 1, 1], [], []>} : vector<8x128xbf16>, vector<128x384xbf16>, vector<8x384xf32> -> vector<8x384xf32>
      %c0_67 = arith.constant 0 : index
      %c0_68 = arith.constant 0 : index
      %100 = vector.load %arg12[%c0_67, %c0_68] : memref<128x384xbf16, #tpu.memory_space<vmem>>, vector<128x384xbf16>
      %cst_69 = arith.constant dense<0.000000e+00> : vector<8x384xf32>
      %101 = tpu.matmul %97, %100, %cst_69 {dimension_numbers = #tpu.dot_dimension_numbers<[1], [0], [0], [1], [0, 0, 1, 1], [], []>} : vector<8x128xbf16>, vector<128x384xbf16>, vector<8x384xf32> -> vector<8x384xf32>
      %102 = arith.addf %99, %101 : vector<8x384xf32>
      %c0_70 = arith.constant 0 : index
      %c0_71 = arith.constant 0 : index
      %103 = vector.load %arg13[%c0_70, %c0_71] : memref<1x384xf32, #tpu.memory_space<vmem>>, vector<1x384xf32>
      %104 = vector.broadcast %103 : vector<1x384xf32> to vector<8x384xf32>
      %105 = arith.addf %102, %104 : vector<8x384xf32>
      %106 = arith.truncf %51 : vector<8x128xf32> to vector<8x128xbf16>
      %c0_72 = arith.constant 0 : index
      %c0_73 = arith.constant 0 : index
      %107 = vector.load %arg14[%c0_72, %c0_73] : memref<128x384xbf16, #tpu.memory_space<vmem>>, vector<128x384xbf16>
      %cst_74 = arith.constant dense<0.000000e+00> : vector<8x384xf32>
      %108 = tpu.matmul %106, %107, %cst_74 {dimension_numbers = #tpu.dot_dimension_numbers<[1], [0], [0], [1], [0, 0, 1, 1], [], []>} : vector<8x128xbf16>, vector<128x384xbf16>, vector<8x384xf32> -> vector<8x384xf32>
      %c0_75 = arith.constant 0 : index
      %c0_76 = arith.constant 0 : index
      %109 = vector.load %arg15[%c0_75, %c0_76] : memref<1x384xf32, #tpu.memory_space<vmem>>, vector<1x384xf32>
      %110 = vector.broadcast %109 : vector<1x384xf32> to vector<8x384xf32>
      %111 = arith.addf %108, %110 : vector<8x384xf32>
      %112 = vector.extract_strided_slice %105 {offsets = [0, 0], sizes = [8, 128], strides = [1, 1]} : vector<8x384xf32> to vector<8x128xf32>
      %113 = vector.extract_strided_slice %111 {offsets = [0, 0], sizes = [8, 128], strides = [1, 1]} : vector<8x384xf32> to vector<8x128xf32>
      %114 = arith.addf %112, %113 : vector<8x128xf32>
      %115 = arith.negf %114 : vector<8x128xf32>
      %116 = math.exp %115 : vector<8x128xf32>
      %cst_77 = arith.constant 1.000000e+00 : f32
      %117 = vector.broadcast %cst_77 : f32 to vector<8x128xf32>
      %118 = arith.addf %117, %116 : vector<8x128xf32>
      %119 = arith.divf %117, %118 : vector<8x128xf32>
      %120 = vector.extract_strided_slice %105 {offsets = [0, 128], sizes = [8, 128], strides = [1, 1]} : vector<8x384xf32> to vector<8x128xf32>
      %121 = vector.extract_strided_slice %111 {offsets = [0, 128], sizes = [8, 128], strides = [1, 1]} : vector<8x384xf32> to vector<8x128xf32>
      %122 = arith.addf %120, %121 : vector<8x128xf32>
      %123 = arith.negf %122 : vector<8x128xf32>
      %124 = math.exp %123 : vector<8x128xf32>
      %cst_78 = arith.constant 1.000000e+00 : f32
      %125 = vector.broadcast %cst_78 : f32 to vector<8x128xf32>
      %126 = arith.addf %125, %124 : vector<8x128xf32>
      %127 = arith.divf %125, %126 : vector<8x128xf32>
      %128 = vector.extract_strided_slice %105 {offsets = [0, 256], sizes = [8, 128], strides = [1, 1]} : vector<8x384xf32> to vector<8x128xf32>
      %129 = vector.extract_strided_slice %111 {offsets = [0, 256], sizes = [8, 128], strides = [1, 1]} : vector<8x384xf32> to vector<8x128xf32>
      %130 = arith.mulf %119, %129 : vector<8x128xf32>
      %131 = arith.addf %128, %130 : vector<8x128xf32>
      %132 = math.tanh %131 : vector<8x128xf32>
      %cst_79 = arith.constant 1.000000e+00 : f32
      %133 = vector.broadcast %cst_79 : f32 to vector<8x128xf32>
      %134 = arith.subf %133, %127 : vector<8x128xf32>
      %135 = arith.mulf %134, %132 : vector<8x128xf32>
      %136 = arith.mulf %127, %51 : vector<8x128xf32>
      %137 = arith.addf %135, %136 : vector<8x128xf32>
      %c0_80 = arith.constant 0 : index
      %c0_81 = arith.constant 0 : index
      %138 = vector.load %arg21[%c0_80, %c0_81] : memref<8x128xf32, #tpu.memory_space<vmem>>, vector<8x128xf32>
      tpu.vector_store %arg21[%c0_80, %c0_81], %137 {strides = array<i32>} : memref<8x128xf32, #tpu.memory_space<vmem>>, vector<8x128xf32>,
      %c0_82 = arith.constant 0 : index
      %c0_83 = arith.constant 0 : index
      %139 = vector.load %arg23[%c0_82, %c0_83] : memref<8x128xbf16, #tpu.memory_space<vmem>>, vector<8x128xbf16>
      tpu.vector_store %arg23[%c0_82, %c0_83], %97 {strides = array<i32>} : memref<8x128xbf16, #tpu.memory_space<vmem>>, vector<8x128xbf16>,
      %cst_84 = arith.constant 0xFF800000 : f32
      %140 = vector.broadcast %cst_84 : f32 to vector<8x1xf32>
      %c0_85 = arith.constant 0 : index
      %c0_86 = arith.constant 0 : index
      %141 = vector.load %arg25[%c0_85, %c0_86] : memref<8x1xf32, #tpu.memory_space<vmem>>, vector<8x1xf32>
      tpu.vector_store %arg25[%c0_85, %c0_86], %140 {strides = array<i32>} : memref<8x1xf32, #tpu.memory_space<vmem>>, vector<8x1xf32>,
      %c0_i32_87 = arith.constant 0 : i32
      %142 = vector.broadcast %c0_i32_87 : i32 to vector<8x1xi32>
      %c0_88 = arith.constant 0 : index
      %c0_89 = arith.constant 0 : index
      %143 = vector.load %arg26[%c0_88, %c0_89] : memref<8x1xi32, #tpu.memory_space<vmem>>, vector<8x1xi32>
      tpu.vector_store %arg26[%c0_88, %c0_89], %142 {strides = array<i32>} : memref<8x1xi32, #tpu.memory_space<vmem>>, vector<8x1xi32>,
    } else {
    }
    %c0 = arith.constant 0 : index
    %c0_1 = arith.constant 0 : index
    %3 = vector.load %arg21[%c0, %c0_1] : memref<8x128xf32, #tpu.memory_space<vmem>>, vector<8x128xf32>
    %4 = arith.truncf %3 : vector<8x128xf32> to vector<8x128xbf16>
    %c0_2 = arith.constant 0 : index
    %c0_3 = arith.constant 0 : index
    %5 = vector.load %arg16[%c0_2, %c0_3] : memref<128x128xbf16, #tpu.memory_space<vmem>>, vector<128x128xbf16>
    %cst = arith.constant dense<0.000000e+00> : vector<8x128xf32>
    %6 = tpu.matmul %4, %5, %cst {dimension_numbers = #tpu.dot_dimension_numbers<[1], [0], [0], [1], [0, 0, 1, 1], [], []>} : vector<8x128xbf16>, vector<128x128xbf16>, vector<8x128xf32> -> vector<8x128xf32>
    %c0_4 = arith.constant 0 : index
    %c0_5 = arith.constant 0 : index
    %7 = vector.load %arg23[%c0_4, %c0_5] : memref<8x128xbf16, #tpu.memory_space<vmem>>, vector<8x128xbf16>
    %c0_6 = arith.constant 0 : index
    %c0_7 = arith.constant 0 : index
    %8 = vector.load %arg17[%c0_6, %c0_7] : memref<128x128xbf16, #tpu.memory_space<vmem>>, vector<128x128xbf16>
    %cst_8 = arith.constant dense<0.000000e+00> : vector<8x128xf32>
    %9 = tpu.matmul %7, %8, %cst_8 {dimension_numbers = #tpu.dot_dimension_numbers<[1], [0], [0], [1], [0, 0, 1, 1], [], []>} : vector<8x128xbf16>, vector<128x128xbf16>, vector<8x128xf32> -> vector<8x128xf32>
    %10 = arith.addf %6, %9 : vector<8x128xf32>
    %c0_9 = arith.constant 0 : index
    %c0_10 = arith.constant 0 : index
    %11 = vector.load %arg22[%c0_9, %c0_10] : memref<8x128xbf16, #tpu.memory_space<vmem>>, vector<8x128xbf16>
    %c0_11 = arith.constant 0 : index
    %c0_12 = arith.constant 0 : index
    %12 = vector.load %arg18[%c0_11, %c0_12] : memref<128x128xbf16, #tpu.memory_space<vmem>>, vector<128x128xbf16>
    %cst_13 = arith.constant dense<0.000000e+00> : vector<8x128xf32>
    %13 = tpu.matmul %11, %12, %cst_13 {dimension_numbers = #tpu.dot_dimension_numbers<[1], [0], [0], [1], [0, 0, 1, 1], [], []>} : vector<8x128xbf16>, vector<128x128xbf16>, vector<8x128xf32> -> vector<8x128xf32>
    %14 = arith.addf %10, %13 : vector<8x128xf32>
    %c0_14 = arith.constant 0 : index
    %c0_15 = arith.constant 0 : index
    %15 = vector.load %arg19[%c0_14, %c0_15] : memref<1x128xf32, #tpu.memory_space<vmem>>, vector<1x128xf32>
    %16 = vector.broadcast %15 : vector<1x128xf32> to vector<8x128xf32>
    %17 = arith.addf %14, %16 : vector<8x128xf32>
    %c0_16 = arith.constant 0 : index
    %c0_17 = arith.constant 0 : index
    %c0_18 = arith.constant 0 : index
    %18 = vector.load %arg20[%c0_16, %c0_17, %c0_18] : memref<1x8x128xf32, #tpu.memory_space<vmem>>, vector<1x8x128xf32>
    %19 = vector.shape_cast %18 : vector<1x8x128xf32> to vector<8x128xf32>
    %20 = vector.shape_cast %17 : vector<8x128xf32> to vector<1x8x128xf32>
    tpu.vector_store %arg20[%c0_16, %c0_17, %c0_18], %20 {strides = array<i32>} : memref<1x8x128xf32, #tpu.memory_space<vmem>>, vector<1x8x128xf32>,
    %21 = tpu.iota {dimensions = array<i32: 1>} : vector<8x128xi32>
    %c128_i32 = arith.constant 128 : i32
    %22 = arith.muli %arg1, %c128_i32 : i32
    %23 = vector.broadcast %22 : i32 to vector<8x128xi32>
    %24 = arith.addi %21, %23 : vector<8x128xi32>
    %c24_i32 = arith.constant 24 : i32
    %25 = vector.broadcast %c24_i32 : i32 to vector<8x128xi32>
    %26 = arith.cmpi slt, %24, %25 : vector<8x128xi32>
    %cst_19 = arith.constant 0xFF800000 : f32
    %27 = vector.broadcast %cst_19 : f32 to vector<8x128xf32>
    %28 = arith.select %26, %17, %27 : vector<8x128xi1>, vector<8x128xf32>
    %cst_20 = arith.constant dense<0xFF800000> : vector<8xf32>
    %29 = vector.multi_reduction <maximumf>, %28, %cst_20 [1] : vector<8x128xf32> to vector<8xf32>
    %30 = vector.shape_cast %29 : vector<8xf32> to vector<8x1xf32>
    %31 = vector.broadcast %30 : vector<8x1xf32> to vector<8x128xf32>
    %32 = arith.cmpf oge, %28, %31 : vector<8x128xf32>
    %c1073741824_i32 = arith.constant 1073741824 : i32
    %33 = vector.broadcast %c1073741824_i32 : i32 to vector<8x128xi32>
    %34 = arith.select %32, %24, %33 : vector<8x128xi1>, vector<8x128xi32>
    %cst_21 = arith.constant dense<2147483647> : vector<8xi32>
    %35 = vector.multi_reduction <minsi>, %34, %cst_21 [1] : vector<8x128xi32> to vector<8xi32>
    %36 = vector.shape_cast %35 : vector<8xi32> to vector<8x1xi32>
    %c0_22 = arith.constant 0 : index
    %c0_23 = arith.constant 0 : index
    %37 = vector.load %arg25[%c0_22, %c0_23] : memref<8x1xf32, #tpu.memory_space<vmem>>, vector<8x1xf32>
    %38 = arith.cmpf ogt, %30, %37 : vector<8x1xf32>
    %c0_24 = arith.constant 0 : index
    %c0_25 = arith.constant 0 : index
    %39 = vector.load %arg26[%c0_24, %c0_25] : memref<8x1xi32, #tpu.memory_space<vmem>>, vector<8x1xi32>
    %40 = arith.select %38, %36, %39 : vector<8x1xi1>, vector<8x1xi32>
    %c0_26 = arith.constant 0 : index
    %c0_27 = arith.constant 0 : index
    %41 = vector.load %arg26[%c0_26, %c0_27] : memref<8x1xi32, #tpu.memory_space<vmem>>, vector<8x1xi32>
    tpu.vector_store %arg26[%c0_26, %c0_27], %40 {strides = array<i32>} : memref<8x1xi32, #tpu.memory_space<vmem>>, vector<8x1xi32>,
    %c0_28 = arith.constant 0 : index
    %c0_29 = arith.constant 0 : index
    %42 = vector.load %arg25[%c0_28, %c0_29] : memref<8x1xf32, #tpu.memory_space<vmem>>, vector<8x1xf32>
    %43 = arith.maximumf %30, %42 : vector<8x1xf32>
    %c0_30 = arith.constant 0 : index
    %c0_31 = arith.constant 0 : index
    %44 = vector.load %arg25[%c0_30, %c0_31] : memref<8x1xf32, #tpu.memory_space<vmem>>, vector<8x1xf32>
    tpu.vector_store %arg25[%c0_30, %c0_31], %43 {strides = array<i32>} : memref<8x1xf32, #tpu.memory_space<vmem>>, vector<8x1xf32>,
    %c0_i32_32 = arith.constant 0 : i32
    %45 = arith.cmpi eq, %arg1, %c0_i32_32 : i32
    %46 = arith.extui %45 : i1 to i32
    %c0_i32_33 = arith.constant 0 : i32
    %47 = arith.cmpi ne, %46, %c0_i32_33 : i32
    scf.if %47 {
      %48 = arith.index_cast %arg0 : i32 to index
      %49 = memref.load %arg2[%48] : memref<5xi32, #tpu.memory_space<smem>>
      %c1_i32 = arith.constant 1 : i32
      %50 = arith.addi %arg0, %c1_i32 : i32
      %51 = arith.index_cast %50 : i32 to index
      %c0_34 = arith.constant 0 : index
      %c0_35 = arith.constant 0 : index
      %52 = vector.load %arg3[%51, %c0_34, %c0_35] : memref<6x8x1xi32, #tpu.memory_space<vmem>>, vector<1x8x1xi32>
      %53 = vector.shape_cast %52 : vector<1x8x1xi32> to vector<8x1xi32>
      %c0_i32_36 = arith.constant 0 : i32
      %54 = arith.cmpi sgt, %49, %c0_i32_36 : i32
      %c0_37 = arith.constant 0 : index
      %c0_38 = arith.constant 0 : index
      %55 = vector.load %arg26[%c0_37, %c0_38] : memref<8x1xi32, #tpu.memory_space<vmem>>, vector<8x1xi32>
      %56 = arith.select %54, %53, %55 : vector<8x1xi32>
      %c0_39 = arith.constant 0 : index
      %c0_40 = arith.constant 0 : index
      %57 = vector.load %arg24[%c0_39, %c0_40] : memref<8x1xi32, #tpu.memory_space<vmem>>, vector<8x1xi32>
      tpu.vector_store %arg24[%c0_39, %c0_40], %56 {strides = array<i32>} : memref<8x1xi32, #tpu.memory_space<vmem>>, vector<8x1xi32>,
    } else {
    }
    return
  }
  func.func @transform_0(%arg0: i32, %arg1: i32, %arg2: memref<5xi32, #tpu.memory_space<smem>>) -> (i32, i32, i32) {
    %c0_i32 = arith.constant 0 : i32
    %c0_i32_0 = arith.constant 0 : i32
    %c0_i32_1 = arith.constant 0 : i32
    %c0_i32_2 = arith.constant 0 : i32
    return %c0_i32, %c0_i32_0, %c0_i32_1 : i32, i32, i32
  }
  func.func @transform_1(%arg0: i32, %arg1: i32, %arg2: memref<5xi32, #tpu.memory_space<smem>>) -> (i32, i32) {
    %c0_i32 = arith.constant 0 : i32
    %c0_i32_0 = arith.constant 0 : i32
    %c0_i32_1 = arith.constant 0 : i32
    return %c0_i32, %c0_i32_0 : i32, i32
  }
  func.func @transform_2(%arg0: i32, %arg1: i32, %arg2: memref<5xi32, #tpu.memory_space<smem>>) -> (i32, i32, i32) {
    %c0_i32 = arith.constant 0 : i32
    %c0_i32_0 = arith.constant 0 : i32
    %c0_i32_1 = arith.constant 0 : i32
    %c0_i32_2 = arith.constant 0 : i32
    return %c0_i32, %c0_i32_0, %c0_i32_1 : i32, i32, i32
  }
  func.func @transform_3(%arg0: i32, %arg1: i32, %arg2: memref<5xi32, #tpu.memory_space<smem>>) -> (i32, i32, i32) {
    %c0_i32 = arith.constant 0 : i32
    %c0_i32_0 = arith.constant 0 : i32
    %c0_i32_1 = arith.constant 0 : i32
    %c0_i32_2 = arith.constant 0 : i32
    return %c0_i32, %c0_i32_0, %c0_i32_1 : i32, i32, i32
  }
  func.func @transform_4(%arg0: i32, %arg1: i32, %arg2: memref<5xi32, #tpu.memory_space<smem>>) -> (i32, i32) {
    %c0_i32 = arith.constant 0 : i32
    %c0_i32_0 = arith.constant 0 : i32
    %c0_i32_1 = arith.constant 0 : i32
    return %c0_i32, %c0_i32_0 : i32, i32
  }
  func.func @transform_5(%arg0: i32, %arg1: i32, %arg2: memref<5xi32, #tpu.memory_space<smem>>) -> (i32, i32) {
    %c0_i32 = arith.constant 0 : i32
    %c0_i32_0 = arith.constant 0 : i32
    %c0_i32_1 = arith.constant 0 : i32
    return %c0_i32, %c0_i32_0 : i32, i32
  }
  func.func @transform_6(%arg0: i32, %arg1: i32, %arg2: memref<5xi32, #tpu.memory_space<smem>>) -> (i32, i32) {
    %c0_i32 = arith.constant 0 : i32
    %c0_i32_0 = arith.constant 0 : i32
    %c0_i32_1 = arith.constant 0 : i32
    return %c0_i32, %c0_i32_0 : i32, i32
  }
  func.func @transform_7(%arg0: i32, %arg1: i32, %arg2: memref<5xi32, #tpu.memory_space<smem>>) -> (i32, i32) {
    %c0_i32 = arith.constant 0 : i32
    %c0_i32_0 = arith.constant 0 : i32
    %c0_i32_1 = arith.constant 0 : i32
    return %c0_i32, %c0_i32_0 : i32, i32
  }
  func.func @transform_8(%arg0: i32, %arg1: i32, %arg2: memref<5xi32, #tpu.memory_space<smem>>) -> (i32, i32) {
    %c0_i32 = arith.constant 0 : i32
    %c0_i32_0 = arith.constant 0 : i32
    %c0_i32_1 = arith.constant 0 : i32
    return %c0_i32, %c0_i32_0 : i32, i32
  }
  func.func @transform_9(%arg0: i32, %arg1: i32, %arg2: memref<5xi32, #tpu.memory_space<smem>>) -> (i32, i32) {
    %c0_i32 = arith.constant 0 : i32
    %c0_i32_0 = arith.constant 0 : i32
    %c0_i32_1 = arith.constant 0 : i32
    return %c0_i32, %c0_i32_0 : i32, i32
  }
  func.func @transform_10(%arg0: i32, %arg1: i32, %arg2: memref<5xi32, #tpu.memory_space<smem>>) -> (i32, i32) {
    %c0_i32 = arith.constant 0 : i32
    %c0_i32_0 = arith.constant 0 : i32
    %c0_i32_1 = arith.constant 0 : i32
    return %c0_i32, %c0_i32_0 : i32, i32
  }
  func.func @transform_11(%arg0: i32, %arg1: i32, %arg2: memref<5xi32, #tpu.memory_space<smem>>) -> (i32, i32) {
    %c0_i32 = arith.constant 0 : i32
    %c0_i32_0 = arith.constant 0 : i32
    %c0_i32_1 = arith.constant 0 : i32
    return %c0_i32, %c0_i32_0 : i32, i32
  }
  func.func @transform_12(%arg0: i32, %arg1: i32, %arg2: memref<5xi32, #tpu.memory_space<smem>>) -> (i32, i32) {
    %c0_i32 = arith.constant 0 : i32
    %c0_i32_0 = arith.constant 0 : i32
    %c0_i32_1 = arith.constant 0 : i32
    return %c0_i32, %c0_i32_0 : i32, i32
  }
  func.func @transform_13(%arg0: i32, %arg1: i32, %arg2: memref<5xi32, #tpu.memory_space<smem>>) -> (i32, i32) {
    %c0_i32 = arith.constant 0 : i32
    %c0_i32_0 = arith.constant 0 : i32
    return %c0_i32, %arg1 : i32, i32
  }
  func.func @transform_14(%arg0: i32, %arg1: i32, %arg2: memref<5xi32, #tpu.memory_space<smem>>) -> (i32, i32) {
    %c0_i32 = arith.constant 0 : i32
    %c0_i32_0 = arith.constant 0 : i32
    return %c0_i32, %arg1 : i32, i32
  }
  func.func @transform_15(%arg0: i32, %arg1: i32, %arg2: memref<5xi32, #tpu.memory_space<smem>>) -> (i32, i32) {
    %c0_i32 = arith.constant 0 : i32
    %c0_i32_0 = arith.constant 0 : i32
    return %c0_i32, %arg1 : i32, i32
  }
  func.func @transform_16(%arg0: i32, %arg1: i32, %arg2: memref<5xi32, #tpu.memory_space<smem>>) -> (i32, i32) {
    %c0_i32 = arith.constant 0 : i32
    %c0_i32_0 = arith.constant 0 : i32
    return %c0_i32, %arg1 : i32, i32
  }
  func.func @transform_17(%arg0: i32, %arg1: i32, %arg2: memref<5xi32, #tpu.memory_space<smem>>) -> (i32, i32, i32) {
    %c0_i32 = arith.constant 0 : i32
    %c0_i32_0 = arith.constant 0 : i32
    return %arg0, %c0_i32, %arg1 : i32, i32, i32
  }
}

module attributes {stable_mosaic.version = 11 : i64} {
  func.func @_encoder_gru_kernel(%arg0: i32, %arg1: memref<16x8x384xbf16, #tpu.memory_space<vmem>>, %arg2: memref<16x8x1xf32, #tpu.memory_space<vmem>>, %arg3: memref<128x384xbf16, #tpu.memory_space<vmem>>, %arg4: memref<1x384xf32, #tpu.memory_space<vmem>>, %arg5: memref<8x16x128xbf16, #tpu.memory_space<vmem>>, %arg6: memref<8x128xf32, #tpu.memory_space<vmem>>, %arg7: memref<8x16x128xf32, #tpu.memory_space<vmem>>) attributes {dimension_semantics = [#tpu.dimension_semantics<arbitrary>], iteration_bounds = array<i64: 1>, scalar_prefetch = 0 : i64, scratch_operands = 1 : i64, tpu.core_type = #tpu.core_type<tc>, window_params = [{transform_indices = @transform_0, window_bounds = array<i64: 16, 8, 384>}, {transform_indices = @transform_1, window_bounds = array<i64: 16, 8, 1>}, {pipeline_mode = #tpu.pipeline_mode<synchronous>, transform_indices = @transform_2, window_bounds = array<i64: 128, 384>}, {pipeline_mode = #tpu.pipeline_mode<synchronous>, transform_indices = @transform_3, window_bounds = array<i64: 1, 384>}, {transform_indices = @transform_4, window_bounds = array<i64: 8, 16, 128>}, {pipeline_mode = #tpu.pipeline_mode<synchronous>, transform_indices = @transform_5, window_bounds = array<i64: 8, 128>}]} {
    %c0_i32 = arith.constant 0 : i32
    %0 = arith.cmpi eq, %arg0, %c0_i32 : i32
    %1 = arith.extui %0 : i1 to i32
    %c0_i32_0 = arith.constant 0 : i32
    %2 = arith.cmpi ne, %1, %c0_i32_0 : i32
    scf.if %2 {
      %cst_282 = arith.constant 0.000000e+00 : f32
      %760 = vector.broadcast %cst_282 : f32 to vector<8x128xf32>
      %c0_283 = arith.constant 0 : index
      %c0_284 = arith.constant 0 : index
      %761 = vector.load %arg6[%c0_283, %c0_284] : memref<8x128xf32, #tpu.memory_space<vmem>>, vector<8x128xf32>
      tpu.vector_store %arg6[%c0_283, %c0_284], %760 {strides = array<i32>} : memref<8x128xf32, #tpu.memory_space<vmem>>, vector<8x128xf32>,
    } else {
    }
    %c0 = arith.constant 0 : index
    %c0_1 = arith.constant 0 : index
    %3 = vector.load %arg6[%c0, %c0_1] : memref<8x128xf32, #tpu.memory_space<vmem>>, vector<8x128xf32>
    %c0_2 = arith.constant 0 : index
    %c0_3 = arith.constant 0 : index
    %c0_4 = arith.constant 0 : index
    %4 = vector.load %arg1[%c0_2, %c0_3, %c0_4] : memref<16x8x384xbf16, #tpu.memory_space<vmem>>, vector<1x8x384xbf16>
    %5 = vector.shape_cast %4 : vector<1x8x384xbf16> to vector<8x384xbf16>
    %6 = arith.extf %5 : vector<8x384xbf16> to vector<8x384xf32>
    %c0_5 = arith.constant 0 : index
    %c0_6 = arith.constant 0 : index
    %c0_7 = arith.constant 0 : index
    %7 = vector.load %arg2[%c0_5, %c0_6, %c0_7] : memref<16x8x1xf32, #tpu.memory_space<vmem>>, vector<1x8x1xf32>
    %8 = vector.shape_cast %7 : vector<1x8x1xf32> to vector<8x1xf32>
    %9 = arith.truncf %3 : vector<8x128xf32> to vector<8x128xbf16>
    %c0_8 = arith.constant 0 : index
    %c0_9 = arith.constant 0 : index
    %10 = vector.load %arg3[%c0_8, %c0_9] : memref<128x384xbf16, #tpu.memory_space<vmem>>, vector<128x384xbf16>
    %cst = arith.constant dense<0.000000e+00> : vector<8x384xf32>
    %11 = tpu.matmul %9, %10, %cst {dimension_numbers = #tpu.dot_dimension_numbers<[1], [0], [0], [1], [0, 0, 1, 1], [], []>} : vector<8x128xbf16>, vector<128x384xbf16>, vector<8x384xf32> -> vector<8x384xf32>
    %c0_10 = arith.constant 0 : index
    %c0_11 = arith.constant 0 : index
    %12 = vector.load %arg4[%c0_10, %c0_11] : memref<1x384xf32, #tpu.memory_space<vmem>>, vector<1x384xf32>
    %13 = vector.broadcast %12 : vector<1x384xf32> to vector<8x384xf32>
    %14 = arith.addf %11, %13 : vector<8x384xf32>
    %15 = vector.extract_strided_slice %6 {offsets = [0, 0], sizes = [8, 128], strides = [1, 1]} : vector<8x384xf32> to vector<8x128xf32>
    %16 = vector.extract_strided_slice %14 {offsets = [0, 0], sizes = [8, 128], strides = [1, 1]} : vector<8x384xf32> to vector<8x128xf32>
    %17 = arith.addf %15, %16 : vector<8x128xf32>
    %18 = arith.negf %17 : vector<8x128xf32>
    %19 = math.exp %18 : vector<8x128xf32>
    %cst_12 = arith.constant 1.000000e+00 : f32
    %20 = vector.broadcast %cst_12 : f32 to vector<8x128xf32>
    %21 = arith.addf %20, %19 : vector<8x128xf32>
    %22 = arith.divf %20, %21 : vector<8x128xf32>
    %23 = vector.extract_strided_slice %6 {offsets = [0, 128], sizes = [8, 128], strides = [1, 1]} : vector<8x384xf32> to vector<8x128xf32>
    %24 = vector.extract_strided_slice %14 {offsets = [0, 128], sizes = [8, 128], strides = [1, 1]} : vector<8x384xf32> to vector<8x128xf32>
    %25 = arith.addf %23, %24 : vector<8x128xf32>
    %26 = arith.negf %25 : vector<8x128xf32>
    %27 = math.exp %26 : vector<8x128xf32>
    %cst_13 = arith.constant 1.000000e+00 : f32
    %28 = vector.broadcast %cst_13 : f32 to vector<8x128xf32>
    %29 = arith.addf %28, %27 : vector<8x128xf32>
    %30 = arith.divf %28, %29 : vector<8x128xf32>
    %31 = vector.extract_strided_slice %6 {offsets = [0, 256], sizes = [8, 128], strides = [1, 1]} : vector<8x384xf32> to vector<8x128xf32>
    %32 = vector.extract_strided_slice %14 {offsets = [0, 256], sizes = [8, 128], strides = [1, 1]} : vector<8x384xf32> to vector<8x128xf32>
    %33 = arith.mulf %22, %32 : vector<8x128xf32>
    %34 = arith.addf %31, %33 : vector<8x128xf32>
    %35 = math.tanh %34 : vector<8x128xf32>
    %cst_14 = arith.constant 1.000000e+00 : f32
    %36 = vector.broadcast %cst_14 : f32 to vector<8x128xf32>
    %37 = arith.subf %36, %30 : vector<8x128xf32>
    %38 = arith.mulf %37, %35 : vector<8x128xf32>
    %39 = arith.mulf %30, %3 : vector<8x128xf32>
    %40 = arith.addf %38, %39 : vector<8x128xf32>
    %41 = vector.broadcast %8 : vector<8x1xf32> to vector<8x128xf32>
    %42 = arith.mulf %41, %40 : vector<8x128xf32>
    %cst_15 = arith.constant 1.000000e+00 : f32
    %43 = vector.broadcast %cst_15 : f32 to vector<8x1xf32>
    %44 = arith.subf %43, %8 : vector<8x1xf32>
    %45 = vector.broadcast %44 : vector<8x1xf32> to vector<8x128xf32>
    %46 = arith.mulf %45, %3 : vector<8x128xf32>
    %47 = arith.addf %42, %46 : vector<8x128xf32>
    %c0_16 = arith.constant 0 : index
    %c0_17 = arith.constant 0 : index
    %c0_18 = arith.constant 0 : index
    %48 = vector.load %arg7[%c0_16, %c0_17, %c0_18] : memref<8x16x128xf32, #tpu.memory_space<vmem>>, vector<8x1x128xf32>
    %49 = vector.shape_cast %48 : vector<8x1x128xf32> to vector<8x128xf32>
    %50 = vector.shape_cast %47 : vector<8x128xf32> to vector<8x1x128xf32>
    tpu.vector_store %arg7[%c0_16, %c0_17, %c0_18], %50 {strides = array<i32>} : memref<8x16x128xf32, #tpu.memory_space<vmem>>, vector<8x1x128xf32>,
    %c1 = arith.constant 1 : index
    %c0_19 = arith.constant 0 : index
    %c0_20 = arith.constant 0 : index
    %51 = vector.load %arg1[%c1, %c0_19, %c0_20] : memref<16x8x384xbf16, #tpu.memory_space<vmem>>, vector<1x8x384xbf16>
    %52 = vector.shape_cast %51 : vector<1x8x384xbf16> to vector<8x384xbf16>
    %53 = arith.extf %52 : vector<8x384xbf16> to vector<8x384xf32>
    %c1_21 = arith.constant 1 : index
    %c0_22 = arith.constant 0 : index
    %c0_23 = arith.constant 0 : index
    %54 = vector.load %arg2[%c1_21, %c0_22, %c0_23] : memref<16x8x1xf32, #tpu.memory_space<vmem>>, vector<1x8x1xf32>
    %55 = vector.shape_cast %54 : vector<1x8x1xf32> to vector<8x1xf32>
    %56 = arith.truncf %47 : vector<8x128xf32> to vector<8x128xbf16>
    %c0_24 = arith.constant 0 : index
    %c0_25 = arith.constant 0 : index
    %57 = vector.load %arg3[%c0_24, %c0_25] : memref<128x384xbf16, #tpu.memory_space<vmem>>, vector<128x384xbf16>
    %cst_26 = arith.constant dense<0.000000e+00> : vector<8x384xf32>
    %58 = tpu.matmul %56, %57, %cst_26 {dimension_numbers = #tpu.dot_dimension_numbers<[1], [0], [0], [1], [0, 0, 1, 1], [], []>} : vector<8x128xbf16>, vector<128x384xbf16>, vector<8x384xf32> -> vector<8x384xf32>
    %c0_27 = arith.constant 0 : index
    %c0_28 = arith.constant 0 : index
    %59 = vector.load %arg4[%c0_27, %c0_28] : memref<1x384xf32, #tpu.memory_space<vmem>>, vector<1x384xf32>
    %60 = vector.broadcast %59 : vector<1x384xf32> to vector<8x384xf32>
    %61 = arith.addf %58, %60 : vector<8x384xf32>
    %62 = vector.extract_strided_slice %53 {offsets = [0, 0], sizes = [8, 128], strides = [1, 1]} : vector<8x384xf32> to vector<8x128xf32>
    %63 = vector.extract_strided_slice %61 {offsets = [0, 0], sizes = [8, 128], strides = [1, 1]} : vector<8x384xf32> to vector<8x128xf32>
    %64 = arith.addf %62, %63 : vector<8x128xf32>
    %65 = arith.negf %64 : vector<8x128xf32>
    %66 = math.exp %65 : vector<8x128xf32>
    %cst_29 = arith.constant 1.000000e+00 : f32
    %67 = vector.broadcast %cst_29 : f32 to vector<8x128xf32>
    %68 = arith.addf %67, %66 : vector<8x128xf32>
    %69 = arith.divf %67, %68 : vector<8x128xf32>
    %70 = vector.extract_strided_slice %53 {offsets = [0, 128], sizes = [8, 128], strides = [1, 1]} : vector<8x384xf32> to vector<8x128xf32>
    %71 = vector.extract_strided_slice %61 {offsets = [0, 128], sizes = [8, 128], strides = [1, 1]} : vector<8x384xf32> to vector<8x128xf32>
    %72 = arith.addf %70, %71 : vector<8x128xf32>
    %73 = arith.negf %72 : vector<8x128xf32>
    %74 = math.exp %73 : vector<8x128xf32>
    %cst_30 = arith.constant 1.000000e+00 : f32
    %75 = vector.broadcast %cst_30 : f32 to vector<8x128xf32>
    %76 = arith.addf %75, %74 : vector<8x128xf32>
    %77 = arith.divf %75, %76 : vector<8x128xf32>
    %78 = vector.extract_strided_slice %53 {offsets = [0, 256], sizes = [8, 128], strides = [1, 1]} : vector<8x384xf32> to vector<8x128xf32>
    %79 = vector.extract_strided_slice %61 {offsets = [0, 256], sizes = [8, 128], strides = [1, 1]} : vector<8x384xf32> to vector<8x128xf32>
    %80 = arith.mulf %69, %79 : vector<8x128xf32>
    %81 = arith.addf %78, %80 : vector<8x128xf32>
    %82 = math.tanh %81 : vector<8x128xf32>
    %cst_31 = arith.constant 1.000000e+00 : f32
    %83 = vector.broadcast %cst_31 : f32 to vector<8x128xf32>
    %84 = arith.subf %83, %77 : vector<8x128xf32>
    %85 = arith.mulf %84, %82 : vector<8x128xf32>
    %86 = arith.mulf %77, %47 : vector<8x128xf32>
    %87 = arith.addf %85, %86 : vector<8x128xf32>
    %88 = vector.broadcast %55 : vector<8x1xf32> to vector<8x128xf32>
    %89 = arith.mulf %88, %87 : vector<8x128xf32>
    %cst_32 = arith.constant 1.000000e+00 : f32
    %90 = vector.broadcast %cst_32 : f32 to vector<8x1xf32>
    %91 = arith.subf %90, %55 : vector<8x1xf32>
    %92 = vector.broadcast %91 : vector<8x1xf32> to vector<8x128xf32>
    %93 = arith.mulf %92, %47 : vector<8x128xf32>
    %94 = arith.addf %89, %93 : vector<8x128xf32>
    %c0_33 = arith.constant 0 : index
    %c1_34 = arith.constant 1 : index
    %c0_35 = arith.constant 0 : index
    %95 = vector.load %arg7[%c0_33, %c1_34, %c0_35] : memref<8x16x128xf32, #tpu.memory_space<vmem>>, vector<8x1x128xf32>
    %96 = vector.shape_cast %95 : vector<8x1x128xf32> to vector<8x128xf32>
    %97 = vector.shape_cast %94 : vector<8x128xf32> to vector<8x1x128xf32>
    tpu.vector_store %arg7[%c0_33, %c1_34, %c0_35], %97 {strides = array<i32>} : memref<8x16x128xf32, #tpu.memory_space<vmem>>, vector<8x1x128xf32>,
    %c2 = arith.constant 2 : index
    %c0_36 = arith.constant 0 : index
    %c0_37 = arith.constant 0 : index
    %98 = vector.load %arg1[%c2, %c0_36, %c0_37] : memref<16x8x384xbf16, #tpu.memory_space<vmem>>, vector<1x8x384xbf16>
    %99 = vector.shape_cast %98 : vector<1x8x384xbf16> to vector<8x384xbf16>
    %100 = arith.extf %99 : vector<8x384xbf16> to vector<8x384xf32>
    %c2_38 = arith.constant 2 : index
    %c0_39 = arith.constant 0 : index
    %c0_40 = arith.constant 0 : index
    %101 = vector.load %arg2[%c2_38, %c0_39, %c0_40] : memref<16x8x1xf32, #tpu.memory_space<vmem>>, vector<1x8x1xf32>
    %102 = vector.shape_cast %101 : vector<1x8x1xf32> to vector<8x1xf32>
    %103 = arith.truncf %94 : vector<8x128xf32> to vector<8x128xbf16>
    %c0_41 = arith.constant 0 : index
    %c0_42 = arith.constant 0 : index
    %104 = vector.load %arg3[%c0_41, %c0_42] : memref<128x384xbf16, #tpu.memory_space<vmem>>, vector<128x384xbf16>
    %cst_43 = arith.constant dense<0.000000e+00> : vector<8x384xf32>
    %105 = tpu.matmul %103, %104, %cst_43 {dimension_numbers = #tpu.dot_dimension_numbers<[1], [0], [0], [1], [0, 0, 1, 1], [], []>} : vector<8x128xbf16>, vector<128x384xbf16>, vector<8x384xf32> -> vector<8x384xf32>
    %c0_44 = arith.constant 0 : index
    %c0_45 = arith.constant 0 : index
    %106 = vector.load %arg4[%c0_44, %c0_45] : memref<1x384xf32, #tpu.memory_space<vmem>>, vector<1x384xf32>
    %107 = vector.broadcast %106 : vector<1x384xf32> to vector<8x384xf32>
    %108 = arith.addf %105, %107 : vector<8x384xf32>
    %109 = vector.extract_strided_slice %100 {offsets = [0, 0], sizes = [8, 128], strides = [1, 1]} : vector<8x384xf32> to vector<8x128xf32>
    %110 = vector.extract_strided_slice %108 {offsets = [0, 0], sizes = [8, 128], strides = [1, 1]} : vector<8x384xf32> to vector<8x128xf32>
    %111 = arith.addf %109, %110 : vector<8x128xf32>
    %112 = arith.negf %111 : vector<8x128xf32>
    %113 = math.exp %112 : vector<8x128xf32>
    %cst_46 = arith.constant 1.000000e+00 : f32
    %114 = vector.broadcast %cst_46 : f32 to vector<8x128xf32>
    %115 = arith.addf %114, %113 : vector<8x128xf32>
    %116 = arith.divf %114, %115 : vector<8x128xf32>
    %117 = vector.extract_strided_slice %100 {offsets = [0, 128], sizes = [8, 128], strides = [1, 1]} : vector<8x384xf32> to vector<8x128xf32>
    %118 = vector.extract_strided_slice %108 {offsets = [0, 128], sizes = [8, 128], strides = [1, 1]} : vector<8x384xf32> to vector<8x128xf32>
    %119 = arith.addf %117, %118 : vector<8x128xf32>
    %120 = arith.negf %119 : vector<8x128xf32>
    %121 = math.exp %120 : vector<8x128xf32>
    %cst_47 = arith.constant 1.000000e+00 : f32
    %122 = vector.broadcast %cst_47 : f32 to vector<8x128xf32>
    %123 = arith.addf %122, %121 : vector<8x128xf32>
    %124 = arith.divf %122, %123 : vector<8x128xf32>
    %125 = vector.extract_strided_slice %100 {offsets = [0, 256], sizes = [8, 128], strides = [1, 1]} : vector<8x384xf32> to vector<8x128xf32>
    %126 = vector.extract_strided_slice %108 {offsets = [0, 256], sizes = [8, 128], strides = [1, 1]} : vector<8x384xf32> to vector<8x128xf32>
    %127 = arith.mulf %116, %126 : vector<8x128xf32>
    %128 = arith.addf %125, %127 : vector<8x128xf32>
    %129 = math.tanh %128 : vector<8x128xf32>
    %cst_48 = arith.constant 1.000000e+00 : f32
    %130 = vector.broadcast %cst_48 : f32 to vector<8x128xf32>
    %131 = arith.subf %130, %124 : vector<8x128xf32>
    %132 = arith.mulf %131, %129 : vector<8x128xf32>
    %133 = arith.mulf %124, %94 : vector<8x128xf32>
    %134 = arith.addf %132, %133 : vector<8x128xf32>
    %135 = vector.broadcast %102 : vector<8x1xf32> to vector<8x128xf32>
    %136 = arith.mulf %135, %134 : vector<8x128xf32>
    %cst_49 = arith.constant 1.000000e+00 : f32
    %137 = vector.broadcast %cst_49 : f32 to vector<8x1xf32>
    %138 = arith.subf %137, %102 : vector<8x1xf32>
    %139 = vector.broadcast %138 : vector<8x1xf32> to vector<8x128xf32>
    %140 = arith.mulf %139, %94 : vector<8x128xf32>
    %141 = arith.addf %136, %140 : vector<8x128xf32>
    %c0_50 = arith.constant 0 : index
    %c2_51 = arith.constant 2 : index
    %c0_52 = arith.constant 0 : index
    %142 = vector.load %arg7[%c0_50, %c2_51, %c0_52] : memref<8x16x128xf32, #tpu.memory_space<vmem>>, vector<8x1x128xf32>
    %143 = vector.shape_cast %142 : vector<8x1x128xf32> to vector<8x128xf32>
    %144 = vector.shape_cast %141 : vector<8x128xf32> to vector<8x1x128xf32>
    tpu.vector_store %arg7[%c0_50, %c2_51, %c0_52], %144 {strides = array<i32>} : memref<8x16x128xf32, #tpu.memory_space<vmem>>, vector<8x1x128xf32>,
    %c3 = arith.constant 3 : index
    %c0_53 = arith.constant 0 : index
    %c0_54 = arith.constant 0 : index
    %145 = vector.load %arg1[%c3, %c0_53, %c0_54] : memref<16x8x384xbf16, #tpu.memory_space<vmem>>, vector<1x8x384xbf16>
    %146 = vector.shape_cast %145 : vector<1x8x384xbf16> to vector<8x384xbf16>
    %147 = arith.extf %146 : vector<8x384xbf16> to vector<8x384xf32>
    %c3_55 = arith.constant 3 : index
    %c0_56 = arith.constant 0 : index
    %c0_57 = arith.constant 0 : index
    %148 = vector.load %arg2[%c3_55, %c0_56, %c0_57] : memref<16x8x1xf32, #tpu.memory_space<vmem>>, vector<1x8x1xf32>
    %149 = vector.shape_cast %148 : vector<1x8x1xf32> to vector<8x1xf32>
    %150 = arith.truncf %141 : vector<8x128xf32> to vector<8x128xbf16>
    %c0_58 = arith.constant 0 : index
    %c0_59 = arith.constant 0 : index
    %151 = vector.load %arg3[%c0_58, %c0_59] : memref<128x384xbf16, #tpu.memory_space<vmem>>, vector<128x384xbf16>
    %cst_60 = arith.constant dense<0.000000e+00> : vector<8x384xf32>
    %152 = tpu.matmul %150, %151, %cst_60 {dimension_numbers = #tpu.dot_dimension_numbers<[1], [0], [0], [1], [0, 0, 1, 1], [], []>} : vector<8x128xbf16>, vector<128x384xbf16>, vector<8x384xf32> -> vector<8x384xf32>
    %c0_61 = arith.constant 0 : index
    %c0_62 = arith.constant 0 : index
    %153 = vector.load %arg4[%c0_61, %c0_62] : memref<1x384xf32, #tpu.memory_space<vmem>>, vector<1x384xf32>
    %154 = vector.broadcast %153 : vector<1x384xf32> to vector<8x384xf32>
    %155 = arith.addf %152, %154 : vector<8x384xf32>
    %156 = vector.extract_strided_slice %147 {offsets = [0, 0], sizes = [8, 128], strides = [1, 1]} : vector<8x384xf32> to vector<8x128xf32>
    %157 = vector.extract_strided_slice %155 {offsets = [0, 0], sizes = [8, 128], strides = [1, 1]} : vector<8x384xf32> to vector<8x128xf32>
    %158 = arith.addf %156, %157 : vector<8x128xf32>
    %159 = arith.negf %158 : vector<8x128xf32>
    %160 = math.exp %159 : vector<8x128xf32>
    %cst_63 = arith.constant 1.000000e+00 : f32
    %161 = vector.broadcast %cst_63 : f32 to vector<8x128xf32>
    %162 = arith.addf %161, %160 : vector<8x128xf32>
    %163 = arith.divf %161, %162 : vector<8x128xf32>
    %164 = vector.extract_strided_slice %147 {offsets = [0, 128], sizes = [8, 128], strides = [1, 1]} : vector<8x384xf32> to vector<8x128xf32>
    %165 = vector.extract_strided_slice %155 {offsets = [0, 128], sizes = [8, 128], strides = [1, 1]} : vector<8x384xf32> to vector<8x128xf32>
    %166 = arith.addf %164, %165 : vector<8x128xf32>
    %167 = arith.negf %166 : vector<8x128xf32>
    %168 = math.exp %167 : vector<8x128xf32>
    %cst_64 = arith.constant 1.000000e+00 : f32
    %169 = vector.broadcast %cst_64 : f32 to vector<8x128xf32>
    %170 = arith.addf %169, %168 : vector<8x128xf32>
    %171 = arith.divf %169, %170 : vector<8x128xf32>
    %172 = vector.extract_strided_slice %147 {offsets = [0, 256], sizes = [8, 128], strides = [1, 1]} : vector<8x384xf32> to vector<8x128xf32>
    %173 = vector.extract_strided_slice %155 {offsets = [0, 256], sizes = [8, 128], strides = [1, 1]} : vector<8x384xf32> to vector<8x128xf32>
    %174 = arith.mulf %163, %173 : vector<8x128xf32>
    %175 = arith.addf %172, %174 : vector<8x128xf32>
    %176 = math.tanh %175 : vector<8x128xf32>
    %cst_65 = arith.constant 1.000000e+00 : f32
    %177 = vector.broadcast %cst_65 : f32 to vector<8x128xf32>
    %178 = arith.subf %177, %171 : vector<8x128xf32>
    %179 = arith.mulf %178, %176 : vector<8x128xf32>
    %180 = arith.mulf %171, %141 : vector<8x128xf32>
    %181 = arith.addf %179, %180 : vector<8x128xf32>
    %182 = vector.broadcast %149 : vector<8x1xf32> to vector<8x128xf32>
    %183 = arith.mulf %182, %181 : vector<8x128xf32>
    %cst_66 = arith.constant 1.000000e+00 : f32
    %184 = vector.broadcast %cst_66 : f32 to vector<8x1xf32>
    %185 = arith.subf %184, %149 : vector<8x1xf32>
    %186 = vector.broadcast %185 : vector<8x1xf32> to vector<8x128xf32>
    %187 = arith.mulf %186, %141 : vector<8x128xf32>
    %188 = arith.addf %183, %187 : vector<8x128xf32>
    %c0_67 = arith.constant 0 : index
    %c3_68 = arith.constant 3 : index
    %c0_69 = arith.constant 0 : index
    %189 = vector.load %arg7[%c0_67, %c3_68, %c0_69] : memref<8x16x128xf32, #tpu.memory_space<vmem>>, vector<8x1x128xf32>
    %190 = vector.shape_cast %189 : vector<8x1x128xf32> to vector<8x128xf32>
    %191 = vector.shape_cast %188 : vector<8x128xf32> to vector<8x1x128xf32>
    tpu.vector_store %arg7[%c0_67, %c3_68, %c0_69], %191 {strides = array<i32>} : memref<8x16x128xf32, #tpu.memory_space<vmem>>, vector<8x1x128xf32>,
    %c4 = arith.constant 4 : index
    %c0_70 = arith.constant 0 : index
    %c0_71 = arith.constant 0 : index
    %192 = vector.load %arg1[%c4, %c0_70, %c0_71] : memref<16x8x384xbf16, #tpu.memory_space<vmem>>, vector<1x8x384xbf16>
    %193 = vector.shape_cast %192 : vector<1x8x384xbf16> to vector<8x384xbf16>
    %194 = arith.extf %193 : vector<8x384xbf16> to vector<8x384xf32>
    %c4_72 = arith.constant 4 : index
    %c0_73 = arith.constant 0 : index
    %c0_74 = arith.constant 0 : index
    %195 = vector.load %arg2[%c4_72, %c0_73, %c0_74] : memref<16x8x1xf32, #tpu.memory_space<vmem>>, vector<1x8x1xf32>
    %196 = vector.shape_cast %195 : vector<1x8x1xf32> to vector<8x1xf32>
    %197 = arith.truncf %188 : vector<8x128xf32> to vector<8x128xbf16>
    %c0_75 = arith.constant 0 : index
    %c0_76 = arith.constant 0 : index
    %198 = vector.load %arg3[%c0_75, %c0_76] : memref<128x384xbf16, #tpu.memory_space<vmem>>, vector<128x384xbf16>
    %cst_77 = arith.constant dense<0.000000e+00> : vector<8x384xf32>
    %199 = tpu.matmul %197, %198, %cst_77 {dimension_numbers = #tpu.dot_dimension_numbers<[1], [0], [0], [1], [0, 0, 1, 1], [], []>} : vector<8x128xbf16>, vector<128x384xbf16>, vector<8x384xf32> -> vector<8x384xf32>
    %c0_78 = arith.constant 0 : index
    %c0_79 = arith.constant 0 : index
    %200 = vector.load %arg4[%c0_78, %c0_79] : memref<1x384xf32, #tpu.memory_space<vmem>>, vector<1x384xf32>
    %201 = vector.broadcast %200 : vector<1x384xf32> to vector<8x384xf32>
    %202 = arith.addf %199, %201 : vector<8x384xf32>
    %203 = vector.extract_strided_slice %194 {offsets = [0, 0], sizes = [8, 128], strides = [1, 1]} : vector<8x384xf32> to vector<8x128xf32>
    %204 = vector.extract_strided_slice %202 {offsets = [0, 0], sizes = [8, 128], strides = [1, 1]} : vector<8x384xf32> to vector<8x128xf32>
    %205 = arith.addf %203, %204 : vector<8x128xf32>
    %206 = arith.negf %205 : vector<8x128xf32>
    %207 = math.exp %206 : vector<8x128xf32>
    %cst_80 = arith.constant 1.000000e+00 : f32
    %208 = vector.broadcast %cst_80 : f32 to vector<8x128xf32>
    %209 = arith.addf %208, %207 : vector<8x128xf32>
    %210 = arith.divf %208, %209 : vector<8x128xf32>
    %211 = vector.extract_strided_slice %194 {offsets = [0, 128], sizes = [8, 128], strides = [1, 1]} : vector<8x384xf32> to vector<8x128xf32>
    %212 = vector.extract_strided_slice %202 {offsets = [0, 128], sizes = [8, 128], strides = [1, 1]} : vector<8x384xf32> to vector<8x128xf32>
    %213 = arith.addf %211, %212 : vector<8x128xf32>
    %214 = arith.negf %213 : vector<8x128xf32>
    %215 = math.exp %214 : vector<8x128xf32>
    %cst_81 = arith.constant 1.000000e+00 : f32
    %216 = vector.broadcast %cst_81 : f32 to vector<8x128xf32>
    %217 = arith.addf %216, %215 : vector<8x128xf32>
    %218 = arith.divf %216, %217 : vector<8x128xf32>
    %219 = vector.extract_strided_slice %194 {offsets = [0, 256], sizes = [8, 128], strides = [1, 1]} : vector<8x384xf32> to vector<8x128xf32>
    %220 = vector.extract_strided_slice %202 {offsets = [0, 256], sizes = [8, 128], strides = [1, 1]} : vector<8x384xf32> to vector<8x128xf32>
    %221 = arith.mulf %210, %220 : vector<8x128xf32>
    %222 = arith.addf %219, %221 : vector<8x128xf32>
    %223 = math.tanh %222 : vector<8x128xf32>
    %cst_82 = arith.constant 1.000000e+00 : f32
    %224 = vector.broadcast %cst_82 : f32 to vector<8x128xf32>
    %225 = arith.subf %224, %218 : vector<8x128xf32>
    %226 = arith.mulf %225, %223 : vector<8x128xf32>
    %227 = arith.mulf %218, %188 : vector<8x128xf32>
    %228 = arith.addf %226, %227 : vector<8x128xf32>
    %229 = vector.broadcast %196 : vector<8x1xf32> to vector<8x128xf32>
    %230 = arith.mulf %229, %228 : vector<8x128xf32>
    %cst_83 = arith.constant 1.000000e+00 : f32
    %231 = vector.broadcast %cst_83 : f32 to vector<8x1xf32>
    %232 = arith.subf %231, %196 : vector<8x1xf32>
    %233 = vector.broadcast %232 : vector<8x1xf32> to vector<8x128xf32>
    %234 = arith.mulf %233, %188 : vector<8x128xf32>
    %235 = arith.addf %230, %234 : vector<8x128xf32>
    %c0_84 = arith.constant 0 : index
    %c4_85 = arith.constant 4 : index
    %c0_86 = arith.constant 0 : index
    %236 = vector.load %arg7[%c0_84, %c4_85, %c0_86] : memref<8x16x128xf32, #tpu.memory_space<vmem>>, vector<8x1x128xf32>
    %237 = vector.shape_cast %236 : vector<8x1x128xf32> to vector<8x128xf32>
    %238 = vector.shape_cast %235 : vector<8x128xf32> to vector<8x1x128xf32>
    tpu.vector_store %arg7[%c0_84, %c4_85, %c0_86], %238 {strides = array<i32>} : memref<8x16x128xf32, #tpu.memory_space<vmem>>, vector<8x1x128xf32>,
    %c5 = arith.constant 5 : index
    %c0_87 = arith.constant 0 : index
    %c0_88 = arith.constant 0 : index
    %239 = vector.load %arg1[%c5, %c0_87, %c0_88] : memref<16x8x384xbf16, #tpu.memory_space<vmem>>, vector<1x8x384xbf16>
    %240 = vector.shape_cast %239 : vector<1x8x384xbf16> to vector<8x384xbf16>
    %241 = arith.extf %240 : vector<8x384xbf16> to vector<8x384xf32>
    %c5_89 = arith.constant 5 : index
    %c0_90 = arith.constant 0 : index
    %c0_91 = arith.constant 0 : index
    %242 = vector.load %arg2[%c5_89, %c0_90, %c0_91] : memref<16x8x1xf32, #tpu.memory_space<vmem>>, vector<1x8x1xf32>
    %243 = vector.shape_cast %242 : vector<1x8x1xf32> to vector<8x1xf32>
    %244 = arith.truncf %235 : vector<8x128xf32> to vector<8x128xbf16>
    %c0_92 = arith.constant 0 : index
    %c0_93 = arith.constant 0 : index
    %245 = vector.load %arg3[%c0_92, %c0_93] : memref<128x384xbf16, #tpu.memory_space<vmem>>, vector<128x384xbf16>
    %cst_94 = arith.constant dense<0.000000e+00> : vector<8x384xf32>
    %246 = tpu.matmul %244, %245, %cst_94 {dimension_numbers = #tpu.dot_dimension_numbers<[1], [0], [0], [1], [0, 0, 1, 1], [], []>} : vector<8x128xbf16>, vector<128x384xbf16>, vector<8x384xf32> -> vector<8x384xf32>
    %c0_95 = arith.constant 0 : index
    %c0_96 = arith.constant 0 : index
    %247 = vector.load %arg4[%c0_95, %c0_96] : memref<1x384xf32, #tpu.memory_space<vmem>>, vector<1x384xf32>
    %248 = vector.broadcast %247 : vector<1x384xf32> to vector<8x384xf32>
    %249 = arith.addf %246, %248 : vector<8x384xf32>
    %250 = vector.extract_strided_slice %241 {offsets = [0, 0], sizes = [8, 128], strides = [1, 1]} : vector<8x384xf32> to vector<8x128xf32>
    %251 = vector.extract_strided_slice %249 {offsets = [0, 0], sizes = [8, 128], strides = [1, 1]} : vector<8x384xf32> to vector<8x128xf32>
    %252 = arith.addf %250, %251 : vector<8x128xf32>
    %253 = arith.negf %252 : vector<8x128xf32>
    %254 = math.exp %253 : vector<8x128xf32>
    %cst_97 = arith.constant 1.000000e+00 : f32
    %255 = vector.broadcast %cst_97 : f32 to vector<8x128xf32>
    %256 = arith.addf %255, %254 : vector<8x128xf32>
    %257 = arith.divf %255, %256 : vector<8x128xf32>
    %258 = vector.extract_strided_slice %241 {offsets = [0, 128], sizes = [8, 128], strides = [1, 1]} : vector<8x384xf32> to vector<8x128xf32>
    %259 = vector.extract_strided_slice %249 {offsets = [0, 128], sizes = [8, 128], strides = [1, 1]} : vector<8x384xf32> to vector<8x128xf32>
    %260 = arith.addf %258, %259 : vector<8x128xf32>
    %261 = arith.negf %260 : vector<8x128xf32>
    %262 = math.exp %261 : vector<8x128xf32>
    %cst_98 = arith.constant 1.000000e+00 : f32
    %263 = vector.broadcast %cst_98 : f32 to vector<8x128xf32>
    %264 = arith.addf %263, %262 : vector<8x128xf32>
    %265 = arith.divf %263, %264 : vector<8x128xf32>
    %266 = vector.extract_strided_slice %241 {offsets = [0, 256], sizes = [8, 128], strides = [1, 1]} : vector<8x384xf32> to vector<8x128xf32>
    %267 = vector.extract_strided_slice %249 {offsets = [0, 256], sizes = [8, 128], strides = [1, 1]} : vector<8x384xf32> to vector<8x128xf32>
    %268 = arith.mulf %257, %267 : vector<8x128xf32>
    %269 = arith.addf %266, %268 : vector<8x128xf32>
    %270 = math.tanh %269 : vector<8x128xf32>
    %cst_99 = arith.constant 1.000000e+00 : f32
    %271 = vector.broadcast %cst_99 : f32 to vector<8x128xf32>
    %272 = arith.subf %271, %265 : vector<8x128xf32>
    %273 = arith.mulf %272, %270 : vector<8x128xf32>
    %274 = arith.mulf %265, %235 : vector<8x128xf32>
    %275 = arith.addf %273, %274 : vector<8x128xf32>
    %276 = vector.broadcast %243 : vector<8x1xf32> to vector<8x128xf32>
    %277 = arith.mulf %276, %275 : vector<8x128xf32>
    %cst_100 = arith.constant 1.000000e+00 : f32
    %278 = vector.broadcast %cst_100 : f32 to vector<8x1xf32>
    %279 = arith.subf %278, %243 : vector<8x1xf32>
    %280 = vector.broadcast %279 : vector<8x1xf32> to vector<8x128xf32>
    %281 = arith.mulf %280, %235 : vector<8x128xf32>
    %282 = arith.addf %277, %281 : vector<8x128xf32>
    %c0_101 = arith.constant 0 : index
    %c5_102 = arith.constant 5 : index
    %c0_103 = arith.constant 0 : index
    %283 = vector.load %arg7[%c0_101, %c5_102, %c0_103] : memref<8x16x128xf32, #tpu.memory_space<vmem>>, vector<8x1x128xf32>
    %284 = vector.shape_cast %283 : vector<8x1x128xf32> to vector<8x128xf32>
    %285 = vector.shape_cast %282 : vector<8x128xf32> to vector<8x1x128xf32>
    tpu.vector_store %arg7[%c0_101, %c5_102, %c0_103], %285 {strides = array<i32>} : memref<8x16x128xf32, #tpu.memory_space<vmem>>, vector<8x1x128xf32>,
    %c6 = arith.constant 6 : index
    %c0_104 = arith.constant 0 : index
    %c0_105 = arith.constant 0 : index
    %286 = vector.load %arg1[%c6, %c0_104, %c0_105] : memref<16x8x384xbf16, #tpu.memory_space<vmem>>, vector<1x8x384xbf16>
    %287 = vector.shape_cast %286 : vector<1x8x384xbf16> to vector<8x384xbf16>
    %288 = arith.extf %287 : vector<8x384xbf16> to vector<8x384xf32>
    %c6_106 = arith.constant 6 : index
    %c0_107 = arith.constant 0 : index
    %c0_108 = arith.constant 0 : index
    %289 = vector.load %arg2[%c6_106, %c0_107, %c0_108] : memref<16x8x1xf32, #tpu.memory_space<vmem>>, vector<1x8x1xf32>
    %290 = vector.shape_cast %289 : vector<1x8x1xf32> to vector<8x1xf32>
    %291 = arith.truncf %282 : vector<8x128xf32> to vector<8x128xbf16>
    %c0_109 = arith.constant 0 : index
    %c0_110 = arith.constant 0 : index
    %292 = vector.load %arg3[%c0_109, %c0_110] : memref<128x384xbf16, #tpu.memory_space<vmem>>, vector<128x384xbf16>
    %cst_111 = arith.constant dense<0.000000e+00> : vector<8x384xf32>
    %293 = tpu.matmul %291, %292, %cst_111 {dimension_numbers = #tpu.dot_dimension_numbers<[1], [0], [0], [1], [0, 0, 1, 1], [], []>} : vector<8x128xbf16>, vector<128x384xbf16>, vector<8x384xf32> -> vector<8x384xf32>
    %c0_112 = arith.constant 0 : index
    %c0_113 = arith.constant 0 : index
    %294 = vector.load %arg4[%c0_112, %c0_113] : memref<1x384xf32, #tpu.memory_space<vmem>>, vector<1x384xf32>
    %295 = vector.broadcast %294 : vector<1x384xf32> to vector<8x384xf32>
    %296 = arith.addf %293, %295 : vector<8x384xf32>
    %297 = vector.extract_strided_slice %288 {offsets = [0, 0], sizes = [8, 128], strides = [1, 1]} : vector<8x384xf32> to vector<8x128xf32>
    %298 = vector.extract_strided_slice %296 {offsets = [0, 0], sizes = [8, 128], strides = [1, 1]} : vector<8x384xf32> to vector<8x128xf32>
    %299 = arith.addf %297, %298 : vector<8x128xf32>
    %300 = arith.negf %299 : vector<8x128xf32>
    %301 = math.exp %300 : vector<8x128xf32>
    %cst_114 = arith.constant 1.000000e+00 : f32
    %302 = vector.broadcast %cst_114 : f32 to vector<8x128xf32>
    %303 = arith.addf %302, %301 : vector<8x128xf32>
    %304 = arith.divf %302, %303 : vector<8x128xf32>
    %305 = vector.extract_strided_slice %288 {offsets = [0, 128], sizes = [8, 128], strides = [1, 1]} : vector<8x384xf32> to vector<8x128xf32>
    %306 = vector.extract_strided_slice %296 {offsets = [0, 128], sizes = [8, 128], strides = [1, 1]} : vector<8x384xf32> to vector<8x128xf32>
    %307 = arith.addf %305, %306 : vector<8x128xf32>
    %308 = arith.negf %307 : vector<8x128xf32>
    %309 = math.exp %308 : vector<8x128xf32>
    %cst_115 = arith.constant 1.000000e+00 : f32
    %310 = vector.broadcast %cst_115 : f32 to vector<8x128xf32>
    %311 = arith.addf %310, %309 : vector<8x128xf32>
    %312 = arith.divf %310, %311 : vector<8x128xf32>
    %313 = vector.extract_strided_slice %288 {offsets = [0, 256], sizes = [8, 128], strides = [1, 1]} : vector<8x384xf32> to vector<8x128xf32>
    %314 = vector.extract_strided_slice %296 {offsets = [0, 256], sizes = [8, 128], strides = [1, 1]} : vector<8x384xf32> to vector<8x128xf32>
    %315 = arith.mulf %304, %314 : vector<8x128xf32>
    %316 = arith.addf %313, %315 : vector<8x128xf32>
    %317 = math.tanh %316 : vector<8x128xf32>
    %cst_116 = arith.constant 1.000000e+00 : f32
    %318 = vector.broadcast %cst_116 : f32 to vector<8x128xf32>
    %319 = arith.subf %318, %312 : vector<8x128xf32>
    %320 = arith.mulf %319, %317 : vector<8x128xf32>
    %321 = arith.mulf %312, %282 : vector<8x128xf32>
    %322 = arith.addf %320, %321 : vector<8x128xf32>
    %323 = vector.broadcast %290 : vector<8x1xf32> to vector<8x128xf32>
    %324 = arith.mulf %323, %322 : vector<8x128xf32>
    %cst_117 = arith.constant 1.000000e+00 : f32
    %325 = vector.broadcast %cst_117 : f32 to vector<8x1xf32>
    %326 = arith.subf %325, %290 : vector<8x1xf32>
    %327 = vector.broadcast %326 : vector<8x1xf32> to vector<8x128xf32>
    %328 = arith.mulf %327, %282 : vector<8x128xf32>
    %329 = arith.addf %324, %328 : vector<8x128xf32>
    %c0_118 = arith.constant 0 : index
    %c6_119 = arith.constant 6 : index
    %c0_120 = arith.constant 0 : index
    %330 = vector.load %arg7[%c0_118, %c6_119, %c0_120] : memref<8x16x128xf32, #tpu.memory_space<vmem>>, vector<8x1x128xf32>
    %331 = vector.shape_cast %330 : vector<8x1x128xf32> to vector<8x128xf32>
    %332 = vector.shape_cast %329 : vector<8x128xf32> to vector<8x1x128xf32>
    tpu.vector_store %arg7[%c0_118, %c6_119, %c0_120], %332 {strides = array<i32>} : memref<8x16x128xf32, #tpu.memory_space<vmem>>, vector<8x1x128xf32>,
    %c7 = arith.constant 7 : index
    %c0_121 = arith.constant 0 : index
    %c0_122 = arith.constant 0 : index
    %333 = vector.load %arg1[%c7, %c0_121, %c0_122] : memref<16x8x384xbf16, #tpu.memory_space<vmem>>, vector<1x8x384xbf16>
    %334 = vector.shape_cast %333 : vector<1x8x384xbf16> to vector<8x384xbf16>
    %335 = arith.extf %334 : vector<8x384xbf16> to vector<8x384xf32>
    %c7_123 = arith.constant 7 : index
    %c0_124 = arith.constant 0 : index
    %c0_125 = arith.constant 0 : index
    %336 = vector.load %arg2[%c7_123, %c0_124, %c0_125] : memref<16x8x1xf32, #tpu.memory_space<vmem>>, vector<1x8x1xf32>
    %337 = vector.shape_cast %336 : vector<1x8x1xf32> to vector<8x1xf32>
    %338 = arith.truncf %329 : vector<8x128xf32> to vector<8x128xbf16>
    %c0_126 = arith.constant 0 : index
    %c0_127 = arith.constant 0 : index
    %339 = vector.load %arg3[%c0_126, %c0_127] : memref<128x384xbf16, #tpu.memory_space<vmem>>, vector<128x384xbf16>
    %cst_128 = arith.constant dense<0.000000e+00> : vector<8x384xf32>
    %340 = tpu.matmul %338, %339, %cst_128 {dimension_numbers = #tpu.dot_dimension_numbers<[1], [0], [0], [1], [0, 0, 1, 1], [], []>} : vector<8x128xbf16>, vector<128x384xbf16>, vector<8x384xf32> -> vector<8x384xf32>
    %c0_129 = arith.constant 0 : index
    %c0_130 = arith.constant 0 : index
    %341 = vector.load %arg4[%c0_129, %c0_130] : memref<1x384xf32, #tpu.memory_space<vmem>>, vector<1x384xf32>
    %342 = vector.broadcast %341 : vector<1x384xf32> to vector<8x384xf32>
    %343 = arith.addf %340, %342 : vector<8x384xf32>
    %344 = vector.extract_strided_slice %335 {offsets = [0, 0], sizes = [8, 128], strides = [1, 1]} : vector<8x384xf32> to vector<8x128xf32>
    %345 = vector.extract_strided_slice %343 {offsets = [0, 0], sizes = [8, 128], strides = [1, 1]} : vector<8x384xf32> to vector<8x128xf32>
    %346 = arith.addf %344, %345 : vector<8x128xf32>
    %347 = arith.negf %346 : vector<8x128xf32>
    %348 = math.exp %347 : vector<8x128xf32>
    %cst_131 = arith.constant 1.000000e+00 : f32
    %349 = vector.broadcast %cst_131 : f32 to vector<8x128xf32>
    %350 = arith.addf %349, %348 : vector<8x128xf32>
    %351 = arith.divf %349, %350 : vector<8x128xf32>
    %352 = vector.extract_strided_slice %335 {offsets = [0, 128], sizes = [8, 128], strides = [1, 1]} : vector<8x384xf32> to vector<8x128xf32>
    %353 = vector.extract_strided_slice %343 {offsets = [0, 128], sizes = [8, 128], strides = [1, 1]} : vector<8x384xf32> to vector<8x128xf32>
    %354 = arith.addf %352, %353 : vector<8x128xf32>
    %355 = arith.negf %354 : vector<8x128xf32>
    %356 = math.exp %355 : vector<8x128xf32>
    %cst_132 = arith.constant 1.000000e+00 : f32
    %357 = vector.broadcast %cst_132 : f32 to vector<8x128xf32>
    %358 = arith.addf %357, %356 : vector<8x128xf32>
    %359 = arith.divf %357, %358 : vector<8x128xf32>
    %360 = vector.extract_strided_slice %335 {offsets = [0, 256], sizes = [8, 128], strides = [1, 1]} : vector<8x384xf32> to vector<8x128xf32>
    %361 = vector.extract_strided_slice %343 {offsets = [0, 256], sizes = [8, 128], strides = [1, 1]} : vector<8x384xf32> to vector<8x128xf32>
    %362 = arith.mulf %351, %361 : vector<8x128xf32>
    %363 = arith.addf %360, %362 : vector<8x128xf32>
    %364 = math.tanh %363 : vector<8x128xf32>
    %cst_133 = arith.constant 1.000000e+00 : f32
    %365 = vector.broadcast %cst_133 : f32 to vector<8x128xf32>
    %366 = arith.subf %365, %359 : vector<8x128xf32>
    %367 = arith.mulf %366, %364 : vector<8x128xf32>
    %368 = arith.mulf %359, %329 : vector<8x128xf32>
    %369 = arith.addf %367, %368 : vector<8x128xf32>
    %370 = vector.broadcast %337 : vector<8x1xf32> to vector<8x128xf32>
    %371 = arith.mulf %370, %369 : vector<8x128xf32>
    %cst_134 = arith.constant 1.000000e+00 : f32
    %372 = vector.broadcast %cst_134 : f32 to vector<8x1xf32>
    %373 = arith.subf %372, %337 : vector<8x1xf32>
    %374 = vector.broadcast %373 : vector<8x1xf32> to vector<8x128xf32>
    %375 = arith.mulf %374, %329 : vector<8x128xf32>
    %376 = arith.addf %371, %375 : vector<8x128xf32>
    %c0_135 = arith.constant 0 : index
    %c7_136 = arith.constant 7 : index
    %c0_137 = arith.constant 0 : index
    %377 = vector.load %arg7[%c0_135, %c7_136, %c0_137] : memref<8x16x128xf32, #tpu.memory_space<vmem>>, vector<8x1x128xf32>
    %378 = vector.shape_cast %377 : vector<8x1x128xf32> to vector<8x128xf32>
    %379 = vector.shape_cast %376 : vector<8x128xf32> to vector<8x1x128xf32>
    tpu.vector_store %arg7[%c0_135, %c7_136, %c0_137], %379 {strides = array<i32>} : memref<8x16x128xf32, #tpu.memory_space<vmem>>, vector<8x1x128xf32>,
    %c8 = arith.constant 8 : index
    %c0_138 = arith.constant 0 : index
    %c0_139 = arith.constant 0 : index
    %380 = vector.load %arg1[%c8, %c0_138, %c0_139] : memref<16x8x384xbf16, #tpu.memory_space<vmem>>, vector<1x8x384xbf16>
    %381 = vector.shape_cast %380 : vector<1x8x384xbf16> to vector<8x384xbf16>
    %382 = arith.extf %381 : vector<8x384xbf16> to vector<8x384xf32>
    %c8_140 = arith.constant 8 : index
    %c0_141 = arith.constant 0 : index
    %c0_142 = arith.constant 0 : index
    %383 = vector.load %arg2[%c8_140, %c0_141, %c0_142] : memref<16x8x1xf32, #tpu.memory_space<vmem>>, vector<1x8x1xf32>
    %384 = vector.shape_cast %383 : vector<1x8x1xf32> to vector<8x1xf32>
    %385 = arith.truncf %376 : vector<8x128xf32> to vector<8x128xbf16>
    %c0_143 = arith.constant 0 : index
    %c0_144 = arith.constant 0 : index
    %386 = vector.load %arg3[%c0_143, %c0_144] : memref<128x384xbf16, #tpu.memory_space<vmem>>, vector<128x384xbf16>
    %cst_145 = arith.constant dense<0.000000e+00> : vector<8x384xf32>
    %387 = tpu.matmul %385, %386, %cst_145 {dimension_numbers = #tpu.dot_dimension_numbers<[1], [0], [0], [1], [0, 0, 1, 1], [], []>} : vector<8x128xbf16>, vector<128x384xbf16>, vector<8x384xf32> -> vector<8x384xf32>
    %c0_146 = arith.constant 0 : index
    %c0_147 = arith.constant 0 : index
    %388 = vector.load %arg4[%c0_146, %c0_147] : memref<1x384xf32, #tpu.memory_space<vmem>>, vector<1x384xf32>
    %389 = vector.broadcast %388 : vector<1x384xf32> to vector<8x384xf32>
    %390 = arith.addf %387, %389 : vector<8x384xf32>
    %391 = vector.extract_strided_slice %382 {offsets = [0, 0], sizes = [8, 128], strides = [1, 1]} : vector<8x384xf32> to vector<8x128xf32>
    %392 = vector.extract_strided_slice %390 {offsets = [0, 0], sizes = [8, 128], strides = [1, 1]} : vector<8x384xf32> to vector<8x128xf32>
    %393 = arith.addf %391, %392 : vector<8x128xf32>
    %394 = arith.negf %393 : vector<8x128xf32>
    %395 = math.exp %394 : vector<8x128xf32>
    %cst_148 = arith.constant 1.000000e+00 : f32
    %396 = vector.broadcast %cst_148 : f32 to vector<8x128xf32>
    %397 = arith.addf %396, %395 : vector<8x128xf32>
    %398 = arith.divf %396, %397 : vector<8x128xf32>
    %399 = vector.extract_strided_slice %382 {offsets = [0, 128], sizes = [8, 128], strides = [1, 1]} : vector<8x384xf32> to vector<8x128xf32>
    %400 = vector.extract_strided_slice %390 {offsets = [0, 128], sizes = [8, 128], strides = [1, 1]} : vector<8x384xf32> to vector<8x128xf32>
    %401 = arith.addf %399, %400 : vector<8x128xf32>
    %402 = arith.negf %401 : vector<8x128xf32>
    %403 = math.exp %402 : vector<8x128xf32>
    %cst_149 = arith.constant 1.000000e+00 : f32
    %404 = vector.broadcast %cst_149 : f32 to vector<8x128xf32>
    %405 = arith.addf %404, %403 : vector<8x128xf32>
    %406 = arith.divf %404, %405 : vector<8x128xf32>
    %407 = vector.extract_strided_slice %382 {offsets = [0, 256], sizes = [8, 128], strides = [1, 1]} : vector<8x384xf32> to vector<8x128xf32>
    %408 = vector.extract_strided_slice %390 {offsets = [0, 256], sizes = [8, 128], strides = [1, 1]} : vector<8x384xf32> to vector<8x128xf32>
    %409 = arith.mulf %398, %408 : vector<8x128xf32>
    %410 = arith.addf %407, %409 : vector<8x128xf32>
    %411 = math.tanh %410 : vector<8x128xf32>
    %cst_150 = arith.constant 1.000000e+00 : f32
    %412 = vector.broadcast %cst_150 : f32 to vector<8x128xf32>
    %413 = arith.subf %412, %406 : vector<8x128xf32>
    %414 = arith.mulf %413, %411 : vector<8x128xf32>
    %415 = arith.mulf %406, %376 : vector<8x128xf32>
    %416 = arith.addf %414, %415 : vector<8x128xf32>
    %417 = vector.broadcast %384 : vector<8x1xf32> to vector<8x128xf32>
    %418 = arith.mulf %417, %416 : vector<8x128xf32>
    %cst_151 = arith.constant 1.000000e+00 : f32
    %419 = vector.broadcast %cst_151 : f32 to vector<8x1xf32>
    %420 = arith.subf %419, %384 : vector<8x1xf32>
    %421 = vector.broadcast %420 : vector<8x1xf32> to vector<8x128xf32>
    %422 = arith.mulf %421, %376 : vector<8x128xf32>
    %423 = arith.addf %418, %422 : vector<8x128xf32>
    %c0_152 = arith.constant 0 : index
    %c8_153 = arith.constant 8 : index
    %c0_154 = arith.constant 0 : index
    %424 = vector.load %arg7[%c0_152, %c8_153, %c0_154] : memref<8x16x128xf32, #tpu.memory_space<vmem>>, vector<8x1x128xf32>
    %425 = vector.shape_cast %424 : vector<8x1x128xf32> to vector<8x128xf32>
    %426 = vector.shape_cast %423 : vector<8x128xf32> to vector<8x1x128xf32>
    tpu.vector_store %arg7[%c0_152, %c8_153, %c0_154], %426 {strides = array<i32>} : memref<8x16x128xf32, #tpu.memory_space<vmem>>, vector<8x1x128xf32>,
    %c9 = arith.constant 9 : index
    %c0_155 = arith.constant 0 : index
    %c0_156 = arith.constant 0 : index
    %427 = vector.load %arg1[%c9, %c0_155, %c0_156] : memref<16x8x384xbf16, #tpu.memory_space<vmem>>, vector<1x8x384xbf16>
    %428 = vector.shape_cast %427 : vector<1x8x384xbf16> to vector<8x384xbf16>
    %429 = arith.extf %428 : vector<8x384xbf16> to vector<8x384xf32>
    %c9_157 = arith.constant 9 : index
    %c0_158 = arith.constant 0 : index
    %c0_159 = arith.constant 0 : index
    %430 = vector.load %arg2[%c9_157, %c0_158, %c0_159] : memref<16x8x1xf32, #tpu.memory_space<vmem>>, vector<1x8x1xf32>
    %431 = vector.shape_cast %430 : vector<1x8x1xf32> to vector<8x1xf32>
    %432 = arith.truncf %423 : vector<8x128xf32> to vector<8x128xbf16>
    %c0_160 = arith.constant 0 : index
    %c0_161 = arith.constant 0 : index
    %433 = vector.load %arg3[%c0_160, %c0_161] : memref<128x384xbf16, #tpu.memory_space<vmem>>, vector<128x384xbf16>
    %cst_162 = arith.constant dense<0.000000e+00> : vector<8x384xf32>
    %434 = tpu.matmul %432, %433, %cst_162 {dimension_numbers = #tpu.dot_dimension_numbers<[1], [0], [0], [1], [0, 0, 1, 1], [], []>} : vector<8x128xbf16>, vector<128x384xbf16>, vector<8x384xf32> -> vector<8x384xf32>
    %c0_163 = arith.constant 0 : index
    %c0_164 = arith.constant 0 : index
    %435 = vector.load %arg4[%c0_163, %c0_164] : memref<1x384xf32, #tpu.memory_space<vmem>>, vector<1x384xf32>
    %436 = vector.broadcast %435 : vector<1x384xf32> to vector<8x384xf32>
    %437 = arith.addf %434, %436 : vector<8x384xf32>
    %438 = vector.extract_strided_slice %429 {offsets = [0, 0], sizes = [8, 128], strides = [1, 1]} : vector<8x384xf32> to vector<8x128xf32>
    %439 = vector.extract_strided_slice %437 {offsets = [0, 0], sizes = [8, 128], strides = [1, 1]} : vector<8x384xf32> to vector<8x128xf32>
    %440 = arith.addf %438, %439 : vector<8x128xf32>
    %441 = arith.negf %440 : vector<8x128xf32>
    %442 = math.exp %441 : vector<8x128xf32>
    %cst_165 = arith.constant 1.000000e+00 : f32
    %443 = vector.broadcast %cst_165 : f32 to vector<8x128xf32>
    %444 = arith.addf %443, %442 : vector<8x128xf32>
    %445 = arith.divf %443, %444 : vector<8x128xf32>
    %446 = vector.extract_strided_slice %429 {offsets = [0, 128], sizes = [8, 128], strides = [1, 1]} : vector<8x384xf32> to vector<8x128xf32>
    %447 = vector.extract_strided_slice %437 {offsets = [0, 128], sizes = [8, 128], strides = [1, 1]} : vector<8x384xf32> to vector<8x128xf32>
    %448 = arith.addf %446, %447 : vector<8x128xf32>
    %449 = arith.negf %448 : vector<8x128xf32>
    %450 = math.exp %449 : vector<8x128xf32>
    %cst_166 = arith.constant 1.000000e+00 : f32
    %451 = vector.broadcast %cst_166 : f32 to vector<8x128xf32>
    %452 = arith.addf %451, %450 : vector<8x128xf32>
    %453 = arith.divf %451, %452 : vector<8x128xf32>
    %454 = vector.extract_strided_slice %429 {offsets = [0, 256], sizes = [8, 128], strides = [1, 1]} : vector<8x384xf32> to vector<8x128xf32>
    %455 = vector.extract_strided_slice %437 {offsets = [0, 256], sizes = [8, 128], strides = [1, 1]} : vector<8x384xf32> to vector<8x128xf32>
    %456 = arith.mulf %445, %455 : vector<8x128xf32>
    %457 = arith.addf %454, %456 : vector<8x128xf32>
    %458 = math.tanh %457 : vector<8x128xf32>
    %cst_167 = arith.constant 1.000000e+00 : f32
    %459 = vector.broadcast %cst_167 : f32 to vector<8x128xf32>
    %460 = arith.subf %459, %453 : vector<8x128xf32>
    %461 = arith.mulf %460, %458 : vector<8x128xf32>
    %462 = arith.mulf %453, %423 : vector<8x128xf32>
    %463 = arith.addf %461, %462 : vector<8x128xf32>
    %464 = vector.broadcast %431 : vector<8x1xf32> to vector<8x128xf32>
    %465 = arith.mulf %464, %463 : vector<8x128xf32>
    %cst_168 = arith.constant 1.000000e+00 : f32
    %466 = vector.broadcast %cst_168 : f32 to vector<8x1xf32>
    %467 = arith.subf %466, %431 : vector<8x1xf32>
    %468 = vector.broadcast %467 : vector<8x1xf32> to vector<8x128xf32>
    %469 = arith.mulf %468, %423 : vector<8x128xf32>
    %470 = arith.addf %465, %469 : vector<8x128xf32>
    %c0_169 = arith.constant 0 : index
    %c9_170 = arith.constant 9 : index
    %c0_171 = arith.constant 0 : index
    %471 = vector.load %arg7[%c0_169, %c9_170, %c0_171] : memref<8x16x128xf32, #tpu.memory_space<vmem>>, vector<8x1x128xf32>
    %472 = vector.shape_cast %471 : vector<8x1x128xf32> to vector<8x128xf32>
    %473 = vector.shape_cast %470 : vector<8x128xf32> to vector<8x1x128xf32>
    tpu.vector_store %arg7[%c0_169, %c9_170, %c0_171], %473 {strides = array<i32>} : memref<8x16x128xf32, #tpu.memory_space<vmem>>, vector<8x1x128xf32>,
    %c10 = arith.constant 10 : index
    %c0_172 = arith.constant 0 : index
    %c0_173 = arith.constant 0 : index
    %474 = vector.load %arg1[%c10, %c0_172, %c0_173] : memref<16x8x384xbf16, #tpu.memory_space<vmem>>, vector<1x8x384xbf16>
    %475 = vector.shape_cast %474 : vector<1x8x384xbf16> to vector<8x384xbf16>
    %476 = arith.extf %475 : vector<8x384xbf16> to vector<8x384xf32>
    %c10_174 = arith.constant 10 : index
    %c0_175 = arith.constant 0 : index
    %c0_176 = arith.constant 0 : index
    %477 = vector.load %arg2[%c10_174, %c0_175, %c0_176] : memref<16x8x1xf32, #tpu.memory_space<vmem>>, vector<1x8x1xf32>
    %478 = vector.shape_cast %477 : vector<1x8x1xf32> to vector<8x1xf32>
    %479 = arith.truncf %470 : vector<8x128xf32> to vector<8x128xbf16>
    %c0_177 = arith.constant 0 : index
    %c0_178 = arith.constant 0 : index
    %480 = vector.load %arg3[%c0_177, %c0_178] : memref<128x384xbf16, #tpu.memory_space<vmem>>, vector<128x384xbf16>
    %cst_179 = arith.constant dense<0.000000e+00> : vector<8x384xf32>
    %481 = tpu.matmul %479, %480, %cst_179 {dimension_numbers = #tpu.dot_dimension_numbers<[1], [0], [0], [1], [0, 0, 1, 1], [], []>} : vector<8x128xbf16>, vector<128x384xbf16>, vector<8x384xf32> -> vector<8x384xf32>
    %c0_180 = arith.constant 0 : index
    %c0_181 = arith.constant 0 : index
    %482 = vector.load %arg4[%c0_180, %c0_181] : memref<1x384xf32, #tpu.memory_space<vmem>>, vector<1x384xf32>
    %483 = vector.broadcast %482 : vector<1x384xf32> to vector<8x384xf32>
    %484 = arith.addf %481, %483 : vector<8x384xf32>
    %485 = vector.extract_strided_slice %476 {offsets = [0, 0], sizes = [8, 128], strides = [1, 1]} : vector<8x384xf32> to vector<8x128xf32>
    %486 = vector.extract_strided_slice %484 {offsets = [0, 0], sizes = [8, 128], strides = [1, 1]} : vector<8x384xf32> to vector<8x128xf32>
    %487 = arith.addf %485, %486 : vector<8x128xf32>
    %488 = arith.negf %487 : vector<8x128xf32>
    %489 = math.exp %488 : vector<8x128xf32>
    %cst_182 = arith.constant 1.000000e+00 : f32
    %490 = vector.broadcast %cst_182 : f32 to vector<8x128xf32>
    %491 = arith.addf %490, %489 : vector<8x128xf32>
    %492 = arith.divf %490, %491 : vector<8x128xf32>
    %493 = vector.extract_strided_slice %476 {offsets = [0, 128], sizes = [8, 128], strides = [1, 1]} : vector<8x384xf32> to vector<8x128xf32>
    %494 = vector.extract_strided_slice %484 {offsets = [0, 128], sizes = [8, 128], strides = [1, 1]} : vector<8x384xf32> to vector<8x128xf32>
    %495 = arith.addf %493, %494 : vector<8x128xf32>
    %496 = arith.negf %495 : vector<8x128xf32>
    %497 = math.exp %496 : vector<8x128xf32>
    %cst_183 = arith.constant 1.000000e+00 : f32
    %498 = vector.broadcast %cst_183 : f32 to vector<8x128xf32>
    %499 = arith.addf %498, %497 : vector<8x128xf32>
    %500 = arith.divf %498, %499 : vector<8x128xf32>
    %501 = vector.extract_strided_slice %476 {offsets = [0, 256], sizes = [8, 128], strides = [1, 1]} : vector<8x384xf32> to vector<8x128xf32>
    %502 = vector.extract_strided_slice %484 {offsets = [0, 256], sizes = [8, 128], strides = [1, 1]} : vector<8x384xf32> to vector<8x128xf32>
    %503 = arith.mulf %492, %502 : vector<8x128xf32>
    %504 = arith.addf %501, %503 : vector<8x128xf32>
    %505 = math.tanh %504 : vector<8x128xf32>
    %cst_184 = arith.constant 1.000000e+00 : f32
    %506 = vector.broadcast %cst_184 : f32 to vector<8x128xf32>
    %507 = arith.subf %506, %500 : vector<8x128xf32>
    %508 = arith.mulf %507, %505 : vector<8x128xf32>
    %509 = arith.mulf %500, %470 : vector<8x128xf32>
    %510 = arith.addf %508, %509 : vector<8x128xf32>
    %511 = vector.broadcast %478 : vector<8x1xf32> to vector<8x128xf32>
    %512 = arith.mulf %511, %510 : vector<8x128xf32>
    %cst_185 = arith.constant 1.000000e+00 : f32
    %513 = vector.broadcast %cst_185 : f32 to vector<8x1xf32>
    %514 = arith.subf %513, %478 : vector<8x1xf32>
    %515 = vector.broadcast %514 : vector<8x1xf32> to vector<8x128xf32>
    %516 = arith.mulf %515, %470 : vector<8x128xf32>
    %517 = arith.addf %512, %516 : vector<8x128xf32>
    %c0_186 = arith.constant 0 : index
    %c10_187 = arith.constant 10 : index
    %c0_188 = arith.constant 0 : index
    %518 = vector.load %arg7[%c0_186, %c10_187, %c0_188] : memref<8x16x128xf32, #tpu.memory_space<vmem>>, vector<8x1x128xf32>
    %519 = vector.shape_cast %518 : vector<8x1x128xf32> to vector<8x128xf32>
    %520 = vector.shape_cast %517 : vector<8x128xf32> to vector<8x1x128xf32>
    tpu.vector_store %arg7[%c0_186, %c10_187, %c0_188], %520 {strides = array<i32>} : memref<8x16x128xf32, #tpu.memory_space<vmem>>, vector<8x1x128xf32>,
    %c11 = arith.constant 11 : index
    %c0_189 = arith.constant 0 : index
    %c0_190 = arith.constant 0 : index
    %521 = vector.load %arg1[%c11, %c0_189, %c0_190] : memref<16x8x384xbf16, #tpu.memory_space<vmem>>, vector<1x8x384xbf16>
    %522 = vector.shape_cast %521 : vector<1x8x384xbf16> to vector<8x384xbf16>
    %523 = arith.extf %522 : vector<8x384xbf16> to vector<8x384xf32>
    %c11_191 = arith.constant 11 : index
    %c0_192 = arith.constant 0 : index
    %c0_193 = arith.constant 0 : index
    %524 = vector.load %arg2[%c11_191, %c0_192, %c0_193] : memref<16x8x1xf32, #tpu.memory_space<vmem>>, vector<1x8x1xf32>
    %525 = vector.shape_cast %524 : vector<1x8x1xf32> to vector<8x1xf32>
    %526 = arith.truncf %517 : vector<8x128xf32> to vector<8x128xbf16>
    %c0_194 = arith.constant 0 : index
    %c0_195 = arith.constant 0 : index
    %527 = vector.load %arg3[%c0_194, %c0_195] : memref<128x384xbf16, #tpu.memory_space<vmem>>, vector<128x384xbf16>
    %cst_196 = arith.constant dense<0.000000e+00> : vector<8x384xf32>
    %528 = tpu.matmul %526, %527, %cst_196 {dimension_numbers = #tpu.dot_dimension_numbers<[1], [0], [0], [1], [0, 0, 1, 1], [], []>} : vector<8x128xbf16>, vector<128x384xbf16>, vector<8x384xf32> -> vector<8x384xf32>
    %c0_197 = arith.constant 0 : index
    %c0_198 = arith.constant 0 : index
    %529 = vector.load %arg4[%c0_197, %c0_198] : memref<1x384xf32, #tpu.memory_space<vmem>>, vector<1x384xf32>
    %530 = vector.broadcast %529 : vector<1x384xf32> to vector<8x384xf32>
    %531 = arith.addf %528, %530 : vector<8x384xf32>
    %532 = vector.extract_strided_slice %523 {offsets = [0, 0], sizes = [8, 128], strides = [1, 1]} : vector<8x384xf32> to vector<8x128xf32>
    %533 = vector.extract_strided_slice %531 {offsets = [0, 0], sizes = [8, 128], strides = [1, 1]} : vector<8x384xf32> to vector<8x128xf32>
    %534 = arith.addf %532, %533 : vector<8x128xf32>
    %535 = arith.negf %534 : vector<8x128xf32>
    %536 = math.exp %535 : vector<8x128xf32>
    %cst_199 = arith.constant 1.000000e+00 : f32
    %537 = vector.broadcast %cst_199 : f32 to vector<8x128xf32>
    %538 = arith.addf %537, %536 : vector<8x128xf32>
    %539 = arith.divf %537, %538 : vector<8x128xf32>
    %540 = vector.extract_strided_slice %523 {offsets = [0, 128], sizes = [8, 128], strides = [1, 1]} : vector<8x384xf32> to vector<8x128xf32>
    %541 = vector.extract_strided_slice %531 {offsets = [0, 128], sizes = [8, 128], strides = [1, 1]} : vector<8x384xf32> to vector<8x128xf32>
    %542 = arith.addf %540, %541 : vector<8x128xf32>
    %543 = arith.negf %542 : vector<8x128xf32>
    %544 = math.exp %543 : vector<8x128xf32>
    %cst_200 = arith.constant 1.000000e+00 : f32
    %545 = vector.broadcast %cst_200 : f32 to vector<8x128xf32>
    %546 = arith.addf %545, %544 : vector<8x128xf32>
    %547 = arith.divf %545, %546 : vector<8x128xf32>
    %548 = vector.extract_strided_slice %523 {offsets = [0, 256], sizes = [8, 128], strides = [1, 1]} : vector<8x384xf32> to vector<8x128xf32>
    %549 = vector.extract_strided_slice %531 {offsets = [0, 256], sizes = [8, 128], strides = [1, 1]} : vector<8x384xf32> to vector<8x128xf32>
    %550 = arith.mulf %539, %549 : vector<8x128xf32>
    %551 = arith.addf %548, %550 : vector<8x128xf32>
    %552 = math.tanh %551 : vector<8x128xf32>
    %cst_201 = arith.constant 1.000000e+00 : f32
    %553 = vector.broadcast %cst_201 : f32 to vector<8x128xf32>
    %554 = arith.subf %553, %547 : vector<8x128xf32>
    %555 = arith.mulf %554, %552 : vector<8x128xf32>
    %556 = arith.mulf %547, %517 : vector<8x128xf32>
    %557 = arith.addf %555, %556 : vector<8x128xf32>
    %558 = vector.broadcast %525 : vector<8x1xf32> to vector<8x128xf32>
    %559 = arith.mulf %558, %557 : vector<8x128xf32>
    %cst_202 = arith.constant 1.000000e+00 : f32
    %560 = vector.broadcast %cst_202 : f32 to vector<8x1xf32>
    %561 = arith.subf %560, %525 : vector<8x1xf32>
    %562 = vector.broadcast %561 : vector<8x1xf32> to vector<8x128xf32>
    %563 = arith.mulf %562, %517 : vector<8x128xf32>
    %564 = arith.addf %559, %563 : vector<8x128xf32>
    %c0_203 = arith.constant 0 : index
    %c11_204 = arith.constant 11 : index
    %c0_205 = arith.constant 0 : index
    %565 = vector.load %arg7[%c0_203, %c11_204, %c0_205] : memref<8x16x128xf32, #tpu.memory_space<vmem>>, vector<8x1x128xf32>
    %566 = vector.shape_cast %565 : vector<8x1x128xf32> to vector<8x128xf32>
    %567 = vector.shape_cast %564 : vector<8x128xf32> to vector<8x1x128xf32>
    tpu.vector_store %arg7[%c0_203, %c11_204, %c0_205], %567 {strides = array<i32>} : memref<8x16x128xf32, #tpu.memory_space<vmem>>, vector<8x1x128xf32>,
    %c12 = arith.constant 12 : index
    %c0_206 = arith.constant 0 : index
    %c0_207 = arith.constant 0 : index
    %568 = vector.load %arg1[%c12, %c0_206, %c0_207] : memref<16x8x384xbf16, #tpu.memory_space<vmem>>, vector<1x8x384xbf16>
    %569 = vector.shape_cast %568 : vector<1x8x384xbf16> to vector<8x384xbf16>
    %570 = arith.extf %569 : vector<8x384xbf16> to vector<8x384xf32>
    %c12_208 = arith.constant 12 : index
    %c0_209 = arith.constant 0 : index
    %c0_210 = arith.constant 0 : index
    %571 = vector.load %arg2[%c12_208, %c0_209, %c0_210] : memref<16x8x1xf32, #tpu.memory_space<vmem>>, vector<1x8x1xf32>
    %572 = vector.shape_cast %571 : vector<1x8x1xf32> to vector<8x1xf32>
    %573 = arith.truncf %564 : vector<8x128xf32> to vector<8x128xbf16>
    %c0_211 = arith.constant 0 : index
    %c0_212 = arith.constant 0 : index
    %574 = vector.load %arg3[%c0_211, %c0_212] : memref<128x384xbf16, #tpu.memory_space<vmem>>, vector<128x384xbf16>
    %cst_213 = arith.constant dense<0.000000e+00> : vector<8x384xf32>
    %575 = tpu.matmul %573, %574, %cst_213 {dimension_numbers = #tpu.dot_dimension_numbers<[1], [0], [0], [1], [0, 0, 1, 1], [], []>} : vector<8x128xbf16>, vector<128x384xbf16>, vector<8x384xf32> -> vector<8x384xf32>
    %c0_214 = arith.constant 0 : index
    %c0_215 = arith.constant 0 : index
    %576 = vector.load %arg4[%c0_214, %c0_215] : memref<1x384xf32, #tpu.memory_space<vmem>>, vector<1x384xf32>
    %577 = vector.broadcast %576 : vector<1x384xf32> to vector<8x384xf32>
    %578 = arith.addf %575, %577 : vector<8x384xf32>
    %579 = vector.extract_strided_slice %570 {offsets = [0, 0], sizes = [8, 128], strides = [1, 1]} : vector<8x384xf32> to vector<8x128xf32>
    %580 = vector.extract_strided_slice %578 {offsets = [0, 0], sizes = [8, 128], strides = [1, 1]} : vector<8x384xf32> to vector<8x128xf32>
    %581 = arith.addf %579, %580 : vector<8x128xf32>
    %582 = arith.negf %581 : vector<8x128xf32>
    %583 = math.exp %582 : vector<8x128xf32>
    %cst_216 = arith.constant 1.000000e+00 : f32
    %584 = vector.broadcast %cst_216 : f32 to vector<8x128xf32>
    %585 = arith.addf %584, %583 : vector<8x128xf32>
    %586 = arith.divf %584, %585 : vector<8x128xf32>
    %587 = vector.extract_strided_slice %570 {offsets = [0, 128], sizes = [8, 128], strides = [1, 1]} : vector<8x384xf32> to vector<8x128xf32>
    %588 = vector.extract_strided_slice %578 {offsets = [0, 128], sizes = [8, 128], strides = [1, 1]} : vector<8x384xf32> to vector<8x128xf32>
    %589 = arith.addf %587, %588 : vector<8x128xf32>
    %590 = arith.negf %589 : vector<8x128xf32>
    %591 = math.exp %590 : vector<8x128xf32>
    %cst_217 = arith.constant 1.000000e+00 : f32
    %592 = vector.broadcast %cst_217 : f32 to vector<8x128xf32>
    %593 = arith.addf %592, %591 : vector<8x128xf32>
    %594 = arith.divf %592, %593 : vector<8x128xf32>
    %595 = vector.extract_strided_slice %570 {offsets = [0, 256], sizes = [8, 128], strides = [1, 1]} : vector<8x384xf32> to vector<8x128xf32>
    %596 = vector.extract_strided_slice %578 {offsets = [0, 256], sizes = [8, 128], strides = [1, 1]} : vector<8x384xf32> to vector<8x128xf32>
    %597 = arith.mulf %586, %596 : vector<8x128xf32>
    %598 = arith.addf %595, %597 : vector<8x128xf32>
    %599 = math.tanh %598 : vector<8x128xf32>
    %cst_218 = arith.constant 1.000000e+00 : f32
    %600 = vector.broadcast %cst_218 : f32 to vector<8x128xf32>
    %601 = arith.subf %600, %594 : vector<8x128xf32>
    %602 = arith.mulf %601, %599 : vector<8x128xf32>
    %603 = arith.mulf %594, %564 : vector<8x128xf32>
    %604 = arith.addf %602, %603 : vector<8x128xf32>
    %605 = vector.broadcast %572 : vector<8x1xf32> to vector<8x128xf32>
    %606 = arith.mulf %605, %604 : vector<8x128xf32>
    %cst_219 = arith.constant 1.000000e+00 : f32
    %607 = vector.broadcast %cst_219 : f32 to vector<8x1xf32>
    %608 = arith.subf %607, %572 : vector<8x1xf32>
    %609 = vector.broadcast %608 : vector<8x1xf32> to vector<8x128xf32>
    %610 = arith.mulf %609, %564 : vector<8x128xf32>
    %611 = arith.addf %606, %610 : vector<8x128xf32>
    %c0_220 = arith.constant 0 : index
    %c12_221 = arith.constant 12 : index
    %c0_222 = arith.constant 0 : index
    %612 = vector.load %arg7[%c0_220, %c12_221, %c0_222] : memref<8x16x128xf32, #tpu.memory_space<vmem>>, vector<8x1x128xf32>
    %613 = vector.shape_cast %612 : vector<8x1x128xf32> to vector<8x128xf32>
    %614 = vector.shape_cast %611 : vector<8x128xf32> to vector<8x1x128xf32>
    tpu.vector_store %arg7[%c0_220, %c12_221, %c0_222], %614 {strides = array<i32>} : memref<8x16x128xf32, #tpu.memory_space<vmem>>, vector<8x1x128xf32>,
    %c13 = arith.constant 13 : index
    %c0_223 = arith.constant 0 : index
    %c0_224 = arith.constant 0 : index
    %615 = vector.load %arg1[%c13, %c0_223, %c0_224] : memref<16x8x384xbf16, #tpu.memory_space<vmem>>, vector<1x8x384xbf16>
    %616 = vector.shape_cast %615 : vector<1x8x384xbf16> to vector<8x384xbf16>
    %617 = arith.extf %616 : vector<8x384xbf16> to vector<8x384xf32>
    %c13_225 = arith.constant 13 : index
    %c0_226 = arith.constant 0 : index
    %c0_227 = arith.constant 0 : index
    %618 = vector.load %arg2[%c13_225, %c0_226, %c0_227] : memref<16x8x1xf32, #tpu.memory_space<vmem>>, vector<1x8x1xf32>
    %619 = vector.shape_cast %618 : vector<1x8x1xf32> to vector<8x1xf32>
    %620 = arith.truncf %611 : vector<8x128xf32> to vector<8x128xbf16>
    %c0_228 = arith.constant 0 : index
    %c0_229 = arith.constant 0 : index
    %621 = vector.load %arg3[%c0_228, %c0_229] : memref<128x384xbf16, #tpu.memory_space<vmem>>, vector<128x384xbf16>
    %cst_230 = arith.constant dense<0.000000e+00> : vector<8x384xf32>
    %622 = tpu.matmul %620, %621, %cst_230 {dimension_numbers = #tpu.dot_dimension_numbers<[1], [0], [0], [1], [0, 0, 1, 1], [], []>} : vector<8x128xbf16>, vector<128x384xbf16>, vector<8x384xf32> -> vector<8x384xf32>
    %c0_231 = arith.constant 0 : index
    %c0_232 = arith.constant 0 : index
    %623 = vector.load %arg4[%c0_231, %c0_232] : memref<1x384xf32, #tpu.memory_space<vmem>>, vector<1x384xf32>
    %624 = vector.broadcast %623 : vector<1x384xf32> to vector<8x384xf32>
    %625 = arith.addf %622, %624 : vector<8x384xf32>
    %626 = vector.extract_strided_slice %617 {offsets = [0, 0], sizes = [8, 128], strides = [1, 1]} : vector<8x384xf32> to vector<8x128xf32>
    %627 = vector.extract_strided_slice %625 {offsets = [0, 0], sizes = [8, 128], strides = [1, 1]} : vector<8x384xf32> to vector<8x128xf32>
    %628 = arith.addf %626, %627 : vector<8x128xf32>
    %629 = arith.negf %628 : vector<8x128xf32>
    %630 = math.exp %629 : vector<8x128xf32>
    %cst_233 = arith.constant 1.000000e+00 : f32
    %631 = vector.broadcast %cst_233 : f32 to vector<8x128xf32>
    %632 = arith.addf %631, %630 : vector<8x128xf32>
    %633 = arith.divf %631, %632 : vector<8x128xf32>
    %634 = vector.extract_strided_slice %617 {offsets = [0, 128], sizes = [8, 128], strides = [1, 1]} : vector<8x384xf32> to vector<8x128xf32>
    %635 = vector.extract_strided_slice %625 {offsets = [0, 128], sizes = [8, 128], strides = [1, 1]} : vector<8x384xf32> to vector<8x128xf32>
    %636 = arith.addf %634, %635 : vector<8x128xf32>
    %637 = arith.negf %636 : vector<8x128xf32>
    %638 = math.exp %637 : vector<8x128xf32>
    %cst_234 = arith.constant 1.000000e+00 : f32
    %639 = vector.broadcast %cst_234 : f32 to vector<8x128xf32>
    %640 = arith.addf %639, %638 : vector<8x128xf32>
    %641 = arith.divf %639, %640 : vector<8x128xf32>
    %642 = vector.extract_strided_slice %617 {offsets = [0, 256], sizes = [8, 128], strides = [1, 1]} : vector<8x384xf32> to vector<8x128xf32>
    %643 = vector.extract_strided_slice %625 {offsets = [0, 256], sizes = [8, 128], strides = [1, 1]} : vector<8x384xf32> to vector<8x128xf32>
    %644 = arith.mulf %633, %643 : vector<8x128xf32>
    %645 = arith.addf %642, %644 : vector<8x128xf32>
    %646 = math.tanh %645 : vector<8x128xf32>
    %cst_235 = arith.constant 1.000000e+00 : f32
    %647 = vector.broadcast %cst_235 : f32 to vector<8x128xf32>
    %648 = arith.subf %647, %641 : vector<8x128xf32>
    %649 = arith.mulf %648, %646 : vector<8x128xf32>
    %650 = arith.mulf %641, %611 : vector<8x128xf32>
    %651 = arith.addf %649, %650 : vector<8x128xf32>
    %652 = vector.broadcast %619 : vector<8x1xf32> to vector<8x128xf32>
    %653 = arith.mulf %652, %651 : vector<8x128xf32>
    %cst_236 = arith.constant 1.000000e+00 : f32
    %654 = vector.broadcast %cst_236 : f32 to vector<8x1xf32>
    %655 = arith.subf %654, %619 : vector<8x1xf32>
    %656 = vector.broadcast %655 : vector<8x1xf32> to vector<8x128xf32>
    %657 = arith.mulf %656, %611 : vector<8x128xf32>
    %658 = arith.addf %653, %657 : vector<8x128xf32>
    %c0_237 = arith.constant 0 : index
    %c13_238 = arith.constant 13 : index
    %c0_239 = arith.constant 0 : index
    %659 = vector.load %arg7[%c0_237, %c13_238, %c0_239] : memref<8x16x128xf32, #tpu.memory_space<vmem>>, vector<8x1x128xf32>
    %660 = vector.shape_cast %659 : vector<8x1x128xf32> to vector<8x128xf32>
    %661 = vector.shape_cast %658 : vector<8x128xf32> to vector<8x1x128xf32>
    tpu.vector_store %arg7[%c0_237, %c13_238, %c0_239], %661 {strides = array<i32>} : memref<8x16x128xf32, #tpu.memory_space<vmem>>, vector<8x1x128xf32>,
    %c14 = arith.constant 14 : index
    %c0_240 = arith.constant 0 : index
    %c0_241 = arith.constant 0 : index
    %662 = vector.load %arg1[%c14, %c0_240, %c0_241] : memref<16x8x384xbf16, #tpu.memory_space<vmem>>, vector<1x8x384xbf16>
    %663 = vector.shape_cast %662 : vector<1x8x384xbf16> to vector<8x384xbf16>
    %664 = arith.extf %663 : vector<8x384xbf16> to vector<8x384xf32>
    %c14_242 = arith.constant 14 : index
    %c0_243 = arith.constant 0 : index
    %c0_244 = arith.constant 0 : index
    %665 = vector.load %arg2[%c14_242, %c0_243, %c0_244] : memref<16x8x1xf32, #tpu.memory_space<vmem>>, vector<1x8x1xf32>
    %666 = vector.shape_cast %665 : vector<1x8x1xf32> to vector<8x1xf32>
    %667 = arith.truncf %658 : vector<8x128xf32> to vector<8x128xbf16>
    %c0_245 = arith.constant 0 : index
    %c0_246 = arith.constant 0 : index
    %668 = vector.load %arg3[%c0_245, %c0_246] : memref<128x384xbf16, #tpu.memory_space<vmem>>, vector<128x384xbf16>
    %cst_247 = arith.constant dense<0.000000e+00> : vector<8x384xf32>
    %669 = tpu.matmul %667, %668, %cst_247 {dimension_numbers = #tpu.dot_dimension_numbers<[1], [0], [0], [1], [0, 0, 1, 1], [], []>} : vector<8x128xbf16>, vector<128x384xbf16>, vector<8x384xf32> -> vector<8x384xf32>
    %c0_248 = arith.constant 0 : index
    %c0_249 = arith.constant 0 : index
    %670 = vector.load %arg4[%c0_248, %c0_249] : memref<1x384xf32, #tpu.memory_space<vmem>>, vector<1x384xf32>
    %671 = vector.broadcast %670 : vector<1x384xf32> to vector<8x384xf32>
    %672 = arith.addf %669, %671 : vector<8x384xf32>
    %673 = vector.extract_strided_slice %664 {offsets = [0, 0], sizes = [8, 128], strides = [1, 1]} : vector<8x384xf32> to vector<8x128xf32>
    %674 = vector.extract_strided_slice %672 {offsets = [0, 0], sizes = [8, 128], strides = [1, 1]} : vector<8x384xf32> to vector<8x128xf32>
    %675 = arith.addf %673, %674 : vector<8x128xf32>
    %676 = arith.negf %675 : vector<8x128xf32>
    %677 = math.exp %676 : vector<8x128xf32>
    %cst_250 = arith.constant 1.000000e+00 : f32
    %678 = vector.broadcast %cst_250 : f32 to vector<8x128xf32>
    %679 = arith.addf %678, %677 : vector<8x128xf32>
    %680 = arith.divf %678, %679 : vector<8x128xf32>
    %681 = vector.extract_strided_slice %664 {offsets = [0, 128], sizes = [8, 128], strides = [1, 1]} : vector<8x384xf32> to vector<8x128xf32>
    %682 = vector.extract_strided_slice %672 {offsets = [0, 128], sizes = [8, 128], strides = [1, 1]} : vector<8x384xf32> to vector<8x128xf32>
    %683 = arith.addf %681, %682 : vector<8x128xf32>
    %684 = arith.negf %683 : vector<8x128xf32>
    %685 = math.exp %684 : vector<8x128xf32>
    %cst_251 = arith.constant 1.000000e+00 : f32
    %686 = vector.broadcast %cst_251 : f32 to vector<8x128xf32>
    %687 = arith.addf %686, %685 : vector<8x128xf32>
    %688 = arith.divf %686, %687 : vector<8x128xf32>
    %689 = vector.extract_strided_slice %664 {offsets = [0, 256], sizes = [8, 128], strides = [1, 1]} : vector<8x384xf32> to vector<8x128xf32>
    %690 = vector.extract_strided_slice %672 {offsets = [0, 256], sizes = [8, 128], strides = [1, 1]} : vector<8x384xf32> to vector<8x128xf32>
    %691 = arith.mulf %680, %690 : vector<8x128xf32>
    %692 = arith.addf %689, %691 : vector<8x128xf32>
    %693 = math.tanh %692 : vector<8x128xf32>
    %cst_252 = arith.constant 1.000000e+00 : f32
    %694 = vector.broadcast %cst_252 : f32 to vector<8x128xf32>
    %695 = arith.subf %694, %688 : vector<8x128xf32>
    %696 = arith.mulf %695, %693 : vector<8x128xf32>
    %697 = arith.mulf %688, %658 : vector<8x128xf32>
    %698 = arith.addf %696, %697 : vector<8x128xf32>
    %699 = vector.broadcast %666 : vector<8x1xf32> to vector<8x128xf32>
    %700 = arith.mulf %699, %698 : vector<8x128xf32>
    %cst_253 = arith.constant 1.000000e+00 : f32
    %701 = vector.broadcast %cst_253 : f32 to vector<8x1xf32>
    %702 = arith.subf %701, %666 : vector<8x1xf32>
    %703 = vector.broadcast %702 : vector<8x1xf32> to vector<8x128xf32>
    %704 = arith.mulf %703, %658 : vector<8x128xf32>
    %705 = arith.addf %700, %704 : vector<8x128xf32>
    %c0_254 = arith.constant 0 : index
    %c14_255 = arith.constant 14 : index
    %c0_256 = arith.constant 0 : index
    %706 = vector.load %arg7[%c0_254, %c14_255, %c0_256] : memref<8x16x128xf32, #tpu.memory_space<vmem>>, vector<8x1x128xf32>
    %707 = vector.shape_cast %706 : vector<8x1x128xf32> to vector<8x128xf32>
    %708 = vector.shape_cast %705 : vector<8x128xf32> to vector<8x1x128xf32>
    tpu.vector_store %arg7[%c0_254, %c14_255, %c0_256], %708 {strides = array<i32>} : memref<8x16x128xf32, #tpu.memory_space<vmem>>, vector<8x1x128xf32>,
    %c15 = arith.constant 15 : index
    %c0_257 = arith.constant 0 : index
    %c0_258 = arith.constant 0 : index
    %709 = vector.load %arg1[%c15, %c0_257, %c0_258] : memref<16x8x384xbf16, #tpu.memory_space<vmem>>, vector<1x8x384xbf16>
    %710 = vector.shape_cast %709 : vector<1x8x384xbf16> to vector<8x384xbf16>
    %711 = arith.extf %710 : vector<8x384xbf16> to vector<8x384xf32>
    %c15_259 = arith.constant 15 : index
    %c0_260 = arith.constant 0 : index
    %c0_261 = arith.constant 0 : index
    %712 = vector.load %arg2[%c15_259, %c0_260, %c0_261] : memref<16x8x1xf32, #tpu.memory_space<vmem>>, vector<1x8x1xf32>
    %713 = vector.shape_cast %712 : vector<1x8x1xf32> to vector<8x1xf32>
    %714 = arith.truncf %705 : vector<8x128xf32> to vector<8x128xbf16>
    %c0_262 = arith.constant 0 : index
    %c0_263 = arith.constant 0 : index
    %715 = vector.load %arg3[%c0_262, %c0_263] : memref<128x384xbf16, #tpu.memory_space<vmem>>, vector<128x384xbf16>
    %cst_264 = arith.constant dense<0.000000e+00> : vector<8x384xf32>
    %716 = tpu.matmul %714, %715, %cst_264 {dimension_numbers = #tpu.dot_dimension_numbers<[1], [0], [0], [1], [0, 0, 1, 1], [], []>} : vector<8x128xbf16>, vector<128x384xbf16>, vector<8x384xf32> -> vector<8x384xf32>
    %c0_265 = arith.constant 0 : index
    %c0_266 = arith.constant 0 : index
    %717 = vector.load %arg4[%c0_265, %c0_266] : memref<1x384xf32, #tpu.memory_space<vmem>>, vector<1x384xf32>
    %718 = vector.broadcast %717 : vector<1x384xf32> to vector<8x384xf32>
    %719 = arith.addf %716, %718 : vector<8x384xf32>
    %720 = vector.extract_strided_slice %711 {offsets = [0, 0], sizes = [8, 128], strides = [1, 1]} : vector<8x384xf32> to vector<8x128xf32>
    %721 = vector.extract_strided_slice %719 {offsets = [0, 0], sizes = [8, 128], strides = [1, 1]} : vector<8x384xf32> to vector<8x128xf32>
    %722 = arith.addf %720, %721 : vector<8x128xf32>
    %723 = arith.negf %722 : vector<8x128xf32>
    %724 = math.exp %723 : vector<8x128xf32>
    %cst_267 = arith.constant 1.000000e+00 : f32
    %725 = vector.broadcast %cst_267 : f32 to vector<8x128xf32>
    %726 = arith.addf %725, %724 : vector<8x128xf32>
    %727 = arith.divf %725, %726 : vector<8x128xf32>
    %728 = vector.extract_strided_slice %711 {offsets = [0, 128], sizes = [8, 128], strides = [1, 1]} : vector<8x384xf32> to vector<8x128xf32>
    %729 = vector.extract_strided_slice %719 {offsets = [0, 128], sizes = [8, 128], strides = [1, 1]} : vector<8x384xf32> to vector<8x128xf32>
    %730 = arith.addf %728, %729 : vector<8x128xf32>
    %731 = arith.negf %730 : vector<8x128xf32>
    %732 = math.exp %731 : vector<8x128xf32>
    %cst_268 = arith.constant 1.000000e+00 : f32
    %733 = vector.broadcast %cst_268 : f32 to vector<8x128xf32>
    %734 = arith.addf %733, %732 : vector<8x128xf32>
    %735 = arith.divf %733, %734 : vector<8x128xf32>
    %736 = vector.extract_strided_slice %711 {offsets = [0, 256], sizes = [8, 128], strides = [1, 1]} : vector<8x384xf32> to vector<8x128xf32>
    %737 = vector.extract_strided_slice %719 {offsets = [0, 256], sizes = [8, 128], strides = [1, 1]} : vector<8x384xf32> to vector<8x128xf32>
    %738 = arith.mulf %727, %737 : vector<8x128xf32>
    %739 = arith.addf %736, %738 : vector<8x128xf32>
    %740 = math.tanh %739 : vector<8x128xf32>
    %cst_269 = arith.constant 1.000000e+00 : f32
    %741 = vector.broadcast %cst_269 : f32 to vector<8x128xf32>
    %742 = arith.subf %741, %735 : vector<8x128xf32>
    %743 = arith.mulf %742, %740 : vector<8x128xf32>
    %744 = arith.mulf %735, %705 : vector<8x128xf32>
    %745 = arith.addf %743, %744 : vector<8x128xf32>
    %746 = vector.broadcast %713 : vector<8x1xf32> to vector<8x128xf32>
    %747 = arith.mulf %746, %745 : vector<8x128xf32>
    %cst_270 = arith.constant 1.000000e+00 : f32
    %748 = vector.broadcast %cst_270 : f32 to vector<8x1xf32>
    %749 = arith.subf %748, %713 : vector<8x1xf32>
    %750 = vector.broadcast %749 : vector<8x1xf32> to vector<8x128xf32>
    %751 = arith.mulf %750, %705 : vector<8x128xf32>
    %752 = arith.addf %747, %751 : vector<8x128xf32>
    %c0_271 = arith.constant 0 : index
    %c15_272 = arith.constant 15 : index
    %c0_273 = arith.constant 0 : index
    %753 = vector.load %arg7[%c0_271, %c15_272, %c0_273] : memref<8x16x128xf32, #tpu.memory_space<vmem>>, vector<8x1x128xf32>
    %754 = vector.shape_cast %753 : vector<8x1x128xf32> to vector<8x128xf32>
    %755 = vector.shape_cast %752 : vector<8x128xf32> to vector<8x1x128xf32>
    tpu.vector_store %arg7[%c0_271, %c15_272, %c0_273], %755 {strides = array<i32>} : memref<8x16x128xf32, #tpu.memory_space<vmem>>, vector<8x1x128xf32>,
    %c0_274 = arith.constant 0 : index
    %c0_275 = arith.constant 0 : index
    %756 = vector.load %arg6[%c0_274, %c0_275] : memref<8x128xf32, #tpu.memory_space<vmem>>, vector<8x128xf32>
    tpu.vector_store %arg6[%c0_274, %c0_275], %752 {strides = array<i32>} : memref<8x128xf32, #tpu.memory_space<vmem>>, vector<8x128xf32>,
    %c0_276 = arith.constant 0 : index
    %c0_277 = arith.constant 0 : index
    %c0_278 = arith.constant 0 : index
    %757 = vector.load %arg7[%c0_276, %c0_277, %c0_278] : memref<8x16x128xf32, #tpu.memory_space<vmem>>, vector<8x16x128xf32>
    %758 = arith.truncf %757 : vector<8x16x128xf32> to vector<8x16x128xbf16>
    %c0_279 = arith.constant 0 : index
    %c0_280 = arith.constant 0 : index
    %c0_281 = arith.constant 0 : index
    %759 = vector.load %arg5[%c0_279, %c0_280, %c0_281] : memref<8x16x128xbf16, #tpu.memory_space<vmem>>, vector<8x16x128xbf16>
    tpu.vector_store %arg5[%c0_279, %c0_280, %c0_281], %758 {strides = array<i32>} : memref<8x16x128xbf16, #tpu.memory_space<vmem>>, vector<8x16x128xbf16>,
    return
  }
  func.func @transform_0(%arg0: i32) -> (i32, i32, i32) {
    %c0_i32 = arith.constant 0 : i32
    %c0_i32_0 = arith.constant 0 : i32
    %c0_i32_1 = arith.constant 0 : i32
    return %arg0, %c0_i32, %c0_i32_0 : i32, i32, i32
  }
  func.func @transform_1(%arg0: i32) -> (i32, i32, i32) {
    %c0_i32 = arith.constant 0 : i32
    %c0_i32_0 = arith.constant 0 : i32
    %c0_i32_1 = arith.constant 0 : i32
    return %arg0, %c0_i32, %c0_i32_0 : i32, i32, i32
  }
  func.func @transform_2(%arg0: i32) -> (i32, i32) {
    %c0_i32 = arith.constant 0 : i32
    %c0_i32_0 = arith.constant 0 : i32
    %c0_i32_1 = arith.constant 0 : i32
    return %c0_i32, %c0_i32_0 : i32, i32
  }
  func.func @transform_3(%arg0: i32) -> (i32, i32) {
    %c0_i32 = arith.constant 0 : i32
    %c0_i32_0 = arith.constant 0 : i32
    %c0_i32_1 = arith.constant 0 : i32
    return %c0_i32, %c0_i32_0 : i32, i32
  }
  func.func @transform_4(%arg0: i32) -> (i32, i32, i32) {
    %c0_i32 = arith.constant 0 : i32
    %c0_i32_0 = arith.constant 0 : i32
    %c0_i32_1 = arith.constant 0 : i32
    return %c0_i32, %arg0, %c0_i32_0 : i32, i32, i32
  }
  func.func @transform_5(%arg0: i32) -> (i32, i32) {
    %c0_i32 = arith.constant 0 : i32
    %c0_i32_0 = arith.constant 0 : i32
    %c0_i32_1 = arith.constant 0 : i32
    return %c0_i32, %c0_i32_0 : i32, i32
  }
}

</mosaic_0001>

<llo_original>
// kernel: seq2seq_forward.6
$region0: #{seq2seq_forward.6}
  #allocation0 [shape = 'u32[]', space=smem, size = 0x4, offset = 0x4, fixed_abs, tag = 'smem constant byte address 0x4 - core index']
  #allocation1 [shape = 'u32[144,128]{1,0:T(1,128)}', space=vmem, size = 0x12000, scoped, tag = 'internal scratch']
  %s0 = inlined_call_operand.vmem [shape: bf16[128,128], index: 0, kind: input, shape index: {}]
  %s1 = inlined_call_operand.vmem [shape: bf16[128,128], index: 1, kind: input, shape index: {}]
  %s2 = inlined_call_operand.vmem [shape: f32[1,128], index: 2, kind: input, shape index: {}]
  %s3 = inlined_call_operand.hbm [shape: bf16[128,128], index: 3, kind: output, shape index: {}]
  %s4 = sld [smem:[#allocation0]]
  $region22: #{seq2seq_forward.6} parent=0
    _
  %s6 = ssub.s32 1, %s4
  %s7 = scalar_select 0, %s6, %s4
  $region1: #{seq2seq_forward.6} parent=0
    #allocation2 [shape = 'u8[32768]{0}', space=vmem, size = 0x8000, scoped, tag = 'output window, operand 0, single buffered']
    #allocation3 [shape = 's32[1]{0}', space=sflag, size = 0x4, scoped, tag = 'scoped memory for seq2seq_forward.6']
    %8 = vsyncpa [#allocation3], 0
    // Predicated region
    $region2: #{seq2seq_forward.6} parent=1 // pred_check
      _
    $region3: #{seq2seq_forward.6} parent=1 // pred_check_branch
      %10 = sbr.rel (0) target = $region5
    $region4: #{seq2seq_forward.6} parent=1 // pred_region
      _
    $region5: #{seq2seq_forward.6} parent=1 // pred_fallthru
      _
    // Predicated region
    $region6: #{seq2seq_forward.6} parent=1 // pred_check
      _
    $region7: #{seq2seq_forward.6} parent=1 // pred_check_branch
      %12 = sbr.rel (0) target = $region9
    $region8: #{seq2seq_forward.6} parent=1 // pred_region
      _
    $region9: #{seq2seq_forward.6} parent=1 // pred_fallthru
      _
    // Predicated region
    $region10: #{seq2seq_forward.6} parent=1 // pred_check
      _
    $region11: #{seq2seq_forward.6} parent=1 // pred_check_branch
      %14 = sbr.rel (0) target = $region13
    $region12: #{seq2seq_forward.6} parent=1 // pred_region
      _
    $region13: #{seq2seq_forward.6} parent=1 // pred_fallthru
      _
    %v16 = vld [vmem:[%s0] sm:$0xf]
    %v17 = vld [vmem:[%s0 + $0x4] sm:$0xf]
    %v18 = vld [vmem:[%s0 + $0x8] sm:$0xf]
    %v19 = vld [vmem:[%s0 + $0xc] sm:$0xf]
    %v20 = vld [vmem:[%s0 + $0x10] sm:$0xf]
    %v21 = vld [vmem:[%s0 + $0x14] sm:$0xf]
    %v22 = vld [vmem:[%s0 + $0x18] sm:$0xf]
    %v23 = vld [vmem:[%s0 + $0x1c] sm:$0xf]
    %v24 = vld [vmem:[%s0 + $0x20] sm:$0xf]
    %v25 = vld [vmem:[%s0 + $0x24] sm:$0xf]
    %v26 = vld [vmem:[%s0 + $0x28] sm:$0xf]
    %v27 = vld [vmem:[%s0 + $0x2c] sm:$0xf]
    %v28 = vld [vmem:[%s0 + $0x30] sm:$0xf]
    %v29 = vld [vmem:[%s0 + $0x34] sm:$0xf]
    %v30 = vld [vmem:[%s0 + $0x38] sm:$0xf]
    %v31 = vld [vmem:[%s0 + $0x3c] sm:$0xf]
    %v32 = vld [vmem:[%s1] sm:$0xf]
    %v33 = vld [vmem:[%s1 + $0x4] sm:$0xf]
    %v34 = vld [vmem:[%s1 + $0x8] sm:$0xf]
    %v35 = vld [vmem:[%s1 + $0xc] sm:$0xf]
    %v36 = vld [vmem:[%s1 + $0x10] sm:$0xf]
    %v37 = vld [vmem:[%s1 + $0x14] sm:$0xf]
    %v38 = vld [vmem:[%s1 + $0x18] sm:$0xf]
    %v39 = vld [vmem:[%s1 + $0x1c] sm:$0xf]
    %v40 = vld [vmem:[%s1 + $0x20] sm:$0xf]
    %v41 = vld [vmem:[%s1 + $0x24] sm:$0xf]
    %v42 = vld [vmem:[%s1 + $0x28] sm:$0xf]
    %v43 = vld [vmem:[%s1 + $0x2c] sm:$0xf]
    %v44 = vld [vmem:[%s1 + $0x30] sm:$0xf]
    %v45 = vld [vmem:[%s1 + $0x34] sm:$0xf]
    %v46 = vld [vmem:[%s1 + $0x38] sm:$0xf]
    %v47 = vld [vmem:[%s1 + $0x3c] sm:$0xf]
    %v48 = vld [vmem:[%s2] sm:$0x1]
    %v50 = vlaneseq
    %v51 = vshrl.u32 %v50, 7
    %v52 = vsub.s32 0, %v51
    %v53 = vrot.slane %v48, %v52
    %v71 = vunpack.c.l.b16 %v16
    %v72 = vunpack.c.l.b16 %v17
    %v73 = vunpack.c.l.b16 %v18
    %v74 = vunpack.c.l.b16 %v19
    %v75 = vunpack.c.l.b16 %v20
    %v76 = vunpack.c.l.b16 %v21
    %v77 = vunpack.c.l.b16 %v22
    %v78 = vunpack.c.l.b16 %v23
    %v79 = vunpack.c.l.b16 %v24
    %v80 = vunpack.c.l.b16 %v25
    %v81 = vunpack.c.l.b16 %v26
    %v82 = vunpack.c.l.b16 %v27
    %v83 = vunpack.c.l.b16 %v28
    %v84 = vunpack.c.l.b16 %v29
    %v85 = vunpack.c.l.b16 %v30
    %v86 = vunpack.c.l.b16 %v31
    %v87 = vpack.c.b16 %v72, %v71
    %v88 = vpack.c.b16 %v74, %v73
    %v89 = vpack.c.b16 %v76, %v75
    %v90 = vpack.c.b16 %v78, %v77
    %v91 = vpack.c.b16 %v80, %v79
    %v92 = vpack.c.b16 %v82, %v81
    %v93 = vpack.c.b16 %v84, %v83
    %v94 = vpack.c.b16 %v86, %v85
    %v119 = vunpack.c.l.b16 %v32
    %v120 = vunpack.c.l.b16 %v33
    %v121 = vunpack.c.l.b16 %v34
    %v122 = vunpack.c.l.b16 %v35
    %v123 = vunpack.c.l.b16 %v36
    %v124 = vunpack.c.l.b16 %v37
    %v125 = vunpack.c.l.b16 %v38
    %v126 = vunpack.c.l.b16 %v39
    %v127 = vunpack.c.l.b16 %v40
    %v128 = vunpack.c.l.b16 %v41
    %v129 = vunpack.c.l.b16 %v42
    %v130 = vunpack.c.l.b16 %v43
    %v131 = vunpack.c.l.b16 %v44
    %v132 = vunpack.c.l.b16 %v45
    %v133 = vunpack.c.l.b16 %v46
    %v134 = vunpack.c.l.b16 %v47
    %v135 = vpack.c.b16 %v120, %v119
    %v136 = vpack.c.b16 %v122, %v121
    %v137 = vpack.c.b16 %v124, %v123
    %v138 = vpack.c.b16 %v126, %v125
    %v139 = vpack.c.b16 %v128, %v127
    %v140 = vpack.c.b16 %v130, %v129
    %v141 = vpack.c.b16 %v132, %v131
    %v142 = vpack.c.b16 %v134, %v133
    %151 = vmatprep.subr.bf16.mxu0 0
    %152 = vmatpush1.bf16.msra.mxu0 %v135
    %153 = vmatprep.subr.bf16.mxu0 0
    %154 = vmatpush1.bf16.msra.mxu0 %v136
    %155 = vmatprep.subr.bf16.mxu0 0
    %156 = vmatpush1.bf16.msra.mxu0 %v137
    %157 = vmatprep.subr.bf16.mxu0 0
    %158 = vmatpush1.bf16.msra.mxu0 %v138
    %159 = vmatprep.subr.bf16.mxu0 0
    %160 = vmatpush1.bf16.msra.mxu0 %v139
    %161 = vmatprep.subr.bf16.mxu0 0
    %162 = vmatpush1.bf16.msra.mxu0 %v140
    %163 = vmatprep.subr.bf16.mxu0 0
    %164 = vmatpush1.bf16.msra.mxu0 %v141
    %165 = vmatprep.subr.bf16.mxu0 0
    %166 = vmatpush1.bf16.msra.mxu0 %v142
    %167 = vmatprep.subr.bf16.mxu0 0
    %168 = vmatpush1.bf16.msra.mxu0 0
    %169 = vmatprep.subr.bf16.mxu0 0
    %170 = vmatpush1.bf16.msra.mxu0 0
    %171 = vmatprep.subr.bf16.mxu0 0
    %172 = vmatpush1.bf16.msra.mxu0 0
    %173 = vmatprep.subr.bf16.mxu0 0
    %174 = vmatpush1.bf16.msra.mxu0 0
    %175 = vmatprep.subr.bf16.mxu0 0
    %176 = vmatpush1.bf16.msra.mxu0 0
    %177 = vmatprep.subr.bf16.mxu0 0
    %178 = vmatpush1.bf16.msra.mxu0 0
    %179 = vmatprep.subr.bf16.mxu0 0
    %180 = vmatpush1.bf16.msra.mxu0 0
    %181 = vmatprep.subr.bf16.mxu0 0
    %182 = vmatpush1.bf16.msra.mxu0 0
    %183 = vmatprep.mubr.bf16.mxu0 0
    %184 = vmatmul.mubr.bf16.gmra.mrb[0].mxu0 %v87
    %v185 = vpop.f32.mrb[0].mxu0
    %v186 = vadd.f32 %v53, %v185
    %v187 = vpop.f32.mrb[0].mxu0
    %v188 = vpop.f32.mrb[0].mxu0
    %v189 = vadd.f32 %v53, %v188
    %v190 = vpop.f32.mrb[0].mxu0
    %191 = vmatprep.mubr.bf16.mxu0 0
    %192 = vmatmul.mubr.bf16.gmra.mrb[0].mxu0 %v88
    %v193 = vpop.f32.mrb[0].mxu0
    %v194 = vadd.f32 %v53, %v193
    %v195 = vpop.f32.mrb[0].mxu0
    %v196 = vpop.f32.mrb[0].mxu0
    %v197 = vadd.f32 %v53, %v196
    %v198 = vpop.f32.mrb[0].mxu0
    %199 = vmatprep.mubr.bf16.mxu0 0
    %200 = vmatmul.mubr.bf16.gmra.mrb[0].mxu0 %v89
    %v201 = vpop.f32.mrb[0].mxu0
    %v202 = vadd.f32 %v53, %v201
    %v203 = vpop.f32.mrb[0].mxu0
    %v204 = vpop.f32.mrb[0].mxu0
    %v205 = vadd.f32 %v53, %v204
    %v206 = vpop.f32.mrb[0].mxu0
    %207 = vmatprep.mubr.bf16.mxu0 0
    %208 = vmatmul.mubr.bf16.gmra.mrb[0].mxu0 %v90
    %v209 = vpop.f32.mrb[0].mxu0
    %v210 = vadd.f32 %v53, %v209
    %v211 = vpop.f32.mrb[0].mxu0
    %v212 = vpop.f32.mrb[0].mxu0
    %v213 = vadd.f32 %v53, %v212
    %v214 = vpop.f32.mrb[0].mxu0
    %215 = vmatprep.mubr.bf16.mxu0 0
    %216 = vmatmul.mubr.bf16.gmra.mrb[0].mxu0 %v91
    %v217 = vpop.f32.mrb[0].mxu0
    %v218 = vadd.f32 %v53, %v217
    %v219 = vpop.f32.mrb[0].mxu0
    %v220 = vpop.f32.mrb[0].mxu0
    %v221 = vadd.f32 %v53, %v220
    %v222 = vpop.f32.mrb[0].mxu0
    %223 = vmatprep.mubr.bf16.mxu0 0
    %224 = vmatmul.mubr.bf16.gmra.mrb[0].mxu0 %v92
    %v225 = vpop.f32.mrb[0].mxu0
    %v226 = vadd.f32 %v53, %v225
    %v227 = vpop.f32.mrb[0].mxu0
    %v228 = vpop.f32.mrb[0].mxu0
    %v229 = vadd.f32 %v53, %v228
    %v230 = vpop.f32.mrb[0].mxu0
    %231 = vmatprep.mubr.bf16.mxu0 0
    %232 = vmatmul.mubr.bf16.gmra.mrb[0].mxu0 %v93
    %v233 = vpop.f32.mrb[0].mxu0
    %v234 = vadd.f32 %v53, %v233
    %v235 = vpop.f32.mrb[0].mxu0
    %v236 = vpop.f32.mrb[0].mxu0
    %v237 = vadd.f32 %v53, %v236
    %v238 = vpop.f32.mrb[0].mxu0
    %239 = vmatprep.mubr.bf16.mxu0 0
    %240 = vmatmul.mubr.bf16.gmra.mrb[0].mxu0 %v94
    %v241 = vpop.f32.mrb[0].mxu0
    %v242 = vadd.f32 %v53, %v241
    %v243 = vpop.f32.mrb[0].mxu0
    %v244 = vpop.f32.mrb[0].mxu0
    %v245 = vadd.f32 %v53, %v244
    %v246 = vpop.f32.mrb[0].mxu0
    %247 = vdwg.mxu0
    %v248 = vpack.c.bf16 %v189, %v186
    %v249 = vpack.c.bf16 %v197, %v194
    %v250 = vpack.c.bf16 %v205, %v202
    %v251 = vpack.c.bf16 %v213, %v210
    %v252 = vpack.c.bf16 %v221, %v218
    %v253 = vpack.c.bf16 %v229, %v226
    %v254 = vpack.c.bf16 %v237, %v234
    %v255 = vpack.c.bf16 %v245, %v242
    %v264 = vunpack.c.l.b16 %v248
    %v265 = vunpack.c.h.b16 %v248
    %v266 = vunpack.c.l.b16 %v249
    %v267 = vunpack.c.h.b16 %v249
    %v268 = vunpack.c.l.b16 %v250
    %v269 = vunpack.c.h.b16 %v250
    %v270 = vunpack.c.l.b16 %v251
    %v271 = vunpack.c.h.b16 %v251
    %v272 = vunpack.c.l.b16 %v252
    %v273 = vunpack.c.h.b16 %v252
    %v274 = vunpack.c.l.b16 %v253
    %v275 = vunpack.c.h.b16 %v253
    %v276 = vunpack.c.l.b16 %v254
    %v277 = vunpack.c.h.b16 %v254
    %v278 = vunpack.c.l.b16 %v255
    %v279 = vunpack.c.h.b16 %v255
    %v280 = vpack.c.b16 %v264, %v264
    %v281 = vpack.c.b16 %v265, %v265
    %v282 = vpack.c.b16 %v266, %v266
    %v283 = vpack.c.b16 %v267, %v267
    %v284 = vpack.c.b16 %v268, %v268
    %v285 = vpack.c.b16 %v269, %v269
    %v286 = vpack.c.b16 %v270, %v270
    %v287 = vpack.c.b16 %v271, %v271
    %v288 = vpack.c.b16 %v272, %v272
    %v289 = vpack.c.b16 %v273, %v273
    %v290 = vpack.c.b16 %v274, %v274
    %v291 = vpack.c.b16 %v275, %v275
    %v292 = vpack.c.b16 %v276, %v276
    %v293 = vpack.c.b16 %v277, %v277
    %v294 = vpack.c.b16 %v278, %v278
    %v295 = vpack.c.b16 %v279, %v279
    %312 = vst [vmem:[#allocation2] sm:$0xf] %v280
    %313 = vst [vmem:[#allocation2 + $0x4] sm:$0xf] %v281
    %314 = vst [vmem:[#allocation2 + $0x8] sm:$0xf] %v282
    %315 = vst [vmem:[#allocation2 + $0xc] sm:$0xf] %v283
    %316 = vst [vmem:[#allocation2 + $0x10] sm:$0xf] %v284
    %317 = vst [vmem:[#allocation2 + $0x14] sm:$0xf] %v285
    %318 = vst [vmem:[#allocation2 + $0x18] sm:$0xf] %v286
    %319 = vst [vmem:[#allocation2 + $0x1c] sm:$0xf] %v287
    %320 = vst [vmem:[#allocation2 + $0x20] sm:$0xf] %v288
    %321 = vst [vmem:[#allocation2 + $0x24] sm:$0xf] %v289
    %322 = vst [vmem:[#allocation2 + $0x28] sm:$0xf] %v290
    %323 = vst [vmem:[#allocation2 + $0x2c] sm:$0xf] %v291
    %324 = vst [vmem:[#allocation2 + $0x30] sm:$0xf] %v292
    %325 = vst [vmem:[#allocation2 + $0x34] sm:$0xf] %v293
    %326 = vst [vmem:[#allocation2 + $0x38] sm:$0xf] %v294
    %327 = vst [vmem:[#allocation2 + $0x3c] sm:$0xf] %v295
    // Predicated region
    $region14: #{seq2seq_forward.6} parent=1 // pred_check
      _
    $region15: #{seq2seq_forward.6} parent=1 // pred_check_branch
      %329 = sbr.rel (0) target = $region17
    $region16: #{seq2seq_forward.6} parent=1 // pred_region
      %s331 = ssub.s32 1024, 1024
      %332 = vsyncadd [#allocation3], %s331
      %s333 = sshll.u32 [#allocation2], 4
      %s334 = int_to_ptr.vmem [resolvable:$true] %s333
      %339 = dma.vmem_to_hbm [thread:$0]  %s334, 1024, %s3, [#allocation3], 64, 64, 4
    $region17: #{seq2seq_forward.6} parent=1 // pred_fallthru
      _
    // Predicated region
    $region18: #{seq2seq_forward.6} parent=1 // pred_check
      _
    $region19: #{seq2seq_forward.6} parent=1 // pred_check_branch
      %341 = sbr.rel (0) target = $region21
    $region20: #{seq2seq_forward.6} parent=1 // pred_region
      %342 = dma.done [#allocation3], 1024
    $region21: #{seq2seq_forward.6} parent=1 // pred_fallthru
      _
    %343 = vsyncpa [#allocation3], 1

// kernel: seq2seq_forward.4
$region0: #{seq2seq_forward.4}
  #allocation0 [shape = 'u32[]', space=smem, size = 0x4, offset = 0x4, fixed_abs, tag = 'smem constant byte address 0x4 - core index']
  #allocation1 [shape = 'u32[144,128]{1,0:T(1,128)}', space=vmem, size = 0x12000, scoped, tag = 'internal scratch']
  %s0 = inlined_call_operand.vmem [shape: bf16[128,128], index: 0, kind: input, shape index: {}]
  %s1 = inlined_call_operand.vmem [shape: bf16[128,384], index: 1, kind: input, shape index: {}]
  %s2 = inlined_call_operand.vmem [shape: f32[1,384], index: 2, kind: input, shape index: {}]
  %s3 = inlined_call_operand.vmem [shape: bf16[128,384], index: 3, kind: output, shape index: {}]
  %s4 = sld [smem:[#allocation0]]
  $region22: #{seq2seq_forward.4} parent=0
    _
  %s6 = ssub.s32 1, %s4
  %s7 = scalar_select 0, %s6, %s4
  // Predicated region
  $region2: #{seq2seq_forward.4} parent=0 // pred_check
    _
  $region3: #{seq2seq_forward.4} parent=0 // pred_check_branch
    %9 = sbr.rel (0) target = $region5
  $region4: #{seq2seq_forward.4} parent=0 // pred_region
    _
  $region5: #{seq2seq_forward.4} parent=0 // pred_fallthru
    _
  // Predicated region
  $region6: #{seq2seq_forward.4} parent=0 // pred_check
    _
  $region7: #{seq2seq_forward.4} parent=0 // pred_check_branch
    %11 = sbr.rel (0) target = $region9
  $region8: #{seq2seq_forward.4} parent=0 // pred_region
    _
  $region9: #{seq2seq_forward.4} parent=0 // pred_fallthru
    _
  // Predicated region
  $region10: #{seq2seq_forward.4} parent=0 // pred_check
    _
  $region11: #{seq2seq_forward.4} parent=0 // pred_check_branch
    %13 = sbr.rel (0) target = $region13
  $region12: #{seq2seq_forward.4} parent=0 // pred_region
    _
  $region13: #{seq2seq_forward.4} parent=0 // pred_fallthru
    _
  %v15 = vld [vmem:[%s0] sm:$0xf]
  %v16 = vld [vmem:[%s0 + $0x4] sm:$0xf]
  %v17 = vld [vmem:[%s0 + $0x8] sm:$0xf]
  %v18 = vld [vmem:[%s0 + $0xc] sm:$0xf]
  %v19 = vld [vmem:[%s0 + $0x10] sm:$0xf]
  %v20 = vld [vmem:[%s0 + $0x14] sm:$0xf]
  %v21 = vld [vmem:[%s0 + $0x18] sm:$0xf]
  %v22 = vld [vmem:[%s0 + $0x1c] sm:$0xf]
  %v23 = vld [vmem:[%s0 + $0x20] sm:$0xf]
  %v24 = vld [vmem:[%s0 + $0x24] sm:$0xf]
  %v25 = vld [vmem:[%s0 + $0x28] sm:$0xf]
  %v26 = vld [vmem:[%s0 + $0x2c] sm:$0xf]
  %v27 = vld [vmem:[%s0 + $0x30] sm:$0xf]
  %v28 = vld [vmem:[%s0 + $0x34] sm:$0xf]
  %v29 = vld [vmem:[%s0 + $0x38] sm:$0xf]
  %v30 = vld [vmem:[%s0 + $0x3c] sm:$0xf]
  %v31 = vld [vmem:[%s1] sm:$0xff]
  %v32 = vld [vmem:[%s1 + $0x8] sm:$0xf]
  %v33 = vld [vmem:[%s1 + $0xc] sm:$0xff]
  %v34 = vld [vmem:[%s1 + $0x14] sm:$0xf]
  %v35 = vld [vmem:[%s1 + $0x18] sm:$0xff]
  %v36 = vld [vmem:[%s1 + $0x20] sm:$0xf]
  %v37 = vld [vmem:[%s1 + $0x24] sm:$0xff]
  %v38 = vld [vmem:[%s1 + $0x2c] sm:$0xf]
  %v39 = vld [vmem:[%s1 + $0x30] sm:$0xff]
  %v40 = vld [vmem:[%s1 + $0x38] sm:$0xf]
  %v41 = vld [vmem:[%s1 + $0x3c] sm:$0xff]
  %v42 = vld [vmem:[%s1 + $0x44] sm:$0xf]
  %v43 = vld [vmem:[%s1 + $0x48] sm:$0xff]
  %v44 = vld [vmem:[%s1 + $0x50] sm:$0xf]
  %v45 = vld [vmem:[%s1 + $0x54] sm:$0xff]
  %v46 = vld [vmem:[%s1 + $0x5c] sm:$0xf]
  %v47 = vld [vmem:[%s1 + $0x60] sm:$0xff]
  %v48 = vld [vmem:[%s1 + $0x68] sm:$0xf]
  %v49 = vld [vmem:[%s1 + $0x6c] sm:$0xff]
  %v50 = vld [vmem:[%s1 + $0x74] sm:$0xf]
  %v51 = vld [vmem:[%s1 + $0x78] sm:$0xff]
  %v52 = vld [vmem:[%s1 + $0x80] sm:$0xf]
  %v53 = vld [vmem:[%s1 + $0x84] sm:$0xff]
  %v54 = vld [vmem:[%s1 + $0x8c] sm:$0xf]
  %v55 = vld [vmem:[%s1 + $0x90] sm:$0xff]
  %v56 = vld [vmem:[%s1 + $0x98] sm:$0xf]
  %v57 = vld [vmem:[%s1 + $0x9c] sm:$0xff]
  %v58 = vld [vmem:[%s1 + $0xa4] sm:$0xf]
  %v59 = vld [vmem:[%s1 + $0xa8] sm:$0xff]
  %v60 = vld [vmem:[%s1 + $0xb0] sm:$0xf]
  %v61 = vld [vmem:[%s1 + $0xb4] sm:$0xff]
  %v62 = vld [vmem:[%s1 + $0xbc] sm:$0xf]
  %v63 = vld [vmem:[%s2] sm:$0x7]
  %v65 = vlaneseq
  %v66 = vshrl.u32 %v65, 7
  %v67 = vsub.s32 0, %v66
  %v68 = vrot.slane %v63, %v67
  %v69 = vlaneseq
  %v70 = vshrl.u32 %v69, 7
  %v71 = vsub.s32 1, %v70
  %v72 = vrot.slane %v63, %v71
  %v73 = vlaneseq
  %v74 = vshrl.u32 %v73, 7
  %v75 = vsub.s32 2, %v74
  %v76 = vrot.slane %v63, %v75
  %v96 = vunpack.c.l.b16 %v15
  %v97 = vunpack.c.l.b16 %v16
  %v98 = vunpack.c.l.b16 %v17
  %v99 = vunpack.c.l.b16 %v18
  %v100 = vunpack.c.l.b16 %v19
  %v101 = vunpack.c.l.b16 %v20
  %v102 = vunpack.c.l.b16 %v21
  %v103 = vunpack.c.l.b16 %v22
  %v104 = vunpack.c.l.b16 %v23
  %v105 = vunpack.c.l.b16 %v24
  %v106 = vunpack.c.l.b16 %v25
  %v107 = vunpack.c.l.b16 %v26
  %v108 = vunpack.c.l.b16 %v27
  %v109 = vunpack.c.l.b16 %v28
  %v110 = vunpack.c.l.b16 %v29
  %v111 = vunpack.c.l.b16 %v30
  %v112 = vpack.c.b16 %v97, %v96
  %v113 = vpack.c.b16 %v99, %v98
  %v114 = vpack.c.b16 %v101, %v100
  %v115 = vpack.c.b16 %v103, %v102
  %v116 = vpack.c.b16 %v105, %v104
  %v117 = vpack.c.b16 %v107, %v106
  %v118 = vpack.c.b16 %v109, %v108
  %v119 = vpack.c.b16 %v111, %v110
  %v160 = vunpack.c.l.b16 %v31
  %v161 = vunpack.c.h.b16 %v31
  %v162 = vunpack.c.l.b16 %v32
  %v163 = vunpack.c.l.b16 %v33
  %v164 = vunpack.c.h.b16 %v33
  %v165 = vunpack.c.l.b16 %v34
  %v166 = vunpack.c.l.b16 %v35
  %v167 = vunpack.c.h.b16 %v35
  %v168 = vunpack.c.l.b16 %v36
  %v169 = vunpack.c.l.b16 %v37
  %v170 = vunpack.c.h.b16 %v37
  %v171 = vunpack.c.l.b16 %v38
  %v172 = vunpack.c.l.b16 %v39
  %v173 = vunpack.c.h.b16 %v39
  %v174 = vunpack.c.l.b16 %v40
  %v175 = vunpack.c.l.b16 %v41
  %v176 = vunpack.c.h.b16 %v41
  %v177 = vunpack.c.l.b16 %v42
  %v178 = vunpack.c.l.b16 %v43
  %v179 = vunpack.c.h.b16 %v43
  %v180 = vunpack.c.l.b16 %v44
  %v181 = vunpack.c.l.b16 %v45
  %v182 = vunpack.c.h.b16 %v45
  %v183 = vunpack.c.l.b16 %v46
  %v184 = vunpack.c.l.b16 %v47
  %v185 = vunpack.c.h.b16 %v47
  %v186 = vunpack.c.l.b16 %v48
  %v187 = vunpack.c.l.b16 %v49
  %v188 = vunpack.c.h.b16 %v49
  %v189 = vunpack.c.l.b16 %v50
  %v190 = vunpack.c.l.b16 %v51
  %v191 = vunpack.c.h.b16 %v51
  %v192 = vunpack.c.l.b16 %v52
  %v193 = vunpack.c.l.b16 %v53
  %v194 = vunpack.c.h.b16 %v53
  %v195 = vunpack.c.l.b16 %v54
  %v196 = vunpack.c.l.b16 %v55
  %v197 = vunpack.c.h.b16 %v55
  %v198 = vunpack.c.l.b16 %v56
  %v199 = vunpack.c.l.b16 %v57
  %v200 = vunpack.c.h.b16 %v57
  %v201 = vunpack.c.l.b16 %v58
  %v202 = vunpack.c.l.b16 %v59
  %v203 = vunpack.c.h.b16 %v59
  %v204 = vunpack.c.l.b16 %v60
  %v205 = vunpack.c.l.b16 %v61
  %v206 = vunpack.c.h.b16 %v61
  %v207 = vunpack.c.l.b16 %v62
  %v208 = vpack.c.b16 %v163, %v160
  %v209 = vpack.c.b16 %v164, %v161
  %v210 = vpack.c.b16 %v165, %v162
  %v211 = vpack.c.b16 %v169, %v166
  %v212 = vpack.c.b16 %v170, %v167
  %v213 = vpack.c.b16 %v171, %v168
  %v214 = vpack.c.b16 %v175, %v172
  %v215 = vpack.c.b16 %v176, %v173
  %v216 = vpack.c.b16 %v177, %v174
  %v217 = vpack.c.b16 %v181, %v178
  %v218 = vpack.c.b16 %v182, %v179
  %v219 = vpack.c.b16 %v183, %v180
  %v220 = vpack.c.b16 %v187, %v184
  %v221 = vpack.c.b16 %v188, %v185
  %v222 = vpack.c.b16 %v189, %v186
  %v223 = vpack.c.b16 %v193, %v190
  %v224 = vpack.c.b16 %v194, %v191
  %v225 = vpack.c.b16 %v195, %v192
  %v226 = vpack.c.b16 %v199, %v196
  %v227 = vpack.c.b16 %v200, %v197
  %v228 = vpack.c.b16 %v201, %v198
  %v229 = vpack.c.b16 %v205, %v202
  %v230 = vpack.c.b16 %v206, %v203
  %v231 = vpack.c.b16 %v207, %v204
  %256 = vmatprep.subr.bf16.mxu0 %v209
  %257 = vmatpush1.bf16.msra.mxu0 %v208
  %258 = vmatprep.subr.bf16.mxu0 %v212
  %259 = vmatpush1.bf16.msra.mxu0 %v211
  %260 = vmatprep.subr.bf16.mxu0 %v215
  %261 = vmatpush1.bf16.msra.mxu0 %v214
  %262 = vmatprep.subr.bf16.mxu0 %v218
  %263 = vmatpush1.bf16.msra.mxu0 %v217
  %264 = vmatprep.subr.bf16.mxu0 %v221
  %265 = vmatpush1.bf16.msra.mxu0 %v220
  %266 = vmatprep.subr.bf16.mxu0 %v224
  %267 = vmatpush1.bf16.msra.mxu0 %v223
  %268 = vmatprep.subr.bf16.mxu0 %v227
  %269 = vmatpush1.bf16.msra.mxu0 %v226
  %270 = vmatprep.subr.bf16.mxu0 %v230
  %271 = vmatpush1.bf16.msra.mxu0 %v229
  %272 = vmatprep.subr.bf16.mxu0 0
  %273 = vmatpush1.bf16.msra.mxu0 0
  %274 = vmatprep.subr.bf16.mxu0 0
  %275 = vmatpush1.bf16.msra.mxu0 0
  %276 = vmatprep.subr.bf16.mxu0 0
  %277 = vmatpush1.bf16.msra.mxu0 0
  %278 = vmatprep.subr.bf16.mxu0 0
  %279 = vmatpush1.bf16.msra.mxu0 0
  %280 = vmatprep.subr.bf16.mxu0 0
  %281 = vmatpush1.bf16.msra.mxu0 0
  %282 = vmatprep.subr.bf16.mxu0 0
  %283 = vmatpush1.bf16.msra.mxu0 0
  %284 = vmatprep.subr.bf16.mxu0 0
  %285 = vmatpush1.bf16.msra.mxu0 0
  %286 = vmatprep.subr.bf16.mxu0 0
  %287 = vmatpush1.bf16.msra.mxu0 0
  %288 = vmatprep.mubr.bf16.mxu0 0
  %289 = vmatmul.mubr.bf16.gmra.mrb[0].mxu0 %v112
  %v290 = vpop.f32.mrb[0].mxu0
  %v291 = vadd.f32 %v68, %v290
  %v292 = vpop.f32.mrb[0].mxu0
  %v293 = vadd.f32 %v72, %v292
  %v294 = vpop.f32.mrb[0].mxu0
  %v295 = vadd.f32 %v68, %v294
  %v296 = vpop.f32.mrb[0].mxu0
  %v297 = vadd.f32 %v72, %v296
  %298 = vmatprep.mubr.bf16.mxu0 0
  %299 = vmatmul.mubr.bf16.gmra.mrb[0].mxu0 %v113
  %v300 = vpop.f32.mrb[0].mxu0
  %v301 = vadd.f32 %v68, %v300
  %v302 = vpop.f32.mrb[0].mxu0
  %v303 = vadd.f32 %v72, %v302
  %v304 = vpop.f32.mrb[0].mxu0
  %v305 = vadd.f32 %v68, %v304
  %v306 = vpop.f32.mrb[0].mxu0
  %v307 = vadd.f32 %v72, %v306
  %308 = vmatprep.mubr.bf16.mxu0 0
  %309 = vmatmul.mubr.bf16.gmra.mrb[0].mxu0 %v114
  %v310 = vpop.f32.mrb[0].mxu0
  %v311 = vadd.f32 %v68, %v310
  %v312 = vpop.f32.mrb[0].mxu0
  %v313 = vadd.f32 %v72, %v312
  %v314 = vpop.f32.mrb[0].mxu0
  %v315 = vadd.f32 %v68, %v314
  %v316 = vpop.f32.mrb[0].mxu0
  %v317 = vadd.f32 %v72, %v316
  %318 = vmatprep.mubr.bf16.mxu0 0
  %319 = vmatmul.mubr.bf16.gmra.mrb[0].mxu0 %v115
  %v320 = vpop.f32.mrb[0].mxu0
  %v321 = vadd.f32 %v68, %v320
  %v322 = vpop.f32.mrb[0].mxu0
  %v323 = vadd.f32 %v72, %v322
  %v324 = vpop.f32.mrb[0].mxu0
  %v325 = vadd.f32 %v68, %v324
  %v326 = vpop.f32.mrb[0].mxu0
  %v327 = vadd.f32 %v72, %v326
  %328 = vmatprep.mubr.bf16.mxu0 0
  %329 = vmatmul.mubr.bf16.gmra.mrb[0].mxu0 %v116
  %v330 = vpop.f32.mrb[0].mxu0
  %v331 = vadd.f32 %v68, %v330
  %v332 = vpop.f32.mrb[0].mxu0
  %v333 = vadd.f32 %v72, %v332
  %v334 = vpop.f32.mrb[0].mxu0
  %v335 = vadd.f32 %v68, %v334
  %v336 = vpop.f32.mrb[0].mxu0
  %v337 = vadd.f32 %v72, %v336
  %338 = vmatprep.mubr.bf16.mxu0 0
  %339 = vmatmul.mubr.bf16.gmra.mrb[0].mxu0 %v117
  %v340 = vpop.f32.mrb[0].mxu0
  %v341 = vadd.f32 %v68, %v340
  %v342 = vpop.f32.mrb[0].mxu0
  %v343 = vadd.f32 %v72, %v342
  %v344 = vpop.f32.mrb[0].mxu0
  %v345 = vadd.f32 %v68, %v344
  %v346 = vpop.f32.mrb[0].mxu0
  %v347 = vadd.f32 %v72, %v346
  %348 = vmatprep.mubr.bf16.mxu0 0
  %349 = vmatmul.mubr.bf16.gmra.mrb[0].mxu0 %v118
  %v350 = vpop.f32.mrb[0].mxu0
  %v351 = vadd.f32 %v68, %v350
  %v352 = vpop.f32.mrb[0].mxu0
  %v353 = vadd.f32 %v72, %v352
  %v354 = vpop.f32.mrb[0].mxu0
  %v355 = vadd.f32 %v68, %v354
  %v356 = vpop.f32.mrb[0].mxu0
  %v357 = vadd.f32 %v72, %v356
  %358 = vmatprep.mubr.bf16.mxu0 0
  %359 = vmatmul.mubr.bf16.gmra.mrb[0].mxu0 %v119
  %v360 = vpop.f32.mrb[0].mxu0
  %v361 = vadd.f32 %v68, %v360
  %v362 = vpop.f32.mrb[0].mxu0
  %v363 = vadd.f32 %v72, %v362
  %v364 = vpop.f32.mrb[0].mxu0
  %v365 = vadd.f32 %v68, %v364
  %v366 = vpop.f32.mrb[0].mxu0
  %v367 = vadd.f32 %v72, %v366
  %368 = vdwg.mxu0
  %369 = vmatprep.subr.bf16.mxu0 0
  %370 = vmatpush1.bf16.msra.mxu0 %v210
  %371 = vmatprep.subr.bf16.mxu0 0
  %372 = vmatpush1.bf16.msra.mxu0 %v213
  %373 = vmatprep.subr.bf16.mxu0 0
  %374 = vmatpush1.bf16.msra.mxu0 %v216
  %375 = vmatprep.subr.bf16.mxu0 0
  %376 = vmatpush1.bf16.msra.mxu0 %v219
  %377 = vmatprep.subr.bf16.mxu0 0
  %378 = vmatpush1.bf16.msra.mxu0 %v222
  %379 = vmatprep.subr.bf16.mxu0 0
  %380 = vmatpush1.bf16.msra.mxu0 %v225
  %381 = vmatprep.subr.bf16.mxu0 0
  %382 = vmatpush1.bf16.msra.mxu0 %v228
  %383 = vmatprep.subr.bf16.mxu0 0
  %384 = vmatpush1.bf16.msra.mxu0 %v231
  %385 = vmatprep.subr.bf16.mxu0 0
  %386 = vmatpush1.bf16.msra.mxu0 0
  %387 = vmatprep.subr.bf16.mxu0 0
  %388 = vmatpush1.bf16.msra.mxu0 0
  %389 = vmatprep.subr.bf16.mxu0 0
  %390 = vmatpush1.bf16.msra.mxu0 0
  %391 = vmatprep.subr.bf16.mxu0 0
  %392 = vmatpush1.bf16.msra.mxu0 0
  %393 = vmatprep.subr.bf16.mxu0 0
  %394 = vmatpush1.bf16.msra.mxu0 0
  %395 = vmatprep.subr.bf16.mxu0 0
  %396 = vmatpush1.bf16.msra.mxu0 0
  %397 = vmatprep.subr.bf16.mxu0 0
  %398 = vmatpush1.bf16.msra.mxu0 0
  %399 = vmatprep.subr.bf16.mxu0 0
  %400 = vmatpush1.bf16.msra.mxu0 0
  %401 = vmatprep.mubr.bf16.mxu0 0
  %402 = vmatmul.mubr.bf16.gmra.mrb[0].mxu0 %v112
  %v403 = vpop.f32.mrb[0].mxu0
  %v404 = vadd.f32 %v76, %v403
  %v405 = vpop.f32.mrb[0].mxu0
  %v406 = vpop.f32.mrb[0].mxu0
  %v407 = vadd.f32 %v76, %v406
  %v408 = vpop.f32.mrb[0].mxu0
  %409 = vmatprep.mubr.bf16.mxu0 0
  %410 = vmatmul.mubr.bf16.gmra.mrb[0].mxu0 %v113
  %v411 = vpop.f32.mrb[0].mxu0
  %v412 = vadd.f32 %v76, %v411
  %v413 = vpop.f32.mrb[0].mxu0
  %v414 = vpop.f32.mrb[0].mxu0
  %v415 = vadd.f32 %v76, %v414
  %v416 = vpop.f32.mrb[0].mxu0
  %417 = vmatprep.mubr.bf16.mxu0 0
  %418 = vmatmul.mubr.bf16.gmra.mrb[0].mxu0 %v114
  %v419 = vpop.f32.mrb[0].mxu0
  %v420 = vadd.f32 %v76, %v419
  %v421 = vpop.f32.mrb[0].mxu0
  %v422 = vpop.f32.mrb[0].mxu0
  %v423 = vadd.f32 %v76, %v422
  %v424 = vpop.f32.mrb[0].mxu0
  %425 = vmatprep.mubr.bf16.mxu0 0
  %426 = vmatmul.mubr.bf16.gmra.mrb[0].mxu0 %v115
  %v427 = vpop.f32.mrb[0].mxu0
  %v428 = vadd.f32 %v76, %v427
  %v429 = vpop.f32.mrb[0].mxu0
  %v430 = vpop.f32.mrb[0].mxu0
  %v431 = vadd.f32 %v76, %v430
  %v432 = vpop.f32.mrb[0].mxu0
  %433 = vmatprep.mubr.bf16.mxu0 0
  %434 = vmatmul.mubr.bf16.gmra.mrb[0].mxu0 %v116
  %v435 = vpop.f32.mrb[0].mxu0
  %v436 = vadd.f32 %v76, %v435
  %v437 = vpop.f32.mrb[0].mxu0
  %v438 = vpop.f32.mrb[0].mxu0
  %v439 = vadd.f32 %v76, %v438
  %v440 = vpop.f32.mrb[0].mxu0
  %441 = vmatprep.mubr.bf16.mxu0 0
  %442 = vmatmul.mubr.bf16.gmra.mrb[0].mxu0 %v117
  %v443 = vpop.f32.mrb[0].mxu0
  %v444 = vadd.f32 %v76, %v443
  %v445 = vpop.f32.mrb[0].mxu0
  %v446 = vpop.f32.mrb[0].mxu0
  %v447 = vadd.f32 %v76, %v446
  %v448 = vpop.f32.mrb[0].mxu0
  %449 = vmatprep.mubr.bf16.mxu0 0
  %450 = vmatmul.mubr.bf16.gmra.mrb[0].mxu0 %v118
  %v451 = vpop.f32.mrb[0].mxu0
  %v452 = vadd.f32 %v76, %v451
  %v453 = vpop.f32.mrb[0].mxu0
  %v454 = vpop.f32.mrb[0].mxu0
  %v455 = vadd.f32 %v76, %v454
  %v456 = vpop.f32.mrb[0].mxu0
  %457 = vmatprep.mubr.bf16.mxu0 0
  %458 = vmatmul.mubr.bf16.gmra.mrb[0].mxu0 %v119
  %v459 = vpop.f32.mrb[0].mxu0
  %v460 = vadd.f32 %v76, %v459
  %v461 = vpop.f32.mrb[0].mxu0
  %v462 = vpop.f32.mrb[0].mxu0
  %v463 = vadd.f32 %v76, %v462
  %v464 = vpop.f32.mrb[0].mxu0
  %465 = vdwg.mxu0
  %v466 = vpack.c.bf16 %v295, %v291
  %v467 = vpack.c.bf16 %v297, %v293
  %v468 = vpack.c.bf16 %v407, %v404
  %v469 = vpack.c.bf16 %v305, %v301
  %v470 = vpack.c.bf16 %v307, %v303
  %v471 = vpack.c.bf16 %v415, %v412
  %v472 = vpack.c.bf16 %v315, %v311
  %v473 = vpack.c.bf16 %v317, %v313
  %v474 = vpack.c.bf16 %v423, %v420
  %v475 = vpack.c.bf16 %v325, %v321
  %v476 = vpack.c.bf16 %v327, %v323
  %v477 = vpack.c.bf16 %v431, %v428
  %v478 = vpack.c.bf16 %v335, %v331
  %v479 = vpack.c.bf16 %v337, %v333
  %v480 = vpack.c.bf16 %v439, %v436
  %v481 = vpack.c.bf16 %v345, %v341
  %v482 = vpack.c.bf16 %v347, %v343
  %v483 = vpack.c.bf16 %v447, %v444
  %v484 = vpack.c.bf16 %v355, %v351
  %v485 = vpack.c.bf16 %v357, %v353
  %v486 = vpack.c.bf16 %v455, %v452
  %v487 = vpack.c.bf16 %v365, %v361
  %v488 = vpack.c.bf16 %v367, %v363
  %v489 = vpack.c.bf16 %v463, %v460
  %v514 = vunpack.c.l.b16 %v466
  %v515 = vunpack.c.l.b16 %v467
  %v516 = vunpack.c.l.b16 %v468
  %v517 = vunpack.c.h.b16 %v466
  %v518 = vunpack.c.h.b16 %v467
  %v519 = vunpack.c.h.b16 %v468
  %v520 = vunpack.c.l.b16 %v469
  %v521 = vunpack.c.l.b16 %v470
  %v522 = vunpack.c.l.b16 %v471
  %v523 = vunpack.c.h.b16 %v469
  %v524 = vunpack.c.h.b16 %v470
  %v525 = vunpack.c.h.b16 %v471
  %v526 = vunpack.c.l.b16 %v472
  %v527 = vunpack.c.l.b16 %v473
  %v528 = vunpack.c.l.b16 %v474
  %v529 = vunpack.c.h.b16 %v472
  %v530 = vunpack.c.h.b16 %v473
  %v531 = vunpack.c.h.b16 %v474
  %v532 = vunpack.c.l.b16 %v475
  %v533 = vunpack.c.l.b16 %v476
  %v534 = vunpack.c.l.b16 %v477
  %v535 = vunpack.c.h.b16 %v475
  %v536 = vunpack.c.h.b16 %v476
  %v537 = vunpack.c.h.b16 %v477
  %v538 = vunpack.c.l.b16 %v478
  %v539 = vunpack.c.l.b16 %v479
  %v540 = vunpack.c.l.b16 %v480
  %v541 = vunpack.c.h.b16 %v478
  %v542 = vunpack.c.h.b16 %v479
  %v543 = vunpack.c.h.b16 %v480
  %v544 = vunpack.c.l.b16 %v481
  %v545 = vunpack.c.l.b16 %v482
  %v546 = vunpack.c.l.b16 %v483
  %v547 = vunpack.c.h.b16 %v481
  %v548 = vunpack.c.h.b16 %v482
  %v549 = vunpack.c.h.b16 %v483
  %v550 = vunpack.c.l.b16 %v484
  %v551 = vunpack.c.l.b16 %v485
  %v552 = vunpack.c.l.b16 %v486
  %v553 = vunpack.c.h.b16 %v484
  %v554 = vunpack.c.h.b16 %v485
  %v555 = vunpack.c.h.b16 %v486
  %v556 = vunpack.c.l.b16 %v487
  %v557 = vunpack.c.l.b16 %v488
  %v558 = vunpack.c.l.b16 %v489
  %v559 = vunpack.c.h.b16 %v487
  %v560 = vunpack.c.h.b16 %v488
  %v561 = vunpack.c.h.b16 %v489
  %v562 = vpack.c.b16 %v515, %v514
  %v563 = vpack.c.b16 %v516, %v516
  %v564 = vpack.c.b16 %v518, %v517
  %v565 = vpack.c.b16 %v519, %v519
  %v566 = vpack.c.b16 %v521, %v520
  %v567 = vpack.c.b16 %v522, %v522
  %v568 = vpack.c.b16 %v524, %v523
  %v569 = vpack.c.b16 %v525, %v525
  %v570 = vpack.c.b16 %v527, %v526
  %v571 = vpack.c.b16 %v528, %v528
  %v572 = vpack.c.b16 %v530, %v529
  %v573 = vpack.c.b16 %v531, %v531
  %v574 = vpack.c.b16 %v533, %v532
  %v575 = vpack.c.b16 %v534, %v534
  %v576 = vpack.c.b16 %v536, %v535
  %v577 = vpack.c.b16 %v537, %v537
  %v578 = vpack.c.b16 %v539, %v538
  %v579 = vpack.c.b16 %v540, %v540
  %v580 = vpack.c.b16 %v542, %v541
  %v581 = vpack.c.b16 %v543, %v543
  %v582 = vpack.c.b16 %v545, %v544
  %v583 = vpack.c.b16 %v546, %v546
  %v584 = vpack.c.b16 %v548, %v547
  %v585 = vpack.c.b16 %v549, %v549
  %v586 = vpack.c.b16 %v551, %v550
  %v587 = vpack.c.b16 %v552, %v552
  %v588 = vpack.c.b16 %v554, %v553
  %v589 = vpack.c.b16 %v555, %v555
  %v590 = vpack.c.b16 %v557, %v556
  %v591 = vpack.c.b16 %v558, %v558
  %v592 = vpack.c.b16 %v560, %v559
  %v593 = vpack.c.b16 %v561, %v561
  %626 = vst [vmem:[%s3] sm:$0xff] %v562
  %627 = vst [vmem:[%s3 + $0x8] sm:$0xf] %v563
  %628 = vst [vmem:[%s3 + $0xc] sm:$0xff] %v564
  %629 = vst [vmem:[%s3 + $0x14] sm:$0xf] %v565
  %630 = vst [vmem:[%s3 + $0x18] sm:$0xff] %v566
  %631 = vst [vmem:[%s3 + $0x20] sm:$0xf] %v567
  %632 = vst [vmem:[%s3 + $0x24] sm:$0xff] %v568
  %633 = vst [vmem:[%s3 + $0x2c] sm:$0xf] %v569
  %634 = vst [vmem:[%s3 + $0x30] sm:$0xff] %v570
  %635 = vst [vmem:[%s3 + $0x38] sm:$0xf] %v571
  %636 = vst [vmem:[%s3 + $0x3c] sm:$0xff] %v572
  %637 = vst [vmem:[%s3 + $0x44] sm:$0xf] %v573
  %638 = vst [vmem:[%s3 + $0x48] sm:$0xff] %v574
  %639 = vst [vmem:[%s3 + $0x50] sm:$0xf] %v575
  %640 = vst [vmem:[%s3 + $0x54] sm:$0xff] %v576
  %641 = vst [vmem:[%s3 + $0x5c] sm:$0xf] %v577
  %642 = vst [vmem:[%s3 + $0x60] sm:$0xff] %v578
  %643 = vst [vmem:[%s3 + $0x68] sm:$0xf] %v579
  %644 = vst [vmem:[%s3 + $0x6c] sm:$0xff] %v580
  %645 = vst [vmem:[%s3 + $0x74] sm:$0xf] %v581
  %646 = vst [vmem:[%s3 + $0x78] sm:$0xff] %v582
  %647 = vst [vmem:[%s3 + $0x80] sm:$0xf] %v583
  %648 = vst [vmem:[%s3 + $0x84] sm:$0xff] %v584
  %649 = vst [vmem:[%s3 + $0x8c] sm:$0xf] %v585
  %650 = vst [vmem:[%s3 + $0x90] sm:$0xff] %v586
  %651 = vst [vmem:[%s3 + $0x98] sm:$0xf] %v587
  %652 = vst [vmem:[%s3 + $0x9c] sm:$0xff] %v588
  %653 = vst [vmem:[%s3 + $0xa4] sm:$0xf] %v589
  %654 = vst [vmem:[%s3 + $0xa8] sm:$0xff] %v590
  %655 = vst [vmem:[%s3 + $0xb0] sm:$0xf] %v591
  %656 = vst [vmem:[%s3 + $0xb4] sm:$0xff] %v592
  %657 = vst [vmem:[%s3 + $0xbc] sm:$0xf] %v593
  // Predicated region
  $region14: #{seq2seq_forward.4} parent=0 // pred_check
    _
  $region15: #{seq2seq_forward.4} parent=0 // pred_check_branch
    %659 = sbr.rel (0) target = $region17
  $region16: #{seq2seq_forward.4} parent=0 // pred_region
    _
  $region17: #{seq2seq_forward.4} parent=0 // pred_fallthru
    _
  // Predicated region
  $region18: #{seq2seq_forward.4} parent=0 // pred_check
    _
  $region19: #{seq2seq_forward.4} parent=0 // pred_check_branch
    %661 = sbr.rel (0) target = $region21
  $region20: #{seq2seq_forward.4} parent=0 // pred_region
    _
  $region21: #{seq2seq_forward.4} parent=0 // pred_fallthru
    _

// kernel: seq2seq_forward.7
$region0: #{seq2seq_forward.7}
  #allocation0 [shape = 'u32[]', space=smem, size = 0x4, offset = 0x4, fixed_abs, tag = 'smem constant byte address 0x4 - core index']
  #allocation1 [shape = 'u32[144,128]{1,0:T(1,128)}', space=vmem, size = 0x12000, scoped, tag = 'internal scratch']
  #allocation2 [shape = 'f32[8,128]{1,0:T(8,128)}', space=vmem, size = 0x1000, scoped, tag = 'scratch operand']
  #allocation3 [shape = 'bf16[8,128]{1,0:T(8,128)(2,1)}', space=vmem, size = 0x800, scoped, tag = 'scratch operand']
  #allocation4 [shape = 'bf16[8,128]{1,0:T(8,128)(2,1)}', space=vmem, size = 0x800, scoped, tag = 'scratch operand']
  #allocation5 [shape = 's32[8,1]{1,0:T(8,128)}', space=vmem, size = 0x1000, scoped, tag = 'scratch operand']
  #allocation6 [shape = 'f32[8,1]{1,0:T(8,128)}', space=vmem, size = 0x1000, scoped, tag = 'scratch operand']
  #allocation7 [shape = 's32[8,1]{1,0:T(8,128)}', space=vmem, size = 0x1000, scoped, tag = 'scratch operand']
  #allocation8 [shape = 's32[1]{0}', space=sflag, size = 0x4, scoped, tag = 'scoped memory for seq2seq_forward.7']
  #allocation9 [shape = 'u8[512]{0}', space=smem, size = 0x200, scoped, tag = 'prefetched SMEM operand 0']
  %s0 = inlined_call_operand.hbm [shape: s32[5], index: 0, kind: input, shape index: {}]
  %s1 = inlined_call_operand.hbm [shape: s32[6,8,1], index: 1, kind: input, shape index: {}]
  %s2 = inlined_call_operand.hbm [shape: f32[8,128], index: 2, kind: input, shape index: {}]
  %s3 = inlined_call_operand.hbm [shape: bf16[8,16,128], index: 3, kind: input, shape index: {}]
  %s4 = inlined_call_operand.hbm [shape: bf16[8,16,128], index: 4, kind: input, shape index: {}]
  %s5 = inlined_call_operand.hbm [shape: f32[8,16], index: 5, kind: input, shape index: {}]
  %s6 = inlined_call_operand.hbm [shape: bf16[128,128], index: 6, kind: input, shape index: {}]
  %s7 = inlined_call_operand.hbm [shape: bf16[128,128], index: 7, kind: input, shape index: {}]
  %s8 = inlined_call_operand.hbm [shape: f32[1,128], index: 8, kind: input, shape index: {}]
  %s9 = inlined_call_operand.hbm [shape: bf16[128,384], index: 9, kind: input, shape index: {}]
  %s10 = inlined_call_operand.hbm [shape: bf16[128,384], index: 10, kind: input, shape index: {}]
  %s11 = inlined_call_operand.hbm [shape: f32[1,384], index: 11, kind: input, shape index: {}]
  %s12 = inlined_call_operand.hbm [shape: bf16[128,384], index: 12, kind: input, shape index: {}]
  %s13 = inlined_call_operand.hbm [shape: f32[1,384], index: 13, kind: input, shape index: {}]
  %s14 = inlined_call_operand.hbm [shape: bf16[128,128], index: 14, kind: input, shape index: {}]
  %s15 = inlined_call_operand.hbm [shape: bf16[128,128], index: 15, kind: input, shape index: {}]
  %s16 = inlined_call_operand.hbm [shape: bf16[128,128], index: 16, kind: input, shape index: {}]
  %s17 = inlined_call_operand.hbm [shape: f32[1,128], index: 17, kind: input, shape index: {}]
  %s18 = inlined_call_operand.hbm [shape: f32[5,8,128], index: 18, kind: output, shape index: {}]
  %s19 = sld [smem:[#allocation0]]
  $region181: #{seq2seq_forward.7} parent=0
    _
  %s21 = ssub.s32 1, %s19
  %s22 = scalar_select 0, %s21, %s19
  %24 = dma.hbm_to_smem %s0, 16, [#allocation9], [#allocation8]
  %25 = dma.done [#allocation8], 16
  %26 = sfence
  $region1: #{seq2seq_forward.7} parent=0
    #allocation10 [shape = 'u8[24576]{0}', space=vmem, size = 0x6000, scoped, tag = 'input window, operand 1, single buffered']
    #allocation11 [shape = 's32[2]{0}', space=sflag, size = 0x8, scoped, tag = 'scoped memory for seq2seq_forward.7']
    #allocation12 [shape = 's32[2]{0}', space=sflag, size = 0x8, scoped, tag = 'scoped memory for seq2seq_forward.7']
    #allocation13 [shape = 'u8[4096]{0}', space=vmem, size = 0x1000, scoped, tag = 'input window, operand 2, single buffered']
    #allocation14 [shape = 's32[1]{0}', space=sflag, size = 0x4, scoped, tag = 'scoped memory for seq2seq_forward.7']
    #allocation15 [shape = 'u8[32768]{0}', space=vmem, size = 0x8000, scoped, tag = 'input window, operand 3, single buffered']
    #allocation16 [shape = 'u8[32768]{0}', space=vmem, size = 0x8000, scoped, tag = 'input window, operand 4, single buffered']
    #allocation17 [shape = 's32[1]{0}', space=sflag, size = 0x4, scoped, tag = 'scoped memory for seq2seq_forward.7']
    #allocation18 [shape = 'u8[4096]{0}', space=vmem, size = 0x1000, scoped, tag = 'input window, operand 5, single buffered']
    #allocation19 [shape = 'u8[32768]{0}', space=vmem, size = 0x8000, scoped, tag = 'input window, operand 6, single buffered']
    #allocation20 [shape = 's32[1]{0}', space=sflag, size = 0x4, scoped, tag = 'scoped memory for seq2seq_forward.7']
    #allocation21 [shape = 'u8[32768]{0}', space=vmem, size = 0x8000, scoped, tag = 'input window, operand 7, single buffered']
    #allocation22 [shape = 'u8[512]{0}', space=vmem, size = 0x400, scoped, tag = 'input window, operand 8, single buffered']
    #allocation23 [shape = 's32[1]{0}', space=sflag, size = 0x4, scoped, tag = 'scoped memory for seq2seq_forward.7']
    #allocation24 [shape = 'u8[98304]{0}', space=vmem, size = 0x18000, scoped, tag = 'input window, operand 9, single buffered']
    #allocation25 [shape = 'u8[98304]{0}', space=vmem, size = 0x18000, scoped, tag = 'input window, operand 10, single buffered']
    #allocation26 [shape = 's32[1]{0}', space=sflag, size = 0x4, scoped, tag = 'scoped memory for seq2seq_forward.7']
    #allocation27 [shape = 'u8[1536]{0}', space=vmem, size = 0x800, scoped, tag = 'input window, operand 11, single buffered']
    #allocation28 [shape = 'u8[98304]{0}', space=vmem, size = 0x18000, scoped, tag = 'input window, operand 12, single buffered']
    #allocation29 [shape = 's32[1]{0}', space=sflag, size = 0x4, scoped, tag = 'scoped memory for seq2seq_forward.7']
    #allocation30 [shape = 'u8[1536]{0}', space=vmem, size = 0x800, scoped, tag = 'input window, operand 13, single buffered']
    #allocation31 [shape = 'u8[32768]{0}', space=vmem, size = 0x8000, scoped, tag = 'input window, operand 14, single buffered']
    #allocation32 [shape = 's32[1]{0}', space=sflag, size = 0x4, scoped, tag = 'scoped memory for seq2seq_forward.7']
    #allocation33 [shape = 'u8[32768]{0}', space=vmem, size = 0x8000, scoped, tag = 'input window, operand 15, single buffered']
    #allocation34 [shape = 'u8[32768]{0}', space=vmem, size = 0x8000, scoped, tag = 'input window, operand 16, single buffered']
    #allocation35 [shape = 's32[1]{0}', space=sflag, size = 0x4, scoped, tag = 'scoped memory for seq2seq_forward.7']
    #allocation36 [shape = 'u8[512]{0}', space=vmem, size = 0x400, scoped, tag = 'input window, operand 17, single buffered']
    #allocation37 [shape = 'u8[8192]{0}', space=vmem, size = 0x2000, scoped, tag = 'output window, operand 0']
    %27 = vsyncpa [#allocation11], 0
    %28 = vsyncpa [#allocation14], 0
    %29 = vsyncpa [#allocation17], 0
    %30 = vsyncpa [#allocation20], 0
    %31 = vsyncpa [#allocation23], 0
    %32 = vsyncpa [#allocation26], 0
    %33 = vsyncpa [#allocation29], 0
    %34 = vsyncpa [#allocation32], 0
    %35 = vsyncpa [#allocation35], 0
    %36 = vsyncpa [#allocation12], 0
    %s37 = scalar_lea.sflag [#allocation12], 1
    %38 = vsyncpa %s37, 0
    loop: start=0, step=1, limit=7
    $region2: #{seq2seq_forward.7} parent=1 // loop_pre_header
      _
    $region3: #{seq2seq_forward.7} parent=1 // loop_header
      %s40 = sphi 0, %s44
      %p41 = scmp.ge.s32.totalorder %s40, 7
      %s47 = sphi 0, %s59
      %s48 = sphi 0, %s55
      %s49 = sphi 0, %s47
      %s50 = sphi 0, %s48
      %s51 = sphi 0, %s49
      %s52 = sphi 0, %s50
      %s60 = sphi 0, %s60
      %s62 = sphi 0, %s60
      %s63 = sphi 0, %s62
      %s77 = sphi 0, %s63
      %s81 = sphi 0, %s81
      %s83 = sphi 0, %s81
      %s84 = sphi 0, %s83
      %s98 = sphi 0, %s84
      %s102 = sphi 0, %s102
      %s104 = sphi 0, %s102
      %s105 = sphi 0, %s104
      %s119 = sphi 0, %s105
      %s123 = sphi 0, %s123
      %s125 = sphi 0, %s123
      %s126 = sphi 0, %s125
      %s140 = sphi 0, %s126
      %s144 = sphi 0, %s144
      %s146 = sphi 0, %s144
      %s147 = sphi 0, %s146
      %s161 = sphi 0, %s147
      %s165 = sphi 0, %s165
      %s167 = sphi 0, %s165
      %s168 = sphi 0, %s167
      %s182 = sphi 0, %s168
      %s186 = sphi 0, %s186
      %s188 = sphi 0, %s186
      %s189 = sphi 0, %s188
      %s203 = sphi 0, %s189
      %s207 = sphi 0, %s207
      %s209 = sphi 0, %s207
      %s210 = sphi 0, %s209
      %s224 = sphi 0, %s210
      %s228 = sphi 0, %s228
      %s230 = sphi 0, %s228
      %s231 = sphi 0, %s230
      %s245 = sphi 0, %s231
      %s249 = sphi 0, %s249
      %s251 = sphi 0, %s249
      %s252 = sphi 0, %s251
      %s266 = sphi 0, %s252
      %s270 = sphi 0, %s270
      %s272 = sphi 0, %s270
      %s273 = sphi 0, %s272
      %s287 = sphi 0, %s273
      %s291 = sphi 0, %s291
      %s293 = sphi 0, %s291
      %s294 = sphi 0, %s293
      %s308 = sphi 0, %s294
      %s312 = sphi 0, %s312
      %s314 = sphi 0, %s312
      %s315 = sphi 0, %s314
      %s329 = sphi 0, %s315
      %s335 = sphi 0, %s337
      %s338 = sphi 0, %s335
      %s339 = sphi 0, %s338
      %s355 = sphi 0, %s339
      %s361 = sphi 0, %s363
      %s364 = sphi 0, %s361
      %s365 = sphi 0, %s364
      %s381 = sphi 0, %s365
      %s387 = sphi 0, %s389
      %s390 = sphi 0, %s387
      %s391 = sphi 0, %s390
      %s407 = sphi 0, %s391
      %s413 = sphi 0, %s415
      %s416 = sphi 0, %s413
      %s417 = sphi 0, %s416
      %s433 = sphi 0, %s417
      %s441 = sphi 0, %s443
      %s444 = sphi 0, %s441
      %s445 = sphi 0, %s444
      %s461 = sphi 0, %s445
    $region4: #{seq2seq_forward.7} parent=1 // loop_header_branch
      %43 = sbr.rel (%p41) target = $region8
    $region5: #{seq2seq_forward.7} parent=1 // loop_body
      %s45 = ssub.s32 %s40, 1
      %s46 = ssub.s32 %s40, 2
      %s53 = sadd.s32 1, %s48
      %p54 = scmp.ge.s32.totalorder %s53, 1
      %s55 = scalar_select %p54, 0, %s53
      %s56 = sadd.s32 1, %s47
      %s57 = scalar_select %p54, %s56, %s47
      %p58 = scmp.ge.s32.totalorder %s57, 5
      %s59 = scalar_select %p58, 0, %s57
      %s61 = sadd.s32 %s60, 1
      %p64 = scmp.eq.s32.totalorder %s40, 4
      %p65 = scmp.ne.s32.totalorder %s60, %s62
      %p66 = scmp.eq.s32.totalorder %s40, 0
      %p67 = por %p65, %p66
      %p68 = scmp.ne.s32.totalorder %s60, %s62
      %p69 = scmp.eq.s32.totalorder %s45, 4
      %p70 = por %p68, %p69
      %p71 = scmp.ne.s32.totalorder %s62, %s63
      %p72 = scmp.eq.s32.totalorder %s45, 0
      %p73 = por %p71, %p72
      %p74 = scmp.ne.s32.totalorder %s62, %s63
      %p75 = scmp.eq.s32.totalorder %s46, 4
      %p76 = por %p74, %p75
      %p78 = scmp.ne.s32.totalorder %s63, %s77
      %p79 = scmp.eq.s32.totalorder %s46, 0
      %p80 = por %p78, %p79
      %s82 = sadd.s32 %s81, 1
      %p85 = scmp.eq.s32.totalorder %s40, 4
      %p86 = scmp.ne.s32.totalorder %s81, %s83
      %p87 = scmp.eq.s32.totalorder %s40, 0
      %p88 = por %p86, %p87
      %p89 = scmp.ne.s32.totalorder %s81, %s83
      %p90 = scmp.eq.s32.totalorder %s45, 4
      %p91 = por %p89, %p90
      %p92 = scmp.ne.s32.totalorder %s83, %s84
      %p93 = scmp.eq.s32.totalorder %s45, 0
      %p94 = por %p92, %p93
      %p95 = scmp.ne.s32.totalorder %s83, %s84
      %p96 = scmp.eq.s32.totalorder %s46, 4
      %p97 = por %p95, %p96
      %p99 = scmp.ne.s32.totalorder %s84, %s98
      %p100 = scmp.eq.s32.totalorder %s46, 0
      %p101 = por %p99, %p100
      %s103 = sadd.s32 %s102, 1
      %p106 = scmp.eq.s32.totalorder %s40, 4
      %p107 = scmp.ne.s32.totalorder %s102, %s104
      %p108 = scmp.eq.s32.totalorder %s40, 0
      %p109 = por %p107, %p108
      %p110 = scmp.ne.s32.totalorder %s102, %s104
      %p111 = scmp.eq.s32.totalorder %s45, 4
      %p112 = por %p110, %p111
      %p113 = scmp.ne.s32.totalorder %s104, %s105
      %p114 = scmp.eq.s32.totalorder %s45, 0
      %p115 = por %p113, %p114
      %p116 = scmp.ne.s32.totalorder %s104, %s105
      %p117 = scmp.eq.s32.totalorder %s46, 4
      %p118 = por %p116, %p117
      %p120 = scmp.ne.s32.totalorder %s105, %s119
      %p121 = scmp.eq.s32.totalorder %s46, 0
      %p122 = por %p120, %p121
      %s124 = sadd.s32 %s123, 1
      %p127 = scmp.eq.s32.totalorder %s40, 4
      %p128 = scmp.ne.s32.totalorder %s123, %s125
      %p129 = scmp.eq.s32.totalorder %s40, 0
      %p130 = por %p128, %p129
      %p131 = scmp.ne.s32.totalorder %s123, %s125
      %p132 = scmp.eq.s32.totalorder %s45, 4
      %p133 = por %p131, %p132
      %p134 = scmp.ne.s32.totalorder %s125, %s126
      %p135 = scmp.eq.s32.totalorder %s45, 0
      %p136 = por %p134, %p135
      %p137 = scmp.ne.s32.totalorder %s125, %s126
      %p138 = scmp.eq.s32.totalorder %s46, 4
      %p139 = por %p137, %p138
      %p141 = scmp.ne.s32.totalorder %s126, %s140
      %p142 = scmp.eq.s32.totalorder %s46, 0
      %p143 = por %p141, %p142
      %s145 = sadd.s32 %s144, 1
      %p148 = scmp.eq.s32.totalorder %s40, 4
      %p149 = scmp.ne.s32.totalorder %s144, %s146
      %p150 = scmp.eq.s32.totalorder %s40, 0
      %p151 = por %p149, %p150
      %p152 = scmp.ne.s32.totalorder %s144, %s146
      %p153 = scmp.eq.s32.totalorder %s45, 4
      %p154 = por %p152, %p153
      %p155 = scmp.ne.s32.totalorder %s146, %s147
      %p156 = scmp.eq.s32.totalorder %s45, 0
      %p157 = por %p155, %p156
      %p158 = scmp.ne.s32.totalorder %s146, %s147
      %p159 = scmp.eq.s32.totalorder %s46, 4
      %p160 = por %p158, %p159
      %p162 = scmp.ne.s32.totalorder %s147, %s161
      %p163 = scmp.eq.s32.totalorder %s46, 0
      %p164 = por %p162, %p163
      %s166 = sadd.s32 %s165, 1
      %p169 = scmp.eq.s32.totalorder %s40, 4
      %p170 = scmp.ne.s32.totalorder %s165, %s167
      %p171 = scmp.eq.s32.totalorder %s40, 0
      %p172 = por %p170, %p171
      %p173 = scmp.ne.s32.totalorder %s165, %s167
      %p174 = scmp.eq.s32.totalorder %s45, 4
      %p175 = por %p173, %p174
      %p176 = scmp.ne.s32.totalorder %s167, %s168
      %p177 = scmp.eq.s32.totalorder %s45, 0
      %p178 = por %p176, %p177
      %p179 = scmp.ne.s32.totalorder %s167, %s168
      %p180 = scmp.eq.s32.totalorder %s46, 4
      %p181 = por %p179, %p180
      %p183 = scmp.ne.s32.totalorder %s168, %s182
      %p184 = scmp.eq.s32.totalorder %s46, 0
      %p185 = por %p183, %p184
      %s187 = sadd.s32 %s186, 1
      %p190 = scmp.eq.s32.totalorder %s40, 4
      %p191 = scmp.ne.s32.totalorder %s186, %s188
      %p192 = scmp.eq.s32.totalorder %s40, 0
      %p193 = por %p191, %p192
      %p194 = scmp.ne.s32.totalorder %s186, %s188
      %p195 = scmp.eq.s32.totalorder %s45, 4
      %p196 = por %p194, %p195
      %p197 = scmp.ne.s32.totalorder %s188, %s189
      %p198 = scmp.eq.s32.totalorder %s45, 0
      %p199 = por %p197, %p198
      %p200 = scmp.ne.s32.totalorder %s188, %s189
      %p201 = scmp.eq.s32.totalorder %s46, 4
      %p202 = por %p200, %p201
      %p204 = scmp.ne.s32.totalorder %s189, %s203
      %p205 = scmp.eq.s32.totalorder %s46, 0
      %p206 = por %p204, %p205
      %s208 = sadd.s32 %s207, 1
      %p211 = scmp.eq.s32.totalorder %s40, 4
      %p212 = scmp.ne.s32.totalorder %s207, %s209
      %p213 = scmp.eq.s32.totalorder %s40, 0
      %p214 = por %p212, %p213
      %p215 = scmp.ne.s32.totalorder %s207, %s209
      %p216 = scmp.eq.s32.totalorder %s45, 4
      %p217 = por %p215, %p216
      %p218 = scmp.ne.s32.totalorder %s209, %s210
      %p219 = scmp.eq.s32.totalorder %s45, 0
      %p220 = por %p218, %p219
      %p221 = scmp.ne.s32.totalorder %s209, %s210
      %p222 = scmp.eq.s32.totalorder %s46, 4
      %p223 = por %p221, %p222
      %p225 = scmp.ne.s32.totalorder %s210, %s224
      %p226 = scmp.eq.s32.totalorder %s46, 0
      %p227 = por %p225, %p226
      %s229 = sadd.s32 %s228, 1
      %p232 = scmp.eq.s32.totalorder %s40, 4
      %p233 = scmp.ne.s32.totalorder %s228, %s230
      %p234 = scmp.eq.s32.totalorder %s40, 0
      %p235 = por %p233, %p234
      %p236 = scmp.ne.s32.totalorder %s228, %s230
      %p237 = scmp.eq.s32.totalorder %s45, 4
      %p238 = por %p236, %p237
      %p239 = scmp.ne.s32.totalorder %s230, %s231
      %p240 = scmp.eq.s32.totalorder %s45, 0
      %p241 = por %p239, %p240
      %p242 = scmp.ne.s32.totalorder %s230, %s231
      %p243 = scmp.eq.s32.totalorder %s46, 4
      %p244 = por %p242, %p243
      %p246 = scmp.ne.s32.totalorder %s231, %s245
      %p247 = scmp.eq.s32.totalorder %s46, 0
      %p248 = por %p246, %p247
      %s250 = sadd.s32 %s249, 1
      %p253 = scmp.eq.s32.totalorder %s40, 4
      %p254 = scmp.ne.s32.totalorder %s249, %s251
      %p255 = scmp.eq.s32.totalorder %s40, 0
      %p256 = por %p254, %p255
      %p257 = scmp.ne.s32.totalorder %s249, %s251
      %p258 = scmp.eq.s32.totalorder %s45, 4
      %p259 = por %p257, %p258
      %p260 = scmp.ne.s32.totalorder %s251, %s252
      %p261 = scmp.eq.s32.totalorder %s45, 0
      %p262 = por %p260, %p261
      %p263 = scmp.ne.s32.totalorder %s251, %s252
      %p264 = scmp.eq.s32.totalorder %s46, 4
      %p265 = por %p263, %p264
      %p267 = scmp.ne.s32.totalorder %s252, %s266
      %p268 = scmp.eq.s32.totalorder %s46, 0
      %p269 = por %p267, %p268
      %s271 = sadd.s32 %s270, 1
      %p274 = scmp.eq.s32.totalorder %s40, 4
      %p275 = scmp.ne.s32.totalorder %s270, %s272
      %p276 = scmp.eq.s32.totalorder %s40, 0
      %p277 = por %p275, %p276
      %p278 = scmp.ne.s32.totalorder %s270, %s272
      %p279 = scmp.eq.s32.totalorder %s45, 4
      %p280 = por %p278, %p279
      %p281 = scmp.ne.s32.totalorder %s272, %s273
      %p282 = scmp.eq.s32.totalorder %s45, 0
      %p283 = por %p281, %p282
      %p284 = scmp.ne.s32.totalorder %s272, %s273
      %p285 = scmp.eq.s32.totalorder %s46, 4
      %p286 = por %p284, %p285
      %p288 = scmp.ne.s32.totalorder %s273, %s287
      %p289 = scmp.eq.s32.totalorder %s46, 0
      %p290 = por %p288, %p289
      %s292 = sadd.s32 %s291, 1
      %p295 = scmp.eq.s32.totalorder %s40, 4
      %p296 = scmp.ne.s32.totalorder %s291, %s293
      %p297 = scmp.eq.s32.totalorder %s40, 0
      %p298 = por %p296, %p297
      %p299 = scmp.ne.s32.totalorder %s291, %s293
      %p300 = scmp.eq.s32.totalorder %s45, 4
      %p301 = por %p299, %p300
      %p302 = scmp.ne.s32.totalorder %s293, %s294
      %p303 = scmp.eq.s32.totalorder %s45, 0
      %p304 = por %p302, %p303
      %p305 = scmp.ne.s32.totalorder %s293, %s294
      %p306 = scmp.eq.s32.totalorder %s46, 4
      %p307 = por %p305, %p306
      %p309 = scmp.ne.s32.totalorder %s294, %s308
      %p310 = scmp.eq.s32.totalorder %s46, 0
      %p311 = por %p309, %p310
      %s313 = sadd.s32 %s312, 1
      %p316 = scmp.eq.s32.totalorder %s40, 4
      %p317 = scmp.ne.s32.totalorder %s312, %s314
      %p318 = scmp.eq.s32.totalorder %s40, 0
      %p319 = por %p317, %p318
      %p320 = scmp.ne.s32.totalorder %s312, %s314
      %p321 = scmp.eq.s32.totalorder %s45, 4
      %p322 = por %p320, %p321
      %p323 = scmp.ne.s32.totalorder %s314, %s315
      %p324 = scmp.eq.s32.totalorder %s45, 0
      %p325 = por %p323, %p324
      %p326 = scmp.ne.s32.totalorder %s314, %s315
      %p327 = scmp.eq.s32.totalorder %s46, 4
      %p328 = por %p326, %p327
      %p330 = scmp.ne.s32.totalorder %s315, %s329
      %p331 = scmp.eq.s32.totalorder %s46, 0
      %p332 = por %p330, %p331
      %s333 = ssub.s32 %s48, %s55
      %p334 = scmp.eq.s32.totalorder %s333, 0
      %s336 = sadd.s32 %s335, 1
      %s337 = scalar_select %p334, %s335, %s336
      %p340 = pneg %p334
      %p341 = scmp.eq.s32.totalorder %s40, 4
      %p342 = por %p340, %p341
      %p343 = scmp.ne.s32.totalorder %s335, %s338
      %p344 = scmp.eq.s32.totalorder %s40, 0
      %p345 = por %p343, %p344
      %p346 = scmp.ne.s32.totalorder %s335, %s338
      %p347 = scmp.eq.s32.totalorder %s45, 4
      %p348 = por %p346, %p347
      %p349 = scmp.ne.s32.totalorder %s338, %s339
      %p350 = scmp.eq.s32.totalorder %s45, 0
      %p351 = por %p349, %p350
      %p352 = scmp.ne.s32.totalorder %s338, %s339
      %p353 = scmp.eq.s32.totalorder %s46, 4
      %p354 = por %p352, %p353
      %p356 = scmp.ne.s32.totalorder %s339, %s355
      %p357 = scmp.eq.s32.totalorder %s46, 0
      %p358 = por %p356, %p357
      %s359 = ssub.s32 %s48, %s55
      %p360 = scmp.eq.s32.totalorder %s359, 0
      %s362 = sadd.s32 %s361, 1
      %s363 = scalar_select %p360, %s361, %s362
      %p366 = pneg %p360
      %p367 = scmp.eq.s32.totalorder %s40, 4
      %p368 = por %p366, %p367
      %p369 = scmp.ne.s32.totalorder %s361, %s364
      %p370 = scmp.eq.s32.totalorder %s40, 0
      %p371 = por %p369, %p370
      %p372 = scmp.ne.s32.totalorder %s361, %s364
      %p373 = scmp.eq.s32.totalorder %s45, 4
      %p374 = por %p372, %p373
      %p375 = scmp.ne.s32.totalorder %s364, %s365
      %p376 = scmp.eq.s32.totalorder %s45, 0
      %p377 = por %p375, %p376
      %p378 = scmp.ne.s32.totalorder %s364, %s365
      %p379 = scmp.eq.s32.totalorder %s46, 4
      %p380 = por %p378, %p379
      %p382 = scmp.ne.s32.totalorder %s365, %s381
      %p383 = scmp.eq.s32.totalorder %s46, 0
      %p384 = por %p382, %p383
      %s385 = ssub.s32 %s48, %s55
      %p386 = scmp.eq.s32.totalorder %s385, 0
      %s388 = sadd.s32 %s387, 1
      %s389 = scalar_select %p386, %s387, %s388
      %p392 = pneg %p386
      %p393 = scmp.eq.s32.totalorder %s40, 4
      %p394 = por %p392, %p393
      %p395 = scmp.ne.s32.totalorder %s387, %s390
      %p396 = scmp.eq.s32.totalorder %s40, 0
      %p397 = por %p395, %p396
      %p398 = scmp.ne.s32.totalorder %s387, %s390
      %p399 = scmp.eq.s32.totalorder %s45, 4
      %p400 = por %p398, %p399
      %p401 = scmp.ne.s32.totalorder %s390, %s391
      %p402 = scmp.eq.s32.totalorder %s45, 0
      %p403 = por %p401, %p402
      %p404 = scmp.ne.s32.totalorder %s390, %s391
      %p405 = scmp.eq.s32.totalorder %s46, 4
      %p406 = por %p404, %p405
      %p408 = scmp.ne.s32.totalorder %s391, %s407
      %p409 = scmp.eq.s32.totalorder %s46, 0
      %p410 = por %p408, %p409
      %s411 = ssub.s32 %s48, %s55
      %p412 = scmp.eq.s32.totalorder %s411, 0
      %s414 = sadd.s32 %s413, 1
      %s415 = scalar_select %p412, %s413, %s414
      %p418 = pneg %p412
      %p419 = scmp.eq.s32.totalorder %s40, 4
      %p420 = por %p418, %p419
      %p421 = scmp.ne.s32.totalorder %s413, %s416
      %p422 = scmp.eq.s32.totalorder %s40, 0
      %p423 = por %p421, %p422
      %p424 = scmp.ne.s32.totalorder %s413, %s416
      %p425 = scmp.eq.s32.totalorder %s45, 4
      %p426 = por %p424, %p425
      %p427 = scmp.ne.s32.totalorder %s416, %s417
      %p428 = scmp.eq.s32.totalorder %s45, 0
      %p429 = por %p427, %p428
      %p430 = scmp.ne.s32.totalorder %s416, %s417
      %p431 = scmp.eq.s32.totalorder %s46, 4
      %p432 = por %p430, %p431
      %p434 = scmp.ne.s32.totalorder %s417, %s433
      %p435 = scmp.eq.s32.totalorder %s46, 0
      %p436 = por %p434, %p435
      %s437 = ssub.s32 %s47, %s59
      %s438 = ssub.s32 %s48, %s55
      %s439 = sor.u32 %s437, %s438
      %p440 = scmp.eq.s32.totalorder %s439, 0
      %s442 = sadd.s32 %s441, 1
      %s443 = scalar_select %p440, %s441, %s442
      %p446 = pneg %p440
      %p447 = scmp.eq.s32.totalorder %s40, 4
      %p448 = por %p446, %p447
      %p449 = scmp.ne.s32.totalorder %s441, %s444
      %p450 = scmp.eq.s32.totalorder %s40, 0
      %p451 = por %p449, %p450
      %p452 = scmp.ne.s32.totalorder %s441, %s444
      %p453 = scmp.eq.s32.totalorder %s45, 4
      %p454 = por %p452, %p453
      %p455 = scmp.ne.s32.totalorder %s444, %s445
      %p456 = scmp.eq.s32.totalorder %s45, 0
      %p457 = por %p455, %p456
      %p458 = scmp.ne.s32.totalorder %s444, %s445
      %p459 = scmp.eq.s32.totalorder %s46, 4
      %p460 = por %p458, %p459
      %p462 = scmp.ne.s32.totalorder %s445, %s461
      %p463 = scmp.eq.s32.totalorder %s46, 0
      %p464 = por %p462, %p463
      %p465 = scmp.le.s32.totalorder 1, %s40
      %p466 = scmp.lt.s32.totalorder %s40, 6
      %p467 = pnand %p465, %p466
      %p468 = pneg %p467
      // Predicated region
      $region9: #{seq2seq_forward.7} parent=5 // pred_check
        _
      $region10: #{seq2seq_forward.7} parent=5 // pred_check_branch
        %470 = sbr.rel (%p467) target = $region12
      $region11: #{seq2seq_forward.7} parent=5 // pred_region
        %s471 = ssub.s32 %s40, 1
        // Predicated region
        $region13: #{seq2seq_forward.7} parent=11 // pred_check
          %p472 = pneg %p73
        $region14: #{seq2seq_forward.7} parent=11 // pred_check_branch
          %474 = sbr.rel (%p472) target = $region16
        $region15: #{seq2seq_forward.7} parent=11 // pred_region
          %s476 = ssub.s32 768, 768
          %477 = vsyncadd [#allocation11], %s476
          %s478 = sshll.u32 [#allocation10], 4
          %s479 = int_to_ptr.vmem [resolvable:$true] %s478
          %484 = dma.hbm_to_vmem [thread:$0]  %s1, 768, %s479, [#allocation11], 128, 128, 8
        $region16: #{seq2seq_forward.7} parent=11 // pred_fallthru
          _
        // Predicated region
        $region17: #{seq2seq_forward.7} parent=11 // pred_check
          %p485 = pneg %p94
        $region18: #{seq2seq_forward.7} parent=11 // pred_check_branch
          %487 = sbr.rel (%p485) target = $region20
        $region19: #{seq2seq_forward.7} parent=11 // pred_region
          %s489 = ssub.s32 128, 128
          %490 = vsyncadd [#allocation14], %s489
          %s492 = sshll.u32 [#allocation13], 4
          %s493 = int_to_ptr.vmem [resolvable:$true] %s492
          %495 = dma.hbm_to_vmem [thread:$0]  %s2, 128, %s493, [#allocation14]
        $region20: #{seq2seq_forward.7} parent=11 // pred_fallthru
          _
        // Predicated region
        $region21: #{seq2seq_forward.7} parent=11 // pred_check
          %p496 = pneg %p115
        $region22: #{seq2seq_forward.7} parent=11 // pred_check_branch
          %498 = sbr.rel (%p496) target = $region24
        $region23: #{seq2seq_forward.7} parent=11 // pred_region
          %s500 = ssub.s32 1024, 1024
          %501 = vsyncadd [#allocation14], %s500
          %s502 = sshll.u32 [#allocation15], 4
          %s503 = int_to_ptr.vmem [resolvable:$true] %s502
          %508 = dma.hbm_to_vmem [thread:$0]  %s3, 1024, %s503, [#allocation14], 64, 64, 4
        $region24: #{seq2seq_forward.7} parent=11 // pred_fallthru
          _
        // Predicated region
        $region25: #{seq2seq_forward.7} parent=11 // pred_check
          %p509 = pneg %p136
        $region26: #{seq2seq_forward.7} parent=11 // pred_check_branch
          %511 = sbr.rel (%p509) target = $region28
        $region27: #{seq2seq_forward.7} parent=11 // pred_region
          %s513 = ssub.s32 1024, 1024
          %514 = vsyncadd [#allocation17], %s513
          %s515 = sshll.u32 [#allocation16], 4
          %s516 = int_to_ptr.vmem [resolvable:$true] %s515
          %521 = dma.hbm_to_vmem [thread:$0]  %s4, 1024, %s516, [#allocation17], 64, 64, 4
        $region28: #{seq2seq_forward.7} parent=11 // pred_fallthru
          _
        // Predicated region
        $region29: #{seq2seq_forward.7} parent=11 // pred_check
          %p522 = pneg %p157
        $region30: #{seq2seq_forward.7} parent=11 // pred_check_branch
          %524 = sbr.rel (%p522) target = $region32
        $region31: #{seq2seq_forward.7} parent=11 // pred_region
          %s526 = ssub.s32 128, 128
          %527 = vsyncadd [#allocation17], %s526
          %s529 = sshll.u32 [#allocation18], 4
          %s530 = int_to_ptr.vmem [resolvable:$true] %s529
          %532 = dma.hbm_to_vmem [thread:$0]  %s5, 128, %s530, [#allocation17]
        $region32: #{seq2seq_forward.7} parent=11 // pred_fallthru
          _
        // Predicated region
        $region33: #{seq2seq_forward.7} parent=11 // pred_check
          %p533 = pneg %p178
        $region34: #{seq2seq_forward.7} parent=11 // pred_check_branch
          %535 = sbr.rel (%p533) target = $region36
        $region35: #{seq2seq_forward.7} parent=11 // pred_region
          %s537 = ssub.s32 1024, 1024
          %538 = vsyncadd [#allocation20], %s537
          %s539 = sshll.u32 [#allocation19], 4
          %s540 = int_to_ptr.vmem [resolvable:$true] %s539
          %545 = dma.hbm_to_vmem [thread:$0]  %s6, 1024, %s540, [#allocation20], 64, 64, 4
        $region36: #{seq2seq_forward.7} parent=11 // pred_fallthru
          _
        // Predicated region
        $region37: #{seq2seq_forward.7} parent=11 // pred_check
          %p546 = pneg %p199
        $region38: #{seq2seq_forward.7} parent=11 // pred_check_branch
          %548 = sbr.rel (%p546) target = $region40
        $region39: #{seq2seq_forward.7} parent=11 // pred_region
          %s550 = ssub.s32 1024, 1024
          %551 = vsyncadd [#allocation20], %s550
          %s552 = sshll.u32 [#allocation21], 4
          %s553 = int_to_ptr.vmem [resolvable:$true] %s552
          %558 = dma.hbm_to_vmem [thread:$0]  %s7, 1024, %s553, [#allocation20], 64, 64, 4
        $region40: #{seq2seq_forward.7} parent=11 // pred_fallthru
          _
        // Predicated region
        $region41: #{seq2seq_forward.7} parent=11 // pred_check
          %p559 = pneg %p220
        $region42: #{seq2seq_forward.7} parent=11 // pred_check_branch
          %561 = sbr.rel (%p559) target = $region44
        $region43: #{seq2seq_forward.7} parent=11 // pred_region
          %s563 = ssub.s32 16, 16
          %564 = vsyncadd [#allocation23], %s563
          %s566 = sshll.u32 [#allocation22], 4
          %s567 = int_to_ptr.vmem [resolvable:$true] %s566
          %569 = dma.hbm_to_vmem [thread:$0]  %s8, 16, %s567, [#allocation23]
        $region44: #{seq2seq_forward.7} parent=11 // pred_fallthru
          _
        // Predicated region
        $region45: #{seq2seq_forward.7} parent=11 // pred_check
          %p570 = pneg %p241
        $region46: #{seq2seq_forward.7} parent=11 // pred_check_branch
          %572 = sbr.rel (%p570) target = $region48
        $region47: #{seq2seq_forward.7} parent=11 // pred_region
          %s574 = ssub.s32 3072, 3072
          %575 = vsyncadd [#allocation23], %s574
          %s576 = sshll.u32 [#allocation24], 4
          %s577 = int_to_ptr.vmem [resolvable:$true] %s576
          %582 = dma.hbm_to_vmem [thread:$0]  %s9, 3072, %s577, [#allocation23], 192, 192, 12
        $region48: #{seq2seq_forward.7} parent=11 // pred_fallthru
          _
        // Predicated region
        $region49: #{seq2seq_forward.7} parent=11 // pred_check
          %p583 = pneg %p262
        $region50: #{seq2seq_forward.7} parent=11 // pred_check_branch
          %585 = sbr.rel (%p583) target = $region52
        $region51: #{seq2seq_forward.7} parent=11 // pred_region
          %s587 = ssub.s32 3072, 3072
          %588 = vsyncadd [#allocation26], %s587
          %s589 = sshll.u32 [#allocation25], 4
          %s590 = int_to_ptr.vmem [resolvable:$true] %s589
          %595 = dma.hbm_to_vmem [thread:$0]  %s10, 3072, %s590, [#allocation26], 192, 192, 12
        $region52: #{seq2seq_forward.7} parent=11 // pred_fallthru
          _
        // Predicated region
        $region53: #{seq2seq_forward.7} parent=11 // pred_check
          %p596 = pneg %p283
        $region54: #{seq2seq_forward.7} parent=11 // pred_check_branch
          %598 = sbr.rel (%p596) target = $region56
        $region55: #{seq2seq_forward.7} parent=11 // pred_region
          %s600 = ssub.s32 48, 48
          %601 = vsyncadd [#allocation26], %s600
          %s603 = sshll.u32 [#allocation27], 4
          %s604 = int_to_ptr.vmem [resolvable:$true] %s603
          %606 = dma.hbm_to_vmem [thread:$0]  %s11, 48, %s604, [#allocation26]
        $region56: #{seq2seq_forward.7} parent=11 // pred_fallthru
          _
        // Predicated region
        $region57: #{seq2seq_forward.7} parent=11 // pred_check
          %p607 = pneg %p304
        $region58: #{seq2seq_forward.7} parent=11 // pred_check_branch
          %609 = sbr.rel (%p607) target = $region60
        $region59: #{seq2seq_forward.7} parent=11 // pred_region
          %s611 = ssub.s32 3072, 3072
          %612 = vsyncadd [#allocation29], %s611
          %s613 = sshll.u32 [#allocation28], 4
          %s614 = int_to_ptr.vmem [resolvable:$true] %s613
          %619 = dma.hbm_to_vmem [thread:$0]  %s12, 3072, %s614, [#allocation29], 192, 192, 12
        $region60: #{seq2seq_forward.7} parent=11 // pred_fallthru
          _
        // Predicated region
        $region61: #{seq2seq_forward.7} parent=11 // pred_check
          %p620 = pneg %p325
        $region62: #{seq2seq_forward.7} parent=11 // pred_check_branch
          %622 = sbr.rel (%p620) target = $region64
        $region63: #{seq2seq_forward.7} parent=11 // pred_region
          %s624 = ssub.s32 48, 48
          %625 = vsyncadd [#allocation29], %s624
          %s627 = sshll.u32 [#allocation30], 4
          %s628 = int_to_ptr.vmem [resolvable:$true] %s627
          %630 = dma.hbm_to_vmem [thread:$0]  %s13, 48, %s628, [#allocation29]
        $region64: #{seq2seq_forward.7} parent=11 // pred_fallthru
          _
        // Predicated region
        $region65: #{seq2seq_forward.7} parent=11 // pred_check
          %p631 = pneg %p351
        $region66: #{seq2seq_forward.7} parent=11 // pred_check_branch
          %633 = sbr.rel (%p631) target = $region68
        $region67: #{seq2seq_forward.7} parent=11 // pred_region
          %s635 = ssub.s32 1024, 1024
          %636 = vsyncadd [#allocation32], %s635
          %s637 = smul.addr %s50, 64
          %s638 = scalar_lea.hbm %s14, %s637
          %s639 = sshll.u32 [#allocation31], 4
          %s640 = int_to_ptr.vmem [resolvable:$true] %s639
          %645 = dma.hbm_to_vmem [thread:$0]  %s638, 1024, %s640, [#allocation32], 64, 64, 4
        $region68: #{seq2seq_forward.7} parent=11 // pred_fallthru
          _
        // Predicated region
        $region69: #{seq2seq_forward.7} parent=11 // pred_check
          %p646 = pneg %p377
        $region70: #{seq2seq_forward.7} parent=11 // pred_check_branch
          %648 = sbr.rel (%p646) target = $region72
        $region71: #{seq2seq_forward.7} parent=11 // pred_region
          %s650 = ssub.s32 1024, 1024
          %651 = vsyncadd [#allocation32], %s650
          %s652 = smul.addr %s50, 64
          %s653 = scalar_lea.hbm %s15, %s652
          %s654 = sshll.u32 [#allocation33], 4
          %s655 = int_to_ptr.vmem [resolvable:$true] %s654
          %660 = dma.hbm_to_vmem [thread:$0]  %s653, 1024, %s655, [#allocation32], 64, 64, 4
        $region72: #{seq2seq_forward.7} parent=11 // pred_fallthru
          _
        // Predicated region
        $region73: #{seq2seq_forward.7} parent=11 // pred_check
          %p661 = pneg %p403
        $region74: #{seq2seq_forward.7} parent=11 // pred_check_branch
          %663 = sbr.rel (%p661) target = $region76
        $region75: #{seq2seq_forward.7} parent=11 // pred_region
          %s665 = ssub.s32 1024, 1024
          %666 = vsyncadd [#allocation35], %s665
          %s667 = smul.addr %s50, 64
          %s668 = scalar_lea.hbm %s16, %s667
          %s669 = sshll.u32 [#allocation34], 4
          %s670 = int_to_ptr.vmem [resolvable:$true] %s669
          %675 = dma.hbm_to_vmem [thread:$0]  %s668, 1024, %s670, [#allocation35], 64, 64, 4
        $region76: #{seq2seq_forward.7} parent=11 // pred_fallthru
          _
        // Predicated region
        $region77: #{seq2seq_forward.7} parent=11 // pred_check
          %p676 = pneg %p429
        $region78: #{seq2seq_forward.7} parent=11 // pred_check_branch
          %678 = sbr.rel (%p676) target = $region80
        $region79: #{seq2seq_forward.7} parent=11 // pred_region
          %s680 = ssub.s32 16, 16
          %681 = vsyncadd [#allocation35], %s680
          %s682 = smul.addr %s50, 16
          %s683 = scalar_lea.hbm %s17, %s682
          %s685 = sshll.u32 [#allocation36], 4
          %s686 = int_to_ptr.vmem [resolvable:$true] %s685
          %688 = dma.hbm_to_vmem [thread:$0]  %s683, 16, %s686, [#allocation35]
        $region80: #{seq2seq_forward.7} parent=11 // pred_fallthru
          _
      $region12: #{seq2seq_forward.7} parent=5 // pred_fallthru
        _
      %p689 = scmp.lt.s32.totalorder %s40, 5
      // Predicated region
      $region81: #{seq2seq_forward.7} parent=5 // pred_check
        %p690 = pneg %p689
      $region82: #{seq2seq_forward.7} parent=5 // pred_check_branch
        %692 = sbr.rel (%p690) target = $region84
      $region83: #{seq2seq_forward.7} parent=5 // pred_region
        _
      $region84: #{seq2seq_forward.7} parent=5 // pred_fallthru
        _
      %p693 = scmp.le.s32.totalorder 1, %s40
      %p694 = scmp.lt.s32.totalorder %s40, 6
      %p695 = pnand %p693, %p694
      %p696 = pneg %p695
      // Predicated region
      $region85: #{seq2seq_forward.7} parent=5 // pred_check
        _
      $region86: #{seq2seq_forward.7} parent=5 // pred_check_branch
        %698 = sbr.rel (%p695) target = $region88
      $region87: #{seq2seq_forward.7} parent=5 // pred_region
        %s699 = ssub.s32 %s40, 1
        // Predicated region
        $region89: #{seq2seq_forward.7} parent=87 // pred_check
          %p700 = pneg %p73
        $region90: #{seq2seq_forward.7} parent=87 // pred_check_branch
          %702 = sbr.rel (%p700) target = $region92
        $region91: #{seq2seq_forward.7} parent=87 // pred_region
          %703 = dma.done [#allocation11], 768
        $region92: #{seq2seq_forward.7} parent=87 // pred_fallthru
          _
        // Predicated region
        $region93: #{seq2seq_forward.7} parent=87 // pred_check
          %p704 = pneg %p94
        $region94: #{seq2seq_forward.7} parent=87 // pred_check_branch
          %706 = sbr.rel (%p704) target = $region96
        $region95: #{seq2seq_forward.7} parent=87 // pred_region
          %707 = dma.done [#allocation14], 128
        $region96: #{seq2seq_forward.7} parent=87 // pred_fallthru
          _
        // Predicated region
        $region97: #{seq2seq_forward.7} parent=87 // pred_check
          %p708 = pneg %p115
        $region98: #{seq2seq_forward.7} parent=87 // pred_check_branch
          %710 = sbr.rel (%p708) target = $region100
        $region99: #{seq2seq_forward.7} parent=87 // pred_region
          %711 = dma.done [#allocation14], 1024
        $region100: #{seq2seq_forward.7} parent=87 // pred_fallthru
          _
        // Predicated region
        $region101: #{seq2seq_forward.7} parent=87 // pred_check
          %p712 = pneg %p136
        $region102: #{seq2seq_forward.7} parent=87 // pred_check_branch
          %714 = sbr.rel (%p712) target = $region104
        $region103: #{seq2seq_forward.7} parent=87 // pred_region
          %715 = dma.done [#allocation17], 1024
        $region104: #{seq2seq_forward.7} parent=87 // pred_fallthru
          _
        // Predicated region
        $region105: #{seq2seq_forward.7} parent=87 // pred_check
          %p716 = pneg %p157
        $region106: #{seq2seq_forward.7} parent=87 // pred_check_branch
          %718 = sbr.rel (%p716) target = $region108
        $region107: #{seq2seq_forward.7} parent=87 // pred_region
          %719 = dma.done [#allocation17], 128
        $region108: #{seq2seq_forward.7} parent=87 // pred_fallthru
          _
        // Predicated region
        $region109: #{seq2seq_forward.7} parent=87 // pred_check
          %p720 = pneg %p178
        $region110: #{seq2seq_forward.7} parent=87 // pred_check_branch
          %722 = sbr.rel (%p720) target = $region112
        $region111: #{seq2seq_forward.7} parent=87 // pred_region
          %723 = dma.done [#allocation20], 1024
        $region112: #{seq2seq_forward.7} parent=87 // pred_fallthru
          _
        // Predicated region
        $region113: #{seq2seq_forward.7} parent=87 // pred_check
          %p724 = pneg %p199
        $region114: #{seq2seq_forward.7} parent=87 // pred_check_branch
          %726 = sbr.rel (%p724) target = $region116
        $region115: #{seq2seq_forward.7} parent=87 // pred_region
          %727 = dma.done [#allocation20], 1024
        $region116: #{seq2seq_forward.7} parent=87 // pred_fallthru
          _
        // Predicated region
        $region117: #{seq2seq_forward.7} parent=87 // pred_check
          %p728 = pneg %p220
        $region118: #{seq2seq_forward.7} parent=87 // pred_check_branch
          %730 = sbr.rel (%p728) target = $region120
        $region119: #{seq2seq_forward.7} parent=87 // pred_region
          %731 = dma.done [#allocation23], 16
        $region120: #{seq2seq_forward.7} parent=87 // pred_fallthru
          _
        // Predicated region
        $region121: #{seq2seq_forward.7} parent=87 // pred_check
          %p732 = pneg %p241
        $region122: #{seq2seq_forward.7} parent=87 // pred_check_branch
          %734 = sbr.rel (%p732) target = $region124
        $region123: #{seq2seq_forward.7} parent=87 // pred_region
          %735 = dma.done [#allocation23], 3072
        $region124: #{seq2seq_forward.7} parent=87 // pred_fallthru
          _
        // Predicated region
        $region125: #{seq2seq_forward.7} parent=87 // pred_check
          %p736 = pneg %p262
        $region126: #{seq2seq_forward.7} parent=87 // pred_check_branch
          %738 = sbr.rel (%p736) target = $region128
        $region127: #{seq2seq_forward.7} parent=87 // pred_region
          %739 = dma.done [#allocation26], 3072
        $region128: #{seq2seq_forward.7} parent=87 // pred_fallthru
          _
        // Predicated region
        $region129: #{seq2seq_forward.7} parent=87 // pred_check
          %p740 = pneg %p283
        $region130: #{seq2seq_forward.7} parent=87 // pred_check_branch
          %742 = sbr.rel (%p740) target = $region132
        $region131: #{seq2seq_forward.7} parent=87 // pred_region
          %743 = dma.done [#allocation26], 48
        $region132: #{seq2seq_forward.7} parent=87 // pred_fallthru
          _
        // Predicated region
        $region133: #{seq2seq_forward.7} parent=87 // pred_check
          %p744 = pneg %p304
        $region134: #{seq2seq_forward.7} parent=87 // pred_check_branch
          %746 = sbr.rel (%p744) target = $region136
        $region135: #{seq2seq_forward.7} parent=87 // pred_region
          %747 = dma.done [#allocation29], 3072
        $region136: #{seq2seq_forward.7} parent=87 // pred_fallthru
          _
        // Predicated region
        $region137: #{seq2seq_forward.7} parent=87 // pred_check
          %p748 = pneg %p325
        $region138: #{seq2seq_forward.7} parent=87 // pred_check_branch
          %750 = sbr.rel (%p748) target = $region140
        $region139: #{seq2seq_forward.7} parent=87 // pred_region
          %751 = dma.done [#allocation29], 48
        $region140: #{seq2seq_forward.7} parent=87 // pred_fallthru
          _
        // Predicated region
        $region141: #{seq2seq_forward.7} parent=87 // pred_check
          %p752 = pneg %p351
        $region142: #{seq2seq_forward.7} parent=87 // pred_check_branch
          %754 = sbr.rel (%p752) target = $region144
        $region143: #{seq2seq_forward.7} parent=87 // pred_region
          %755 = dma.done [#allocation32], 1024
        $region144: #{seq2seq_forward.7} parent=87 // pred_fallthru
          _
        // Predicated region
        $region145: #{seq2seq_forward.7} parent=87 // pred_check
          %p756 = pneg %p377
        $region146: #{seq2seq_forward.7} parent=87 // pred_check_branch
          %758 = sbr.rel (%p756) target = $region148
        $region147: #{seq2seq_forward.7} parent=87 // pred_region
          %759 = dma.done [#allocation32], 1024
        $region148: #{seq2seq_forward.7} parent=87 // pred_fallthru
          _
        // Predicated region
        $region149: #{seq2seq_forward.7} parent=87 // pred_check
          %p760 = pneg %p403
        $region150: #{seq2seq_forward.7} parent=87 // pred_check_branch
          %762 = sbr.rel (%p760) target = $region152
        $region151: #{seq2seq_forward.7} parent=87 // pred_region
          %763 = dma.done [#allocation35], 1024
        $region152: #{seq2seq_forward.7} parent=87 // pred_fallthru
          _
        // Predicated region
        $region153: #{seq2seq_forward.7} parent=87 // pred_check
          %p764 = pneg %p429
        $region154: #{seq2seq_forward.7} parent=87 // pred_check_branch
          %766 = sbr.rel (%p764) target = $region156
        $region155: #{seq2seq_forward.7} parent=87 // pred_region
          %767 = dma.done [#allocation35], 16
        $region156: #{seq2seq_forward.7} parent=87 // pred_fallthru
          _
        %p768 = pneg %p73
        %p769 = pneg %p70
        %p770 = pneg %p94
        %p771 = pneg %p91
        %p772 = pneg %p115
        %p773 = pneg %p112
        %p774 = pneg %p136
        %p775 = pneg %p133
        %p776 = pneg %p157
        %p777 = pneg %p154
        %p778 = pneg %p178
        %p779 = pneg %p175
        %p780 = pneg %p199
        %p781 = pneg %p196
        %p782 = pneg %p220
        %p783 = pneg %p217
        %p784 = pneg %p241
        %p785 = pneg %p238
        %p786 = pneg %p262
        %p787 = pneg %p259
        %p788 = pneg %p283
        %p789 = pneg %p280
        %p790 = pneg %p304
        %p791 = pneg %p301
        %p792 = pneg %p325
        %p793 = pneg %p322
        %p794 = pneg %p351
        %p795 = pneg %p348
        %p796 = pneg %p377
        %p797 = pneg %p374
        %p798 = pneg %p403
        %p799 = pneg %p400
        %p800 = pneg %p429
        %p801 = pneg %p426
        %p802 = pneg %p457
        %p803 = pneg %p454
        %s804 = sand.u32 %s444, 1
        %s805 = scalar_lea.sflag [#allocation12], %s804
        %s806 = sand.u32 %s444, 1
        %s807 = smul.addr %s806, 8
        %s808 = scalar_lea.vmem [#allocation37], %s807
        %p810 = scmp.eq.s32.totalorder %s50, 0
        // Predicated region
        $region157: #{seq2seq_forward.7} parent=87 // pred_check
          %p811 = pneg %p810
        $region158: #{seq2seq_forward.7} parent=87 // pred_check_branch
          %813 = sbr.rel (%p811) target = $region160
        $region159: #{seq2seq_forward.7} parent=87 // pred_region
          %p814 = scmp.eq.s32.totalorder %s49, 0
          // Predicated region
          $region161: #{seq2seq_forward.7} parent=159 // pred_check
            %p815 = pneg %p814
          $region162: #{seq2seq_forward.7} parent=159 // pred_check_branch
            %817 = sbr.rel (%p815) target = $region164
          $region163: #{seq2seq_forward.7} parent=159 // pred_region
            %v818 = vld [vmem:[#allocation13] sm:$0xff]
            %819 = vst [vmem:[#allocation2] sm:$0xff] %v818
            %v820 = vld [vmem:[#allocation10] sm:$0xff]
            %vm821 = vcmask 7168
            %822 = vst.msk [vmem:[#allocation5] sm:$0xff] %vm821, %v820
          $region164: #{seq2seq_forward.7} parent=159 // pred_fallthru
            _
          %v823 = vld [vmem:[#allocation2] sm:$0xff]
          %v824 = vlaneseq
          %v825 = vand.u32 %v824, 127
          %v826 = vld [vmem:[#allocation5] sm:$0xff]
          %827 = vset.pattern.permute.xlu0 0
          %828 = vperm.xlu0 %827, %v826
          %v829 = vpop.permute.xlu0 %828
          %vm830 = vcmp.eq.s32.totalorder %v825, %v829
          %v831 = vsel %vm830, 1, 0
          %v832 = vcvt.s32.f32 %v831
          %v833 = vpack.c.bf16 %v832, %v832
          %v834 = vld [vmem:[#allocation19] sm:$0xf]
          %v835 = vld [vmem:[#allocation19 + $0x4] sm:$0xf]
          %v836 = vld [vmem:[#allocation19 + $0x8] sm:$0xf]
          %v837 = vld [vmem:[#allocation19 + $0xc] sm:$0xf]
          %v838 = vld [vmem:[#allocation19 + $0x10] sm:$0xf]
          %v839 = vld [vmem:[#allocation19 + $0x14] sm:$0xf]
          %v840 = vld [vmem:[#allocation19 + $0x18] sm:$0xf]
          %v841 = vld [vmem:[#allocation19 + $0x1c] sm:$0xf]
          %v842 = vld [vmem:[#allocation19 + $0x20] sm:$0xf]
          %v843 = vld [vmem:[#allocation19 + $0x24] sm:$0xf]
          %v844 = vld [vmem:[#allocation19 + $0x28] sm:$0xf]
          %v845 = vld [vmem:[#allocation19 + $0x2c] sm:$0xf]
          %v846 = vld [vmem:[#allocation19 + $0x30] sm:$0xf]
          %v847 = vld [vmem:[#allocation19 + $0x34] sm:$0xf]
          %v848 = vld [vmem:[#allocation19 + $0x38] sm:$0xf]
          %v849 = vld [vmem:[#allocation19 + $0x3c] sm:$0xf]
          %v866 = vunpack.c.l.b16 %v834
          %v867 = vunpack.c.l.b16 %v835
          %v868 = vunpack.c.l.b16 %v836
          %v869 = vunpack.c.l.b16 %v837
          %v870 = vunpack.c.l.b16 %v838
          %v871 = vunpack.c.l.b16 %v839
          %v872 = vunpack.c.l.b16 %v840
          %v873 = vunpack.c.l.b16 %v841
          %v874 = vunpack.c.l.b16 %v842
          %v875 = vunpack.c.l.b16 %v843
          %v876 = vunpack.c.l.b16 %v844
          %v877 = vunpack.c.l.b16 %v845
          %v878 = vunpack.c.l.b16 %v846
          %v879 = vunpack.c.l.b16 %v847
          %v880 = vunpack.c.l.b16 %v848
          %v881 = vunpack.c.l.b16 %v849
          %v882 = vpack.c.b16 %v867, %v866
          %v883 = vpack.c.b16 %v869, %v868
          %v884 = vpack.c.b16 %v871, %v870
          %v885 = vpack.c.b16 %v873, %v872
          %v886 = vpack.c.b16 %v875, %v874
          %v887 = vpack.c.b16 %v877, %v876
          %v888 = vpack.c.b16 %v879, %v878
          %v889 = vpack.c.b16 %v881, %v880
          %898 = vmatprep.subr.bf16.mxu0 0
          %899 = vmatpush1.bf16.msra.mxu0 %v882
          %900 = vmatprep.subr.bf16.mxu0 0
          %901 = vmatpush1.bf16.msra.mxu0 %v883
          %902 = vmatprep.subr.bf16.mxu0 0
          %903 = vmatpush1.bf16.msra.mxu0 %v884
          %904 = vmatprep.subr.bf16.mxu0 0
          %905 = vmatpush1.bf16.msra.mxu0 %v885
          %906 = vmatprep.subr.bf16.mxu0 0
          %907 = vmatpush1.bf16.msra.mxu0 %v886
          %908 = vmatprep.subr.bf16.mxu0 0
          %909 = vmatpush1.bf16.msra.mxu0 %v887
          %910 = vmatprep.subr.bf16.mxu0 0
          %911 = vmatpush1.bf16.msra.mxu0 %v888
          %912 = vmatprep.subr.bf16.mxu0 0
          %913 = vmatpush1.bf16.msra.mxu0 %v889
          %914 = vmatprep.subr.bf16.mxu0 0
          %915 = vmatpush1.bf16.msra.mxu0 0
          %916 = vmatprep.subr.bf16.mxu0 0
          %917 = vmatpush1.bf16.msra.mxu0 0
          %918 = vmatprep.subr.bf16.mxu0 0
          %919 = vmatpush1.bf16.msra.mxu0 0
          %920 = vmatprep.subr.bf16.mxu0 0
          %921 = vmatpush1.bf16.msra.mxu0 0
          %922 = vmatprep.subr.bf16.mxu0 0
          %923 = vmatpush1.bf16.msra.mxu0 0
          %924 = vmatprep.subr.bf16.mxu0 0
          %925 = vmatpush1.bf16.msra.mxu0 0
          %926 = vmatprep.subr.bf16.mxu0 0
          %927 = vmatpush1.bf16.msra.mxu0 0
          %928 = vmatprep.subr.bf16.mxu0 0
          %929 = vmatpush1.bf16.msra.mxu0 0
          %930 = vmatprep.mubr.bf16.mxu0 0
          %931 = vmatmul.mubr.bf16.gmra.mrb[0].mxu0 %v833
          %v932 = vpop.f32.mrb[0].mxu0
          %v933 = vadd.f32 0.0, %v932
          %v934 = vpop.f32.mrb[0].mxu0
          %v935 = vpop.f32.mrb[0].mxu0
          %v936 = vpop.f32.mrb[0].mxu0
          %937 = vdwg.mxu0
          %v938 = vpack.c.bf16 %v933, %v933
          %939 = vst [vmem:[#allocation3] sm:$0xf] %v938
          %v940 = vpack.c.bf16 %v823, %v823
          %v941 = vld [vmem:[#allocation21] sm:$0xf]
          %v942 = vld [vmem:[#allocation21 + $0x4] sm:$0xf]
          %v943 = vld [vmem:[#allocation21 + $0x8] sm:$0xf]
          %v944 = vld [vmem:[#allocation21 + $0xc] sm:$0xf]
          %v945 = vld [vmem:[#allocation21 + $0x10] sm:$0xf]
          %v946 = vld [vmem:[#allocation21 + $0x14] sm:$0xf]
          %v947 = vld [vmem:[#allocation21 + $0x18] sm:$0xf]
          %v948 = vld [vmem:[#allocation21 + $0x1c] sm:$0xf]
          %v949 = vld [vmem:[#allocation21 + $0x20] sm:$0xf]
          %v950 = vld [vmem:[#allocation21 + $0x24] sm:$0xf]
          %v951 = vld [vmem:[#allocation21 + $0x28] sm:$0xf]
          %v952 = vld [vmem:[#allocation21 + $0x2c] sm:$0xf]
          %v953 = vld [vmem:[#allocation21 + $0x30] sm:$0xf]
          %v954 = vld [vmem:[#allocation21 + $0x34] sm:$0xf]
          %v955 = vld [vmem:[#allocation21 + $0x38] sm:$0xf]
          %v956 = vld [vmem:[#allocation21 + $0x3c] sm:$0xf]
          %v973 = vunpack.c.l.b16 %v941
          %v974 = vunpack.c.l.b16 %v942
          %v975 = vunpack.c.l.b16 %v943
          %v976 = vunpack.c.l.b16 %v944
          %v977 = vunpack.c.l.b16 %v945
          %v978 = vunpack.c.l.b16 %v946
          %v979 = vunpack.c.l.b16 %v947
          %v980 = vunpack.c.l.b16 %v948
          %v981 = vunpack.c.l.b16 %v949
          %v982 = vunpack.c.l.b16 %v950
          %v983 = vunpack.c.l.b16 %v951
          %v984 = vunpack.c.l.b16 %v952
          %v985 = vunpack.c.l.b16 %v953
          %v986 = vunpack.c.l.b16 %v954
          %v987 = vunpack.c.l.b16 %v955
          %v988 = vunpack.c.l.b16 %v956
          %v989 = vpack.c.b16 %v974, %v973
          %v990 = vpack.c.b16 %v976, %v975
          %v991 = vpack.c.b16 %v978, %v977
          %v992 = vpack.c.b16 %v980, %v979
          %v993 = vpack.c.b16 %v982, %v981
          %v994 = vpack.c.b16 %v984, %v983
          %v995 = vpack.c.b16 %v986, %v985
          %v996 = vpack.c.b16 %v988, %v987
          %1005 = vmatprep.subr.bf16.mxu0 0
          %1006 = vmatpush1.bf16.msra.mxu0 %v989
          %1007 = vmatprep.subr.bf16.mxu0 0
          %1008 = vmatpush1.bf16.msra.mxu0 %v990
          %1009 = vmatprep.subr.bf16.mxu0 0
          %1010 = vmatpush1.bf16.msra.mxu0 %v991
          %1011 = vmatprep.subr.bf16.mxu0 0
          %1012 = vmatpush1.bf16.msra.mxu0 %v992
          %1013 = vmatprep.subr.bf16.mxu0 0
          %1014 = vmatpush1.bf16.msra.mxu0 %v993
          %1015 = vmatprep.subr.bf16.mxu0 0
          %1016 = vmatpush1.bf16.msra.mxu0 %v994
          %1017 = vmatprep.subr.bf16.mxu0 0
          %1018 = vmatpush1.bf16.msra.mxu0 %v995
          %1019 = vmatprep.subr.bf16.mxu0 0
          %1020 = vmatpush1.bf16.msra.mxu0 %v996
          %1021 = vmatprep.subr.bf16.mxu0 0
          %1022 = vmatpush1.bf16.msra.mxu0 0
          %1023 = vmatprep.subr.bf16.mxu0 0
          %1024 = vmatpush1.bf16.msra.mxu0 0
          %1025 = vmatprep.subr.bf16.mxu0 0
          %1026 = vmatpush1.bf16.msra.mxu0 0
          %1027 = vmatprep.subr.bf16.mxu0 0
          %1028 = vmatpush1.bf16.msra.mxu0 0
          %1029 = vmatprep.subr.bf16.mxu0 0
          %1030 = vmatpush1.bf16.msra.mxu0 0
          %1031 = vmatprep.subr.bf16.mxu0 0
          %1032 = vmatpush1.bf16.msra.mxu0 0
          %1033 = vmatprep.subr.bf16.mxu0 0
          %1034 = vmatpush1.bf16.msra.mxu0 0
          %1035 = vmatprep.subr.bf16.mxu0 0
          %1036 = vmatpush1.bf16.msra.mxu0 0
          %1037 = vmatprep.mubr.bf16.mxu0 0
          %1038 = vmatmul.mubr.bf16.gmra.mrb[0].mxu0 %v940
          %v1039 = vpop.f32.mrb[0].mxu0
          %v1040 = vadd.f32 0.0, %v1039
          %v1041 = vpop.f32.mrb[0].mxu0
          %v1042 = vpop.f32.mrb[0].mxu0
          %v1043 = vpop.f32.mrb[0].mxu0
          %1044 = vdwg.mxu0
          %v1045 = vld [vmem:[#allocation16] sm:$0xf]
          %v1046 = vld [vmem:[#allocation16 + $0x4] sm:$0xf]
          %v1047 = vld [vmem:[#allocation16 + $0x8] sm:$0xf]
          %v1048 = vld [vmem:[#allocation16 + $0xc] sm:$0xf]
          %v1049 = vld [vmem:[#allocation16 + $0x10] sm:$0xf]
          %v1050 = vld [vmem:[#allocation16 + $0x14] sm:$0xf]
          %v1051 = vld [vmem:[#allocation16 + $0x18] sm:$0xf]
          %v1052 = vld [vmem:[#allocation16 + $0x1c] sm:$0xf]
          %v1053 = vld [vmem:[#allocation16 + $0x20] sm:$0xf]
          %v1054 = vld [vmem:[#allocation16 + $0x24] sm:$0xf]
          %v1055 = vld [vmem:[#allocation16 + $0x28] sm:$0xf]
          %v1056 = vld [vmem:[#allocation16 + $0x2c] sm:$0xf]
          %v1057 = vld [vmem:[#allocation16 + $0x30] sm:$0xf]
          %v1058 = vld [vmem:[#allocation16 + $0x34] sm:$0xf]
          %v1059 = vld [vmem:[#allocation16 + $0x38] sm:$0xf]
          %v1060 = vld [vmem:[#allocation16 + $0x3c] sm:$0xf]
          %v1061 = vunpack.c.l.bf16 %v1045
          %v1062 = vunpack.c.l.bf16 %v1046
          %v1063 = vunpack.c.l.bf16 %v1047
          %v1064 = vunpack.c.l.bf16 %v1048
          %v1065 = vunpack.c.l.bf16 %v1049
          %v1066 = vunpack.c.l.bf16 %v1050
          %v1067 = vunpack.c.l.bf16 %v1051
          %v1068 = vunpack.c.l.bf16 %v1052
          %v1069 = vunpack.c.l.bf16 %v1053
          %v1070 = vunpack.c.l.bf16 %v1054
          %v1071 = vunpack.c.l.bf16 %v1055
          %v1072 = vunpack.c.l.bf16 %v1056
          %v1073 = vunpack.c.l.bf16 %v1057
          %v1074 = vunpack.c.l.bf16 %v1058
          %v1075 = vunpack.c.l.bf16 %v1059
          %v1076 = vunpack.c.l.bf16 %v1060
          %v1078 = vcombine.high %v1040, %v1040
          %v1080 = vunpack.c.l.s4 1966171168
          %v1081 = vunpack.c.0.s8 %v1080
          %v1082 = vlaneseq
          %v1083 = vshrl.u32 %v1082, 7
          %v1084 = vsub.s32 %v1081, %v1083
          %v1085 = vrot.slane %v1040, %v1084
          %v1087 = vunpack.c.l.s4 1966171168
          %v1088 = vunpack.c.0.s8 %v1087
          %v1089 = vlaneseq
          %v1090 = vshrl.u32 %v1089, 7
          %v1091 = vsub.s32 %v1088, %v1090
          %v1092 = vrot.slane %v1078, %v1091
          %v1093 = vcombine.high %v1085, %v1085
          %v1094 = vcombine.high %v1092, %v1092
          %v1096 = vunpack.c.l.s4 1966171168
          %v1097 = vunpack.c.0.s8 %v1096
          %v1098 = vlaneseq
          %v1099 = vshrl.u32 %v1098, 7
          %v1100 = vsub.s32 %v1097, %v1099
          %v1101 = vrot.slane %v1085, %v1100
          %v1103 = vunpack.c.l.s4 1966171168
          %v1104 = vunpack.c.0.s8 %v1103
          %v1105 = vlaneseq
          %v1106 = vshrl.u32 %v1105, 7
          %v1107 = vsub.s32 %v1104, %v1106
          %v1108 = vrot.slane %v1092, %v1107
          %v1110 = vunpack.c.l.s4 1966171168
          %v1111 = vunpack.c.0.s8 %v1110
          %v1112 = vlaneseq
          %v1113 = vshrl.u32 %v1112, 7
          %v1114 = vsub.s32 %v1111, %v1113
          %v1115 = vrot.slane %v1093, %v1114
          %v1117 = vunpack.c.l.s4 1966171168
          %v1118 = vunpack.c.0.s8 %v1117
          %v1119 = vlaneseq
          %v1120 = vshrl.u32 %v1119, 7
          %v1121 = vsub.s32 %v1118, %v1120
          %v1122 = vrot.slane %v1094, %v1121
          %v1123 = vcombine.high %v1101, %v1101
          %v1124 = vcombine.high %v1108, %v1108
          %v1125 = vcombine.high %v1115, %v1115
          %v1126 = vcombine.high %v1122, %v1122
          %v1127 = vlaneseq
          %v1128 = vshrl.u32 %v1127, 7
          %v1129 = vsub.s32 0, %v1128
          %v1130 = vrot.slane %v1101, %v1129
          %v1131 = vlaneseq
          %v1132 = vshrl.u32 %v1131, 7
          %v1133 = vsub.s32 0, %v1132
          %v1134 = vrot.slane %v1115, %v1133
          %v1135 = vlaneseq
          %v1136 = vshrl.u32 %v1135, 7
          %v1137 = vsub.s32 0, %v1136
          %v1138 = vrot.slane %v1123, %v1137
          %v1139 = vlaneseq
          %v1140 = vshrl.u32 %v1139, 7
          %v1141 = vsub.s32 0, %v1140
          %v1142 = vrot.slane %v1125, %v1141
          %v1143 = vlaneseq
          %v1144 = vshrl.u32 %v1143, 7
          %v1145 = vsub.s32 0, %v1144
          %v1146 = vrot.slane %v1108, %v1145
          %v1147 = vlaneseq
          %v1148 = vshrl.u32 %v1147, 7
          %v1149 = vsub.s32 0, %v1148
          %v1150 = vrot.slane %v1122, %v1149
          %v1151 = vlaneseq
          %v1152 = vshrl.u32 %v1151, 7
          %v1153 = vsub.s32 0, %v1152
          %v1154 = vrot.slane %v1124, %v1153
          %v1155 = vlaneseq
          %v1156 = vshrl.u32 %v1155, 7
          %v1157 = vsub.s32 0, %v1156
          %v1158 = vrot.slane %v1126, %v1157
          %v1167 = vadd.f32 %v1061, %v1130
          %v1168 = vadd.f32 %v1062, %v1130
          %v1169 = vadd.f32 %v1063, %v1134
          %v1170 = vadd.f32 %v1064, %v1134
          %v1171 = vadd.f32 %v1065, %v1138
          %v1172 = vadd.f32 %v1066, %v1138
          %v1173 = vadd.f32 %v1067, %v1142
          %v1174 = vadd.f32 %v1068, %v1142
          %v1175 = vadd.f32 %v1069, %v1146
          %v1176 = vadd.f32 %v1070, %v1146
          %v1177 = vadd.f32 %v1071, %v1150
          %v1178 = vadd.f32 %v1072, %v1150
          %v1179 = vadd.f32 %v1073, %v1154
          %v1180 = vadd.f32 %v1074, %v1154
          %v1181 = vadd.f32 %v1075, %v1158
          %v1182 = vadd.f32 %v1076, %v1158
          %v1183 = vtanh.pop %v1167
          %v1184 = vtanh.pop %v1168
          %v1185 = vtanh.pop %v1169
          %v1186 = vtanh.pop %v1170
          %v1187 = vtanh.pop %v1171
          %v1188 = vtanh.pop %v1172
          %v1189 = vtanh.pop %v1173
          %v1190 = vtanh.pop %v1174
          %v1191 = vtanh.pop %v1175
          %v1192 = vtanh.pop %v1176
          %v1193 = vtanh.pop %v1177
          %v1194 = vtanh.pop %v1178
          %v1195 = vtanh.pop %v1179
          %v1196 = vtanh.pop %v1180
          %v1197 = vtanh.pop %v1181
          %v1198 = vtanh.pop %v1182
          %v1199 = vld [vmem:[#allocation22] sm:$0x1]
          %v1201 = vlaneseq
          %v1202 = vshrl.u32 %v1201, 7
          %v1203 = vsub.s32 0, %v1202
          %v1204 = vrot.slane %v1199, %v1203
          %v1206 = vmul.f32 %v1183, %v1204
          %v1207 = vmul.f32 %v1184, %v1204
          %v1208 = vmul.f32 %v1185, %v1204
          %v1209 = vmul.f32 %v1186, %v1204
          %v1210 = vmul.f32 %v1187, %v1204
          %v1211 = vmul.f32 %v1188, %v1204
          %v1212 = vmul.f32 %v1189, %v1204
          %v1213 = vmul.f32 %v1190, %v1204
          %v1214 = vmul.f32 %v1191, %v1204
          %v1215 = vmul.f32 %v1192, %v1204
          %v1216 = vmul.f32 %v1193, %v1204
          %v1217 = vmul.f32 %v1194, %v1204
          %v1218 = vmul.f32 %v1195, %v1204
          %v1219 = vmul.f32 %v1196, %v1204
          %v1220 = vmul.f32 %v1197, %v1204
          %v1221 = vmul.f32 %v1198, %v1204
          %1222 = vadd.xlane.f32.xlu0 %v1206
          %v1223 = vpop.xlane.xlu0 %1222
          %1224 = vadd.xlane.f32.xlu0 %v1207
          %v1225 = vpop.xlane.xlu0 %1224
          %1226 = vadd.xlane.f32.xlu0 %v1208
          %v1227 = vpop.xlane.xlu0 %1226
          %1228 = vadd.xlane.f32.xlu0 %v1209
          %v1229 = vpop.xlane.xlu0 %1228
          %1230 = vadd.xlane.f32.xlu0 %v1210
          %v1231 = vpop.xlane.xlu0 %1230
          %1232 = vadd.xlane.f32.xlu0 %v1211
          %v1233 = vpop.xlane.xlu0 %1232
          %1234 = vadd.xlane.f32.xlu0 %v1212
          %v1235 = vpop.xlane.xlu0 %1234
          %1236 = vadd.xlane.f32.xlu0 %v1213
          %v1237 = vpop.xlane.xlu0 %1236
          %1238 = vadd.xlane.f32.xlu0 %v1214
          %v1239 = vpop.xlane.xlu0 %1238
          %1240 = vadd.xlane.f32.xlu0 %v1215
          %v1241 = vpop.xlane.xlu0 %1240
          %1242 = vadd.xlane.f32.xlu0 %v1216
          %v1243 = vpop.xlane.xlu0 %1242
          %1244 = vadd.xlane.f32.xlu0 %v1217
          %v1245 = vpop.xlane.xlu0 %1244
          %1246 = vadd.xlane.f32.xlu0 %v1218
          %v1247 = vpop.xlane.xlu0 %1246
          %1248 = vadd.xlane.f32.xlu0 %v1219
          %v1249 = vpop.xlane.xlu0 %1248
          %1250 = vadd.xlane.f32.xlu0 %v1220
          %v1251 = vpop.xlane.xlu0 %1250
          %1252 = vadd.xlane.f32.xlu0 %v1221
          %v1253 = vpop.xlane.xlu0 %1252
          %v1254 = vld [vmem:[#allocation18] sm:$0xff]
          %vm1255 = vcmp.gt.f32.partialorder %v1254, 0.5
          %v1272 = vlaneseq
          %v1273 = vshrl.u32 %v1272, 7
          %v1274 = vsub.s32 %v825, %v1273
          %v1275 = vrot.slane %v1223, %v1274
          %v1276 = vadd.s32 %v825, 4294967288
          %v1277 = vlaneseq
          %v1278 = vshrl.u32 %v1277, 7
          %v1279 = vsub.s32 %v1276, %v1278
          %v1280 = vrot.slane %v1225, %v1279
          %vm1281 = vcmask 130112
          %v1282 = vsel %vm1281, %v1280, %v1275
          %v1283 = vlaneseq
          %v1284 = vshrl.u32 %v1283, 7
          %v1285 = vsub.s32 %v825, %v1284
          %v1286 = vrot.slane %v1227, %v1285
          %v1287 = vlaneseq
          %v1288 = vshrl.u32 %v1287, 7
          %v1289 = vsub.s32 %v1276, %v1288
          %v1290 = vrot.slane %v1229, %v1289
          %v1291 = vsel %vm1281, %v1290, %v1286
          %v1292 = vlaneseq
          %v1293 = vshrl.u32 %v1292, 7
          %v1294 = vsub.s32 %v825, %v1293
          %v1295 = vrot.slane %v1231, %v1294
          %v1296 = vlaneseq
          %v1297 = vshrl.u32 %v1296, 7
          %v1298 = vsub.s32 %v1276, %v1297
          %v1299 = vrot.slane %v1233, %v1298
          %v1300 = vsel %vm1281, %v1299, %v1295
          %v1301 = vlaneseq
          %v1302 = vshrl.u32 %v1301, 7
          %v1303 = vsub.s32 %v825, %v1302
          %v1304 = vrot.slane %v1235, %v1303
          %v1305 = vlaneseq
          %v1306 = vshrl.u32 %v1305, 7
          %v1307 = vsub.s32 %v1276, %v1306
          %v1308 = vrot.slane %v1237, %v1307
          %v1309 = vsel %vm1281, %v1308, %v1304
          %v1310 = vlaneseq
          %v1311 = vshrl.u32 %v1310, 7
          %v1312 = vsub.s32 %v825, %v1311
          %v1313 = vrot.slane %v1239, %v1312
          %v1314 = vlaneseq
          %v1315 = vshrl.u32 %v1314, 7
          %v1316 = vsub.s32 %v1276, %v1315
          %v1317 = vrot.slane %v1241, %v1316
          %v1318 = vsel %vm1281, %v1317, %v1313
          %v1319 = vlaneseq
          %v1320 = vshrl.u32 %v1319, 7
          %v1321 = vsub.s32 %v825, %v1320
          %v1322 = vrot.slane %v1243, %v1321
          %v1323 = vlaneseq
          %v1324 = vshrl.u32 %v1323, 7
          %v1325 = vsub.s32 %v1276, %v1324
          %v1326 = vrot.slane %v1245, %v1325
          %v1327 = vsel %vm1281, %v1326, %v1322
          %v1328 = vlaneseq
          %v1329 = vshrl.u32 %v1328, 7
          %v1330 = vsub.s32 %v825, %v1329
          %v1331 = vrot.slane %v1247, %v1330
          %v1332 = vlaneseq
          %v1333 = vshrl.u32 %v1332, 7
          %v1334 = vsub.s32 %v1276, %v1333
          %v1335 = vrot.slane %v1249, %v1334
          %v1336 = vsel %vm1281, %v1335, %v1331
          %v1337 = vlaneseq
          %v1338 = vshrl.u32 %v1337, 7
          %v1339 = vsub.s32 %v825, %v1338
          %v1340 = vrot.slane %v1251, %v1339
          %v1341 = vlaneseq
          %v1342 = vshrl.u32 %v1341, 7
          %v1343 = vsub.s32 %v1276, %v1342
          %v1344 = vrot.slane %v1253, %v1343
          %v1345 = vsel %vm1281, %v1344, %v1340
          %vm1346 = vcmask 1041409
          %v1347 = vsel %vm1346, %v1291, %v1282
          %vm1348 = vcmask 1042434
          %v1349 = vsel %vm1348, %v1300, %v1347
          %vm1350 = vcmask 1043459
          %v1351 = vsel %vm1350, %v1309, %v1349
          %vm1352 = vcmask 1044484
          %v1353 = vsel %vm1352, %v1318, %v1351
          %vm1354 = vcmask 1045509
          %v1355 = vsel %vm1354, %v1327, %v1353
          %vm1356 = vcmask 1046534
          %v1357 = vsel %vm1356, %v1336, %v1355
          %vm1358 = vcmask 1047559
          %v1359 = vsel %vm1358, %v1345, %v1357
          %v1361 = vsel %vm1255, %v1359, -1e+10
          %vm1362 = vcmask 130048
          %v1363 = vsel %vm1362, %v1361, -inf
          %1364 = vmax.xlane.f32.xlu0 %v1363
          %v1365 = vpop.xlane.xlu0 %1364
          %v1366 = vsub.f32 %v1361, %v1365
          %v1367 = vmul.f32 %v1366, 1.442695
          %v1368 = vpow.pop %v1367
          %v1369 = vsel %vm1362, %v1368, 0.0
          %1370 = vadd.xlane.f32.xlu0 %v1369
          %v1371 = vpop.xlane.xlu0 %1370
          %v1372 = vrcp.pop %v1371
          %v1373 = vmul.f32 %v1368, %v1372
          %v1375 = vcombine.high %v1373, %v1373
          %v1377 = vunpack.c.l.s4 1966171168
          %v1378 = vunpack.c.0.s8 %v1377
          %v1379 = vlaneseq
          %v1380 = vshrl.u32 %v1379, 7
          %v1381 = vsub.s32 %v1378, %v1380
          %v1382 = vrot.slane %v1373, %v1381
          %v1384 = vunpack.c.l.s4 1966171168
          %v1385 = vunpack.c.0.s8 %v1384
          %v1386 = vlaneseq
          %v1387 = vshrl.u32 %v1386, 7
          %v1388 = vsub.s32 %v1385, %v1387
          %v1389 = vrot.slane %v1375, %v1388
          %v1390 = vcombine.high %v1382, %v1382
          %v1391 = vcombine.high %v1389, %v1389
          %v1393 = vunpack.c.l.s4 1966171168
          %v1394 = vunpack.c.0.s8 %v1393
          %v1395 = vlaneseq
          %v1396 = vshrl.u32 %v1395, 7
          %v1397 = vsub.s32 %v1394, %v1396
          %v1398 = vrot.slane %v1382, %v1397
          %v1400 = vunpack.c.l.s4 1966171168
          %v1401 = vunpack.c.0.s8 %v1400
          %v1402 = vlaneseq
          %v1403 = vshrl.u32 %v1402, 7
          %v1404 = vsub.s32 %v1401, %v1403
          %v1405 = vrot.slane %v1389, %v1404
          %v1407 = vunpack.c.l.s4 1966171168
          %v1408 = vunpack.c.0.s8 %v1407
          %v1409 = vlaneseq
          %v1410 = vshrl.u32 %v1409, 7
          %v1411 = vsub.s32 %v1408, %v1410
          %v1412 = vrot.slane %v1390, %v1411
          %v1414 = vunpack.c.l.s4 1966171168
          %v1415 = vunpack.c.0.s8 %v1414
          %v1416 = vlaneseq
          %v1417 = vshrl.u32 %v1416, 7
          %v1418 = vsub.s32 %v1415, %v1417
          %v1419 = vrot.slane %v1391, %v1418
          %v1420 = vcombine.high %v1398, %v1398
          %v1421 = vcombine.high %v1405, %v1405
          %v1422 = vcombine.high %v1412, %v1412
          %v1423 = vcombine.high %v1419, %v1419
          %v1432 = vpack.c.bf16 %v1398, %v1398
          %v1433 = vpack.c.bf16 %v1412, %v1412
          %v1434 = vpack.c.bf16 %v1420, %v1420
          %v1435 = vpack.c.bf16 %v1422, %v1422
          %v1436 = vpack.c.bf16 %v1405, %v1405
          %v1437 = vpack.c.bf16 %v1419, %v1419
          %v1438 = vpack.c.bf16 %v1421, %v1421
          %v1439 = vpack.c.bf16 %v1423, %v1423
          %v1440 = vld [vmem:[#allocation15] sm:$0xf]
          %v1441 = vld [vmem:[#allocation15 + $0x4] sm:$0xf]
          %v1442 = vld [vmem:[#allocation15 + $0x8] sm:$0xf]
          %v1443 = vld [vmem:[#allocation15 + $0xc] sm:$0xf]
          %v1444 = vld [vmem:[#allocation15 + $0x10] sm:$0xf]
          %v1445 = vld [vmem:[#allocation15 + $0x14] sm:$0xf]
          %v1446 = vld [vmem:[#allocation15 + $0x18] sm:$0xf]
          %v1447 = vld [vmem:[#allocation15 + $0x1c] sm:$0xf]
          %v1448 = vld [vmem:[#allocation15 + $0x20] sm:$0xf]
          %v1449 = vld [vmem:[#allocation15 + $0x24] sm:$0xf]
          %v1450 = vld [vmem:[#allocation15 + $0x28] sm:$0xf]
          %v1451 = vld [vmem:[#allocation15 + $0x2c] sm:$0xf]
          %v1452 = vld [vmem:[#allocation15 + $0x30] sm:$0xf]
          %v1453 = vld [vmem:[#allocation15 + $0x34] sm:$0xf]
          %v1454 = vld [vmem:[#allocation15 + $0x38] sm:$0xf]
          %v1455 = vld [vmem:[#allocation15 + $0x3c] sm:$0xf]
          %v1458 = vunpack.c.l.b16 %v1440
          %v1459 = vunpack.c.l.b16 %v1441
          %v1460 = vpack.c.b16 %v1459, %v1458
          %v1463 = vsel %vm1362, %v1432, 0
          %1465 = vmatprep.subr.bf16.mxu0 0
          %1466 = vmatpush1.bf16.msra.mxu0 %v1460
          %1467 = vmatprep.subr.bf16.mxu0 0
          %1468 = vmatpush1.bf16.msra.mxu0 0
          %1469 = vmatprep.subr.bf16.mxu0 0
          %1470 = vmatpush1.bf16.msra.mxu0 0
          %1471 = vmatprep.subr.bf16.mxu0 0
          %1472 = vmatpush1.bf16.msra.mxu0 0
          %1473 = vmatprep.subr.bf16.mxu0 0
          %1474 = vmatpush1.bf16.msra.mxu0 0
          %1475 = vmatprep.subr.bf16.mxu0 0
          %1476 = vmatpush1.bf16.msra.mxu0 0
          %1477 = vmatprep.subr.bf16.mxu0 0
          %1478 = vmatpush1.bf16.msra.mxu0 0
          %1479 = vmatprep.subr.bf16.mxu0 0
          %1480 = vmatpush1.bf16.msra.mxu0 0
          %1481 = vmatprep.subr.bf16.mxu0 0
          %1482 = vmatpush1.bf16.msra.mxu0 0
          %1483 = vmatprep.subr.bf16.mxu0 0
          %1484 = vmatpush1.bf16.msra.mxu0 0
          %1485 = vmatprep.subr.bf16.mxu0 0
          %1486 = vmatpush1.bf16.msra.mxu0 0
          %1487 = vmatprep.subr.bf16.mxu0 0
          %1488 = vmatpush1.bf16.msra.mxu0 0
          %1489 = vmatprep.subr.bf16.mxu0 0
          %1490 = vmatpush1.bf16.msra.mxu0 0
          %1491 = vmatprep.subr.bf16.mxu0 0
          %1492 = vmatpush1.bf16.msra.mxu0 0
          %1493 = vmatprep.subr.bf16.mxu0 0
          %1494 = vmatpush1.bf16.msra.mxu0 0
          %1495 = vmatprep.subr.bf16.mxu0 0
          %1496 = vmatpush1.bf16.msra.mxu0 0
          %1497 = vmatprep.mubr.bf16.mxu0 0
          %1498 = vmatmul.mubr.bf16.gmra.mrb[0].mxu0 %v1463
          %v1499 = vpop.f32.mrb[0].mxu0
          %v1500 = vadd.f32 0.0, %v1499
          %v1501 = vpop.f32.mrb[0].mxu0
          %v1502 = vpop.f32.mrb[0].mxu0
          %v1503 = vpop.f32.mrb[0].mxu0
          %1504 = vdwg.mxu0
          %v1507 = vunpack.c.l.b16 %v1442
          %v1508 = vunpack.c.l.b16 %v1443
          %v1509 = vpack.c.b16 %v1508, %v1507
          %v1512 = vsel %vm1362, %v1433, 0
          %1514 = vmatprep.subr.bf16.mxu0 0
          %1515 = vmatpush1.bf16.msra.mxu0 %v1509
          %1516 = vmatprep.subr.bf16.mxu0 0
          %1517 = vmatpush1.bf16.msra.mxu0 0
          %1518 = vmatprep.subr.bf16.mxu0 0
          %1519 = vmatpush1.bf16.msra.mxu0 0
          %1520 = vmatprep.subr.bf16.mxu0 0
          %1521 = vmatpush1.bf16.msra.mxu0 0
          %1522 = vmatprep.subr.bf16.mxu0 0
          %1523 = vmatpush1.bf16.msra.mxu0 0
          %1524 = vmatprep.subr.bf16.mxu0 0
          %1525 = vmatpush1.bf16.msra.mxu0 0
          %1526 = vmatprep.subr.bf16.mxu0 0
          %1527 = vmatpush1.bf16.msra.mxu0 0
          %1528 = vmatprep.subr.bf16.mxu0 0
          %1529 = vmatpush1.bf16.msra.mxu0 0
          %1530 = vmatprep.subr.bf16.mxu0 0
          %1531 = vmatpush1.bf16.msra.mxu0 0
          %1532 = vmatprep.subr.bf16.mxu0 0
          %1533 = vmatpush1.bf16.msra.mxu0 0
          %1534 = vmatprep.subr.bf16.mxu0 0
          %1535 = vmatpush1.bf16.msra.mxu0 0
          %1536 = vmatprep.subr.bf16.mxu0 0
          %1537 = vmatpush1.bf16.msra.mxu0 0
          %1538 = vmatprep.subr.bf16.mxu0 0
          %1539 = vmatpush1.bf16.msra.mxu0 0
          %1540 = vmatprep.subr.bf16.mxu0 0
          %1541 = vmatpush1.bf16.msra.mxu0 0
          %1542 = vmatprep.subr.bf16.mxu0 0
          %1543 = vmatpush1.bf16.msra.mxu0 0
          %1544 = vmatprep.subr.bf16.mxu0 0
          %1545 = vmatpush1.bf16.msra.mxu0 0
          %1546 = vmatprep.mubr.bf16.mxu0 0
          %1547 = vmatmul.mubr.bf16.gmra.mrb[0].mxu0 %v1512
          %v1548 = vpop.f32.mrb[0].mxu0
          %v1549 = vadd.f32 0.0, %v1548
          %v1550 = vpop.f32.mrb[0].mxu0
          %v1551 = vpop.f32.mrb[0].mxu0
          %v1552 = vpop.f32.mrb[0].mxu0
          %1553 = vdwg.mxu0
          %v1556 = vunpack.c.l.b16 %v1444
          %v1557 = vunpack.c.l.b16 %v1445
          %v1558 = vpack.c.b16 %v1557, %v1556
          %v1561 = vsel %vm1362, %v1434, 0
          %1563 = vmatprep.subr.bf16.mxu0 0
          %1564 = vmatpush1.bf16.msra.mxu0 %v1558
          %1565 = vmatprep.subr.bf16.mxu0 0
          %1566 = vmatpush1.bf16.msra.mxu0 0
          %1567 = vmatprep.subr.bf16.mxu0 0
          %1568 = vmatpush1.bf16.msra.mxu0 0
          %1569 = vmatprep.subr.bf16.mxu0 0
          %1570 = vmatpush1.bf16.msra.mxu0 0
          %1571 = vmatprep.subr.bf16.mxu0 0
          %1572 = vmatpush1.bf16.msra.mxu0 0
          %1573 = vmatprep.subr.bf16.mxu0 0
          %1574 = vmatpush1.bf16.msra.mxu0 0
          %1575 = vmatprep.subr.bf16.mxu0 0
          %1576 = vmatpush1.bf16.msra.mxu0 0
          %1577 = vmatprep.subr.bf16.mxu0 0
          %1578 = vmatpush1.bf16.msra.mxu0 0
          %1579 = vmatprep.subr.bf16.mxu0 0
          %1580 = vmatpush1.bf16.msra.mxu0 0
          %1581 = vmatprep.subr.bf16.mxu0 0
          %1582 = vmatpush1.bf16.msra.mxu0 0
          %1583 = vmatprep.subr.bf16.mxu0 0
          %1584 = vmatpush1.bf16.msra.mxu0 0
          %1585 = vmatprep.subr.bf16.mxu0 0
          %1586 = vmatpush1.bf16.msra.mxu0 0
          %1587 = vmatprep.subr.bf16.mxu0 0
          %1588 = vmatpush1.bf16.msra.mxu0 0
          %1589 = vmatprep.subr.bf16.mxu0 0
          %1590 = vmatpush1.bf16.msra.mxu0 0
          %1591 = vmatprep.subr.bf16.mxu0 0
          %1592 = vmatpush1.bf16.msra.mxu0 0
          %1593 = vmatprep.subr.bf16.mxu0 0
          %1594 = vmatpush1.bf16.msra.mxu0 0
          %1595 = vmatprep.mubr.bf16.mxu0 0
          %1596 = vmatmul.mubr.bf16.gmra.mrb[0].mxu0 %v1561
          %v1597 = vpop.f32.mrb[0].mxu0
          %v1598 = vadd.f32 0.0, %v1597
          %v1599 = vpop.f32.mrb[0].mxu0
          %v1600 = vpop.f32.mrb[0].mxu0
          %v1601 = vpop.f32.mrb[0].mxu0
          %1602 = vdwg.mxu0
          %v1605 = vunpack.c.l.b16 %v1446
          %v1606 = vunpack.c.l.b16 %v1447
          %v1607 = vpack.c.b16 %v1606, %v1605
          %v1610 = vsel %vm1362, %v1435, 0
          %1612 = vmatprep.subr.bf16.mxu0 0
          %1613 = vmatpush1.bf16.msra.mxu0 %v1607
          %1614 = vmatprep.subr.bf16.mxu0 0
          %1615 = vmatpush1.bf16.msra.mxu0 0
          %1616 = vmatprep.subr.bf16.mxu0 0
          %1617 = vmatpush1.bf16.msra.mxu0 0
          %1618 = vmatprep.subr.bf16.mxu0 0
          %1619 = vmatpush1.bf16.msra.mxu0 0
          %1620 = vmatprep.subr.bf16.mxu0 0
          %1621 = vmatpush1.bf16.msra.mxu0 0
          %1622 = vmatprep.subr.bf16.mxu0 0
          %1623 = vmatpush1.bf16.msra.mxu0 0
          %1624 = vmatprep.subr.bf16.mxu0 0
          %1625 = vmatpush1.bf16.msra.mxu0 0
          %1626 = vmatprep.subr.bf16.mxu0 0
          %1627 = vmatpush1.bf16.msra.mxu0 0
          %1628 = vmatprep.subr.bf16.mxu0 0
          %1629 = vmatpush1.bf16.msra.mxu0 0
          %1630 = vmatprep.subr.bf16.mxu0 0
          %1631 = vmatpush1.bf16.msra.mxu0 0
          %1632 = vmatprep.subr.bf16.mxu0 0
          %1633 = vmatpush1.bf16.msra.mxu0 0
          %1634 = vmatprep.subr.bf16.mxu0 0
          %1635 = vmatpush1.bf16.msra.mxu0 0
          %1636 = vmatprep.subr.bf16.mxu0 0
          %1637 = vmatpush1.bf16.msra.mxu0 0
          %1638 = vmatprep.subr.bf16.mxu0 0
          %1639 = vmatpush1.bf16.msra.mxu0 0
          %1640 = vmatprep.subr.bf16.mxu0 0
          %1641 = vmatpush1.bf16.msra.mxu0 0
          %1642 = vmatprep.subr.bf16.mxu0 0
          %1643 = vmatpush1.bf16.msra.mxu0 0
          %1644 = vmatprep.mubr.bf16.mxu0 0
          %1645 = vmatmul.mubr.bf16.gmra.mrb[0].mxu0 %v1610
          %v1646 = vpop.f32.mrb[0].mxu0
          %v1647 = vadd.f32 0.0, %v1646
          %v1648 = vpop.f32.mrb[0].mxu0
          %v1649 = vpop.f32.mrb[0].mxu0
          %v1650 = vpop.f32.mrb[0].mxu0
          %1651 = vdwg.mxu0
          %v1654 = vunpack.c.l.b16 %v1448
          %v1655 = vunpack.c.l.b16 %v1449
          %v1656 = vpack.c.b16 %v1655, %v1654
          %v1659 = vsel %vm1362, %v1436, 0
          %1661 = vmatprep.subr.bf16.mxu0 0
          %1662 = vmatpush1.bf16.msra.mxu0 %v1656
          %1663 = vmatprep.subr.bf16.mxu0 0
          %1664 = vmatpush1.bf16.msra.mxu0 0
          %1665 = vmatprep.subr.bf16.mxu0 0
          %1666 = vmatpush1.bf16.msra.mxu0 0
          %1667 = vmatprep.subr.bf16.mxu0 0
          %1668 = vmatpush1.bf16.msra.mxu0 0
          %1669 = vmatprep.subr.bf16.mxu0 0
          %1670 = vmatpush1.bf16.msra.mxu0 0
          %1671 = vmatprep.subr.bf16.mxu0 0
          %1672 = vmatpush1.bf16.msra.mxu0 0
          %1673 = vmatprep.subr.bf16.mxu0 0
          %1674 = vmatpush1.bf16.msra.mxu0 0
          %1675 = vmatprep.subr.bf16.mxu0 0
          %1676 = vmatpush1.bf16.msra.mxu0 0
          %1677 = vmatprep.subr.bf16.mxu0 0
          %1678 = vmatpush1.bf16.msra.mxu0 0
          %1679 = vmatprep.subr.bf16.mxu0 0
          %1680 = vmatpush1.bf16.msra.mxu0 0
          %1681 = vmatprep.subr.bf16.mxu0 0
          %1682 = vmatpush1.bf16.msra.mxu0 0
          %1683 = vmatprep.subr.bf16.mxu0 0
          %1684 = vmatpush1.bf16.msra.mxu0 0
          %1685 = vmatprep.subr.bf16.mxu0 0
          %1686 = vmatpush1.bf16.msra.mxu0 0
          %1687 = vmatprep.subr.bf16.mxu0 0
          %1688 = vmatpush1.bf16.msra.mxu0 0
          %1689 = vmatprep.subr.bf16.mxu0 0
          %1690 = vmatpush1.bf16.msra.mxu0 0
          %1691 = vmatprep.subr.bf16.mxu0 0
          %1692 = vmatpush1.bf16.msra.mxu0 0
          %1693 = vmatprep.mubr.bf16.mxu0 0
          %1694 = vmatmul.mubr.bf16.gmra.mrb[0].mxu0 %v1659
          %v1695 = vpop.f32.mrb[0].mxu0
          %v1696 = vadd.f32 0.0, %v1695
          %v1697 = vpop.f32.mrb[0].mxu0
          %v1698 = vpop.f32.mrb[0].mxu0
          %v1699 = vpop.f32.mrb[0].mxu0
          %1700 = vdwg.mxu0
          %v1703 = vunpack.c.l.b16 %v1450
          %v1704 = vunpack.c.l.b16 %v1451
          %v1705 = vpack.c.b16 %v1704, %v1703
          %v1708 = vsel %vm1362, %v1437, 0
          %1710 = vmatprep.subr.bf16.mxu0 0
          %1711 = vmatpush1.bf16.msra.mxu0 %v1705
          %1712 = vmatprep.subr.bf16.mxu0 0
          %1713 = vmatpush1.bf16.msra.mxu0 0
          %1714 = vmatprep.subr.bf16.mxu0 0
          %1715 = vmatpush1.bf16.msra.mxu0 0
          %1716 = vmatprep.subr.bf16.mxu0 0
          %1717 = vmatpush1.bf16.msra.mxu0 0
          %1718 = vmatprep.subr.bf16.mxu0 0
          %1719 = vmatpush1.bf16.msra.mxu0 0
          %1720 = vmatprep.subr.bf16.mxu0 0
          %1721 = vmatpush1.bf16.msra.mxu0 0
          %1722 = vmatprep.subr.bf16.mxu0 0
          %1723 = vmatpush1.bf16.msra.mxu0 0
          %1724 = vmatprep.subr.bf16.mxu0 0
          %1725 = vmatpush1.bf16.msra.mxu0 0
          %1726 = vmatprep.subr.bf16.mxu0 0
          %1727 = vmatpush1.bf16.msra.mxu0 0
          %1728 = vmatprep.subr.bf16.mxu0 0
          %1729 = vmatpush1.bf16.msra.mxu0 0
          %1730 = vmatprep.subr.bf16.mxu0 0
          %1731 = vmatpush1.bf16.msra.mxu0 0
          %1732 = vmatprep.subr.bf16.mxu0 0
          %1733 = vmatpush1.bf16.msra.mxu0 0
          %1734 = vmatprep.subr.bf16.mxu0 0
          %1735 = vmatpush1.bf16.msra.mxu0 0
          %1736 = vmatprep.subr.bf16.mxu0 0
          %1737 = vmatpush1.bf16.msra.mxu0 0
          %1738 = vmatprep.subr.bf16.mxu0 0
          %1739 = vmatpush1.bf16.msra.mxu0 0
          %1740 = vmatprep.subr.bf16.mxu0 0
          %1741 = vmatpush1.bf16.msra.mxu0 0
          %1742 = vmatprep.mubr.bf16.mxu0 0
          %1743 = vmatmul.mubr.bf16.gmra.mrb[0].mxu0 %v1708
          %v1744 = vpop.f32.mrb[0].mxu0
          %v1745 = vadd.f32 0.0, %v1744
          %v1746 = vpop.f32.mrb[0].mxu0
          %v1747 = vpop.f32.mrb[0].mxu0
          %v1748 = vpop.f32.mrb[0].mxu0
          %1749 = vdwg.mxu0
          %v1752 = vunpack.c.l.b16 %v1452
          %v1753 = vunpack.c.l.b16 %v1453
          %v1754 = vpack.c.b16 %v1753, %v1752
          %v1757 = vsel %vm1362, %v1438, 0
          %1759 = vmatprep.subr.bf16.mxu0 0
          %1760 = vmatpush1.bf16.msra.mxu0 %v1754
          %1761 = vmatprep.subr.bf16.mxu0 0
          %1762 = vmatpush1.bf16.msra.mxu0 0
          %1763 = vmatprep.subr.bf16.mxu0 0
          %1764 = vmatpush1.bf16.msra.mxu0 0
          %1765 = vmatprep.subr.bf16.mxu0 0
          %1766 = vmatpush1.bf16.msra.mxu0 0
          %1767 = vmatprep.subr.bf16.mxu0 0
          %1768 = vmatpush1.bf16.msra.mxu0 0
          %1769 = vmatprep.subr.bf16.mxu0 0
          %1770 = vmatpush1.bf16.msra.mxu0 0
          %1771 = vmatprep.subr.bf16.mxu0 0
          %1772 = vmatpush1.bf16.msra.mxu0 0
          %1773 = vmatprep.subr.bf16.mxu0 0
          %1774 = vmatpush1.bf16.msra.mxu0 0
          %1775 = vmatprep.subr.bf16.mxu0 0
          %1776 = vmatpush1.bf16.msra.mxu0 0
          %1777 = vmatprep.subr.bf16.mxu0 0
          %1778 = vmatpush1.bf16.msra.mxu0 0
          %1779 = vmatprep.subr.bf16.mxu0 0
          %1780 = vmatpush1.bf16.msra.mxu0 0
          %1781 = vmatprep.subr.bf16.mxu0 0
          %1782 = vmatpush1.bf16.msra.mxu0 0
          %1783 = vmatprep.subr.bf16.mxu0 0
          %1784 = vmatpush1.bf16.msra.mxu0 0
          %1785 = vmatprep.subr.bf16.mxu0 0
          %1786 = vmatpush1.bf16.msra.mxu0 0
          %1787 = vmatprep.subr.bf16.mxu0 0
          %1788 = vmatpush1.bf16.msra.mxu0 0
          %1789 = vmatprep.subr.bf16.mxu0 0
          %1790 = vmatpush1.bf16.msra.mxu0 0
          %1791 = vmatprep.mubr.bf16.mxu0 0
          %1792 = vmatmul.mubr.bf16.gmra.mrb[0].mxu0 %v1757
          %v1793 = vpop.f32.mrb[0].mxu0
          %v1794 = vadd.f32 0.0, %v1793
          %v1795 = vpop.f32.mrb[0].mxu0
          %v1796 = vpop.f32.mrb[0].mxu0
          %v1797 = vpop.f32.mrb[0].mxu0
          %1798 = vdwg.mxu0
          %v1801 = vunpack.c.l.b16 %v1454
          %v1802 = vunpack.c.l.b16 %v1455
          %v1803 = vpack.c.b16 %v1802, %v1801
          %v1806 = vsel %vm1362, %v1439, 0
          %1808 = vmatprep.subr.bf16.mxu0 0
          %1809 = vmatpush1.bf16.msra.mxu0 %v1803
          %1810 = vmatprep.subr.bf16.mxu0 0
          %1811 = vmatpush1.bf16.msra.mxu0 0
          %1812 = vmatprep.subr.bf16.mxu0 0
          %1813 = vmatpush1.bf16.msra.mxu0 0
          %1814 = vmatprep.subr.bf16.mxu0 0
          %1815 = vmatpush1.bf16.msra.mxu0 0
          %1816 = vmatprep.subr.bf16.mxu0 0
          %1817 = vmatpush1.bf16.msra.mxu0 0
          %1818 = vmatprep.subr.bf16.mxu0 0
          %1819 = vmatpush1.bf16.msra.mxu0 0
          %1820 = vmatprep.subr.bf16.mxu0 0
          %1821 = vmatpush1.bf16.msra.mxu0 0
          %1822 = vmatprep.subr.bf16.mxu0 0
          %1823 = vmatpush1.bf16.msra.mxu0 0
          %1824 = vmatprep.subr.bf16.mxu0 0
          %1825 = vmatpush1.bf16.msra.mxu0 0
          %1826 = vmatprep.subr.bf16.mxu0 0
          %1827 = vmatpush1.bf16.msra.mxu0 0
          %1828 = vmatprep.subr.bf16.mxu0 0
          %1829 = vmatpush1.bf16.msra.mxu0 0
          %1830 = vmatprep.subr.bf16.mxu0 0
          %1831 = vmatpush1.bf16.msra.mxu0 0
          %1832 = vmatprep.subr.bf16.mxu0 0
          %1833 = vmatpush1.bf16.msra.mxu0 0
          %1834 = vmatprep.subr.bf16.mxu0 0
          %1835 = vmatpush1.bf16.msra.mxu0 0
          %1836 = vmatprep.subr.bf16.mxu0 0
          %1837 = vmatpush1.bf16.msra.mxu0 0
          %1838 = vmatprep.subr.bf16.mxu0 0
          %1839 = vmatpush1.bf16.msra.mxu0 0
          %1840 = vmatprep.mubr.bf16.mxu0 0
          %1841 = vmatmul.mubr.bf16.gmra.mrb[0].mxu0 %v1806
          %v1842 = vpop.f32.mrb[0].mxu0
          %v1843 = vadd.f32 0.0, %v1842
          %v1844 = vpop.f32.mrb[0].mxu0
          %v1845 = vpop.f32.mrb[0].mxu0
          %v1846 = vpop.f32.mrb[0].mxu0
          %1847 = vdwg.mxu0
          %v1848 = vpack.c.bf16 %v1500, %v1500
          %v1849 = vpack.c.bf16 %v1549, %v1549
          %v1850 = vpack.c.bf16 %v1598, %v1598
          %v1851 = vpack.c.bf16 %v1647, %v1647
          %v1852 = vpack.c.bf16 %v1696, %v1696
          %v1853 = vpack.c.bf16 %v1745, %v1745
          %v1854 = vpack.c.bf16 %v1794, %v1794
          %v1855 = vpack.c.bf16 %v1843, %v1843
          %v1856 = vld [vmem:[#allocation24] sm:$0xff]
          %v1857 = vld [vmem:[#allocation24 + $0x8] sm:$0xf]
          %v1858 = vld [vmem:[#allocation24 + $0xc] sm:$0xff]
          %v1859 = vld [vmem:[#allocation24 + $0x14] sm:$0xf]
          %v1860 = vld [vmem:[#allocation24 + $0x18] sm:$0xff]
          %v1861 = vld [vmem:[#allocation24 + $0x20] sm:$0xf]
          %v1862 = vld [vmem:[#allocation24 + $0x24] sm:$0xff]
          %v1863 = vld [vmem:[#allocation24 + $0x2c] sm:$0xf]
          %v1864 = vld [vmem:[#allocation24 + $0x30] sm:$0xff]
          %v1865 = vld [vmem:[#allocation24 + $0x38] sm:$0xf]
          %v1866 = vld [vmem:[#allocation24 + $0x3c] sm:$0xff]
          %v1867 = vld [vmem:[#allocation24 + $0x44] sm:$0xf]
          %v1868 = vld [vmem:[#allocation24 + $0x48] sm:$0xff]
          %v1869 = vld [vmem:[#allocation24 + $0x50] sm:$0xf]
          %v1870 = vld [vmem:[#allocation24 + $0x54] sm:$0xff]
          %v1871 = vld [vmem:[#allocation24 + $0x5c] sm:$0xf]
          %v1872 = vld [vmem:[#allocation24 + $0x60] sm:$0xff]
          %v1873 = vld [vmem:[#allocation24 + $0x68] sm:$0xf]
          %v1874 = vld [vmem:[#allocation24 + $0x6c] sm:$0xff]
          %v1875 = vld [vmem:[#allocation24 + $0x74] sm:$0xf]
          %v1876 = vld [vmem:[#allocation24 + $0x78] sm:$0xff]
          %v1877 = vld [vmem:[#allocation24 + $0x80] sm:$0xf]
          %v1878 = vld [vmem:[#allocation24 + $0x84] sm:$0xff]
          %v1879 = vld [vmem:[#allocation24 + $0x8c] sm:$0xf]
          %v1880 = vld [vmem:[#allocation24 + $0x90] sm:$0xff]
          %v1881 = vld [vmem:[#allocation24 + $0x98] sm:$0xf]
          %v1882 = vld [vmem:[#allocation24 + $0x9c] sm:$0xff]
          %v1883 = vld [vmem:[#allocation24 + $0xa4] sm:$0xf]
          %v1884 = vld [vmem:[#allocation24 + $0xa8] sm:$0xff]
          %v1885 = vld [vmem:[#allocation24 + $0xb0] sm:$0xf]
          %v1886 = vld [vmem:[#allocation24 + $0xb4] sm:$0xff]
          %v1887 = vld [vmem:[#allocation24 + $0xbc] sm:$0xf]
          %v1888 = vld [vmem:[#allocation25] sm:$0xff]
          %v1889 = vld [vmem:[#allocation25 + $0x8] sm:$0xf]
          %v1890 = vld [vmem:[#allocation25 + $0xc] sm:$0xff]
          %v1891 = vld [vmem:[#allocation25 + $0x14] sm:$0xf]
          %v1892 = vld [vmem:[#allocation25 + $0x18] sm:$0xff]
          %v1893 = vld [vmem:[#allocation25 + $0x20] sm:$0xf]
          %v1894 = vld [vmem:[#allocation25 + $0x24] sm:$0xff]
          %v1895 = vld [vmem:[#allocation25 + $0x2c] sm:$0xf]
          %v1896 = vld [vmem:[#allocation25 + $0x30] sm:$0xff]
          %v1897 = vld [vmem:[#allocation25 + $0x38] sm:$0xf]
          %v1898 = vld [vmem:[#allocation25 + $0x3c] sm:$0xff]
          %v1899 = vld [vmem:[#allocation25 + $0x44] sm:$0xf]
          %v1900 = vld [vmem:[#allocation25 + $0x48] sm:$0xff]
          %v1901 = vld [vmem:[#allocation25 + $0x50] sm:$0xf]
          %v1902 = vld [vmem:[#allocation25 + $0x54] sm:$0xff]
          %v1903 = vld [vmem:[#allocation25 + $0x5c] sm:$0xf]
          %v1904 = vld [vmem:[#allocation25 + $0x60] sm:$0xff]
          %v1905 = vld [vmem:[#allocation25 + $0x68] sm:$0xf]
          %v1906 = vld [vmem:[#allocation25 + $0x6c] sm:$0xff]
          %v1907 = vld [vmem:[#allocation25 + $0x74] sm:$0xf]
          %v1908 = vld [vmem:[#allocation25 + $0x78] sm:$0xff]
          %v1909 = vld [vmem:[#allocation25 + $0x80] sm:$0xf]
          %v1910 = vld [vmem:[#allocation25 + $0x84] sm:$0xff]
          %v1911 = vld [vmem:[#allocation25 + $0x8c] sm:$0xf]
          %v1912 = vld [vmem:[#allocation25 + $0x90] sm:$0xff]
          %v1913 = vld [vmem:[#allocation25 + $0x98] sm:$0xf]
          %v1914 = vld [vmem:[#allocation25 + $0x9c] sm:$0xff]
          %v1915 = vld [vmem:[#allocation25 + $0xa4] sm:$0xf]
          %v1916 = vld [vmem:[#allocation25 + $0xa8] sm:$0xff]
          %v1917 = vld [vmem:[#allocation25 + $0xb0] sm:$0xf]
          %v1918 = vld [vmem:[#allocation25 + $0xb4] sm:$0xff]
          %v1919 = vld [vmem:[#allocation25 + $0xbc] sm:$0xf]
          %v1928 = vunpack.c.l.b16 %v1848
          %v1929 = vunpack.c.l.b16 %v1849
          %v1930 = vunpack.c.l.b16 %v1850
          %v1931 = vunpack.c.l.b16 %v1851
          %v1932 = vunpack.c.l.b16 %v1852
          %v1933 = vunpack.c.l.b16 %v1853
          %v1934 = vunpack.c.l.b16 %v1854
          %v1935 = vunpack.c.l.b16 %v1855
          %v1936 = vrot.slane %v1929, 7
          %v1937 = vsel %vm1346, %v1936, %v1928
          %v1938 = vrot.slane %v1930, 6
          %v1939 = vsel %vm1348, %v1938, %v1937
          %v1940 = vrot.slane %v1931, 5
          %v1941 = vsel %vm1350, %v1940, %v1939
          %v1942 = vrot.slane %v1932, 4
          %v1943 = vsel %vm1352, %v1942, %v1941
          %v1944 = vrot.slane %v1933, 3
          %v1945 = vsel %vm1354, %v1944, %v1943
          %v1946 = vrot.slane %v1934, 2
          %v1947 = vsel %vm1356, %v1946, %v1945
          %v1948 = vrot.slane %v1935, 1
          %v1949 = vsel %vm1358, %v1948, %v1947
          %v1950 = vpack.c.b16 %v1949, %v1949
          %v1984 = vunpack.c.l.b16 %v1888
          %v1985 = vunpack.c.h.b16 %v1888
          %v1986 = vunpack.c.l.b16 %v1889
          %v1987 = vunpack.c.l.b16 %v1890
          %v1988 = vunpack.c.h.b16 %v1890
          %v1989 = vunpack.c.l.b16 %v1891
          %v1990 = vunpack.c.l.b16 %v1892
          %v1991 = vunpack.c.h.b16 %v1892
          %v1992 = vunpack.c.l.b16 %v1893
          %v1993 = vunpack.c.l.b16 %v1894
          %v1994 = vunpack.c.h.b16 %v1894
          %v1995 = vunpack.c.l.b16 %v1895
          %v1996 = vunpack.c.l.b16 %v1896
          %v1997 = vunpack.c.h.b16 %v1896
          %v1998 = vunpack.c.l.b16 %v1897
          %v1999 = vunpack.c.l.b16 %v1898
          %v2000 = vunpack.c.h.b16 %v1898
          %v2001 = vunpack.c.l.b16 %v1899
          %v2002 = vunpack.c.l.b16 %v1900
          %v2003 = vunpack.c.h.b16 %v1900
          %v2004 = vunpack.c.l.b16 %v1901
          %v2005 = vunpack.c.l.b16 %v1902
          %v2006 = vunpack.c.h.b16 %v1902
          %v2007 = vunpack.c.l.b16 %v1903
          %v2008 = vunpack.c.l.b16 %v1904
          %v2009 = vunpack.c.h.b16 %v1904
          %v2010 = vunpack.c.l.b16 %v1905
          %v2011 = vunpack.c.l.b16 %v1906
          %v2012 = vunpack.c.h.b16 %v1906
          %v2013 = vunpack.c.l.b16 %v1907
          %v2014 = vunpack.c.l.b16 %v1908
          %v2015 = vunpack.c.h.b16 %v1908
          %v2016 = vunpack.c.l.b16 %v1909
          %v2017 = vunpack.c.l.b16 %v1910
          %v2018 = vunpack.c.h.b16 %v1910
          %v2019 = vunpack.c.l.b16 %v1911
          %v2020 = vunpack.c.l.b16 %v1912
          %v2021 = vunpack.c.h.b16 %v1912
          %v2022 = vunpack.c.l.b16 %v1913
          %v2023 = vunpack.c.l.b16 %v1914
          %v2024 = vunpack.c.h.b16 %v1914
          %v2025 = vunpack.c.l.b16 %v1915
          %v2026 = vunpack.c.l.b16 %v1916
          %v2027 = vunpack.c.h.b16 %v1916
          %v2028 = vunpack.c.l.b16 %v1917
          %v2029 = vunpack.c.l.b16 %v1918
          %v2030 = vunpack.c.h.b16 %v1918
          %v2031 = vunpack.c.l.b16 %v1919
          %v2032 = vpack.c.b16 %v1987, %v1984
          %v2033 = vpack.c.b16 %v1988, %v1985
          %v2034 = vpack.c.b16 %v1989, %v1986
          %v2035 = vpack.c.b16 %v1993, %v1990
          %v2036 = vpack.c.b16 %v1994, %v1991
          %v2037 = vpack.c.b16 %v1995, %v1992
          %v2038 = vpack.c.b16 %v1999, %v1996
          %v2039 = vpack.c.b16 %v2000, %v1997
          %v2040 = vpack.c.b16 %v2001, %v1998
          %v2041 = vpack.c.b16 %v2005, %v2002
          %v2042 = vpack.c.b16 %v2006, %v2003
          %v2043 = vpack.c.b16 %v2007, %v2004
          %v2044 = vpack.c.b16 %v2011, %v2008
          %v2045 = vpack.c.b16 %v2012, %v2009
          %v2046 = vpack.c.b16 %v2013, %v2010
          %v2047 = vpack.c.b16 %v2017, %v2014
          %v2048 = vpack.c.b16 %v2018, %v2015
          %v2049 = vpack.c.b16 %v2019, %v2016
          %v2050 = vpack.c.b16 %v2023, %v2020
          %v2051 = vpack.c.b16 %v2024, %v2021
          %v2052 = vpack.c.b16 %v2025, %v2022
          %v2053 = vpack.c.b16 %v2029, %v2026
          %v2054 = vpack.c.b16 %v2030, %v2027
          %v2055 = vpack.c.b16 %v2031, %v2028
          %2080 = vmatprep.subr.bf16.mxu0 %v2033
          %2081 = vmatpush1.bf16.msra.mxu0 %v2032
          %2082 = vmatprep.subr.bf16.mxu0 %v2036
          %2083 = vmatpush1.bf16.msra.mxu0 %v2035
          %2084 = vmatprep.subr.bf16.mxu0 %v2039
          %2085 = vmatpush1.bf16.msra.mxu0 %v2038
          %2086 = vmatprep.subr.bf16.mxu0 %v2042
          %2087 = vmatpush1.bf16.msra.mxu0 %v2041
          %2088 = vmatprep.subr.bf16.mxu0 %v2045
          %2089 = vmatpush1.bf16.msra.mxu0 %v2044
          %2090 = vmatprep.subr.bf16.mxu0 %v2048
          %2091 = vmatpush1.bf16.msra.mxu0 %v2047
          %2092 = vmatprep.subr.bf16.mxu0 %v2051
          %2093 = vmatpush1.bf16.msra.mxu0 %v2050
          %2094 = vmatprep.subr.bf16.mxu0 %v2054
          %2095 = vmatpush1.bf16.msra.mxu0 %v2053
          %2096 = vmatprep.subr.bf16.mxu0 0
          %2097 = vmatpush1.bf16.msra.mxu0 0
          %2098 = vmatprep.subr.bf16.mxu0 0
          %2099 = vmatpush1.bf16.msra.mxu0 0
          %2100 = vmatprep.subr.bf16.mxu0 0
          %2101 = vmatpush1.bf16.msra.mxu0 0
          %2102 = vmatprep.subr.bf16.mxu0 0
          %2103 = vmatpush1.bf16.msra.mxu0 0
          %2104 = vmatprep.subr.bf16.mxu0 0
          %2105 = vmatpush1.bf16.msra.mxu0 0
          %2106 = vmatprep.subr.bf16.mxu0 0
          %2107 = vmatpush1.bf16.msra.mxu0 0
          %2108 = vmatprep.subr.bf16.mxu0 0
          %2109 = vmatpush1.bf16.msra.mxu0 0
          %2110 = vmatprep.subr.bf16.mxu0 0
          %2111 = vmatpush1.bf16.msra.mxu0 0
          %2112 = vmatprep.mubr.bf16.mxu0 0
          %2113 = vmatmul.mubr.bf16.gmra.mrb[0].mxu0 %v1950
          %v2114 = vpop.f32.mrb[0].mxu0
          %v2115 = vadd.f32 0.0, %v2114
          %v2116 = vpop.f32.mrb[0].mxu0
          %v2117 = vadd.f32 0.0, %v2116
          %v2118 = vpop.f32.mrb[0].mxu0
          %v2119 = vpop.f32.mrb[0].mxu0
          %2120 = vdwg.mxu0
          %2121 = vmatprep.subr.bf16.mxu0 0
          %2122 = vmatpush1.bf16.msra.mxu0 %v2034
          %2123 = vmatprep.subr.bf16.mxu0 0
          %2124 = vmatpush1.bf16.msra.mxu0 %v2037
          %2125 = vmatprep.subr.bf16.mxu0 0
          %2126 = vmatpush1.bf16.msra.mxu0 %v2040
          %2127 = vmatprep.subr.bf16.mxu0 0
          %2128 = vmatpush1.bf16.msra.mxu0 %v2043
          %2129 = vmatprep.subr.bf16.mxu0 0
          %2130 = vmatpush1.bf16.msra.mxu0 %v2046
          %2131 = vmatprep.subr.bf16.mxu0 0
          %2132 = vmatpush1.bf16.msra.mxu0 %v2049
          %2133 = vmatprep.subr.bf16.mxu0 0
          %2134 = vmatpush1.bf16.msra.mxu0 %v2052
          %2135 = vmatprep.subr.bf16.mxu0 0
          %2136 = vmatpush1.bf16.msra.mxu0 %v2055
          %2137 = vmatprep.subr.bf16.mxu0 0
          %2138 = vmatpush1.bf16.msra.mxu0 0
          %2139 = vmatprep.subr.bf16.mxu0 0
          %2140 = vmatpush1.bf16.msra.mxu0 0
          %2141 = vmatprep.subr.bf16.mxu0 0
          %2142 = vmatpush1.bf16.msra.mxu0 0
          %2143 = vmatprep.subr.bf16.mxu0 0
          %2144 = vmatpush1.bf16.msra.mxu0 0
          %2145 = vmatprep.subr.bf16.mxu0 0
          %2146 = vmatpush1.bf16.msra.mxu0 0
          %2147 = vmatprep.subr.bf16.mxu0 0
          %2148 = vmatpush1.bf16.msra.mxu0 0
          %2149 = vmatprep.subr.bf16.mxu0 0
          %2150 = vmatpush1.bf16.msra.mxu0 0
          %2151 = vmatprep.subr.bf16.mxu0 0
          %2152 = vmatpush1.bf16.msra.mxu0 0
          %2153 = vmatprep.mubr.bf16.mxu0 0
          %2154 = vmatmul.mubr.bf16.gmra.mrb[0].mxu0 %v1950
          %v2155 = vpop.f32.mrb[0].mxu0
          %v2156 = vadd.f32 0.0, %v2155
          %v2157 = vpop.f32.mrb[0].mxu0
          %v2158 = vpop.f32.mrb[0].mxu0
          %v2159 = vpop.f32.mrb[0].mxu0
          %2160 = vdwg.mxu0
          %v2193 = vunpack.c.l.b16 %v1856
          %v2194 = vunpack.c.h.b16 %v1856
          %v2195 = vunpack.c.l.b16 %v1857
          %v2196 = vunpack.c.l.b16 %v1858
          %v2197 = vunpack.c.h.b16 %v1858
          %v2198 = vunpack.c.l.b16 %v1859
          %v2199 = vunpack.c.l.b16 %v1860
          %v2200 = vunpack.c.h.b16 %v1860
          %v2201 = vunpack.c.l.b16 %v1861
          %v2202 = vunpack.c.l.b16 %v1862
          %v2203 = vunpack.c.h.b16 %v1862
          %v2204 = vunpack.c.l.b16 %v1863
          %v2205 = vunpack.c.l.b16 %v1864
          %v2206 = vunpack.c.h.b16 %v1864
          %v2207 = vunpack.c.l.b16 %v1865
          %v2208 = vunpack.c.l.b16 %v1866
          %v2209 = vunpack.c.h.b16 %v1866
          %v2210 = vunpack.c.l.b16 %v1867
          %v2211 = vunpack.c.l.b16 %v1868
          %v2212 = vunpack.c.h.b16 %v1868
          %v2213 = vunpack.c.l.b16 %v1869
          %v2214 = vunpack.c.l.b16 %v1870
          %v2215 = vunpack.c.h.b16 %v1870
          %v2216 = vunpack.c.l.b16 %v1871
          %v2217 = vunpack.c.l.b16 %v1872
          %v2218 = vunpack.c.h.b16 %v1872
          %v2219 = vunpack.c.l.b16 %v1873
          %v2220 = vunpack.c.l.b16 %v1874
          %v2221 = vunpack.c.h.b16 %v1874
          %v2222 = vunpack.c.l.b16 %v1875
          %v2223 = vunpack.c.l.b16 %v1876
          %v2224 = vunpack.c.h.b16 %v1876
          %v2225 = vunpack.c.l.b16 %v1877
          %v2226 = vunpack.c.l.b16 %v1878
          %v2227 = vunpack.c.h.b16 %v1878
          %v2228 = vunpack.c.l.b16 %v1879
          %v2229 = vunpack.c.l.b16 %v1880
          %v2230 = vunpack.c.h.b16 %v1880
          %v2231 = vunpack.c.l.b16 %v1881
          %v2232 = vunpack.c.l.b16 %v1882
          %v2233 = vunpack.c.h.b16 %v1882
          %v2234 = vunpack.c.l.b16 %v1883
          %v2235 = vunpack.c.l.b16 %v1884
          %v2236 = vunpack.c.h.b16 %v1884
          %v2237 = vunpack.c.l.b16 %v1885
          %v2238 = vunpack.c.l.b16 %v1886
          %v2239 = vunpack.c.h.b16 %v1886
          %v2240 = vunpack.c.l.b16 %v1887
          %v2241 = vpack.c.b16 %v2196, %v2193
          %v2242 = vpack.c.b16 %v2197, %v2194
          %v2243 = vpack.c.b16 %v2198, %v2195
          %v2244 = vpack.c.b16 %v2202, %v2199
          %v2245 = vpack.c.b16 %v2203, %v2200
          %v2246 = vpack.c.b16 %v2204, %v2201
          %v2247 = vpack.c.b16 %v2208, %v2205
          %v2248 = vpack.c.b16 %v2209, %v2206
          %v2249 = vpack.c.b16 %v2210, %v2207
          %v2250 = vpack.c.b16 %v2214, %v2211
          %v2251 = vpack.c.b16 %v2215, %v2212
          %v2252 = vpack.c.b16 %v2216, %v2213
          %v2253 = vpack.c.b16 %v2220, %v2217
          %v2254 = vpack.c.b16 %v2221, %v2218
          %v2255 = vpack.c.b16 %v2222, %v2219
          %v2256 = vpack.c.b16 %v2226, %v2223
          %v2257 = vpack.c.b16 %v2227, %v2224
          %v2258 = vpack.c.b16 %v2228, %v2225
          %v2259 = vpack.c.b16 %v2232, %v2229
          %v2260 = vpack.c.b16 %v2233, %v2230
          %v2261 = vpack.c.b16 %v2234, %v2231
          %v2262 = vpack.c.b16 %v2238, %v2235
          %v2263 = vpack.c.b16 %v2239, %v2236
          %v2264 = vpack.c.b16 %v2240, %v2237
          %2289 = vmatprep.subr.bf16.mxu0 %v2242
          %2290 = vmatpush1.bf16.msra.mxu0 %v2241
          %2291 = vmatprep.subr.bf16.mxu0 %v2245
          %2292 = vmatpush1.bf16.msra.mxu0 %v2244
          %2293 = vmatprep.subr.bf16.mxu0 %v2248
          %2294 = vmatpush1.bf16.msra.mxu0 %v2247
          %2295 = vmatprep.subr.bf16.mxu0 %v2251
          %2296 = vmatpush1.bf16.msra.mxu0 %v2250
          %2297 = vmatprep.subr.bf16.mxu0 %v2254
          %2298 = vmatpush1.bf16.msra.mxu0 %v2253
          %2299 = vmatprep.subr.bf16.mxu0 %v2257
          %2300 = vmatpush1.bf16.msra.mxu0 %v2256
          %2301 = vmatprep.subr.bf16.mxu0 %v2260
          %2302 = vmatpush1.bf16.msra.mxu0 %v2259
          %2303 = vmatprep.subr.bf16.mxu0 %v2263
          %2304 = vmatpush1.bf16.msra.mxu0 %v2262
          %2305 = vmatprep.subr.bf16.mxu0 0
          %2306 = vmatpush1.bf16.msra.mxu0 0
          %2307 = vmatprep.subr.bf16.mxu0 0
          %2308 = vmatpush1.bf16.msra.mxu0 0
          %2309 = vmatprep.subr.bf16.mxu0 0
          %2310 = vmatpush1.bf16.msra.mxu0 0
          %2311 = vmatprep.subr.bf16.mxu0 0
          %2312 = vmatpush1.bf16.msra.mxu0 0
          %2313 = vmatprep.subr.bf16.mxu0 0
          %2314 = vmatpush1.bf16.msra.mxu0 0
          %2315 = vmatprep.subr.bf16.mxu0 0
          %2316 = vmatpush1.bf16.msra.mxu0 0
          %2317 = vmatprep.subr.bf16.mxu0 0
          %2318 = vmatpush1.bf16.msra.mxu0 0
          %2319 = vmatprep.subr.bf16.mxu0 0
          %2320 = vmatpush1.bf16.msra.mxu0 0
          %2321 = vmatprep.mubr.bf16.mxu0 0
          %2322 = vmatmul.mubr.bf16.gmra.mrb[0].mxu0 %v938
          %v2323 = vpop.f32.mrb[0].mxu0
          %v2324 = vadd.f32 %v2115, %v2323
          %v2325 = vpop.f32.mrb[0].mxu0
          %v2326 = vadd.f32 %v2117, %v2325
          %v2327 = vpop.f32.mrb[0].mxu0
          %v2328 = vpop.f32.mrb[0].mxu0
          %2329 = vdwg.mxu0
          %2330 = vmatprep.subr.bf16.mxu0 0
          %2331 = vmatpush1.bf16.msra.mxu0 %v2243
          %2332 = vmatprep.subr.bf16.mxu0 0
          %2333 = vmatpush1.bf16.msra.mxu0 %v2246
          %2334 = vmatprep.subr.bf16.mxu0 0
          %2335 = vmatpush1.bf16.msra.mxu0 %v2249
          %2336 = vmatprep.subr.bf16.mxu0 0
          %2337 = vmatpush1.bf16.msra.mxu0 %v2252
          %2338 = vmatprep.subr.bf16.mxu0 0
          %2339 = vmatpush1.bf16.msra.mxu0 %v2255
          %2340 = vmatprep.subr.bf16.mxu0 0
          %2341 = vmatpush1.bf16.msra.mxu0 %v2258
          %2342 = vmatprep.subr.bf16.mxu0 0
          %2343 = vmatpush1.bf16.msra.mxu0 %v2261
          %2344 = vmatprep.subr.bf16.mxu0 0
          %2345 = vmatpush1.bf16.msra.mxu0 %v2264
          %2346 = vmatprep.subr.bf16.mxu0 0
          %2347 = vmatpush1.bf16.msra.mxu0 0
          %2348 = vmatprep.subr.bf16.mxu0 0
          %2349 = vmatpush1.bf16.msra.mxu0 0
          %2350 = vmatprep.subr.bf16.mxu0 0
          %2351 = vmatpush1.bf16.msra.mxu0 0
          %2352 = vmatprep.subr.bf16.mxu0 0
          %2353 = vmatpush1.bf16.msra.mxu0 0
          %2354 = vmatprep.subr.bf16.mxu0 0
          %2355 = vmatpush1.bf16.msra.mxu0 0
          %2356 = vmatprep.subr.bf16.mxu0 0
          %2357 = vmatpush1.bf16.msra.mxu0 0
          %2358 = vmatprep.subr.bf16.mxu0 0
          %2359 = vmatpush1.bf16.msra.mxu0 0
          %2360 = vmatprep.subr.bf16.mxu0 0
          %2361 = vmatpush1.bf16.msra.mxu0 0
          %2362 = vmatprep.mubr.bf16.mxu0 0
          %2363 = vmatmul.mubr.bf16.gmra.mrb[0].mxu0 %v938
          %v2364 = vpop.f32.mrb[0].mxu0
          %v2365 = vadd.f32 %v2156, %v2364
          %v2366 = vpop.f32.mrb[0].mxu0
          %v2367 = vpop.f32.mrb[0].mxu0
          %v2368 = vpop.f32.mrb[0].mxu0
          %2369 = vdwg.mxu0
          %v2370 = vld [vmem:[#allocation27] sm:$0x7]
          %v2372 = vlaneseq
          %v2373 = vshrl.u32 %v2372, 7
          %v2374 = vsub.s32 0, %v2373
          %v2375 = vrot.slane %v2370, %v2374
          %v2376 = vlaneseq
          %v2377 = vshrl.u32 %v2376, 7
          %v2378 = vsub.s32 1, %v2377
          %v2379 = vrot.slane %v2370, %v2378
          %v2380 = vlaneseq
          %v2381 = vshrl.u32 %v2380, 7
          %v2382 = vsub.s32 2, %v2381
          %v2383 = vrot.slane %v2370, %v2382
          %v2387 = vadd.f32 %v2324, %v2375
          %v2388 = vadd.f32 %v2326, %v2379
          %v2389 = vadd.f32 %v2365, %v2383
          %v2390 = vld [vmem:[#allocation28] sm:$0xff]
          %v2391 = vld [vmem:[#allocation28 + $0x8] sm:$0xf]
          %v2392 = vld [vmem:[#allocation28 + $0xc] sm:$0xff]
          %v2393 = vld [vmem:[#allocation28 + $0x14] sm:$0xf]
          %v2394 = vld [vmem:[#allocation28 + $0x18] sm:$0xff]
          %v2395 = vld [vmem:[#allocation28 + $0x20] sm:$0xf]
          %v2396 = vld [vmem:[#allocation28 + $0x24] sm:$0xff]
          %v2397 = vld [vmem:[#allocation28 + $0x2c] sm:$0xf]
          %v2398 = vld [vmem:[#allocation28 + $0x30] sm:$0xff]
          %v2399 = vld [vmem:[#allocation28 + $0x38] sm:$0xf]
          %v2400 = vld [vmem:[#allocation28 + $0x3c] sm:$0xff]
          %v2401 = vld [vmem:[#allocation28 + $0x44] sm:$0xf]
          %v2402 = vld [vmem:[#allocation28 + $0x48] sm:$0xff]
          %v2403 = vld [vmem:[#allocation28 + $0x50] sm:$0xf]
          %v2404 = vld [vmem:[#allocation28 + $0x54] sm:$0xff]
          %v2405 = vld [vmem:[#allocation28 + $0x5c] sm:$0xf]
          %v2406 = vld [vmem:[#allocation28 + $0x60] sm:$0xff]
          %v2407 = vld [vmem:[#allocation28 + $0x68] sm:$0xf]
          %v2408 = vld [vmem:[#allocation28 + $0x6c] sm:$0xff]
          %v2409 = vld [vmem:[#allocation28 + $0x74] sm:$0xf]
          %v2410 = vld [vmem:[#allocation28 + $0x78] sm:$0xff]
          %v2411 = vld [vmem:[#allocation28 + $0x80] sm:$0xf]
          %v2412 = vld [vmem:[#allocation28 + $0x84] sm:$0xff]
          %v2413 = vld [vmem:[#allocation28 + $0x8c] sm:$0xf]
          %v2414 = vld [vmem:[#allocation28 + $0x90] sm:$0xff]
          %v2415 = vld [vmem:[#allocation28 + $0x98] sm:$0xf]
          %v2416 = vld [vmem:[#allocation28 + $0x9c] sm:$0xff]
          %v2417 = vld [vmem:[#allocation28 + $0xa4] sm:$0xf]
          %v2418 = vld [vmem:[#allocation28 + $0xa8] sm:$0xff]
          %v2419 = vld [vmem:[#allocation28 + $0xb0] sm:$0xf]
          %v2420 = vld [vmem:[#allocation28 + $0xb4] sm:$0xff]
          %v2421 = vld [vmem:[#allocation28 + $0xbc] sm:$0xf]
          %v2422 = vld [vmem:[#allocation30] sm:$0x7]
          %v2424 = vlaneseq
          %v2425 = vshrl.u32 %v2424, 7
          %v2426 = vsub.s32 0, %v2425
          %v2427 = vrot.slane %v2422, %v2426
          %v2428 = vlaneseq
          %v2429 = vshrl.u32 %v2428, 7
          %v2430 = vsub.s32 1, %v2429
          %v2431 = vrot.slane %v2422, %v2430
          %v2432 = vlaneseq
          %v2433 = vshrl.u32 %v2432, 7
          %v2434 = vsub.s32 2, %v2433
          %v2435 = vrot.slane %v2422, %v2434
          %v2471 = vunpack.c.l.b16 %v2390
          %v2472 = vunpack.c.h.b16 %v2390
          %v2473 = vunpack.c.l.b16 %v2391
          %v2474 = vunpack.c.l.b16 %v2392
          %v2475 = vunpack.c.h.b16 %v2392
          %v2476 = vunpack.c.l.b16 %v2393
          %v2477 = vunpack.c.l.b16 %v2394
          %v2478 = vunpack.c.h.b16 %v2394
          %v2479 = vunpack.c.l.b16 %v2395
          %v2480 = vunpack.c.l.b16 %v2396
          %v2481 = vunpack.c.h.b16 %v2396
          %v2482 = vunpack.c.l.b16 %v2397
          %v2483 = vunpack.c.l.b16 %v2398
          %v2484 = vunpack.c.h.b16 %v2398
          %v2485 = vunpack.c.l.b16 %v2399
          %v2486 = vunpack.c.l.b16 %v2400
          %v2487 = vunpack.c.h.b16 %v2400
          %v2488 = vunpack.c.l.b16 %v2401
          %v2489 = vunpack.c.l.b16 %v2402
          %v2490 = vunpack.c.h.b16 %v2402
          %v2491 = vunpack.c.l.b16 %v2403
          %v2492 = vunpack.c.l.b16 %v2404
          %v2493 = vunpack.c.h.b16 %v2404
          %v2494 = vunpack.c.l.b16 %v2405
          %v2495 = vunpack.c.l.b16 %v2406
          %v2496 = vunpack.c.h.b16 %v2406
          %v2497 = vunpack.c.l.b16 %v2407
          %v2498 = vunpack.c.l.b16 %v2408
          %v2499 = vunpack.c.h.b16 %v2408
          %v2500 = vunpack.c.l.b16 %v2409
          %v2501 = vunpack.c.l.b16 %v2410
          %v2502 = vunpack.c.h.b16 %v2410
          %v2503 = vunpack.c.l.b16 %v2411
          %v2504 = vunpack.c.l.b16 %v2412
          %v2505 = vunpack.c.h.b16 %v2412
          %v2506 = vunpack.c.l.b16 %v2413
          %v2507 = vunpack.c.l.b16 %v2414
          %v2508 = vunpack.c.h.b16 %v2414
          %v2509 = vunpack.c.l.b16 %v2415
          %v2510 = vunpack.c.l.b16 %v2416
          %v2511 = vunpack.c.h.b16 %v2416
          %v2512 = vunpack.c.l.b16 %v2417
          %v2513 = vunpack.c.l.b16 %v2418
          %v2514 = vunpack.c.h.b16 %v2418
          %v2515 = vunpack.c.l.b16 %v2419
          %v2516 = vunpack.c.l.b16 %v2420
          %v2517 = vunpack.c.h.b16 %v2420
          %v2518 = vunpack.c.l.b16 %v2421
          %v2519 = vpack.c.b16 %v2474, %v2471
          %v2520 = vpack.c.b16 %v2475, %v2472
          %v2521 = vpack.c.b16 %v2476, %v2473
          %v2522 = vpack.c.b16 %v2480, %v2477
          %v2523 = vpack.c.b16 %v2481, %v2478
          %v2524 = vpack.c.b16 %v2482, %v2479
          %v2525 = vpack.c.b16 %v2486, %v2483
          %v2526 = vpack.c.b16 %v2487, %v2484
          %v2527 = vpack.c.b16 %v2488, %v2485
          %v2528 = vpack.c.b16 %v2492, %v2489
          %v2529 = vpack.c.b16 %v2493, %v2490
          %v2530 = vpack.c.b16 %v2494, %v2491
          %v2531 = vpack.c.b16 %v2498, %v2495
          %v2532 = vpack.c.b16 %v2499, %v2496
          %v2533 = vpack.c.b16 %v2500, %v2497
          %v2534 = vpack.c.b16 %v2504, %v2501
          %v2535 = vpack.c.b16 %v2505, %v2502
          %v2536 = vpack.c.b16 %v2506, %v2503
          %v2537 = vpack.c.b16 %v2510, %v2507
          %v2538 = vpack.c.b16 %v2511, %v2508
          %v2539 = vpack.c.b16 %v2512, %v2509
          %v2540 = vpack.c.b16 %v2516, %v2513
          %v2541 = vpack.c.b16 %v2517, %v2514
          %v2542 = vpack.c.b16 %v2518, %v2515
          %2567 = vmatprep.subr.bf16.mxu0 %v2520
          %2568 = vmatpush1.bf16.msra.mxu0 %v2519
          %2569 = vmatprep.subr.bf16.mxu0 %v2523
          %2570 = vmatpush1.bf16.msra.mxu0 %v2522
          %2571 = vmatprep.subr.bf16.mxu0 %v2526
          %2572 = vmatpush1.bf16.msra.mxu0 %v2525
          %2573 = vmatprep.subr.bf16.mxu0 %v2529
          %2574 = vmatpush1.bf16.msra.mxu0 %v2528
          %2575 = vmatprep.subr.bf16.mxu0 %v2532
          %2576 = vmatpush1.bf16.msra.mxu0 %v2531
          %2577 = vmatprep.subr.bf16.mxu0 %v2535
          %2578 = vmatpush1.bf16.msra.mxu0 %v2534
          %2579 = vmatprep.subr.bf16.mxu0 %v2538
          %2580 = vmatpush1.bf16.msra.mxu0 %v2537
          %2581 = vmatprep.subr.bf16.mxu0 %v2541
          %2582 = vmatpush1.bf16.msra.mxu0 %v2540
          %2583 = vmatprep.subr.bf16.mxu0 0
          %2584 = vmatpush1.bf16.msra.mxu0 0
          %2585 = vmatprep.subr.bf16.mxu0 0
          %2586 = vmatpush1.bf16.msra.mxu0 0
          %2587 = vmatprep.subr.bf16.mxu0 0
          %2588 = vmatpush1.bf16.msra.mxu0 0
          %2589 = vmatprep.subr.bf16.mxu0 0
          %2590 = vmatpush1.bf16.msra.mxu0 0
          %2591 = vmatprep.subr.bf16.mxu0 0
          %2592 = vmatpush1.bf16.msra.mxu0 0
          %2593 = vmatprep.subr.bf16.mxu0 0
          %2594 = vmatpush1.bf16.msra.mxu0 0
          %2595 = vmatprep.subr.bf16.mxu0 0
          %2596 = vmatpush1.bf16.msra.mxu0 0
          %2597 = vmatprep.subr.bf16.mxu0 0
          %2598 = vmatpush1.bf16.msra.mxu0 0
          %2599 = vmatprep.mubr.bf16.mxu0 0
          %2600 = vmatmul.mubr.bf16.gmra.mrb[0].mxu0 %v940
          %v2601 = vpop.f32.mrb[0].mxu0
          %v2602 = vadd.f32 %v2427, %v2601
          %v2603 = vpop.f32.mrb[0].mxu0
          %v2604 = vadd.f32 %v2431, %v2603
          %v2605 = vpop.f32.mrb[0].mxu0
          %v2606 = vpop.f32.mrb[0].mxu0
          %2607 = vdwg.mxu0
          %2608 = vmatprep.subr.bf16.mxu0 0
          %2609 = vmatpush1.bf16.msra.mxu0 %v2521
          %2610 = vmatprep.subr.bf16.mxu0 0
          %2611 = vmatpush1.bf16.msra.mxu0 %v2524
          %2612 = vmatprep.subr.bf16.mxu0 0
          %2613 = vmatpush1.bf16.msra.mxu0 %v2527
          %2614 = vmatprep.subr.bf16.mxu0 0
          %2615 = vmatpush1.bf16.msra.mxu0 %v2530
          %2616 = vmatprep.subr.bf16.mxu0 0
          %2617 = vmatpush1.bf16.msra.mxu0 %v2533
          %2618 = vmatprep.subr.bf16.mxu0 0
          %2619 = vmatpush1.bf16.msra.mxu0 %v2536
          %2620 = vmatprep.subr.bf16.mxu0 0
          %2621 = vmatpush1.bf16.msra.mxu0 %v2539
          %2622 = vmatprep.subr.bf16.mxu0 0
          %2623 = vmatpush1.bf16.msra.mxu0 %v2542
          %2624 = vmatprep.subr.bf16.mxu0 0
          %2625 = vmatpush1.bf16.msra.mxu0 0
          %2626 = vmatprep.subr.bf16.mxu0 0
          %2627 = vmatpush1.bf16.msra.mxu0 0
          %2628 = vmatprep.subr.bf16.mxu0 0
          %2629 = vmatpush1.bf16.msra.mxu0 0
          %2630 = vmatprep.subr.bf16.mxu0 0
          %2631 = vmatpush1.bf16.msra.mxu0 0
          %2632 = vmatprep.subr.bf16.mxu0 0
          %2633 = vmatpush1.bf16.msra.mxu0 0
          %2634 = vmatprep.subr.bf16.mxu0 0
          %2635 = vmatpush1.bf16.msra.mxu0 0
          %2636 = vmatprep.subr.bf16.mxu0 0
          %2637 = vmatpush1.bf16.msra.mxu0 0
          %2638 = vmatprep.subr.bf16.mxu0 0
          %2639 = vmatpush1.bf16.msra.mxu0 0
          %2640 = vmatprep.mubr.bf16.mxu0 0
          %2641 = vmatmul.mubr.bf16.gmra.mrb[0].mxu0 %v940
          %v2642 = vpop.f32.mrb[0].mxu0
          %v2643 = vadd.f32 %v2435, %v2642
          %v2644 = vpop.f32.mrb[0].mxu0
          %v2645 = vpop.f32.mrb[0].mxu0
          %v2646 = vpop.f32.mrb[0].mxu0
          %2647 = vdwg.mxu0
          %v2648 = vadd.f32 %v2387, %v2602
          %v2649 = vxor.u32 %v2648, 2147483648
          %v2650 = vmul.f32 %v2649, 1.442695
          %v2651 = vpow.pop %v2650
          %v2652 = vadd.f32 %v2651, 1.0
          %v2653 = vrcp.pop %v2652
          %v2654 = vmul.f32 1.0, %v2653
          %v2655 = vadd.f32 %v2388, %v2604
          %v2656 = vxor.u32 %v2655, 2147483648
          %v2657 = vmul.f32 %v2656, 1.442695
          %v2658 = vpow.pop %v2657
          %v2659 = vadd.f32 %v2658, 1.0
          %v2660 = vrcp.pop %v2659
          %v2661 = vmul.f32 1.0, %v2660
          %v2662 = vmul.f32 %v2654, %v2643
          %v2663 = vadd.f32 %v2389, %v2662
          %v2664 = vtanh.pop %v2663
          %v2665 = vsub.f32 1.0, %v2661
          %v2666 = vmul.f32 %v2665, %v2664
          %v2667 = vmul.f32 %v2661, %v823
          %v2668 = vadd.f32 %v2666, %v2667
          %2669 = vst [vmem:[#allocation2] sm:$0xff] %v2668
          %v2670 = vpack.c.b16 %v1928, %v1928
          %v2671 = vpack.c.b16 %v1929, %v1929
          %v2672 = vpack.c.b16 %v1930, %v1930
          %v2673 = vpack.c.b16 %v1931, %v1931
          %v2674 = vpack.c.b16 %v1932, %v1932
          %v2675 = vpack.c.b16 %v1933, %v1933
          %v2676 = vpack.c.b16 %v1934, %v1934
          %v2677 = vpack.c.b16 %v1935, %v1935
          %v2678 = vunpack.c.l.b16 %v2670
          %v2679 = vunpack.c.l.b16 %v2671
          %v2680 = vunpack.c.l.b16 %v2672
          %v2681 = vunpack.c.l.b16 %v2673
          %v2682 = vunpack.c.l.b16 %v2674
          %v2683 = vunpack.c.l.b16 %v2675
          %v2684 = vunpack.c.l.b16 %v2676
          %v2685 = vunpack.c.l.b16 %v2677
          %v2686 = vrot.slane %v2679, 7
          %v2687 = vsel %vm1346, %v2686, %v2678
          %v2688 = vrot.slane %v2680, 6
          %v2689 = vsel %vm1348, %v2688, %v2687
          %v2690 = vrot.slane %v2681, 5
          %v2691 = vsel %vm1350, %v2690, %v2689
          %v2692 = vrot.slane %v2682, 4
          %v2693 = vsel %vm1352, %v2692, %v2691
          %v2694 = vrot.slane %v2683, 3
          %v2695 = vsel %vm1354, %v2694, %v2693
          %v2696 = vrot.slane %v2684, 2
          %v2697 = vsel %vm1356, %v2696, %v2695
          %v2698 = vrot.slane %v2685, 1
          %v2699 = vsel %vm1358, %v2698, %v2697
          %v2700 = vpack.c.b16 %v2699, %v2699
          %2702 = vst [vmem:[#allocation4] sm:$0xf] %v2700
          %vm2703 = vcmask 7168
          %2704 = vst.msk [vmem:[#allocation6] sm:$0xff] %vm2703, -inf
          %2705 = vst.msk [vmem:[#allocation7] sm:$0xff] %vm2703, 0
        $region160: #{seq2seq_forward.7} parent=87 // pred_fallthru
          _
        %v2706 = vld [vmem:[#allocation2] sm:$0xff]
        %v2707 = vpack.c.bf16 %v2706, %v2706
        %v2708 = vld [vmem:[#allocation31] sm:$0xf]
        %v2709 = vld [vmem:[#allocation31 + $0x4] sm:$0xf]
        %v2710 = vld [vmem:[#allocation31 + $0x8] sm:$0xf]
        %v2711 = vld [vmem:[#allocation31 + $0xc] sm:$0xf]
        %v2712 = vld [vmem:[#allocation31 + $0x10] sm:$0xf]
        %v2713 = vld [vmem:[#allocation31 + $0x14] sm:$0xf]
        %v2714 = vld [vmem:[#allocation31 + $0x18] sm:$0xf]
        %v2715 = vld [vmem:[#allocation31 + $0x1c] sm:$0xf]
        %v2716 = vld [vmem:[#allocation31 + $0x20] sm:$0xf]
        %v2717 = vld [vmem:[#allocation31 + $0x24] sm:$0xf]
        %v2718 = vld [vmem:[#allocation31 + $0x28] sm:$0xf]
        %v2719 = vld [vmem:[#allocation31 + $0x2c] sm:$0xf]
        %v2720 = vld [vmem:[#allocation31 + $0x30] sm:$0xf]
        %v2721 = vld [vmem:[#allocation31 + $0x34] sm:$0xf]
        %v2722 = vld [vmem:[#allocation31 + $0x38] sm:$0xf]
        %v2723 = vld [vmem:[#allocation31 + $0x3c] sm:$0xf]
        %v2724 = vld [vmem:[#allocation4] sm:$0xf]
        %v2725 = vld [vmem:[#allocation33] sm:$0xf]
        %v2726 = vld [vmem:[#allocation33 + $0x4] sm:$0xf]
        %v2727 = vld [vmem:[#allocation33 + $0x8] sm:$0xf]
        %v2728 = vld [vmem:[#allocation33 + $0xc] sm:$0xf]
        %v2729 = vld [vmem:[#allocation33 + $0x10] sm:$0xf]
        %v2730 = vld [vmem:[#allocation33 + $0x14] sm:$0xf]
        %v2731 = vld [vmem:[#allocation33 + $0x18] sm:$0xf]
        %v2732 = vld [vmem:[#allocation33 + $0x1c] sm:$0xf]
        %v2733 = vld [vmem:[#allocation33 + $0x20] sm:$0xf]
        %v2734 = vld [vmem:[#allocation33 + $0x24] sm:$0xf]
        %v2735 = vld [vmem:[#allocation33 + $0x28] sm:$0xf]
        %v2736 = vld [vmem:[#allocation33 + $0x2c] sm:$0xf]
        %v2737 = vld [vmem:[#allocation33 + $0x30] sm:$0xf]
        %v2738 = vld [vmem:[#allocation33 + $0x34] sm:$0xf]
        %v2739 = vld [vmem:[#allocation33 + $0x38] sm:$0xf]
        %v2740 = vld [vmem:[#allocation33 + $0x3c] sm:$0xf]
        %v2757 = vunpack.c.l.b16 %v2725
        %v2758 = vunpack.c.l.b16 %v2726
        %v2759 = vunpack.c.l.b16 %v2727
        %v2760 = vunpack.c.l.b16 %v2728
        %v2761 = vunpack.c.l.b16 %v2729
        %v2762 = vunpack.c.l.b16 %v2730
        %v2763 = vunpack.c.l.b16 %v2731
        %v2764 = vunpack.c.l.b16 %v2732
        %v2765 = vunpack.c.l.b16 %v2733
        %v2766 = vunpack.c.l.b16 %v2734
        %v2767 = vunpack.c.l.b16 %v2735
        %v2768 = vunpack.c.l.b16 %v2736
        %v2769 = vunpack.c.l.b16 %v2737
        %v2770 = vunpack.c.l.b16 %v2738
        %v2771 = vunpack.c.l.b16 %v2739
        %v2772 = vunpack.c.l.b16 %v2740
        %v2773 = vpack.c.b16 %v2758, %v2757
        %v2774 = vpack.c.b16 %v2760, %v2759
        %v2775 = vpack.c.b16 %v2762, %v2761
        %v2776 = vpack.c.b16 %v2764, %v2763
        %v2777 = vpack.c.b16 %v2766, %v2765
        %v2778 = vpack.c.b16 %v2768, %v2767
        %v2779 = vpack.c.b16 %v2770, %v2769
        %v2780 = vpack.c.b16 %v2772, %v2771
        %2789 = vmatprep.subr.bf16.mxu0 0
        %2790 = vmatpush1.bf16.msra.mxu0 %v2773
        %2791 = vmatprep.subr.bf16.mxu0 0
        %2792 = vmatpush1.bf16.msra.mxu0 %v2774
        %2793 = vmatprep.subr.bf16.mxu0 0
        %2794 = vmatpush1.bf16.msra.mxu0 %v2775
        %2795 = vmatprep.subr.bf16.mxu0 0
        %2796 = vmatpush1.bf16.msra.mxu0 %v2776
        %2797 = vmatprep.subr.bf16.mxu0 0
        %2798 = vmatpush1.bf16.msra.mxu0 %v2777
        %2799 = vmatprep.subr.bf16.mxu0 0
        %2800 = vmatpush1.bf16.msra.mxu0 %v2778
        %2801 = vmatprep.subr.bf16.mxu0 0
        %2802 = vmatpush1.bf16.msra.mxu0 %v2779
        %2803 = vmatprep.subr.bf16.mxu0 0
        %2804 = vmatpush1.bf16.msra.mxu0 %v2780
        %2805 = vmatprep.subr.bf16.mxu0 0
        %2806 = vmatpush1.bf16.msra.mxu0 0
        %2807 = vmatprep.subr.bf16.mxu0 0
        %2808 = vmatpush1.bf16.msra.mxu0 0
        %2809 = vmatprep.subr.bf16.mxu0 0
        %2810 = vmatpush1.bf16.msra.mxu0 0
        %2811 = vmatprep.subr.bf16.mxu0 0
        %2812 = vmatpush1.bf16.msra.mxu0 0
        %2813 = vmatprep.subr.bf16.mxu0 0
        %2814 = vmatpush1.bf16.msra.mxu0 0
        %2815 = vmatprep.subr.bf16.mxu0 0
        %2816 = vmatpush1.bf16.msra.mxu0 0
        %2817 = vmatprep.subr.bf16.mxu0 0
        %2818 = vmatpush1.bf16.msra.mxu0 0
        %2819 = vmatprep.subr.bf16.mxu0 0
        %2820 = vmatpush1.bf16.msra.mxu0 0
        %2821 = vmatprep.mubr.bf16.mxu0 0
        %2822 = vmatmul.mubr.bf16.gmra.mrb[0].mxu0 %v2724
        %v2823 = vpop.f32.mrb[0].mxu0
        %v2824 = vadd.f32 0.0, %v2823
        %v2825 = vpop.f32.mrb[0].mxu0
        %v2826 = vpop.f32.mrb[0].mxu0
        %v2827 = vpop.f32.mrb[0].mxu0
        %2828 = vdwg.mxu0
        %v2845 = vunpack.c.l.b16 %v2708
        %v2846 = vunpack.c.l.b16 %v2709
        %v2847 = vunpack.c.l.b16 %v2710
        %v2848 = vunpack.c.l.b16 %v2711
        %v2849 = vunpack.c.l.b16 %v2712
        %v2850 = vunpack.c.l.b16 %v2713
        %v2851 = vunpack.c.l.b16 %v2714
        %v2852 = vunpack.c.l.b16 %v2715
        %v2853 = vunpack.c.l.b16 %v2716
        %v2854 = vunpack.c.l.b16 %v2717
        %v2855 = vunpack.c.l.b16 %v2718
        %v2856 = vunpack.c.l.b16 %v2719
        %v2857 = vunpack.c.l.b16 %v2720
        %v2858 = vunpack.c.l.b16 %v2721
        %v2859 = vunpack.c.l.b16 %v2722
        %v2860 = vunpack.c.l.b16 %v2723
        %v2861 = vpack.c.b16 %v2846, %v2845
        %v2862 = vpack.c.b16 %v2848, %v2847
        %v2863 = vpack.c.b16 %v2850, %v2849
        %v2864 = vpack.c.b16 %v2852, %v2851
        %v2865 = vpack.c.b16 %v2854, %v2853
        %v2866 = vpack.c.b16 %v2856, %v2855
        %v2867 = vpack.c.b16 %v2858, %v2857
        %v2868 = vpack.c.b16 %v2860, %v2859
        %2877 = vmatprep.subr.bf16.mxu0 0
        %2878 = vmatpush1.bf16.msra.mxu0 %v2861
        %2879 = vmatprep.subr.bf16.mxu0 0
        %2880 = vmatpush1.bf16.msra.mxu0 %v2862
        %2881 = vmatprep.subr.bf16.mxu0 0
        %2882 = vmatpush1.bf16.msra.mxu0 %v2863
        %2883 = vmatprep.subr.bf16.mxu0 0
        %2884 = vmatpush1.bf16.msra.mxu0 %v2864
        %2885 = vmatprep.subr.bf16.mxu0 0
        %2886 = vmatpush1.bf16.msra.mxu0 %v2865
        %2887 = vmatprep.subr.bf16.mxu0 0
        %2888 = vmatpush1.bf16.msra.mxu0 %v2866
        %2889 = vmatprep.subr.bf16.mxu0 0
        %2890 = vmatpush1.bf16.msra.mxu0 %v2867
        %2891 = vmatprep.subr.bf16.mxu0 0
        %2892 = vmatpush1.bf16.msra.mxu0 %v2868
        %2893 = vmatprep.subr.bf16.mxu0 0
        %2894 = vmatpush1.bf16.msra.mxu0 0
        %2895 = vmatprep.subr.bf16.mxu0 0
        %2896 = vmatpush1.bf16.msra.mxu0 0
        %2897 = vmatprep.subr.bf16.mxu0 0
        %2898 = vmatpush1.bf16.msra.mxu0 0
        %2899 = vmatprep.subr.bf16.mxu0 0
        %2900 = vmatpush1.bf16.msra.mxu0 0
        %2901 = vmatprep.subr.bf16.mxu0 0
        %2902 = vmatpush1.bf16.msra.mxu0 0
        %2903 = vmatprep.subr.bf16.mxu0 0
        %2904 = vmatpush1.bf16.msra.mxu0 0
        %2905 = vmatprep.subr.bf16.mxu0 0
        %2906 = vmatpush1.bf16.msra.mxu0 0
        %2907 = vmatprep.subr.bf16.mxu0 0
        %2908 = vmatpush1.bf16.msra.mxu0 0
        %2909 = vmatprep.mubr.bf16.mxu0 0
        %2910 = vmatmul.mubr.bf16.gmra.mrb[0].mxu0 %v2707
        %v2911 = vpop.f32.mrb[0].mxu0
        %v2912 = vadd.f32 %v2824, %v2911
        %v2913 = vpop.f32.mrb[0].mxu0
        %v2914 = vpop.f32.mrb[0].mxu0
        %v2915 = vpop.f32.mrb[0].mxu0
        %2916 = vdwg.mxu0
        %v2917 = vld [vmem:[#allocation3] sm:$0xf]
        %v2918 = vld [vmem:[#allocation34] sm:$0xf]
        %v2919 = vld [vmem:[#allocation34 + $0x4] sm:$0xf]
        %v2920 = vld [vmem:[#allocation34 + $0x8] sm:$0xf]
        %v2921 = vld [vmem:[#allocation34 + $0xc] sm:$0xf]
        %v2922 = vld [vmem:[#allocation34 + $0x10] sm:$0xf]
        %v2923 = vld [vmem:[#allocation34 + $0x14] sm:$0xf]
        %v2924 = vld [vmem:[#allocation34 + $0x18] sm:$0xf]
        %v2925 = vld [vmem:[#allocation34 + $0x1c] sm:$0xf]
        %v2926 = vld [vmem:[#allocation34 + $0x20] sm:$0xf]
        %v2927 = vld [vmem:[#allocation34 + $0x24] sm:$0xf]
        %v2928 = vld [vmem:[#allocation34 + $0x28] sm:$0xf]
        %v2929 = vld [vmem:[#allocation34 + $0x2c] sm:$0xf]
        %v2930 = vld [vmem:[#allocation34 + $0x30] sm:$0xf]
        %v2931 = vld [vmem:[#allocation34 + $0x34] sm:$0xf]
        %v2932 = vld [vmem:[#allocation34 + $0x38] sm:$0xf]
        %v2933 = vld [vmem:[#allocation34 + $0x3c] sm:$0xf]
        %v2950 = vunpack.c.l.b16 %v2918
        %v2951 = vunpack.c.l.b16 %v2919
        %v2952 = vunpack.c.l.b16 %v2920
        %v2953 = vunpack.c.l.b16 %v2921
        %v2954 = vunpack.c.l.b16 %v2922
        %v2955 = vunpack.c.l.b16 %v2923
        %v2956 = vunpack.c.l.b16 %v2924
        %v2957 = vunpack.c.l.b16 %v2925
        %v2958 = vunpack.c.l.b16 %v2926
        %v2959 = vunpack.c.l.b16 %v2927
        %v2960 = vunpack.c.l.b16 %v2928
        %v2961 = vunpack.c.l.b16 %v2929
        %v2962 = vunpack.c.l.b16 %v2930
        %v2963 = vunpack.c.l.b16 %v2931
        %v2964 = vunpack.c.l.b16 %v2932
        %v2965 = vunpack.c.l.b16 %v2933
        %v2966 = vpack.c.b16 %v2951, %v2950
        %v2967 = vpack.c.b16 %v2953, %v2952
        %v2968 = vpack.c.b16 %v2955, %v2954
        %v2969 = vpack.c.b16 %v2957, %v2956
        %v2970 = vpack.c.b16 %v2959, %v2958
        %v2971 = vpack.c.b16 %v2961, %v2960
        %v2972 = vpack.c.b16 %v2963, %v2962
        %v2973 = vpack.c.b16 %v2965, %v2964
        %2982 = vmatprep.subr.bf16.mxu0 0
        %2983 = vmatpush1.bf16.msra.mxu0 %v2966
        %2984 = vmatprep.subr.bf16.mxu0 0
        %2985 = vmatpush1.bf16.msra.mxu0 %v2967
        %2986 = vmatprep.subr.bf16.mxu0 0
        %2987 = vmatpush1.bf16.msra.mxu0 %v2968
        %2988 = vmatprep.subr.bf16.mxu0 0
        %2989 = vmatpush1.bf16.msra.mxu0 %v2969
        %2990 = vmatprep.subr.bf16.mxu0 0
        %2991 = vmatpush1.bf16.msra.mxu0 %v2970
        %2992 = vmatprep.subr.bf16.mxu0 0
        %2993 = vmatpush1.bf16.msra.mxu0 %v2971
        %2994 = vmatprep.subr.bf16.mxu0 0
        %2995 = vmatpush1.bf16.msra.mxu0 %v2972
        %2996 = vmatprep.subr.bf16.mxu0 0
        %2997 = vmatpush1.bf16.msra.mxu0 %v2973
        %2998 = vmatprep.subr.bf16.mxu0 0
        %2999 = vmatpush1.bf16.msra.mxu0 0
        %3000 = vmatprep.subr.bf16.mxu0 0
        %3001 = vmatpush1.bf16.msra.mxu0 0
        %3002 = vmatprep.subr.bf16.mxu0 0
        %3003 = vmatpush1.bf16.msra.mxu0 0
        %3004 = vmatprep.subr.bf16.mxu0 0
        %3005 = vmatpush1.bf16.msra.mxu0 0
        %3006 = vmatprep.subr.bf16.mxu0 0
        %3007 = vmatpush1.bf16.msra.mxu0 0
        %3008 = vmatprep.subr.bf16.mxu0 0
        %3009 = vmatpush1.bf16.msra.mxu0 0
        %3010 = vmatprep.subr.bf16.mxu0 0
        %3011 = vmatpush1.bf16.msra.mxu0 0
        %3012 = vmatprep.subr.bf16.mxu0 0
        %3013 = vmatpush1.bf16.msra.mxu0 0
        %3014 = vmatprep.mubr.bf16.mxu0 0
        %3015 = vmatmul.mubr.bf16.gmra.mrb[0].mxu0 %v2917
        %v3016 = vpop.f32.mrb[0].mxu0
        %v3017 = vadd.f32 0.0, %v3016
        %v3018 = vpop.f32.mrb[0].mxu0
        %v3019 = vpop.f32.mrb[0].mxu0
        %v3020 = vpop.f32.mrb[0].mxu0
        %3021 = vdwg.mxu0
        %v3022 = vadd.f32 %v2912, %v3017
        %v3023 = vld [vmem:[#allocation36] sm:$0x1]
        %v3025 = vlaneseq
        %v3026 = vshrl.u32 %v3025, 7
        %v3027 = vsub.s32 0, %v3026
        %v3028 = vrot.slane %v3023, %v3027
        %v3030 = vadd.f32 %v3022, %v3028
        %3031 = vst [vmem:[%s808] sm:$0xff] %v3030
        %v3032 = vlaneseq
        %v3033 = vand.u32 %v3032, 127
        %s3034 = smul.u32 %s50, 128
        %v3035 = vstv %s3034
        %v3036 = vadd.s32 %v3033, %v3035
        %vm3037 = vcmp.lt.s32.totalorder %v3036, 24
        %v3038 = vsel %vm3037, %v3030, -inf
        %3039 = vmax.xlane.f32.xlu0 %v3038
        %v3040 = vpop.xlane.xlu0 %3039
        %vm3041 = vcmp.ge.f32.partialorder %v3038, %v3040
        %v3042 = vsel %vm3041, %v3036, 1073741824
        %v3043 = vand.u32 %v3042, 65535
        %v3044 = vshra.s32 %v3042, 16
        %v3045 = vcvt.s32.f32 %v3043
        %v3046 = vcvt.s32.f32 %v3044
        %3047 = vmin.xlane.f32.xlu0 %v3046
        %v3048 = vpop.xlane.xlu0 %3047
        %vm3049 = vcmp.eq.f32.partialorder %v3046, %v3048
        %v3050 = vsel %vm3049, %v3045, inf
        %3051 = vmin.xlane.f32.xlu0 %v3050
        %v3052 = vpop.xlane.xlu0 %3051
        %v3053 = vcvt.f32.s32 %v3052
        %v3054 = vcvt.f32.s32 %v3048
        %v3055 = vshll.u32 %v3054, 16
        %v3056 = vadd.s32 %v3055, %v3053
        %v3057 = vld [vmem:[#allocation6] sm:$0xff]
        %vm3058 = vcmp.gt.f32.partialorder %v3040, %v3057
        %v3059 = vld [vmem:[#allocation7] sm:$0xff]
        %v3060 = vsel %vm3058, %v3056, %v3059
        %vm3061 = vcmask 7168
        %3062 = vst.msk [vmem:[#allocation7] sm:$0xff] %vm3061, %v3060
        %v3063 = vld [vmem:[#allocation6] sm:$0xff]
        %v3064 = vmax.f32 %v3040, %v3063
        %3065 = vst.msk [vmem:[#allocation6] sm:$0xff] %vm3061, %v3064
        // Predicated region
        $region165: #{seq2seq_forward.7} parent=87 // pred_check
          %p3066 = pneg %p810
        $region166: #{seq2seq_forward.7} parent=87 // pred_check_branch
          %3068 = sbr.rel (%p3066) target = $region168
        $region167: #{seq2seq_forward.7} parent=87 // pred_region
          %s3069 = sld [smem:[#allocation9 + %s49]]
          %s3070 = sadd.s32 %s49, 1
          %s3071 = smul.u32 %s3070, 8
          %s3072 = scalar_lea.vmem [#allocation10], %s3071
          %v3073 = vld [vmem:[%s3072] sm:$0xff]
          %p3074 = scmp.gt.s32.totalorder %s3069, 0
          %v3075 = vld [vmem:[#allocation7] sm:$0xff]
          %s3076 = scalar_select %p3074, 1, 0
          %v3077 = vstv %s3076
          %vm3078 = vcmp.eq.s32.totalorder %v3077, 1
          %v3079 = vsel %vm3078, %v3073, %v3075
          %3080 = vst.msk [vmem:[#allocation5] sm:$0xff] %vm3061, %v3079
        $region168: #{seq2seq_forward.7} parent=87 // pred_fallthru
          _
        %s3081 = sand.u32 %s444, 1
        %s3082 = scalar_lea.sflag [#allocation12], %s3081
        %s3083 = sand.u32 %s444, 1
        %s3084 = smul.addr %s3083, 8
        %s3085 = scalar_lea.vmem [#allocation37], %s3084
        // Predicated region
        $region169: #{seq2seq_forward.7} parent=87 // pred_check
          %p3086 = pneg %p454
        $region170: #{seq2seq_forward.7} parent=87 // pred_check_branch
          %3088 = sbr.rel (%p3086) target = $region172
        $region171: #{seq2seq_forward.7} parent=87 // pred_region
          %s3090 = ssub.s32 128, 128
          %3091 = vsyncadd %s3082, %s3090
          %s3092 = sadd.s32 %s50, %s49
          %s3093 = smul.addr %s3092, 128
          %s3094 = scalar_lea.hbm %s18, %s3093
          %s3096 = sshll.u32 %s3085, 4
          %s3097 = int_to_ptr.vmem [resolvable:$true] %s3096
          %3099 = dma.vmem_to_hbm [thread:$0]  %s3097, 128, %s3094, %s3082
        $region172: #{seq2seq_forward.7} parent=87 // pred_fallthru
          _
      $region88: #{seq2seq_forward.7} parent=5 // pred_fallthru
        _
      %p3100 = scmp.le.s32.totalorder 2, %s40
      // Predicated region
      $region173: #{seq2seq_forward.7} parent=5 // pred_check
        %p3101 = pneg %p3100
      $region174: #{seq2seq_forward.7} parent=5 // pred_check_branch
        %3103 = sbr.rel (%p3101) target = $region176
      $region175: #{seq2seq_forward.7} parent=5 // pred_region
        %s3104 = ssub.s32 %s40, 2
        // Predicated region
        $region177: #{seq2seq_forward.7} parent=175 // pred_check
          %p3105 = pneg %p460
        $region178: #{seq2seq_forward.7} parent=175 // pred_check_branch
          %3107 = sbr.rel (%p3105) target = $region180
        $region179: #{seq2seq_forward.7} parent=175 // pred_region
          %s3108 = sand.u32 %s445, 1
          %s3109 = scalar_lea.sflag [#allocation12], %s3108
          %s3110 = sand.u32 %s445, 1
          %s3111 = smul.addr %s3110, 8
          %s3112 = scalar_lea.vmem [#allocation37], %s3111
          %3113 = dma.done %s3109, 128
        $region180: #{seq2seq_forward.7} parent=175 // pred_fallthru
          _
      $region176: #{seq2seq_forward.7} parent=5 // pred_fallthru
        _
    $region6: #{seq2seq_forward.7} parent=1 // loop_footer
      %s44 = sadd.s32 1, %s40
    $region7: #{seq2seq_forward.7} parent=1 // loop_footer_branch
      %39 = sbr.rel target = $region3
    $region8: #{seq2seq_forward.7} parent=1 // loop_exit
      _
    %3114 = vsyncpa [#allocation11], 1
    %s3115 = scalar_lea.sflag [#allocation11], 1
    %3116 = vsyncpa %s3115, 1
    %3117 = vsyncpa [#allocation14], 1
    %3118 = vsyncpa [#allocation17], 1
    %3119 = vsyncpa [#allocation20], 1
    %3120 = vsyncpa [#allocation23], 1
    %3121 = vsyncpa [#allocation26], 1
    %3122 = vsyncpa [#allocation29], 1
    %3123 = vsyncpa [#allocation32], 1
    %3124 = vsyncpa [#allocation35], 1
    %3125 = vsyncpa [#allocation12], 1
    %s3126 = scalar_lea.sflag [#allocation12], 1
    %3127 = vsyncpa %s3126, 1

// kernel: seq2seq_forward.5
$region0: #{seq2seq_forward.5}
  #allocation0 [shape = 'u32[]', space=smem, size = 0x4, offset = 0x4, fixed_abs, tag = 'smem constant byte address 0x4 - core index']
  #allocation1 [shape = 'u32[144,128]{1,0:T(1,128)}', space=vmem, size = 0x12000, scoped, tag = 'internal scratch']
  #allocation2 [shape = 'f32[8,16,128]{2,1,0:T(8,128)}', space=vmem, size = 0x10000, scoped, tag = 'scratch operand']
  %s0 = inlined_call_operand.vmem [shape: bf16[16,8,384], index: 0, kind: input, shape index: {}]
  %s1 = inlined_call_operand.vmem [shape: f32[16,8,1], index: 1, kind: input, shape index: {}]
  %s2 = inlined_call_operand.vmem [shape: bf16[128,384], index: 2, kind: input, shape index: {}]
  %s3 = inlined_call_operand.vmem [shape: f32[1,384], index: 3, kind: input, shape index: {}]
  %s4 = inlined_call_operand.vmem [shape: bf16[8,16,128], index: 4, kind: output, shape index: {0}]
  %s5 = inlined_call_operand.hbm [shape: f32[8,128], index: 5, kind: output, shape index: {1}]
  %6 = xla_tuple %s4, %s5
  %s7 = sld [smem:[#allocation0]]
  $region38: #{seq2seq_forward.5} parent=0
    _
  %s9 = ssub.s32 1, %s7
  %s10 = scalar_select 0, %s9, %s7
  $region1: #{seq2seq_forward.5} parent=0
    #allocation3 [shape = 'u8[4096]{0}', space=vmem, size = 0x1000, scoped, tag = 'output window, operand 1, single buffered']
    #allocation4 [shape = 's32[1]{0}', space=sflag, size = 0x4, scoped, tag = 'scoped memory for seq2seq_forward.5']
    %11 = vsyncpa [#allocation4], 0
    // Predicated region
    $region2: #{seq2seq_forward.5} parent=1 // pred_check
      _
    $region3: #{seq2seq_forward.5} parent=1 // pred_check_branch
      %13 = sbr.rel (0) target = $region5
    $region4: #{seq2seq_forward.5} parent=1 // pred_region
      _
    $region5: #{seq2seq_forward.5} parent=1 // pred_fallthru
      _
    // Predicated region
    $region6: #{seq2seq_forward.5} parent=1 // pred_check
      _
    $region7: #{seq2seq_forward.5} parent=1 // pred_check_branch
      %15 = sbr.rel (0) target = $region9
    $region8: #{seq2seq_forward.5} parent=1 // pred_region
      _
    $region9: #{seq2seq_forward.5} parent=1 // pred_fallthru
      _
    // Predicated region
    $region10: #{seq2seq_forward.5} parent=1 // pred_check
      _
    $region11: #{seq2seq_forward.5} parent=1 // pred_check_branch
      %17 = sbr.rel (0) target = $region13
    $region12: #{seq2seq_forward.5} parent=1 // pred_region
      _
    $region13: #{seq2seq_forward.5} parent=1 // pred_fallthru
      _
    // Predicated region
    $region14: #{seq2seq_forward.5} parent=1 // pred_check
      _
    $region15: #{seq2seq_forward.5} parent=1 // pred_check_branch
      %19 = sbr.rel (0) target = $region17
    $region16: #{seq2seq_forward.5} parent=1 // pred_region
      _
    $region17: #{seq2seq_forward.5} parent=1 // pred_fallthru
      _
    %p21 = scmp.eq.s32.totalorder 0, 0
    // Predicated region
    $region18: #{seq2seq_forward.5} parent=1 // pred_check
      %p22 = pneg %p21
    $region19: #{seq2seq_forward.5} parent=1 // pred_check_branch
      %24 = sbr.rel (%p22) target = $region21
    $region20: #{seq2seq_forward.5} parent=1 // pred_region
      %25 = vst [vmem:[#allocation3] sm:$0xff] 0.0
    $region21: #{seq2seq_forward.5} parent=1 // pred_fallthru
      _
    %v26 = vld [vmem:[#allocation3] sm:$0xff]
    %v27 = vld [vmem:[%s0] sm:$0xff]
    %v28 = vld [vmem:[%s0 + $0x8] sm:$0xf]
    %v29 = vunpack.c.l.bf16 %v27
    %v30 = vunpack.c.h.bf16 %v27
    %v31 = vunpack.c.l.bf16 %v28
    %v32 = vld [vmem:[%s1] sm:$0xff]
    %v33 = vpack.c.bf16 %v26, %v26
    %v34 = vld [vmem:[%s2] sm:$0xff]
    %v35 = vld [vmem:[%s2 + $0x8] sm:$0xf]
    %v36 = vld [vmem:[%s2 + $0xc] sm:$0xff]
    %v37 = vld [vmem:[%s2 + $0x14] sm:$0xf]
    %v38 = vld [vmem:[%s2 + $0x18] sm:$0xff]
    %v39 = vld [vmem:[%s2 + $0x20] sm:$0xf]
    %v40 = vld [vmem:[%s2 + $0x24] sm:$0xff]
    %v41 = vld [vmem:[%s2 + $0x2c] sm:$0xf]
    %v42 = vld [vmem:[%s2 + $0x30] sm:$0xff]
    %v43 = vld [vmem:[%s2 + $0x38] sm:$0xf]
    %v44 = vld [vmem:[%s2 + $0x3c] sm:$0xff]
    %v45 = vld [vmem:[%s2 + $0x44] sm:$0xf]
    %v46 = vld [vmem:[%s2 + $0x48] sm:$0xff]
    %v47 = vld [vmem:[%s2 + $0x50] sm:$0xf]
    %v48 = vld [vmem:[%s2 + $0x54] sm:$0xff]
    %v49 = vld [vmem:[%s2 + $0x5c] sm:$0xf]
    %v50 = vld [vmem:[%s2 + $0x60] sm:$0xff]
    %v51 = vld [vmem:[%s2 + $0x68] sm:$0xf]
    %v52 = vld [vmem:[%s2 + $0x6c] sm:$0xff]
    %v53 = vld [vmem:[%s2 + $0x74] sm:$0xf]
    %v54 = vld [vmem:[%s2 + $0x78] sm:$0xff]
    %v55 = vld [vmem:[%s2 + $0x80] sm:$0xf]
    %v56 = vld [vmem:[%s2 + $0x84] sm:$0xff]
    %v57 = vld [vmem:[%s2 + $0x8c] sm:$0xf]
    %v58 = vld [vmem:[%s2 + $0x90] sm:$0xff]
    %v59 = vld [vmem:[%s2 + $0x98] sm:$0xf]
    %v60 = vld [vmem:[%s2 + $0x9c] sm:$0xff]
    %v61 = vld [vmem:[%s2 + $0xa4] sm:$0xf]
    %v62 = vld [vmem:[%s2 + $0xa8] sm:$0xff]
    %v63 = vld [vmem:[%s2 + $0xb0] sm:$0xf]
    %v64 = vld [vmem:[%s2 + $0xb4] sm:$0xff]
    %v65 = vld [vmem:[%s2 + $0xbc] sm:$0xf]
    %v66 = vld [vmem:[%s3] sm:$0x7]
    %v68 = vlaneseq
    %v69 = vshrl.u32 %v68, 7
    %v70 = vsub.s32 0, %v69
    %v71 = vrot.slane %v66, %v70
    %v72 = vlaneseq
    %v73 = vshrl.u32 %v72, 7
    %v74 = vsub.s32 1, %v73
    %v75 = vrot.slane %v66, %v74
    %v76 = vlaneseq
    %v77 = vshrl.u32 %v76, 7
    %v78 = vsub.s32 2, %v77
    %v79 = vrot.slane %v66, %v78
    %v115 = vunpack.c.l.b16 %v34
    %v116 = vunpack.c.h.b16 %v34
    %v117 = vunpack.c.l.b16 %v35
    %v118 = vunpack.c.l.b16 %v36
    %v119 = vunpack.c.h.b16 %v36
    %v120 = vunpack.c.l.b16 %v37
    %v121 = vunpack.c.l.b16 %v38
    %v122 = vunpack.c.h.b16 %v38
    %v123 = vunpack.c.l.b16 %v39
    %v124 = vunpack.c.l.b16 %v40
    %v125 = vunpack.c.h.b16 %v40
    %v126 = vunpack.c.l.b16 %v41
    %v127 = vunpack.c.l.b16 %v42
    %v128 = vunpack.c.h.b16 %v42
    %v129 = vunpack.c.l.b16 %v43
    %v130 = vunpack.c.l.b16 %v44
    %v131 = vunpack.c.h.b16 %v44
    %v132 = vunpack.c.l.b16 %v45
    %v133 = vunpack.c.l.b16 %v46
    %v134 = vunpack.c.h.b16 %v46
    %v135 = vunpack.c.l.b16 %v47
    %v136 = vunpack.c.l.b16 %v48
    %v137 = vunpack.c.h.b16 %v48
    %v138 = vunpack.c.l.b16 %v49
    %v139 = vunpack.c.l.b16 %v50
    %v140 = vunpack.c.h.b16 %v50
    %v141 = vunpack.c.l.b16 %v51
    %v142 = vunpack.c.l.b16 %v52
    %v143 = vunpack.c.h.b16 %v52
    %v144 = vunpack.c.l.b16 %v53
    %v145 = vunpack.c.l.b16 %v54
    %v146 = vunpack.c.h.b16 %v54
    %v147 = vunpack.c.l.b16 %v55
    %v148 = vunpack.c.l.b16 %v56
    %v149 = vunpack.c.h.b16 %v56
    %v150 = vunpack.c.l.b16 %v57
    %v151 = vunpack.c.l.b16 %v58
    %v152 = vunpack.c.h.b16 %v58
    %v153 = vunpack.c.l.b16 %v59
    %v154 = vunpack.c.l.b16 %v60
    %v155 = vunpack.c.h.b16 %v60
    %v156 = vunpack.c.l.b16 %v61
    %v157 = vunpack.c.l.b16 %v62
    %v158 = vunpack.c.h.b16 %v62
    %v159 = vunpack.c.l.b16 %v63
    %v160 = vunpack.c.l.b16 %v64
    %v161 = vunpack.c.h.b16 %v64
    %v162 = vunpack.c.l.b16 %v65
    %v163 = vpack.c.b16 %v118, %v115
    %v164 = vpack.c.b16 %v119, %v116
    %v165 = vpack.c.b16 %v120, %v117
    %v166 = vpack.c.b16 %v124, %v121
    %v167 = vpack.c.b16 %v125, %v122
    %v168 = vpack.c.b16 %v126, %v123
    %v169 = vpack.c.b16 %v130, %v127
    %v170 = vpack.c.b16 %v131, %v128
    %v171 = vpack.c.b16 %v132, %v129
    %v172 = vpack.c.b16 %v136, %v133
    %v173 = vpack.c.b16 %v137, %v134
    %v174 = vpack.c.b16 %v138, %v135
    %v175 = vpack.c.b16 %v142, %v139
    %v176 = vpack.c.b16 %v143, %v140
    %v177 = vpack.c.b16 %v144, %v141
    %v178 = vpack.c.b16 %v148, %v145
    %v179 = vpack.c.b16 %v149, %v146
    %v180 = vpack.c.b16 %v150, %v147
    %v181 = vpack.c.b16 %v154, %v151
    %v182 = vpack.c.b16 %v155, %v152
    %v183 = vpack.c.b16 %v156, %v153
    %v184 = vpack.c.b16 %v160, %v157
    %v185 = vpack.c.b16 %v161, %v158
    %v186 = vpack.c.b16 %v162, %v159
    %211 = vmatprep.subr.bf16.mxu0 %v164
    %212 = vmatpush1.bf16.msra.mxu0 %v163
    %213 = vmatprep.subr.bf16.mxu0 %v167
    %214 = vmatpush1.bf16.msra.mxu0 %v166
    %215 = vmatprep.subr.bf16.mxu0 %v170
    %216 = vmatpush1.bf16.msra.mxu0 %v169
    %217 = vmatprep.subr.bf16.mxu0 %v173
    %218 = vmatpush1.bf16.msra.mxu0 %v172
    %219 = vmatprep.subr.bf16.mxu0 %v176
    %220 = vmatpush1.bf16.msra.mxu0 %v175
    %221 = vmatprep.subr.bf16.mxu0 %v179
    %222 = vmatpush1.bf16.msra.mxu0 %v178
    %223 = vmatprep.subr.bf16.mxu0 %v182
    %224 = vmatpush1.bf16.msra.mxu0 %v181
    %225 = vmatprep.subr.bf16.mxu0 %v185
    %226 = vmatpush1.bf16.msra.mxu0 %v184
    %227 = vmatprep.subr.bf16.mxu0 0
    %228 = vmatpush1.bf16.msra.mxu0 0
    %229 = vmatprep.subr.bf16.mxu0 0
    %230 = vmatpush1.bf16.msra.mxu0 0
    %231 = vmatprep.subr.bf16.mxu0 0
    %232 = vmatpush1.bf16.msra.mxu0 0
    %233 = vmatprep.subr.bf16.mxu0 0
    %234 = vmatpush1.bf16.msra.mxu0 0
    %235 = vmatprep.subr.bf16.mxu0 0
    %236 = vmatpush1.bf16.msra.mxu0 0
    %237 = vmatprep.subr.bf16.mxu0 0
    %238 = vmatpush1.bf16.msra.mxu0 0
    %239 = vmatprep.subr.bf16.mxu0 0
    %240 = vmatpush1.bf16.msra.mxu0 0
    %241 = vmatprep.subr.bf16.mxu0 0
    %242 = vmatpush1.bf16.msra.mxu0 0
    %243 = vmatprep.mubr.bf16.mxu0 0
    %244 = vmatmul.mubr.bf16.gmra.mrb[0].mxu0 %v33
    %v245 = vpop.f32.mrb[0].mxu0
    %v246 = vadd.f32 %v71, %v245
    %v247 = vpop.f32.mrb[0].mxu0
    %v248 = vadd.f32 %v75, %v247
    %v249 = vpop.f32.mrb[0].mxu0
    %v250 = vpop.f32.mrb[0].mxu0
    %251 = vdwg.mxu0
    %252 = vmatprep.subr.bf16.mxu0 0
    %253 = vmatpush1.bf16.msra.mxu0 %v165
    %254 = vmatprep.subr.bf16.mxu0 0
    %255 = vmatpush1.bf16.msra.mxu0 %v168
    %256 = vmatprep.subr.bf16.mxu0 0
    %257 = vmatpush1.bf16.msra.mxu0 %v171
    %258 = vmatprep.subr.bf16.mxu0 0
    %259 = vmatpush1.bf16.msra.mxu0 %v174
    %260 = vmatprep.subr.bf16.mxu0 0
    %261 = vmatpush1.bf16.msra.mxu0 %v177
    %262 = vmatprep.subr.bf16.mxu0 0
    %263 = vmatpush1.bf16.msra.mxu0 %v180
    %264 = vmatprep.subr.bf16.mxu0 0
    %265 = vmatpush1.bf16.msra.mxu0 %v183
    %266 = vmatprep.subr.bf16.mxu0 0
    %267 = vmatpush1.bf16.msra.mxu0 %v186
    %268 = vmatprep.subr.bf16.mxu0 0
    %269 = vmatpush1.bf16.msra.mxu0 0
    %270 = vmatprep.subr.bf16.mxu0 0
    %271 = vmatpush1.bf16.msra.mxu0 0
    %272 = vmatprep.subr.bf16.mxu0 0
    %273 = vmatpush1.bf16.msra.mxu0 0
    %274 = vmatprep.subr.bf16.mxu0 0
    %275 = vmatpush1.bf16.msra.mxu0 0
    %276 = vmatprep.subr.bf16.mxu0 0
    %277 = vmatpush1.bf16.msra.mxu0 0
    %278 = vmatprep.subr.bf16.mxu0 0
    %279 = vmatpush1.bf16.msra.mxu0 0
    %280 = vmatprep.subr.bf16.mxu0 0
    %281 = vmatpush1.bf16.msra.mxu0 0
    %282 = vmatprep.subr.bf16.mxu0 0
    %283 = vmatpush1.bf16.msra.mxu0 0
    %284 = vmatprep.mubr.bf16.mxu0 0
    %285 = vmatmul.mubr.bf16.gmra.mrb[0].mxu0 %v33
    %v286 = vpop.f32.mrb[0].mxu0
    %v287 = vadd.f32 %v79, %v286
    %v288 = vpop.f32.mrb[0].mxu0
    %v289 = vpop.f32.mrb[0].mxu0
    %v290 = vpop.f32.mrb[0].mxu0
    %291 = vdwg.mxu0
    %v292 = vadd.f32 %v29, %v246
    %v293 = vxor.u32 %v292, 2147483648
    %v294 = vmul.f32 %v293, 1.442695
    %v295 = vpow.pop %v294
    %v296 = vadd.f32 %v295, 1.0
    %v297 = vrcp.pop %v296
    %v298 = vmul.f32 1.0, %v297
    %v299 = vadd.f32 %v30, %v248
    %v300 = vxor.u32 %v299, 2147483648
    %v301 = vmul.f32 %v300, 1.442695
    %v302 = vpow.pop %v301
    %v303 = vadd.f32 %v302, 1.0
    %v304 = vrcp.pop %v303
    %v305 = vmul.f32 1.0, %v304
    %v306 = vmul.f32 %v298, %v287
    %v307 = vadd.f32 %v31, %v306
    %v308 = vtanh.pop %v307
    %v309 = vsub.f32 1.0, %v305
    %v310 = vmul.f32 %v309, %v308
    %v311 = vmul.f32 %v305, %v26
    %v312 = vadd.f32 %v310, %v311
    %314 = vset.pattern.permute.xlu0 0
    %315 = vperm.xlu0 %314, %v32
    %v316 = vpop.permute.xlu0 %315
    %v318 = vmul.f32 %v316, %v312
    %v319 = vsub.f32 1.0, %v32
    %321 = vset.pattern.permute.xlu0 0
    %322 = vperm.xlu0 %321, %v319
    %v323 = vpop.permute.xlu0 %322
    %v325 = vmul.f32 %v323, %v26
    %v326 = vadd.f32 %v318, %v325
    %v328 = vcombine.high %v326, %v326
    %v330 = vunpack.c.l.s4 1966171168
    %v331 = vunpack.c.0.s8 %v330
    %v332 = vlaneseq
    %v333 = vshrl.u32 %v332, 7
    %v334 = vsub.s32 %v331, %v333
    %v335 = vrot.slane %v326, %v334
    %v337 = vunpack.c.l.s4 1966171168
    %v338 = vunpack.c.0.s8 %v337
    %v339 = vlaneseq
    %v340 = vshrl.u32 %v339, 7
    %v341 = vsub.s32 %v338, %v340
    %v342 = vrot.slane %v328, %v341
    %v343 = vcombine.high %v335, %v335
    %v344 = vcombine.high %v342, %v342
    %v346 = vunpack.c.l.s4 1966171168
    %v347 = vunpack.c.0.s8 %v346
    %v348 = vlaneseq
    %v349 = vshrl.u32 %v348, 7
    %v350 = vsub.s32 %v347, %v349
    %v351 = vrot.slane %v335, %v350
    %v353 = vunpack.c.l.s4 1966171168
    %v354 = vunpack.c.0.s8 %v353
    %v355 = vlaneseq
    %v356 = vshrl.u32 %v355, 7
    %v357 = vsub.s32 %v354, %v356
    %v358 = vrot.slane %v342, %v357
    %v360 = vunpack.c.l.s4 1966171168
    %v361 = vunpack.c.0.s8 %v360
    %v362 = vlaneseq
    %v363 = vshrl.u32 %v362, 7
    %v364 = vsub.s32 %v361, %v363
    %v365 = vrot.slane %v343, %v364
    %v367 = vunpack.c.l.s4 1966171168
    %v368 = vunpack.c.0.s8 %v367
    %v369 = vlaneseq
    %v370 = vshrl.u32 %v369, 7
    %v371 = vsub.s32 %v368, %v370
    %v372 = vrot.slane %v344, %v371
    %v373 = vcombine.high %v351, %v351
    %v374 = vcombine.high %v358, %v358
    %v375 = vcombine.high %v365, %v365
    %v376 = vcombine.high %v372, %v372
    %385 = vst [vmem:[#allocation2] sm:$0x1] %v351
    %386 = vst [vmem:[#allocation2 + $0x10] sm:$0x1] %v365
    %387 = vst [vmem:[#allocation2 + $0x20] sm:$0x1] %v373
    %388 = vst [vmem:[#allocation2 + $0x30] sm:$0x1] %v375
    %389 = vst [vmem:[#allocation2 + $0x40] sm:$0x1] %v358
    %390 = vst [vmem:[#allocation2 + $0x50] sm:$0x1] %v372
    %391 = vst [vmem:[#allocation2 + $0x60] sm:$0x1] %v374
    %392 = vst [vmem:[#allocation2 + $0x70] sm:$0x1] %v376
    %s393 = scalar_lea.vmem %s0, 12
    %v394 = vld [vmem:[%s393] sm:$0xff]
    %v395 = vld [vmem:[%s393 + $0x8] sm:$0xf]
    %v396 = vunpack.c.l.bf16 %v394
    %v397 = vunpack.c.h.bf16 %v394
    %v398 = vunpack.c.l.bf16 %v395
    %s399 = scalar_lea.vmem %s1, 8
    %v400 = vld [vmem:[%s399] sm:$0xff]
    %v401 = vpack.c.bf16 %v326, %v326
    %v402 = vld [vmem:[%s2] sm:$0xff]
    %v403 = vld [vmem:[%s2 + $0x8] sm:$0xf]
    %v404 = vld [vmem:[%s2 + $0xc] sm:$0xff]
    %v405 = vld [vmem:[%s2 + $0x14] sm:$0xf]
    %v406 = vld [vmem:[%s2 + $0x18] sm:$0xff]
    %v407 = vld [vmem:[%s2 + $0x20] sm:$0xf]
    %v408 = vld [vmem:[%s2 + $0x24] sm:$0xff]
    %v409 = vld [vmem:[%s2 + $0x2c] sm:$0xf]
    %v410 = vld [vmem:[%s2 + $0x30] sm:$0xff]
    %v411 = vld [vmem:[%s2 + $0x38] sm:$0xf]
    %v412 = vld [vmem:[%s2 + $0x3c] sm:$0xff]
    %v413 = vld [vmem:[%s2 + $0x44] sm:$0xf]
    %v414 = vld [vmem:[%s2 + $0x48] sm:$0xff]
    %v415 = vld [vmem:[%s2 + $0x50] sm:$0xf]
    %v416 = vld [vmem:[%s2 + $0x54] sm:$0xff]
    %v417 = vld [vmem:[%s2 + $0x5c] sm:$0xf]
    %v418 = vld [vmem:[%s2 + $0x60] sm:$0xff]
    %v419 = vld [vmem:[%s2 + $0x68] sm:$0xf]
    %v420 = vld [vmem:[%s2 + $0x6c] sm:$0xff]
    %v421 = vld [vmem:[%s2 + $0x74] sm:$0xf]
    %v422 = vld [vmem:[%s2 + $0x78] sm:$0xff]
    %v423 = vld [vmem:[%s2 + $0x80] sm:$0xf]
    %v424 = vld [vmem:[%s2 + $0x84] sm:$0xff]
    %v425 = vld [vmem:[%s2 + $0x8c] sm:$0xf]
    %v426 = vld [vmem:[%s2 + $0x90] sm:$0xff]
    %v427 = vld [vmem:[%s2 + $0x98] sm:$0xf]
    %v428 = vld [vmem:[%s2 + $0x9c] sm:$0xff]
    %v429 = vld [vmem:[%s2 + $0xa4] sm:$0xf]
    %v430 = vld [vmem:[%s2 + $0xa8] sm:$0xff]
    %v431 = vld [vmem:[%s2 + $0xb0] sm:$0xf]
    %v432 = vld [vmem:[%s2 + $0xb4] sm:$0xff]
    %v433 = vld [vmem:[%s2 + $0xbc] sm:$0xf]
    %v434 = vld [vmem:[%s3] sm:$0x7]
    %v436 = vlaneseq
    %v437 = vshrl.u32 %v436, 7
    %v438 = vsub.s32 0, %v437
    %v439 = vrot.slane %v434, %v438
    %v440 = vlaneseq
    %v441 = vshrl.u32 %v440, 7
    %v442 = vsub.s32 1, %v441
    %v443 = vrot.slane %v434, %v442
    %v444 = vlaneseq
    %v445 = vshrl.u32 %v444, 7
    %v446 = vsub.s32 2, %v445
    %v447 = vrot.slane %v434, %v446
    %v483 = vunpack.c.l.b16 %v402
    %v484 = vunpack.c.h.b16 %v402
    %v485 = vunpack.c.l.b16 %v403
    %v486 = vunpack.c.l.b16 %v404
    %v487 = vunpack.c.h.b16 %v404
    %v488 = vunpack.c.l.b16 %v405
    %v489 = vunpack.c.l.b16 %v406
    %v490 = vunpack.c.h.b16 %v406
    %v491 = vunpack.c.l.b16 %v407
    %v492 = vunpack.c.l.b16 %v408
    %v493 = vunpack.c.h.b16 %v408
    %v494 = vunpack.c.l.b16 %v409
    %v495 = vunpack.c.l.b16 %v410
    %v496 = vunpack.c.h.b16 %v410
    %v497 = vunpack.c.l.b16 %v411
    %v498 = vunpack.c.l.b16 %v412
    %v499 = vunpack.c.h.b16 %v412
    %v500 = vunpack.c.l.b16 %v413
    %v501 = vunpack.c.l.b16 %v414
    %v502 = vunpack.c.h.b16 %v414
    %v503 = vunpack.c.l.b16 %v415
    %v504 = vunpack.c.l.b16 %v416
    %v505 = vunpack.c.h.b16 %v416
    %v506 = vunpack.c.l.b16 %v417
    %v507 = vunpack.c.l.b16 %v418
    %v508 = vunpack.c.h.b16 %v418
    %v509 = vunpack.c.l.b16 %v419
    %v510 = vunpack.c.l.b16 %v420
    %v511 = vunpack.c.h.b16 %v420
    %v512 = vunpack.c.l.b16 %v421
    %v513 = vunpack.c.l.b16 %v422
    %v514 = vunpack.c.h.b16 %v422
    %v515 = vunpack.c.l.b16 %v423
    %v516 = vunpack.c.l.b16 %v424
    %v517 = vunpack.c.h.b16 %v424
    %v518 = vunpack.c.l.b16 %v425
    %v519 = vunpack.c.l.b16 %v426
    %v520 = vunpack.c.h.b16 %v426
    %v521 = vunpack.c.l.b16 %v427
    %v522 = vunpack.c.l.b16 %v428
    %v523 = vunpack.c.h.b16 %v428
    %v524 = vunpack.c.l.b16 %v429
    %v525 = vunpack.c.l.b16 %v430
    %v526 = vunpack.c.h.b16 %v430
    %v527 = vunpack.c.l.b16 %v431
    %v528 = vunpack.c.l.b16 %v432
    %v529 = vunpack.c.h.b16 %v432
    %v530 = vunpack.c.l.b16 %v433
    %v531 = vpack.c.b16 %v486, %v483
    %v532 = vpack.c.b16 %v487, %v484
    %v533 = vpack.c.b16 %v488, %v485
    %v534 = vpack.c.b16 %v492, %v489
    %v535 = vpack.c.b16 %v493, %v490
    %v536 = vpack.c.b16 %v494, %v491
    %v537 = vpack.c.b16 %v498, %v495
    %v538 = vpack.c.b16 %v499, %v496
    %v539 = vpack.c.b16 %v500, %v497
    %v540 = vpack.c.b16 %v504, %v501
    %v541 = vpack.c.b16 %v505, %v502
    %v542 = vpack.c.b16 %v506, %v503
    %v543 = vpack.c.b16 %v510, %v507
    %v544 = vpack.c.b16 %v511, %v508
    %v545 = vpack.c.b16 %v512, %v509
    %v546 = vpack.c.b16 %v516, %v513
    %v547 = vpack.c.b16 %v517, %v514
    %v548 = vpack.c.b16 %v518, %v515
    %v549 = vpack.c.b16 %v522, %v519
    %v550 = vpack.c.b16 %v523, %v520
    %v551 = vpack.c.b16 %v524, %v521
    %v552 = vpack.c.b16 %v528, %v525
    %v553 = vpack.c.b16 %v529, %v526
    %v554 = vpack.c.b16 %v530, %v527
    %579 = vmatprep.subr.bf16.mxu0 %v532
    %580 = vmatpush1.bf16.msra.mxu0 %v531
    %581 = vmatprep.subr.bf16.mxu0 %v535
    %582 = vmatpush1.bf16.msra.mxu0 %v534
    %583 = vmatprep.subr.bf16.mxu0 %v538
    %584 = vmatpush1.bf16.msra.mxu0 %v537
    %585 = vmatprep.subr.bf16.mxu0 %v541
    %586 = vmatpush1.bf16.msra.mxu0 %v540
    %587 = vmatprep.subr.bf16.mxu0 %v544
    %588 = vmatpush1.bf16.msra.mxu0 %v543
    %589 = vmatprep.subr.bf16.mxu0 %v547
    %590 = vmatpush1.bf16.msra.mxu0 %v546
    %591 = vmatprep.subr.bf16.mxu0 %v550
    %592 = vmatpush1.bf16.msra.mxu0 %v549
    %593 = vmatprep.subr.bf16.mxu0 %v553
    %594 = vmatpush1.bf16.msra.mxu0 %v552
    %595 = vmatprep.subr.bf16.mxu0 0
    %596 = vmatpush1.bf16.msra.mxu0 0
    %597 = vmatprep.subr.bf16.mxu0 0
    %598 = vmatpush1.bf16.msra.mxu0 0
    %599 = vmatprep.subr.bf16.mxu0 0
    %600 = vmatpush1.bf16.msra.mxu0 0
    %601 = vmatprep.subr.bf16.mxu0 0
    %602 = vmatpush1.bf16.msra.mxu0 0
    %603 = vmatprep.subr.bf16.mxu0 0
    %604 = vmatpush1.bf16.msra.mxu0 0
    %605 = vmatprep.subr.bf16.mxu0 0
    %606 = vmatpush1.bf16.msra.mxu0 0
    %607 = vmatprep.subr.bf16.mxu0 0
    %608 = vmatpush1.bf16.msra.mxu0 0
    %609 = vmatprep.subr.bf16.mxu0 0
    %610 = vmatpush1.bf16.msra.mxu0 0
    %611 = vmatprep.mubr.bf16.mxu0 0
    %612 = vmatmul.mubr.bf16.gmra.mrb[0].mxu0 %v401
    %v613 = vpop.f32.mrb[0].mxu0
    %v614 = vadd.f32 %v439, %v613
    %v615 = vpop.f32.mrb[0].mxu0
    %v616 = vadd.f32 %v443, %v615
    %v617 = vpop.f32.mrb[0].mxu0
    %v618 = vpop.f32.mrb[0].mxu0
    %619 = vdwg.mxu0
    %620 = vmatprep.subr.bf16.mxu0 0
    %621 = vmatpush1.bf16.msra.mxu0 %v533
    %622 = vmatprep.subr.bf16.mxu0 0
    %623 = vmatpush1.bf16.msra.mxu0 %v536
    %624 = vmatprep.subr.bf16.mxu0 0
    %625 = vmatpush1.bf16.msra.mxu0 %v539
    %626 = vmatprep.subr.bf16.mxu0 0
    %627 = vmatpush1.bf16.msra.mxu0 %v542
    %628 = vmatprep.subr.bf16.mxu0 0
    %629 = vmatpush1.bf16.msra.mxu0 %v545
    %630 = vmatprep.subr.bf16.mxu0 0
    %631 = vmatpush1.bf16.msra.mxu0 %v548
    %632 = vmatprep.subr.bf16.mxu0 0
    %633 = vmatpush1.bf16.msra.mxu0 %v551
    %634 = vmatprep.subr.bf16.mxu0 0
    %635 = vmatpush1.bf16.msra.mxu0 %v554
    %636 = vmatprep.subr.bf16.mxu0 0
    %637 = vmatpush1.bf16.msra.mxu0 0
    %638 = vmatprep.subr.bf16.mxu0 0
    %639 = vmatpush1.bf16.msra.mxu0 0
    %640 = vmatprep.subr.bf16.mxu0 0
    %641 = vmatpush1.bf16.msra.mxu0 0
    %642 = vmatprep.subr.bf16.mxu0 0
    %643 = vmatpush1.bf16.msra.mxu0 0
    %644 = vmatprep.subr.bf16.mxu0 0
    %645 = vmatpush1.bf16.msra.mxu0 0
    %646 = vmatprep.subr.bf16.mxu0 0
    %647 = vmatpush1.bf16.msra.mxu0 0
    %648 = vmatprep.subr.bf16.mxu0 0
    %649 = vmatpush1.bf16.msra.mxu0 0
    %650 = vmatprep.subr.bf16.mxu0 0
    %651 = vmatpush1.bf16.msra.mxu0 0
    %652 = vmatprep.mubr.bf16.mxu0 0
    %653 = vmatmul.mubr.bf16.gmra.mrb[0].mxu0 %v401
    %v654 = vpop.f32.mrb[0].mxu0
    %v655 = vadd.f32 %v447, %v654
    %v656 = vpop.f32.mrb[0].mxu0
    %v657 = vpop.f32.mrb[0].mxu0
    %v658 = vpop.f32.mrb[0].mxu0
    %659 = vdwg.mxu0
    %v660 = vadd.f32 %v396, %v614
    %v661 = vxor.u32 %v660, 2147483648
    %v662 = vmul.f32 %v661, 1.442695
    %v663 = vpow.pop %v662
    %v664 = vadd.f32 %v663, 1.0
    %v665 = vrcp.pop %v664
    %v666 = vmul.f32 1.0, %v665
    %v667 = vadd.f32 %v397, %v616
    %v668 = vxor.u32 %v667, 2147483648
    %v669 = vmul.f32 %v668, 1.442695
    %v670 = vpow.pop %v669
    %v671 = vadd.f32 %v670, 1.0
    %v672 = vrcp.pop %v671
    %v673 = vmul.f32 1.0, %v672
    %v674 = vmul.f32 %v666, %v655
    %v675 = vadd.f32 %v398, %v674
    %v676 = vtanh.pop %v675
    %v677 = vsub.f32 1.0, %v673
    %v678 = vmul.f32 %v677, %v676
    %v679 = vmul.f32 %v673, %v326
    %v680 = vadd.f32 %v678, %v679
    %682 = vset.pattern.permute.xlu0 0
    %683 = vperm.xlu0 %682, %v400
    %v684 = vpop.permute.xlu0 %683
    %v686 = vmul.f32 %v684, %v680
    %v687 = vsub.f32 1.0, %v400
    %689 = vset.pattern.permute.xlu0 0
    %690 = vperm.xlu0 %689, %v687
    %v691 = vpop.permute.xlu0 %690
    %v693 = vmul.f32 %v691, %v326
    %v694 = vadd.f32 %v686, %v693
    %v696 = vcombine.high %v694, %v694
    %v698 = vunpack.c.l.s4 1966171168
    %v699 = vunpack.c.0.s8 %v698
    %v700 = vlaneseq
    %v701 = vshrl.u32 %v700, 7
    %v702 = vsub.s32 %v699, %v701
    %v703 = vrot.slane %v694, %v702
    %v705 = vunpack.c.l.s4 1966171168
    %v706 = vunpack.c.0.s8 %v705
    %v707 = vlaneseq
    %v708 = vshrl.u32 %v707, 7
    %v709 = vsub.s32 %v706, %v708
    %v710 = vrot.slane %v696, %v709
    %v711 = vcombine.high %v703, %v703
    %v712 = vcombine.high %v710, %v710
    %v714 = vunpack.c.l.s4 1966171168
    %v715 = vunpack.c.0.s8 %v714
    %v716 = vlaneseq
    %v717 = vshrl.u32 %v716, 7
    %v718 = vsub.s32 %v715, %v717
    %v719 = vrot.slane %v703, %v718
    %v721 = vunpack.c.l.s4 1966171168
    %v722 = vunpack.c.0.s8 %v721
    %v723 = vlaneseq
    %v724 = vshrl.u32 %v723, 7
    %v725 = vsub.s32 %v722, %v724
    %v726 = vrot.slane %v710, %v725
    %v728 = vunpack.c.l.s4 1966171168
    %v729 = vunpack.c.0.s8 %v728
    %v730 = vlaneseq
    %v731 = vshrl.u32 %v730, 7
    %v732 = vsub.s32 %v729, %v731
    %v733 = vrot.slane %v711, %v732
    %v735 = vunpack.c.l.s4 1966171168
    %v736 = vunpack.c.0.s8 %v735
    %v737 = vlaneseq
    %v738 = vshrl.u32 %v737, 7
    %v739 = vsub.s32 %v736, %v738
    %v740 = vrot.slane %v712, %v739
    %v741 = vcombine.high %v719, %v719
    %v742 = vcombine.high %v726, %v726
    %v743 = vcombine.high %v733, %v733
    %v744 = vcombine.high %v740, %v740
    %753 = vst [vmem:[#allocation2 + $0x1] sm:$0x1] %v719
    %754 = vst [vmem:[#allocation2 + $0x11] sm:$0x1] %v733
    %755 = vst [vmem:[#allocation2 + $0x21] sm:$0x1] %v741
    %756 = vst [vmem:[#allocation2 + $0x31] sm:$0x1] %v743
    %757 = vst [vmem:[#allocation2 + $0x41] sm:$0x1] %v726
    %758 = vst [vmem:[#allocation2 + $0x51] sm:$0x1] %v740
    %759 = vst [vmem:[#allocation2 + $0x61] sm:$0x1] %v742
    %760 = vst [vmem:[#allocation2 + $0x71] sm:$0x1] %v744
    %s761 = scalar_lea.vmem %s0, 24
    %v762 = vld [vmem:[%s761] sm:$0xff]
    %v763 = vld [vmem:[%s761 + $0x8] sm:$0xf]
    %v764 = vunpack.c.l.bf16 %v762
    %v765 = vunpack.c.h.bf16 %v762
    %v766 = vunpack.c.l.bf16 %v763
    %s767 = scalar_lea.vmem %s1, 16
    %v768 = vld [vmem:[%s767] sm:$0xff]
    %v769 = vpack.c.bf16 %v694, %v694
    %v770 = vld [vmem:[%s2] sm:$0xff]
    %v771 = vld [vmem:[%s2 + $0x8] sm:$0xf]
    %v772 = vld [vmem:[%s2 + $0xc] sm:$0xff]
    %v773 = vld [vmem:[%s2 + $0x14] sm:$0xf]
    %v774 = vld [vmem:[%s2 + $0x18] sm:$0xff]
    %v775 = vld [vmem:[%s2 + $0x20] sm:$0xf]
    %v776 = vld [vmem:[%s2 + $0x24] sm:$0xff]
    %v777 = vld [vmem:[%s2 + $0x2c] sm:$0xf]
    %v778 = vld [vmem:[%s2 + $0x30] sm:$0xff]
    %v779 = vld [vmem:[%s2 + $0x38] sm:$0xf]
    %v780 = vld [vmem:[%s2 + $0x3c] sm:$0xff]
    %v781 = vld [vmem:[%s2 + $0x44] sm:$0xf]
    %v782 = vld [vmem:[%s2 + $0x48] sm:$0xff]
    %v783 = vld [vmem:[%s2 + $0x50] sm:$0xf]
    %v784 = vld [vmem:[%s2 + $0x54] sm:$0xff]
    %v785 = vld [vmem:[%s2 + $0x5c] sm:$0xf]
    %v786 = vld [vmem:[%s2 + $0x60] sm:$0xff]
    %v787 = vld [vmem:[%s2 + $0x68] sm:$0xf]
    %v788 = vld [vmem:[%s2 + $0x6c] sm:$0xff]
    %v789 = vld [vmem:[%s2 + $0x74] sm:$0xf]
    %v790 = vld [vmem:[%s2 + $0x78] sm:$0xff]
    %v791 = vld [vmem:[%s2 + $0x80] sm:$0xf]
    %v792 = vld [vmem:[%s2 + $0x84] sm:$0xff]
    %v793 = vld [vmem:[%s2 + $0x8c] sm:$0xf]
    %v794 = vld [vmem:[%s2 + $0x90] sm:$0xff]
    %v795 = vld [vmem:[%s2 + $0x98] sm:$0xf]
    %v796 = vld [vmem:[%s2 + $0x9c] sm:$0xff]
    %v797 = vld [vmem:[%s2 + $0xa4] sm:$0xf]
    %v798 = vld [vmem:[%s2 + $0xa8] sm:$0xff]
    %v799 = vld [vmem:[%s2 + $0xb0] sm:$0xf]
    %v800 = vld [vmem:[%s2 + $0xb4] sm:$0xff]
    %v801 = vld [vmem:[%s2 + $0xbc] sm:$0xf]
    %v802 = vld [vmem:[%s3] sm:$0x7]
    %v804 = vlaneseq
    %v805 = vshrl.u32 %v804, 7
    %v806 = vsub.s32 0, %v805
    %v807 = vrot.slane %v802, %v806
    %v808 = vlaneseq
    %v809 = vshrl.u32 %v808, 7
    %v810 = vsub.s32 1, %v809
    %v811 = vrot.slane %v802, %v810
    %v812 = vlaneseq
    %v813 = vshrl.u32 %v812, 7
    %v814 = vsub.s32 2, %v813
    %v815 = vrot.slane %v802, %v814
    %v851 = vunpack.c.l.b16 %v770
    %v852 = vunpack.c.h.b16 %v770
    %v853 = vunpack.c.l.b16 %v771
    %v854 = vunpack.c.l.b16 %v772
    %v855 = vunpack.c.h.b16 %v772
    %v856 = vunpack.c.l.b16 %v773
    %v857 = vunpack.c.l.b16 %v774
    %v858 = vunpack.c.h.b16 %v774
    %v859 = vunpack.c.l.b16 %v775
    %v860 = vunpack.c.l.b16 %v776
    %v861 = vunpack.c.h.b16 %v776
    %v862 = vunpack.c.l.b16 %v777
    %v863 = vunpack.c.l.b16 %v778
    %v864 = vunpack.c.h.b16 %v778
    %v865 = vunpack.c.l.b16 %v779
    %v866 = vunpack.c.l.b16 %v780
    %v867 = vunpack.c.h.b16 %v780
    %v868 = vunpack.c.l.b16 %v781
    %v869 = vunpack.c.l.b16 %v782
    %v870 = vunpack.c.h.b16 %v782
    %v871 = vunpack.c.l.b16 %v783
    %v872 = vunpack.c.l.b16 %v784
    %v873 = vunpack.c.h.b16 %v784
    %v874 = vunpack.c.l.b16 %v785
    %v875 = vunpack.c.l.b16 %v786
    %v876 = vunpack.c.h.b16 %v786
    %v877 = vunpack.c.l.b16 %v787
    %v878 = vunpack.c.l.b16 %v788
    %v879 = vunpack.c.h.b16 %v788
    %v880 = vunpack.c.l.b16 %v789
    %v881 = vunpack.c.l.b16 %v790
    %v882 = vunpack.c.h.b16 %v790
    %v883 = vunpack.c.l.b16 %v791
    %v884 = vunpack.c.l.b16 %v792
    %v885 = vunpack.c.h.b16 %v792
    %v886 = vunpack.c.l.b16 %v793
    %v887 = vunpack.c.l.b16 %v794
    %v888 = vunpack.c.h.b16 %v794
    %v889 = vunpack.c.l.b16 %v795
    %v890 = vunpack.c.l.b16 %v796
    %v891 = vunpack.c.h.b16 %v796
    %v892 = vunpack.c.l.b16 %v797
    %v893 = vunpack.c.l.b16 %v798
    %v894 = vunpack.c.h.b16 %v798
    %v895 = vunpack.c.l.b16 %v799
    %v896 = vunpack.c.l.b16 %v800
    %v897 = vunpack.c.h.b16 %v800
    %v898 = vunpack.c.l.b16 %v801
    %v899 = vpack.c.b16 %v854, %v851
    %v900 = vpack.c.b16 %v855, %v852
    %v901 = vpack.c.b16 %v856, %v853
    %v902 = vpack.c.b16 %v860, %v857
    %v903 = vpack.c.b16 %v861, %v858
    %v904 = vpack.c.b16 %v862, %v859
    %v905 = vpack.c.b16 %v866, %v863
    %v906 = vpack.c.b16 %v867, %v864
    %v907 = vpack.c.b16 %v868, %v865
    %v908 = vpack.c.b16 %v872, %v869
    %v909 = vpack.c.b16 %v873, %v870
    %v910 = vpack.c.b16 %v874, %v871
    %v911 = vpack.c.b16 %v878, %v875
    %v912 = vpack.c.b16 %v879, %v876
    %v913 = vpack.c.b16 %v880, %v877
    %v914 = vpack.c.b16 %v884, %v881
    %v915 = vpack.c.b16 %v885, %v882
    %v916 = vpack.c.b16 %v886, %v883
    %v917 = vpack.c.b16 %v890, %v887
    %v918 = vpack.c.b16 %v891, %v888
    %v919 = vpack.c.b16 %v892, %v889
    %v920 = vpack.c.b16 %v896, %v893
    %v921 = vpack.c.b16 %v897, %v894
    %v922 = vpack.c.b16 %v898, %v895
    %947 = vmatprep.subr.bf16.mxu0 %v900
    %948 = vmatpush1.bf16.msra.mxu0 %v899
    %949 = vmatprep.subr.bf16.mxu0 %v903
    %950 = vmatpush1.bf16.msra.mxu0 %v902
    %951 = vmatprep.subr.bf16.mxu0 %v906
    %952 = vmatpush1.bf16.msra.mxu0 %v905
    %953 = vmatprep.subr.bf16.mxu0 %v909
    %954 = vmatpush1.bf16.msra.mxu0 %v908
    %955 = vmatprep.subr.bf16.mxu0 %v912
    %956 = vmatpush1.bf16.msra.mxu0 %v911
    %957 = vmatprep.subr.bf16.mxu0 %v915
    %958 = vmatpush1.bf16.msra.mxu0 %v914
    %959 = vmatprep.subr.bf16.mxu0 %v918
    %960 = vmatpush1.bf16.msra.mxu0 %v917
    %961 = vmatprep.subr.bf16.mxu0 %v921
    %962 = vmatpush1.bf16.msra.mxu0 %v920
    %963 = vmatprep.subr.bf16.mxu0 0
    %964 = vmatpush1.bf16.msra.mxu0 0
    %965 = vmatprep.subr.bf16.mxu0 0
    %966 = vmatpush1.bf16.msra.mxu0 0
    %967 = vmatprep.subr.bf16.mxu0 0
    %968 = vmatpush1.bf16.msra.mxu0 0
    %969 = vmatprep.subr.bf16.mxu0 0
    %970 = vmatpush1.bf16.msra.mxu0 0
    %971 = vmatprep.subr.bf16.mxu0 0
    %972 = vmatpush1.bf16.msra.mxu0 0
    %973 = vmatprep.subr.bf16.mxu0 0
    %974 = vmatpush1.bf16.msra.mxu0 0
    %975 = vmatprep.subr.bf16.mxu0 0
    %976 = vmatpush1.bf16.msra.mxu0 0
    %977 = vmatprep.subr.bf16.mxu0 0
    %978 = vmatpush1.bf16.msra.mxu0 0
    %979 = vmatprep.mubr.bf16.mxu0 0
    %980 = vmatmul.mubr.bf16.gmra.mrb[0].mxu0 %v769
    %v981 = vpop.f32.mrb[0].mxu0
    %v982 = vadd.f32 %v807, %v981
    %v983 = vpop.f32.mrb[0].mxu0
    %v984 = vadd.f32 %v811, %v983
    %v985 = vpop.f32.mrb[0].mxu0
    %v986 = vpop.f32.mrb[0].mxu0
    %987 = vdwg.mxu0
    %988 = vmatprep.subr.bf16.mxu0 0
    %989 = vmatpush1.bf16.msra.mxu0 %v901
    %990 = vmatprep.subr.bf16.mxu0 0
    %991 = vmatpush1.bf16.msra.mxu0 %v904
    %992 = vmatprep.subr.bf16.mxu0 0
    %993 = vmatpush1.bf16.msra.mxu0 %v907
    %994 = vmatprep.subr.bf16.mxu0 0
    %995 = vmatpush1.bf16.msra.mxu0 %v910
    %996 = vmatprep.subr.bf16.mxu0 0
    %997 = vmatpush1.bf16.msra.mxu0 %v913
    %998 = vmatprep.subr.bf16.mxu0 0
    %999 = vmatpush1.bf16.msra.mxu0 %v916
    %1000 = vmatprep.subr.bf16.mxu0 0
    %1001 = vmatpush1.bf16.msra.mxu0 %v919
    %1002 = vmatprep.subr.bf16.mxu0 0
    %1003 = vmatpush1.bf16.msra.mxu0 %v922
    %1004 = vmatprep.subr.bf16.mxu0 0
    %1005 = vmatpush1.bf16.msra.mxu0 0
    %1006 = vmatprep.subr.bf16.mxu0 0
    %1007 = vmatpush1.bf16.msra.mxu0 0
    %1008 = vmatprep.subr.bf16.mxu0 0
    %1009 = vmatpush1.bf16.msra.mxu0 0
    %1010 = vmatprep.subr.bf16.mxu0 0
    %1011 = vmatpush1.bf16.msra.mxu0 0
    %1012 = vmatprep.subr.bf16.mxu0 0
    %1013 = vmatpush1.bf16.msra.mxu0 0
    %1014 = vmatprep.subr.bf16.mxu0 0
    %1015 = vmatpush1.bf16.msra.mxu0 0
    %1016 = vmatprep.subr.bf16.mxu0 0
    %1017 = vmatpush1.bf16.msra.mxu0 0
    %1018 = vmatprep.subr.bf16.mxu0 0
    %1019 = vmatpush1.bf16.msra.mxu0 0
    %1020 = vmatprep.mubr.bf16.mxu0 0
    %1021 = vmatmul.mubr.bf16.gmra.mrb[0].mxu0 %v769
    %v1022 = vpop.f32.mrb[0].mxu0
    %v1023 = vadd.f32 %v815, %v1022
    %v1024 = vpop.f32.mrb[0].mxu0
    %v1025 = vpop.f32.mrb[0].mxu0
    %v1026 = vpop.f32.mrb[0].mxu0
    %1027 = vdwg.mxu0
    %v1028 = vadd.f32 %v764, %v982
    %v1029 = vxor.u32 %v1028, 2147483648
    %v1030 = vmul.f32 %v1029, 1.442695
    %v1031 = vpow.pop %v1030
    %v1032 = vadd.f32 %v1031, 1.0
    %v1033 = vrcp.pop %v1032
    %v1034 = vmul.f32 1.0, %v1033
    %v1035 = vadd.f32 %v765, %v984
    %v1036 = vxor.u32 %v1035, 2147483648
    %v1037 = vmul.f32 %v1036, 1.442695
    %v1038 = vpow.pop %v1037
    %v1039 = vadd.f32 %v1038, 1.0
    %v1040 = vrcp.pop %v1039
    %v1041 = vmul.f32 1.0, %v1040
    %v1042 = vmul.f32 %v1034, %v1023
    %v1043 = vadd.f32 %v766, %v1042
    %v1044 = vtanh.pop %v1043
    %v1045 = vsub.f32 1.0, %v1041
    %v1046 = vmul.f32 %v1045, %v1044
    %v1047 = vmul.f32 %v1041, %v694
    %v1048 = vadd.f32 %v1046, %v1047
    %1050 = vset.pattern.permute.xlu0 0
    %1051 = vperm.xlu0 %1050, %v768
    %v1052 = vpop.permute.xlu0 %1051
    %v1054 = vmul.f32 %v1052, %v1048
    %v1055 = vsub.f32 1.0, %v768
    %1057 = vset.pattern.permute.xlu0 0
    %1058 = vperm.xlu0 %1057, %v1055
    %v1059 = vpop.permute.xlu0 %1058
    %v1061 = vmul.f32 %v1059, %v694
    %v1062 = vadd.f32 %v1054, %v1061
    %v1064 = vcombine.high %v1062, %v1062
    %v1066 = vunpack.c.l.s4 1966171168
    %v1067 = vunpack.c.0.s8 %v1066
    %v1068 = vlaneseq
    %v1069 = vshrl.u32 %v1068, 7
    %v1070 = vsub.s32 %v1067, %v1069
    %v1071 = vrot.slane %v1062, %v1070
    %v1073 = vunpack.c.l.s4 1966171168
    %v1074 = vunpack.c.0.s8 %v1073
    %v1075 = vlaneseq
    %v1076 = vshrl.u32 %v1075, 7
    %v1077 = vsub.s32 %v1074, %v1076
    %v1078 = vrot.slane %v1064, %v1077
    %v1079 = vcombine.high %v1071, %v1071
    %v1080 = vcombine.high %v1078, %v1078
    %v1082 = vunpack.c.l.s4 1966171168
    %v1083 = vunpack.c.0.s8 %v1082
    %v1084 = vlaneseq
    %v1085 = vshrl.u32 %v1084, 7
    %v1086 = vsub.s32 %v1083, %v1085
    %v1087 = vrot.slane %v1071, %v1086
    %v1089 = vunpack.c.l.s4 1966171168
    %v1090 = vunpack.c.0.s8 %v1089
    %v1091 = vlaneseq
    %v1092 = vshrl.u32 %v1091, 7
    %v1093 = vsub.s32 %v1090, %v1092
    %v1094 = vrot.slane %v1078, %v1093
    %v1096 = vunpack.c.l.s4 1966171168
    %v1097 = vunpack.c.0.s8 %v1096
    %v1098 = vlaneseq
    %v1099 = vshrl.u32 %v1098, 7
    %v1100 = vsub.s32 %v1097, %v1099
    %v1101 = vrot.slane %v1079, %v1100
    %v1103 = vunpack.c.l.s4 1966171168
    %v1104 = vunpack.c.0.s8 %v1103
    %v1105 = vlaneseq
    %v1106 = vshrl.u32 %v1105, 7
    %v1107 = vsub.s32 %v1104, %v1106
    %v1108 = vrot.slane %v1080, %v1107
    %v1109 = vcombine.high %v1087, %v1087
    %v1110 = vcombine.high %v1094, %v1094
    %v1111 = vcombine.high %v1101, %v1101
    %v1112 = vcombine.high %v1108, %v1108
    %1121 = vst [vmem:[#allocation2 + $0x2] sm:$0x1] %v1087
    %1122 = vst [vmem:[#allocation2 + $0x12] sm:$0x1] %v1101
    %1123 = vst [vmem:[#allocation2 + $0x22] sm:$0x1] %v1109
    %1124 = vst [vmem:[#allocation2 + $0x32] sm:$0x1] %v1111
    %1125 = vst [vmem:[#allocation2 + $0x42] sm:$0x1] %v1094
    %1126 = vst [vmem:[#allocation2 + $0x52] sm:$0x1] %v1108
    %1127 = vst [vmem:[#allocation2 + $0x62] sm:$0x1] %v1110
    %1128 = vst [vmem:[#allocation2 + $0x72] sm:$0x1] %v1112
    %s1129 = scalar_lea.vmem %s0, 36
    %v1130 = vld [vmem:[%s1129] sm:$0xff]
    %v1131 = vld [vmem:[%s1129 + $0x8] sm:$0xf]
    %v1132 = vunpack.c.l.bf16 %v1130
    %v1133 = vunpack.c.h.bf16 %v1130
    %v1134 = vunpack.c.l.bf16 %v1131
    %s1135 = scalar_lea.vmem %s1, 24
    %v1136 = vld [vmem:[%s1135] sm:$0xff]
    %v1137 = vpack.c.bf16 %v1062, %v1062
    %v1138 = vld [vmem:[%s2] sm:$0xff]
    %v1139 = vld [vmem:[%s2 + $0x8] sm:$0xf]
    %v1140 = vld [vmem:[%s2 + $0xc] sm:$0xff]
    %v1141 = vld [vmem:[%s2 + $0x14] sm:$0xf]
    %v1142 = vld [vmem:[%s2 + $0x18] sm:$0xff]
    %v1143 = vld [vmem:[%s2 + $0x20] sm:$0xf]
    %v1144 = vld [vmem:[%s2 + $0x24] sm:$0xff]
    %v1145 = vld [vmem:[%s2 + $0x2c] sm:$0xf]
    %v1146 = vld [vmem:[%s2 + $0x30] sm:$0xff]
    %v1147 = vld [vmem:[%s2 + $0x38] sm:$0xf]
    %v1148 = vld [vmem:[%s2 + $0x3c] sm:$0xff]
    %v1149 = vld [vmem:[%s2 + $0x44] sm:$0xf]
    %v1150 = vld [vmem:[%s2 + $0x48] sm:$0xff]
    %v1151 = vld [vmem:[%s2 + $0x50] sm:$0xf]
    %v1152 = vld [vmem:[%s2 + $0x54] sm:$0xff]
    %v1153 = vld [vmem:[%s2 + $0x5c] sm:$0xf]
    %v1154 = vld [vmem:[%s2 + $0x60] sm:$0xff]
    %v1155 = vld [vmem:[%s2 + $0x68] sm:$0xf]
    %v1156 = vld [vmem:[%s2 + $0x6c] sm:$0xff]
    %v1157 = vld [vmem:[%s2 + $0x74] sm:$0xf]
    %v1158 = vld [vmem:[%s2 + $0x78] sm:$0xff]
    %v1159 = vld [vmem:[%s2 + $0x80] sm:$0xf]
    %v1160 = vld [vmem:[%s2 + $0x84] sm:$0xff]
    %v1161 = vld [vmem:[%s2 + $0x8c] sm:$0xf]
    %v1162 = vld [vmem:[%s2 + $0x90] sm:$0xff]
    %v1163 = vld [vmem:[%s2 + $0x98] sm:$0xf]
    %v1164 = vld [vmem:[%s2 + $0x9c] sm:$0xff]
    %v1165 = vld [vmem:[%s2 + $0xa4] sm:$0xf]
    %v1166 = vld [vmem:[%s2 + $0xa8] sm:$0xff]
    %v1167 = vld [vmem:[%s2 + $0xb0] sm:$0xf]
    %v1168 = vld [vmem:[%s2 + $0xb4] sm:$0xff]
    %v1169 = vld [vmem:[%s2 + $0xbc] sm:$0xf]
    %v1170 = vld [vmem:[%s3] sm:$0x7]
    %v1172 = vlaneseq
    %v1173 = vshrl.u32 %v1172, 7
    %v1174 = vsub.s32 0, %v1173
    %v1175 = vrot.slane %v1170, %v1174
    %v1176 = vlaneseq
    %v1177 = vshrl.u32 %v1176, 7
    %v1178 = vsub.s32 1, %v1177
    %v1179 = vrot.slane %v1170, %v1178
    %v1180 = vlaneseq
    %v1181 = vshrl.u32 %v1180, 7
    %v1182 = vsub.s32 2, %v1181
    %v1183 = vrot.slane %v1170, %v1182
    %v1219 = vunpack.c.l.b16 %v1138
    %v1220 = vunpack.c.h.b16 %v1138
    %v1221 = vunpack.c.l.b16 %v1139
    %v1222 = vunpack.c.l.b16 %v1140
    %v1223 = vunpack.c.h.b16 %v1140
    %v1224 = vunpack.c.l.b16 %v1141
    %v1225 = vunpack.c.l.b16 %v1142
    %v1226 = vunpack.c.h.b16 %v1142
    %v1227 = vunpack.c.l.b16 %v1143
    %v1228 = vunpack.c.l.b16 %v1144
    %v1229 = vunpack.c.h.b16 %v1144
    %v1230 = vunpack.c.l.b16 %v1145
    %v1231 = vunpack.c.l.b16 %v1146
    %v1232 = vunpack.c.h.b16 %v1146
    %v1233 = vunpack.c.l.b16 %v1147
    %v1234 = vunpack.c.l.b16 %v1148
    %v1235 = vunpack.c.h.b16 %v1148
    %v1236 = vunpack.c.l.b16 %v1149
    %v1237 = vunpack.c.l.b16 %v1150
    %v1238 = vunpack.c.h.b16 %v1150
    %v1239 = vunpack.c.l.b16 %v1151
    %v1240 = vunpack.c.l.b16 %v1152
    %v1241 = vunpack.c.h.b16 %v1152
    %v1242 = vunpack.c.l.b16 %v1153
    %v1243 = vunpack.c.l.b16 %v1154
    %v1244 = vunpack.c.h.b16 %v1154
    %v1245 = vunpack.c.l.b16 %v1155
    %v1246 = vunpack.c.l.b16 %v1156
    %v1247 = vunpack.c.h.b16 %v1156
    %v1248 = vunpack.c.l.b16 %v1157
    %v1249 = vunpack.c.l.b16 %v1158
    %v1250 = vunpack.c.h.b16 %v1158
    %v1251 = vunpack.c.l.b16 %v1159
    %v1252 = vunpack.c.l.b16 %v1160
    %v1253 = vunpack.c.h.b16 %v1160
    %v1254 = vunpack.c.l.b16 %v1161
    %v1255 = vunpack.c.l.b16 %v1162
    %v1256 = vunpack.c.h.b16 %v1162
    %v1257 = vunpack.c.l.b16 %v1163
    %v1258 = vunpack.c.l.b16 %v1164
    %v1259 = vunpack.c.h.b16 %v1164
    %v1260 = vunpack.c.l.b16 %v1165
    %v1261 = vunpack.c.l.b16 %v1166
    %v1262 = vunpack.c.h.b16 %v1166
    %v1263 = vunpack.c.l.b16 %v1167
    %v1264 = vunpack.c.l.b16 %v1168
    %v1265 = vunpack.c.h.b16 %v1168
    %v1266 = vunpack.c.l.b16 %v1169
    %v1267 = vpack.c.b16 %v1222, %v1219
    %v1268 = vpack.c.b16 %v1223, %v1220
    %v1269 = vpack.c.b16 %v1224, %v1221
    %v1270 = vpack.c.b16 %v1228, %v1225
    %v1271 = vpack.c.b16 %v1229, %v1226
    %v1272 = vpack.c.b16 %v1230, %v1227
    %v1273 = vpack.c.b16 %v1234, %v1231
    %v1274 = vpack.c.b16 %v1235, %v1232
    %v1275 = vpack.c.b16 %v1236, %v1233
    %v1276 = vpack.c.b16 %v1240, %v1237
    %v1277 = vpack.c.b16 %v1241, %v1238
    %v1278 = vpack.c.b16 %v1242, %v1239
    %v1279 = vpack.c.b16 %v1246, %v1243
    %v1280 = vpack.c.b16 %v1247, %v1244
    %v1281 = vpack.c.b16 %v1248, %v1245
    %v1282 = vpack.c.b16 %v1252, %v1249
    %v1283 = vpack.c.b16 %v1253, %v1250
    %v1284 = vpack.c.b16 %v1254, %v1251
    %v1285 = vpack.c.b16 %v1258, %v1255
    %v1286 = vpack.c.b16 %v1259, %v1256
    %v1287 = vpack.c.b16 %v1260, %v1257
    %v1288 = vpack.c.b16 %v1264, %v1261
    %v1289 = vpack.c.b16 %v1265, %v1262
    %v1290 = vpack.c.b16 %v1266, %v1263
    %1315 = vmatprep.subr.bf16.mxu0 %v1268
    %1316 = vmatpush1.bf16.msra.mxu0 %v1267
    %1317 = vmatprep.subr.bf16.mxu0 %v1271
    %1318 = vmatpush1.bf16.msra.mxu0 %v1270
    %1319 = vmatprep.subr.bf16.mxu0 %v1274
    %1320 = vmatpush1.bf16.msra.mxu0 %v1273
    %1321 = vmatprep.subr.bf16.mxu0 %v1277
    %1322 = vmatpush1.bf16.msra.mxu0 %v1276
    %1323 = vmatprep.subr.bf16.mxu0 %v1280
    %1324 = vmatpush1.bf16.msra.mxu0 %v1279
    %1325 = vmatprep.subr.bf16.mxu0 %v1283
    %1326 = vmatpush1.bf16.msra.mxu0 %v1282
    %1327 = vmatprep.subr.bf16.mxu0 %v1286
    %1328 = vmatpush1.bf16.msra.mxu0 %v1285
    %1329 = vmatprep.subr.bf16.mxu0 %v1289
    %1330 = vmatpush1.bf16.msra.mxu0 %v1288
    %1331 = vmatprep.subr.bf16.mxu0 0
    %1332 = vmatpush1.bf16.msra.mxu0 0
    %1333 = vmatprep.subr.bf16.mxu0 0
    %1334 = vmatpush1.bf16.msra.mxu0 0
    %1335 = vmatprep.subr.bf16.mxu0 0
    %1336 = vmatpush1.bf16.msra.mxu0 0
    %1337 = vmatprep.subr.bf16.mxu0 0
    %1338 = vmatpush1.bf16.msra.mxu0 0
    %1339 = vmatprep.subr.bf16.mxu0 0
    %1340 = vmatpush1.bf16.msra.mxu0 0
    %1341 = vmatprep.subr.bf16.mxu0 0
    %1342 = vmatpush1.bf16.msra.mxu0 0
    %1343 = vmatprep.subr.bf16.mxu0 0
    %1344 = vmatpush1.bf16.msra.mxu0 0
    %1345 = vmatprep.subr.bf16.mxu0 0
    %1346 = vmatpush1.bf16.msra.mxu0 0
    %1347 = vmatprep.mubr.bf16.mxu0 0
    %1348 = vmatmul.mubr.bf16.gmra.mrb[0].mxu0 %v1137
    %v1349 = vpop.f32.mrb[0].mxu0
    %v1350 = vadd.f32 %v1175, %v1349
    %v1351 = vpop.f32.mrb[0].mxu0
    %v1352 = vadd.f32 %v1179, %v1351
    %v1353 = vpop.f32.mrb[0].mxu0
    %v1354 = vpop.f32.mrb[0].mxu0
    %1355 = vdwg.mxu0
    %1356 = vmatprep.subr.bf16.mxu0 0
    %1357 = vmatpush1.bf16.msra.mxu0 %v1269
    %1358 = vmatprep.subr.bf16.mxu0 0
    %1359 = vmatpush1.bf16.msra.mxu0 %v1272
    %1360 = vmatprep.subr.bf16.mxu0 0
    %1361 = vmatpush1.bf16.msra.mxu0 %v1275
    %1362 = vmatprep.subr.bf16.mxu0 0
    %1363 = vmatpush1.bf16.msra.mxu0 %v1278
    %1364 = vmatprep.subr.bf16.mxu0 0
    %1365 = vmatpush1.bf16.msra.mxu0 %v1281
    %1366 = vmatprep.subr.bf16.mxu0 0
    %1367 = vmatpush1.bf16.msra.mxu0 %v1284
    %1368 = vmatprep.subr.bf16.mxu0 0
    %1369 = vmatpush1.bf16.msra.mxu0 %v1287
    %1370 = vmatprep.subr.bf16.mxu0 0
    %1371 = vmatpush1.bf16.msra.mxu0 %v1290
    %1372 = vmatprep.subr.bf16.mxu0 0
    %1373 = vmatpush1.bf16.msra.mxu0 0
    %1374 = vmatprep.subr.bf16.mxu0 0
    %1375 = vmatpush1.bf16.msra.mxu0 0
    %1376 = vmatprep.subr.bf16.mxu0 0
    %1377 = vmatpush1.bf16.msra.mxu0 0
    %1378 = vmatprep.subr.bf16.mxu0 0
    %1379 = vmatpush1.bf16.msra.mxu0 0
    %1380 = vmatprep.subr.bf16.mxu0 0
    %1381 = vmatpush1.bf16.msra.mxu0 0
    %1382 = vmatprep.subr.bf16.mxu0 0
    %1383 = vmatpush1.bf16.msra.mxu0 0
    %1384 = vmatprep.subr.bf16.mxu0 0
    %1385 = vmatpush1.bf16.msra.mxu0 0
    %1386 = vmatprep.subr.bf16.mxu0 0
    %1387 = vmatpush1.bf16.msra.mxu0 0
    %1388 = vmatprep.mubr.bf16.mxu0 0
    %1389 = vmatmul.mubr.bf16.gmra.mrb[0].mxu0 %v1137
    %v1390 = vpop.f32.mrb[0].mxu0
    %v1391 = vadd.f32 %v1183, %v1390
    %v1392 = vpop.f32.mrb[0].mxu0
    %v1393 = vpop.f32.mrb[0].mxu0
    %v1394 = vpop.f32.mrb[0].mxu0
    %1395 = vdwg.mxu0
    %v1396 = vadd.f32 %v1132, %v1350
    %v1397 = vxor.u32 %v1396, 2147483648
    %v1398 = vmul.f32 %v1397, 1.442695
    %v1399 = vpow.pop %v1398
    %v1400 = vadd.f32 %v1399, 1.0
    %v1401 = vrcp.pop %v1400
    %v1402 = vmul.f32 1.0, %v1401
    %v1403 = vadd.f32 %v1133, %v1352
    %v1404 = vxor.u32 %v1403, 2147483648
    %v1405 = vmul.f32 %v1404, 1.442695
    %v1406 = vpow.pop %v1405
    %v1407 = vadd.f32 %v1406, 1.0
    %v1408 = vrcp.pop %v1407
    %v1409 = vmul.f32 1.0, %v1408
    %v1410 = vmul.f32 %v1402, %v1391
    %v1411 = vadd.f32 %v1134, %v1410
    %v1412 = vtanh.pop %v1411
    %v1413 = vsub.f32 1.0, %v1409
    %v1414 = vmul.f32 %v1413, %v1412
    %v1415 = vmul.f32 %v1409, %v1062
    %v1416 = vadd.f32 %v1414, %v1415
    %1418 = vset.pattern.permute.xlu0 0
    %1419 = vperm.xlu0 %1418, %v1136
    %v1420 = vpop.permute.xlu0 %1419
    %v1422 = vmul.f32 %v1420, %v1416
    %v1423 = vsub.f32 1.0, %v1136
    %1425 = vset.pattern.permute.xlu0 0
    %1426 = vperm.xlu0 %1425, %v1423
    %v1427 = vpop.permute.xlu0 %1426
    %v1429 = vmul.f32 %v1427, %v1062
    %v1430 = vadd.f32 %v1422, %v1429
    %v1432 = vcombine.high %v1430, %v1430
    %v1434 = vunpack.c.l.s4 1966171168
    %v1435 = vunpack.c.0.s8 %v1434
    %v1436 = vlaneseq
    %v1437 = vshrl.u32 %v1436, 7
    %v1438 = vsub.s32 %v1435, %v1437
    %v1439 = vrot.slane %v1430, %v1438
    %v1441 = vunpack.c.l.s4 1966171168
    %v1442 = vunpack.c.0.s8 %v1441
    %v1443 = vlaneseq
    %v1444 = vshrl.u32 %v1443, 7
    %v1445 = vsub.s32 %v1442, %v1444
    %v1446 = vrot.slane %v1432, %v1445
    %v1447 = vcombine.high %v1439, %v1439
    %v1448 = vcombine.high %v1446, %v1446
    %v1450 = vunpack.c.l.s4 1966171168
    %v1451 = vunpack.c.0.s8 %v1450
    %v1452 = vlaneseq
    %v1453 = vshrl.u32 %v1452, 7
    %v1454 = vsub.s32 %v1451, %v1453
    %v1455 = vrot.slane %v1439, %v1454
    %v1457 = vunpack.c.l.s4 1966171168
    %v1458 = vunpack.c.0.s8 %v1457
    %v1459 = vlaneseq
    %v1460 = vshrl.u32 %v1459, 7
    %v1461 = vsub.s32 %v1458, %v1460
    %v1462 = vrot.slane %v1446, %v1461
    %v1464 = vunpack.c.l.s4 1966171168
    %v1465 = vunpack.c.0.s8 %v1464
    %v1466 = vlaneseq
    %v1467 = vshrl.u32 %v1466, 7
    %v1468 = vsub.s32 %v1465, %v1467
    %v1469 = vrot.slane %v1447, %v1468
    %v1471 = vunpack.c.l.s4 1966171168
    %v1472 = vunpack.c.0.s8 %v1471
    %v1473 = vlaneseq
    %v1474 = vshrl.u32 %v1473, 7
    %v1475 = vsub.s32 %v1472, %v1474
    %v1476 = vrot.slane %v1448, %v1475
    %v1477 = vcombine.high %v1455, %v1455
    %v1478 = vcombine.high %v1462, %v1462
    %v1479 = vcombine.high %v1469, %v1469
    %v1480 = vcombine.high %v1476, %v1476
    %1489 = vst [vmem:[#allocation2 + $0x3] sm:$0x1] %v1455
    %1490 = vst [vmem:[#allocation2 + $0x13] sm:$0x1] %v1469
    %1491 = vst [vmem:[#allocation2 + $0x23] sm:$0x1] %v1477
    %1492 = vst [vmem:[#allocation2 + $0x33] sm:$0x1] %v1479
    %1493 = vst [vmem:[#allocation2 + $0x43] sm:$0x1] %v1462
    %1494 = vst [vmem:[#allocation2 + $0x53] sm:$0x1] %v1476
    %1495 = vst [vmem:[#allocation2 + $0x63] sm:$0x1] %v1478
    %1496 = vst [vmem:[#allocation2 + $0x73] sm:$0x1] %v1480
    %s1497 = scalar_lea.vmem %s0, 48
    %v1498 = vld [vmem:[%s1497] sm:$0xff]
    %v1499 = vld [vmem:[%s1497 + $0x8] sm:$0xf]
    %v1500 = vunpack.c.l.bf16 %v1498
    %v1501 = vunpack.c.h.bf16 %v1498
    %v1502 = vunpack.c.l.bf16 %v1499
    %s1503 = scalar_lea.vmem %s1, 32
    %v1504 = vld [vmem:[%s1503] sm:$0xff]
    %v1505 = vpack.c.bf16 %v1430, %v1430
    %v1506 = vld [vmem:[%s2] sm:$0xff]
    %v1507 = vld [vmem:[%s2 + $0x8] sm:$0xf]
    %v1508 = vld [vmem:[%s2 + $0xc] sm:$0xff]
    %v1509 = vld [vmem:[%s2 + $0x14] sm:$0xf]
    %v1510 = vld [vmem:[%s2 + $0x18] sm:$0xff]
    %v1511 = vld [vmem:[%s2 + $0x20] sm:$0xf]
    %v1512 = vld [vmem:[%s2 + $0x24] sm:$0xff]
    %v1513 = vld [vmem:[%s2 + $0x2c] sm:$0xf]
    %v1514 = vld [vmem:[%s2 + $0x30] sm:$0xff]
    %v1515 = vld [vmem:[%s2 + $0x38] sm:$0xf]
    %v1516 = vld [vmem:[%s2 + $0x3c] sm:$0xff]
    %v1517 = vld [vmem:[%s2 + $0x44] sm:$0xf]
    %v1518 = vld [vmem:[%s2 + $0x48] sm:$0xff]
    %v1519 = vld [vmem:[%s2 + $0x50] sm:$0xf]
    %v1520 = vld [vmem:[%s2 + $0x54] sm:$0xff]
    %v1521 = vld [vmem:[%s2 + $0x5c] sm:$0xf]
    %v1522 = vld [vmem:[%s2 + $0x60] sm:$0xff]
    %v1523 = vld [vmem:[%s2 + $0x68] sm:$0xf]
    %v1524 = vld [vmem:[%s2 + $0x6c] sm:$0xff]
    %v1525 = vld [vmem:[%s2 + $0x74] sm:$0xf]
    %v1526 = vld [vmem:[%s2 + $0x78] sm:$0xff]
    %v1527 = vld [vmem:[%s2 + $0x80] sm:$0xf]
    %v1528 = vld [vmem:[%s2 + $0x84] sm:$0xff]
    %v1529 = vld [vmem:[%s2 + $0x8c] sm:$0xf]
    %v1530 = vld [vmem:[%s2 + $0x90] sm:$0xff]
    %v1531 = vld [vmem:[%s2 + $0x98] sm:$0xf]
    %v1532 = vld [vmem:[%s2 + $0x9c] sm:$0xff]
    %v1533 = vld [vmem:[%s2 + $0xa4] sm:$0xf]
    %v1534 = vld [vmem:[%s2 + $0xa8] sm:$0xff]
    %v1535 = vld [vmem:[%s2 + $0xb0] sm:$0xf]
    %v1536 = vld [vmem:[%s2 + $0xb4] sm:$0xff]
    %v1537 = vld [vmem:[%s2 + $0xbc] sm:$0xf]
    %v1538 = vld [vmem:[%s3] sm:$0x7]
    %v1540 = vlaneseq
    %v1541 = vshrl.u32 %v1540, 7
    %v1542 = vsub.s32 0, %v1541
    %v1543 = vrot.slane %v1538, %v1542
    %v1544 = vlaneseq
    %v1545 = vshrl.u32 %v1544, 7
    %v1546 = vsub.s32 1, %v1545
    %v1547 = vrot.slane %v1538, %v1546
    %v1548 = vlaneseq
    %v1549 = vshrl.u32 %v1548, 7
    %v1550 = vsub.s32 2, %v1549
    %v1551 = vrot.slane %v1538, %v1550
    %v1587 = vunpack.c.l.b16 %v1506
    %v1588 = vunpack.c.h.b16 %v1506
    %v1589 = vunpack.c.l.b16 %v1507
    %v1590 = vunpack.c.l.b16 %v1508
    %v1591 = vunpack.c.h.b16 %v1508
    %v1592 = vunpack.c.l.b16 %v1509
    %v1593 = vunpack.c.l.b16 %v1510
    %v1594 = vunpack.c.h.b16 %v1510
    %v1595 = vunpack.c.l.b16 %v1511
    %v1596 = vunpack.c.l.b16 %v1512
    %v1597 = vunpack.c.h.b16 %v1512
    %v1598 = vunpack.c.l.b16 %v1513
    %v1599 = vunpack.c.l.b16 %v1514
    %v1600 = vunpack.c.h.b16 %v1514
    %v1601 = vunpack.c.l.b16 %v1515
    %v1602 = vunpack.c.l.b16 %v1516
    %v1603 = vunpack.c.h.b16 %v1516
    %v1604 = vunpack.c.l.b16 %v1517
    %v1605 = vunpack.c.l.b16 %v1518
    %v1606 = vunpack.c.h.b16 %v1518
    %v1607 = vunpack.c.l.b16 %v1519
    %v1608 = vunpack.c.l.b16 %v1520
    %v1609 = vunpack.c.h.b16 %v1520
    %v1610 = vunpack.c.l.b16 %v1521
    %v1611 = vunpack.c.l.b16 %v1522
    %v1612 = vunpack.c.h.b16 %v1522
    %v1613 = vunpack.c.l.b16 %v1523
    %v1614 = vunpack.c.l.b16 %v1524
    %v1615 = vunpack.c.h.b16 %v1524
    %v1616 = vunpack.c.l.b16 %v1525
    %v1617 = vunpack.c.l.b16 %v1526
    %v1618 = vunpack.c.h.b16 %v1526
    %v1619 = vunpack.c.l.b16 %v1527
    %v1620 = vunpack.c.l.b16 %v1528
    %v1621 = vunpack.c.h.b16 %v1528
    %v1622 = vunpack.c.l.b16 %v1529
    %v1623 = vunpack.c.l.b16 %v1530
    %v1624 = vunpack.c.h.b16 %v1530
    %v1625 = vunpack.c.l.b16 %v1531
    %v1626 = vunpack.c.l.b16 %v1532
    %v1627 = vunpack.c.h.b16 %v1532
    %v1628 = vunpack.c.l.b16 %v1533
    %v1629 = vunpack.c.l.b16 %v1534
    %v1630 = vunpack.c.h.b16 %v1534
    %v1631 = vunpack.c.l.b16 %v1535
    %v1632 = vunpack.c.l.b16 %v1536
    %v1633 = vunpack.c.h.b16 %v1536
    %v1634 = vunpack.c.l.b16 %v1537
    %v1635 = vpack.c.b16 %v1590, %v1587
    %v1636 = vpack.c.b16 %v1591, %v1588
    %v1637 = vpack.c.b16 %v1592, %v1589
    %v1638 = vpack.c.b16 %v1596, %v1593
    %v1639 = vpack.c.b16 %v1597, %v1594
    %v1640 = vpack.c.b16 %v1598, %v1595
    %v1641 = vpack.c.b16 %v1602, %v1599
    %v1642 = vpack.c.b16 %v1603, %v1600
    %v1643 = vpack.c.b16 %v1604, %v1601
    %v1644 = vpack.c.b16 %v1608, %v1605
    %v1645 = vpack.c.b16 %v1609, %v1606
    %v1646 = vpack.c.b16 %v1610, %v1607
    %v1647 = vpack.c.b16 %v1614, %v1611
    %v1648 = vpack.c.b16 %v1615, %v1612
    %v1649 = vpack.c.b16 %v1616, %v1613
    %v1650 = vpack.c.b16 %v1620, %v1617
    %v1651 = vpack.c.b16 %v1621, %v1618
    %v1652 = vpack.c.b16 %v1622, %v1619
    %v1653 = vpack.c.b16 %v1626, %v1623
    %v1654 = vpack.c.b16 %v1627, %v1624
    %v1655 = vpack.c.b16 %v1628, %v1625
    %v1656 = vpack.c.b16 %v1632, %v1629
    %v1657 = vpack.c.b16 %v1633, %v1630
    %v1658 = vpack.c.b16 %v1634, %v1631
    %1683 = vmatprep.subr.bf16.mxu0 %v1636
    %1684 = vmatpush1.bf16.msra.mxu0 %v1635
    %1685 = vmatprep.subr.bf16.mxu0 %v1639
    %1686 = vmatpush1.bf16.msra.mxu0 %v1638
    %1687 = vmatprep.subr.bf16.mxu0 %v1642
    %1688 = vmatpush1.bf16.msra.mxu0 %v1641
    %1689 = vmatprep.subr.bf16.mxu0 %v1645
    %1690 = vmatpush1.bf16.msra.mxu0 %v1644
    %1691 = vmatprep.subr.bf16.mxu0 %v1648
    %1692 = vmatpush1.bf16.msra.mxu0 %v1647
    %1693 = vmatprep.subr.bf16.mxu0 %v1651
    %1694 = vmatpush1.bf16.msra.mxu0 %v1650
    %1695 = vmatprep.subr.bf16.mxu0 %v1654
    %1696 = vmatpush1.bf16.msra.mxu0 %v1653
    %1697 = vmatprep.subr.bf16.mxu0 %v1657
    %1698 = vmatpush1.bf16.msra.mxu0 %v1656
    %1699 = vmatprep.subr.bf16.mxu0 0
    %1700 = vmatpush1.bf16.msra.mxu0 0
    %1701 = vmatprep.subr.bf16.mxu0 0
    %1702 = vmatpush1.bf16.msra.mxu0 0
    %1703 = vmatprep.subr.bf16.mxu0 0
    %1704 = vmatpush1.bf16.msra.mxu0 0
    %1705 = vmatprep.subr.bf16.mxu0 0
    %1706 = vmatpush1.bf16.msra.mxu0 0
    %1707 = vmatprep.subr.bf16.mxu0 0
    %1708 = vmatpush1.bf16.msra.mxu0 0
    %1709 = vmatprep.subr.bf16.mxu0 0
    %1710 = vmatpush1.bf16.msra.mxu0 0
    %1711 = vmatprep.subr.bf16.mxu0 0
    %1712 = vmatpush1.bf16.msra.mxu0 0
    %1713 = vmatprep.subr.bf16.mxu0 0
    %1714 = vmatpush1.bf16.msra.mxu0 0
    %1715 = vmatprep.mubr.bf16.mxu0 0
    %1716 = vmatmul.mubr.bf16.gmra.mrb[0].mxu0 %v1505
    %v1717 = vpop.f32.mrb[0].mxu0
    %v1718 = vadd.f32 %v1543, %v1717
    %v1719 = vpop.f32.mrb[0].mxu0
    %v1720 = vadd.f32 %v1547, %v1719
    %v1721 = vpop.f32.mrb[0].mxu0
    %v1722 = vpop.f32.mrb[0].mxu0
    %1723 = vdwg.mxu0
    %1724 = vmatprep.subr.bf16.mxu0 0
    %1725 = vmatpush1.bf16.msra.mxu0 %v1637
    %1726 = vmatprep.subr.bf16.mxu0 0
    %1727 = vmatpush1.bf16.msra.mxu0 %v1640
    %1728 = vmatprep.subr.bf16.mxu0 0
    %1729 = vmatpush1.bf16.msra.mxu0 %v1643
    %1730 = vmatprep.subr.bf16.mxu0 0
    %1731 = vmatpush1.bf16.msra.mxu0 %v1646
    %1732 = vmatprep.subr.bf16.mxu0 0
    %1733 = vmatpush1.bf16.msra.mxu0 %v1649
    %1734 = vmatprep.subr.bf16.mxu0 0
    %1735 = vmatpush1.bf16.msra.mxu0 %v1652
    %1736 = vmatprep.subr.bf16.mxu0 0
    %1737 = vmatpush1.bf16.msra.mxu0 %v1655
    %1738 = vmatprep.subr.bf16.mxu0 0
    %1739 = vmatpush1.bf16.msra.mxu0 %v1658
    %1740 = vmatprep.subr.bf16.mxu0 0
    %1741 = vmatpush1.bf16.msra.mxu0 0
    %1742 = vmatprep.subr.bf16.mxu0 0
    %1743 = vmatpush1.bf16.msra.mxu0 0
    %1744 = vmatprep.subr.bf16.mxu0 0
    %1745 = vmatpush1.bf16.msra.mxu0 0
    %1746 = vmatprep.subr.bf16.mxu0 0
    %1747 = vmatpush1.bf16.msra.mxu0 0
    %1748 = vmatprep.subr.bf16.mxu0 0
    %1749 = vmatpush1.bf16.msra.mxu0 0
    %1750 = vmatprep.subr.bf16.mxu0 0
    %1751 = vmatpush1.bf16.msra.mxu0 0
    %1752 = vmatprep.subr.bf16.mxu0 0
    %1753 = vmatpush1.bf16.msra.mxu0 0
    %1754 = vmatprep.subr.bf16.mxu0 0
    %1755 = vmatpush1.bf16.msra.mxu0 0
    %1756 = vmatprep.mubr.bf16.mxu0 0
    %1757 = vmatmul.mubr.bf16.gmra.mrb[0].mxu0 %v1505
    %v1758 = vpop.f32.mrb[0].mxu0
    %v1759 = vadd.f32 %v1551, %v1758
    %v1760 = vpop.f32.mrb[0].mxu0
    %v1761 = vpop.f32.mrb[0].mxu0
    %v1762 = vpop.f32.mrb[0].mxu0
    %1763 = vdwg.mxu0
    %v1764 = vadd.f32 %v1500, %v1718
    %v1765 = vxor.u32 %v1764, 2147483648
    %v1766 = vmul.f32 %v1765, 1.442695
    %v1767 = vpow.pop %v1766
    %v1768 = vadd.f32 %v1767, 1.0
    %v1769 = vrcp.pop %v1768
    %v1770 = vmul.f32 1.0, %v1769
    %v1771 = vadd.f32 %v1501, %v1720
    %v1772 = vxor.u32 %v1771, 2147483648
    %v1773 = vmul.f32 %v1772, 1.442695
    %v1774 = vpow.pop %v1773
    %v1775 = vadd.f32 %v1774, 1.0
    %v1776 = vrcp.pop %v1775
    %v1777 = vmul.f32 1.0, %v1776
    %v1778 = vmul.f32 %v1770, %v1759
    %v1779 = vadd.f32 %v1502, %v1778
    %v1780 = vtanh.pop %v1779
    %v1781 = vsub.f32 1.0, %v1777
    %v1782 = vmul.f32 %v1781, %v1780
    %v1783 = vmul.f32 %v1777, %v1430
    %v1784 = vadd.f32 %v1782, %v1783
    %1786 = vset.pattern.permute.xlu0 0
    %1787 = vperm.xlu0 %1786, %v1504
    %v1788 = vpop.permute.xlu0 %1787
    %v1790 = vmul.f32 %v1788, %v1784
    %v1791 = vsub.f32 1.0, %v1504
    %1793 = vset.pattern.permute.xlu0 0
    %1794 = vperm.xlu0 %1793, %v1791
    %v1795 = vpop.permute.xlu0 %1794
    %v1797 = vmul.f32 %v1795, %v1430
    %v1798 = vadd.f32 %v1790, %v1797
    %v1800 = vcombine.high %v1798, %v1798
    %v1802 = vunpack.c.l.s4 1966171168
    %v1803 = vunpack.c.0.s8 %v1802
    %v1804 = vlaneseq
    %v1805 = vshrl.u32 %v1804, 7
    %v1806 = vsub.s32 %v1803, %v1805
    %v1807 = vrot.slane %v1798, %v1806
    %v1809 = vunpack.c.l.s4 1966171168
    %v1810 = vunpack.c.0.s8 %v1809
    %v1811 = vlaneseq
    %v1812 = vshrl.u32 %v1811, 7
    %v1813 = vsub.s32 %v1810, %v1812
    %v1814 = vrot.slane %v1800, %v1813
    %v1815 = vcombine.high %v1807, %v1807
    %v1816 = vcombine.high %v1814, %v1814
    %v1818 = vunpack.c.l.s4 1966171168
    %v1819 = vunpack.c.0.s8 %v1818
    %v1820 = vlaneseq
    %v1821 = vshrl.u32 %v1820, 7
    %v1822 = vsub.s32 %v1819, %v1821
    %v1823 = vrot.slane %v1807, %v1822
    %v1825 = vunpack.c.l.s4 1966171168
    %v1826 = vunpack.c.0.s8 %v1825
    %v1827 = vlaneseq
    %v1828 = vshrl.u32 %v1827, 7
    %v1829 = vsub.s32 %v1826, %v1828
    %v1830 = vrot.slane %v1814, %v1829
    %v1832 = vunpack.c.l.s4 1966171168
    %v1833 = vunpack.c.0.s8 %v1832
    %v1834 = vlaneseq
    %v1835 = vshrl.u32 %v1834, 7
    %v1836 = vsub.s32 %v1833, %v1835
    %v1837 = vrot.slane %v1815, %v1836
    %v1839 = vunpack.c.l.s4 1966171168
    %v1840 = vunpack.c.0.s8 %v1839
    %v1841 = vlaneseq
    %v1842 = vshrl.u32 %v1841, 7
    %v1843 = vsub.s32 %v1840, %v1842
    %v1844 = vrot.slane %v1816, %v1843
    %v1845 = vcombine.high %v1823, %v1823
    %v1846 = vcombine.high %v1830, %v1830
    %v1847 = vcombine.high %v1837, %v1837
    %v1848 = vcombine.high %v1844, %v1844
    %1857 = vst [vmem:[#allocation2 + $0x4] sm:$0x1] %v1823
    %1858 = vst [vmem:[#allocation2 + $0x14] sm:$0x1] %v1837
    %1859 = vst [vmem:[#allocation2 + $0x24] sm:$0x1] %v1845
    %1860 = vst [vmem:[#allocation2 + $0x34] sm:$0x1] %v1847
    %1861 = vst [vmem:[#allocation2 + $0x44] sm:$0x1] %v1830
    %1862 = vst [vmem:[#allocation2 + $0x54] sm:$0x1] %v1844
    %1863 = vst [vmem:[#allocation2 + $0x64] sm:$0x1] %v1846
    %1864 = vst [vmem:[#allocation2 + $0x74] sm:$0x1] %v1848
    %s1865 = scalar_lea.vmem %s0, 60
    %v1866 = vld [vmem:[%s1865] sm:$0xff]
    %v1867 = vld [vmem:[%s1865 + $0x8] sm:$0xf]
    %v1868 = vunpack.c.l.bf16 %v1866
    %v1869 = vunpack.c.h.bf16 %v1866
    %v1870 = vunpack.c.l.bf16 %v1867
    %s1871 = scalar_lea.vmem %s1, 40
    %v1872 = vld [vmem:[%s1871] sm:$0xff]
    %v1873 = vpack.c.bf16 %v1798, %v1798
    %v1874 = vld [vmem:[%s2] sm:$0xff]
    %v1875 = vld [vmem:[%s2 + $0x8] sm:$0xf]
    %v1876 = vld [vmem:[%s2 + $0xc] sm:$0xff]
    %v1877 = vld [vmem:[%s2 + $0x14] sm:$0xf]
    %v1878 = vld [vmem:[%s2 + $0x18] sm:$0xff]
    %v1879 = vld [vmem:[%s2 + $0x20] sm:$0xf]
    %v1880 = vld [vmem:[%s2 + $0x24] sm:$0xff]
    %v1881 = vld [vmem:[%s2 + $0x2c] sm:$0xf]
    %v1882 = vld [vmem:[%s2 + $0x30] sm:$0xff]
    %v1883 = vld [vmem:[%s2 + $0x38] sm:$0xf]
    %v1884 = vld [vmem:[%s2 + $0x3c] sm:$0xff]
    %v1885 = vld [vmem:[%s2 + $0x44] sm:$0xf]
    %v1886 = vld [vmem:[%s2 + $0x48] sm:$0xff]
    %v1887 = vld [vmem:[%s2 + $0x50] sm:$0xf]
    %v1888 = vld [vmem:[%s2 + $0x54] sm:$0xff]
    %v1889 = vld [vmem:[%s2 + $0x5c] sm:$0xf]
    %v1890 = vld [vmem:[%s2 + $0x60] sm:$0xff]
    %v1891 = vld [vmem:[%s2 + $0x68] sm:$0xf]
    %v1892 = vld [vmem:[%s2 + $0x6c] sm:$0xff]
    %v1893 = vld [vmem:[%s2 + $0x74] sm:$0xf]
    %v1894 = vld [vmem:[%s2 + $0x78] sm:$0xff]
    %v1895 = vld [vmem:[%s2 + $0x80] sm:$0xf]
    %v1896 = vld [vmem:[%s2 + $0x84] sm:$0xff]
    %v1897 = vld [vmem:[%s2 + $0x8c] sm:$0xf]
    %v1898 = vld [vmem:[%s2 + $0x90] sm:$0xff]
    %v1899 = vld [vmem:[%s2 + $0x98] sm:$0xf]
    %v1900 = vld [vmem:[%s2 + $0x9c] sm:$0xff]
    %v1901 = vld [vmem:[%s2 + $0xa4] sm:$0xf]
    %v1902 = vld [vmem:[%s2 + $0xa8] sm:$0xff]
    %v1903 = vld [vmem:[%s2 + $0xb0] sm:$0xf]
    %v1904 = vld [vmem:[%s2 + $0xb4] sm:$0xff]
    %v1905 = vld [vmem:[%s2 + $0xbc] sm:$0xf]
    %v1906 = vld [vmem:[%s3] sm:$0x7]
    %v1908 = vlaneseq
    %v1909 = vshrl.u32 %v1908, 7
    %v1910 = vsub.s32 0, %v1909
    %v1911 = vrot.slane %v1906, %v1910
    %v1912 = vlaneseq
    %v1913 = vshrl.u32 %v1912, 7
    %v1914 = vsub.s32 1, %v1913
    %v1915 = vrot.slane %v1906, %v1914
    %v1916 = vlaneseq
    %v1917 = vshrl.u32 %v1916, 7
    %v1918 = vsub.s32 2, %v1917
    %v1919 = vrot.slane %v1906, %v1918
    %v1955 = vunpack.c.l.b16 %v1874
    %v1956 = vunpack.c.h.b16 %v1874
    %v1957 = vunpack.c.l.b16 %v1875
    %v1958 = vunpack.c.l.b16 %v1876
    %v1959 = vunpack.c.h.b16 %v1876
    %v1960 = vunpack.c.l.b16 %v1877
    %v1961 = vunpack.c.l.b16 %v1878
    %v1962 = vunpack.c.h.b16 %v1878
    %v1963 = vunpack.c.l.b16 %v1879
    %v1964 = vunpack.c.l.b16 %v1880
    %v1965 = vunpack.c.h.b16 %v1880
    %v1966 = vunpack.c.l.b16 %v1881
    %v1967 = vunpack.c.l.b16 %v1882
    %v1968 = vunpack.c.h.b16 %v1882
    %v1969 = vunpack.c.l.b16 %v1883
    %v1970 = vunpack.c.l.b16 %v1884
    %v1971 = vunpack.c.h.b16 %v1884
    %v1972 = vunpack.c.l.b16 %v1885
    %v1973 = vunpack.c.l.b16 %v1886
    %v1974 = vunpack.c.h.b16 %v1886
    %v1975 = vunpack.c.l.b16 %v1887
    %v1976 = vunpack.c.l.b16 %v1888
    %v1977 = vunpack.c.h.b16 %v1888
    %v1978 = vunpack.c.l.b16 %v1889
    %v1979 = vunpack.c.l.b16 %v1890
    %v1980 = vunpack.c.h.b16 %v1890
    %v1981 = vunpack.c.l.b16 %v1891
    %v1982 = vunpack.c.l.b16 %v1892
    %v1983 = vunpack.c.h.b16 %v1892
    %v1984 = vunpack.c.l.b16 %v1893
    %v1985 = vunpack.c.l.b16 %v1894
    %v1986 = vunpack.c.h.b16 %v1894
    %v1987 = vunpack.c.l.b16 %v1895
    %v1988 = vunpack.c.l.b16 %v1896
    %v1989 = vunpack.c.h.b16 %v1896
    %v1990 = vunpack.c.l.b16 %v1897
    %v1991 = vunpack.c.l.b16 %v1898
    %v1992 = vunpack.c.h.b16 %v1898
    %v1993 = vunpack.c.l.b16 %v1899
    %v1994 = vunpack.c.l.b16 %v1900
    %v1995 = vunpack.c.h.b16 %v1900
    %v1996 = vunpack.c.l.b16 %v1901
    %v1997 = vunpack.c.l.b16 %v1902
    %v1998 = vunpack.c.h.b16 %v1902
    %v1999 = vunpack.c.l.b16 %v1903
    %v2000 = vunpack.c.l.b16 %v1904
    %v2001 = vunpack.c.h.b16 %v1904
    %v2002 = vunpack.c.l.b16 %v1905
    %v2003 = vpack.c.b16 %v1958, %v1955
    %v2004 = vpack.c.b16 %v1959, %v1956
    %v2005 = vpack.c.b16 %v1960, %v1957
    %v2006 = vpack.c.b16 %v1964, %v1961
    %v2007 = vpack.c.b16 %v1965, %v1962
    %v2008 = vpack.c.b16 %v1966, %v1963
    %v2009 = vpack.c.b16 %v1970, %v1967
    %v2010 = vpack.c.b16 %v1971, %v1968
    %v2011 = vpack.c.b16 %v1972, %v1969
    %v2012 = vpack.c.b16 %v1976, %v1973
    %v2013 = vpack.c.b16 %v1977, %v1974
    %v2014 = vpack.c.b16 %v1978, %v1975
    %v2015 = vpack.c.b16 %v1982, %v1979
    %v2016 = vpack.c.b16 %v1983, %v1980
    %v2017 = vpack.c.b16 %v1984, %v1981
    %v2018 = vpack.c.b16 %v1988, %v1985
    %v2019 = vpack.c.b16 %v1989, %v1986
    %v2020 = vpack.c.b16 %v1990, %v1987
    %v2021 = vpack.c.b16 %v1994, %v1991
    %v2022 = vpack.c.b16 %v1995, %v1992
    %v2023 = vpack.c.b16 %v1996, %v1993
    %v2024 = vpack.c.b16 %v2000, %v1997
    %v2025 = vpack.c.b16 %v2001, %v1998
    %v2026 = vpack.c.b16 %v2002, %v1999
    %2051 = vmatprep.subr.bf16.mxu0 %v2004
    %2052 = vmatpush1.bf16.msra.mxu0 %v2003
    %2053 = vmatprep.subr.bf16.mxu0 %v2007
    %2054 = vmatpush1.bf16.msra.mxu0 %v2006
    %2055 = vmatprep.subr.bf16.mxu0 %v2010
    %2056 = vmatpush1.bf16.msra.mxu0 %v2009
    %2057 = vmatprep.subr.bf16.mxu0 %v2013
    %2058 = vmatpush1.bf16.msra.mxu0 %v2012
    %2059 = vmatprep.subr.bf16.mxu0 %v2016
    %2060 = vmatpush1.bf16.msra.mxu0 %v2015
    %2061 = vmatprep.subr.bf16.mxu0 %v2019
    %2062 = vmatpush1.bf16.msra.mxu0 %v2018
    %2063 = vmatprep.subr.bf16.mxu0 %v2022
    %2064 = vmatpush1.bf16.msra.mxu0 %v2021
    %2065 = vmatprep.subr.bf16.mxu0 %v2025
    %2066 = vmatpush1.bf16.msra.mxu0 %v2024
    %2067 = vmatprep.subr.bf16.mxu0 0
    %2068 = vmatpush1.bf16.msra.mxu0 0
    %2069 = vmatprep.subr.bf16.mxu0 0
    %2070 = vmatpush1.bf16.msra.mxu0 0
    %2071 = vmatprep.subr.bf16.mxu0 0
    %2072 = vmatpush1.bf16.msra.mxu0 0
    %2073 = vmatprep.subr.bf16.mxu0 0
    %2074 = vmatpush1.bf16.msra.mxu0 0
    %2075 = vmatprep.subr.bf16.mxu0 0
    %2076 = vmatpush1.bf16.msra.mxu0 0
    %2077 = vmatprep.subr.bf16.mxu0 0
    %2078 = vmatpush1.bf16.msra.mxu0 0
    %2079 = vmatprep.subr.bf16.mxu0 0
    %2080 = vmatpush1.bf16.msra.mxu0 0
    %2081 = vmatprep.subr.bf16.mxu0 0
    %2082 = vmatpush1.bf16.msra.mxu0 0
    %2083 = vmatprep.mubr.bf16.mxu0 0
    %2084 = vmatmul.mubr.bf16.gmra.mrb[0].mxu0 %v1873
    %v2085 = vpop.f32.mrb[0].mxu0
    %v2086 = vadd.f32 %v1911, %v2085
    %v2087 = vpop.f32.mrb[0].mxu0
    %v2088 = vadd.f32 %v1915, %v2087
    %v2089 = vpop.f32.mrb[0].mxu0
    %v2090 = vpop.f32.mrb[0].mxu0
    %2091 = vdwg.mxu0
    %2092 = vmatprep.subr.bf16.mxu0 0
    %2093 = vmatpush1.bf16.msra.mxu0 %v2005
    %2094 = vmatprep.subr.bf16.mxu0 0
    %2095 = vmatpush1.bf16.msra.mxu0 %v2008
    %2096 = vmatprep.subr.bf16.mxu0 0
    %2097 = vmatpush1.bf16.msra.mxu0 %v2011
    %2098 = vmatprep.subr.bf16.mxu0 0
    %2099 = vmatpush1.bf16.msra.mxu0 %v2014
    %2100 = vmatprep.subr.bf16.mxu0 0
    %2101 = vmatpush1.bf16.msra.mxu0 %v2017
    %2102 = vmatprep.subr.bf16.mxu0 0
    %2103 = vmatpush1.bf16.msra.mxu0 %v2020
    %2104 = vmatprep.subr.bf16.mxu0 0
    %2105 = vmatpush1.bf16.msra.mxu0 %v2023
    %2106 = vmatprep.subr.bf16.mxu0 0
    %2107 = vmatpush1.bf16.msra.mxu0 %v2026
    %2108 = vmatprep.subr.bf16.mxu0 0
    %2109 = vmatpush1.bf16.msra.mxu0 0
    %2110 = vmatprep.subr.bf16.mxu0 0
    %2111 = vmatpush1.bf16.msra.mxu0 0
    %2112 = vmatprep.subr.bf16.mxu0 0
    %2113 = vmatpush1.bf16.msra.mxu0 0
    %2114 = vmatprep.subr.bf16.mxu0 0
    %2115 = vmatpush1.bf16.msra.mxu0 0
    %2116 = vmatprep.subr.bf16.mxu0 0
    %2117 = vmatpush1.bf16.msra.mxu0 0
    %2118 = vmatprep.subr.bf16.mxu0 0
    %2119 = vmatpush1.bf16.msra.mxu0 0
    %2120 = vmatprep.subr.bf16.mxu0 0
    %2121 = vmatpush1.bf16.msra.mxu0 0
    %2122 = vmatprep.subr.bf16.mxu0 0
    %2123 = vmatpush1.bf16.msra.mxu0 0
    %2124 = vmatprep.mubr.bf16.mxu0 0
    %2125 = vmatmul.mubr.bf16.gmra.mrb[0].mxu0 %v1873
    %v2126 = vpop.f32.mrb[0].mxu0
    %v2127 = vadd.f32 %v1919, %v2126
    %v2128 = vpop.f32.mrb[0].mxu0
    %v2129 = vpop.f32.mrb[0].mxu0
    %v2130 = vpop.f32.mrb[0].mxu0
    %2131 = vdwg.mxu0
    %v2132 = vadd.f32 %v1868, %v2086
    %v2133 = vxor.u32 %v2132, 2147483648
    %v2134 = vmul.f32 %v2133, 1.442695
    %v2135 = vpow.pop %v2134
    %v2136 = vadd.f32 %v2135, 1.0
    %v2137 = vrcp.pop %v2136
    %v2138 = vmul.f32 1.0, %v2137
    %v2139 = vadd.f32 %v1869, %v2088
    %v2140 = vxor.u32 %v2139, 2147483648
    %v2141 = vmul.f32 %v2140, 1.442695
    %v2142 = vpow.pop %v2141
    %v2143 = vadd.f32 %v2142, 1.0
    %v2144 = vrcp.pop %v2143
    %v2145 = vmul.f32 1.0, %v2144
    %v2146 = vmul.f32 %v2138, %v2127
    %v2147 = vadd.f32 %v1870, %v2146
    %v2148 = vtanh.pop %v2147
    %v2149 = vsub.f32 1.0, %v2145
    %v2150 = vmul.f32 %v2149, %v2148
    %v2151 = vmul.f32 %v2145, %v1798
    %v2152 = vadd.f32 %v2150, %v2151
    %2154 = vset.pattern.permute.xlu0 0
    %2155 = vperm.xlu0 %2154, %v1872
    %v2156 = vpop.permute.xlu0 %2155
    %v2158 = vmul.f32 %v2156, %v2152
    %v2159 = vsub.f32 1.0, %v1872
    %2161 = vset.pattern.permute.xlu0 0
    %2162 = vperm.xlu0 %2161, %v2159
    %v2163 = vpop.permute.xlu0 %2162
    %v2165 = vmul.f32 %v2163, %v1798
    %v2166 = vadd.f32 %v2158, %v2165
    %v2168 = vcombine.high %v2166, %v2166
    %v2170 = vunpack.c.l.s4 1966171168
    %v2171 = vunpack.c.0.s8 %v2170
    %v2172 = vlaneseq
    %v2173 = vshrl.u32 %v2172, 7
    %v2174 = vsub.s32 %v2171, %v2173
    %v2175 = vrot.slane %v2166, %v2174
    %v2177 = vunpack.c.l.s4 1966171168
    %v2178 = vunpack.c.0.s8 %v2177
    %v2179 = vlaneseq
    %v2180 = vshrl.u32 %v2179, 7
    %v2181 = vsub.s32 %v2178, %v2180
    %v2182 = vrot.slane %v2168, %v2181
    %v2183 = vcombine.high %v2175, %v2175
    %v2184 = vcombine.high %v2182, %v2182
    %v2186 = vunpack.c.l.s4 1966171168
    %v2187 = vunpack.c.0.s8 %v2186
    %v2188 = vlaneseq
    %v2189 = vshrl.u32 %v2188, 7
    %v2190 = vsub.s32 %v2187, %v2189
    %v2191 = vrot.slane %v2175, %v2190
    %v2193 = vunpack.c.l.s4 1966171168
    %v2194 = vunpack.c.0.s8 %v2193
    %v2195 = vlaneseq
    %v2196 = vshrl.u32 %v2195, 7
    %v2197 = vsub.s32 %v2194, %v2196
    %v2198 = vrot.slane %v2182, %v2197
    %v2200 = vunpack.c.l.s4 1966171168
    %v2201 = vunpack.c.0.s8 %v2200
    %v2202 = vlaneseq
    %v2203 = vshrl.u32 %v2202, 7
    %v2204 = vsub.s32 %v2201, %v2203
    %v2205 = vrot.slane %v2183, %v2204
    %v2207 = vunpack.c.l.s4 1966171168
    %v2208 = vunpack.c.0.s8 %v2207
    %v2209 = vlaneseq
    %v2210 = vshrl.u32 %v2209, 7
    %v2211 = vsub.s32 %v2208, %v2210
    %v2212 = vrot.slane %v2184, %v2211
    %v2213 = vcombine.high %v2191, %v2191
    %v2214 = vcombine.high %v2198, %v2198
    %v2215 = vcombine.high %v2205, %v2205
    %v2216 = vcombine.high %v2212, %v2212
    %2225 = vst [vmem:[#allocation2 + $0x5] sm:$0x1] %v2191
    %2226 = vst [vmem:[#allocation2 + $0x15] sm:$0x1] %v2205
    %2227 = vst [vmem:[#allocation2 + $0x25] sm:$0x1] %v2213
    %2228 = vst [vmem:[#allocation2 + $0x35] sm:$0x1] %v2215
    %2229 = vst [vmem:[#allocation2 + $0x45] sm:$0x1] %v2198
    %2230 = vst [vmem:[#allocation2 + $0x55] sm:$0x1] %v2212
    %2231 = vst [vmem:[#allocation2 + $0x65] sm:$0x1] %v2214
    %2232 = vst [vmem:[#allocation2 + $0x75] sm:$0x1] %v2216
    %s2233 = scalar_lea.vmem %s0, 72
    %v2234 = vld [vmem:[%s2233] sm:$0xff]
    %v2235 = vld [vmem:[%s2233 + $0x8] sm:$0xf]
    %v2236 = vunpack.c.l.bf16 %v2234
    %v2237 = vunpack.c.h.bf16 %v2234
    %v2238 = vunpack.c.l.bf16 %v2235
    %s2239 = scalar_lea.vmem %s1, 48
    %v2240 = vld [vmem:[%s2239] sm:$0xff]
    %v2241 = vpack.c.bf16 %v2166, %v2166
    %v2242 = vld [vmem:[%s2] sm:$0xff]
    %v2243 = vld [vmem:[%s2 + $0x8] sm:$0xf]
    %v2244 = vld [vmem:[%s2 + $0xc] sm:$0xff]
    %v2245 = vld [vmem:[%s2 + $0x14] sm:$0xf]
    %v2246 = vld [vmem:[%s2 + $0x18] sm:$0xff]
    %v2247 = vld [vmem:[%s2 + $0x20] sm:$0xf]
    %v2248 = vld [vmem:[%s2 + $0x24] sm:$0xff]
    %v2249 = vld [vmem:[%s2 + $0x2c] sm:$0xf]
    %v2250 = vld [vmem:[%s2 + $0x30] sm:$0xff]
    %v2251 = vld [vmem:[%s2 + $0x38] sm:$0xf]
    %v2252 = vld [vmem:[%s2 + $0x3c] sm:$0xff]
    %v2253 = vld [vmem:[%s2 + $0x44] sm:$0xf]
    %v2254 = vld [vmem:[%s2 + $0x48] sm:$0xff]
    %v2255 = vld [vmem:[%s2 + $0x50] sm:$0xf]
    %v2256 = vld [vmem:[%s2 + $0x54] sm:$0xff]
    %v2257 = vld [vmem:[%s2 + $0x5c] sm:$0xf]
    %v2258 = vld [vmem:[%s2 + $0x60] sm:$0xff]
    %v2259 = vld [vmem:[%s2 + $0x68] sm:$0xf]
    %v2260 = vld [vmem:[%s2 + $0x6c] sm:$0xff]
    %v2261 = vld [vmem:[%s2 + $0x74] sm:$0xf]
    %v2262 = vld [vmem:[%s2 + $0x78] sm:$0xff]
    %v2263 = vld [vmem:[%s2 + $0x80] sm:$0xf]
    %v2264 = vld [vmem:[%s2 + $0x84] sm:$0xff]
    %v2265 = vld [vmem:[%s2 + $0x8c] sm:$0xf]
    %v2266 = vld [vmem:[%s2 + $0x90] sm:$0xff]
    %v2267 = vld [vmem:[%s2 + $0x98] sm:$0xf]
    %v2268 = vld [vmem:[%s2 + $0x9c] sm:$0xff]
    %v2269 = vld [vmem:[%s2 + $0xa4] sm:$0xf]
    %v2270 = vld [vmem:[%s2 + $0xa8] sm:$0xff]
    %v2271 = vld [vmem:[%s2 + $0xb0] sm:$0xf]
    %v2272 = vld [vmem:[%s2 + $0xb4] sm:$0xff]
    %v2273 = vld [vmem:[%s2 + $0xbc] sm:$0xf]
    %v2274 = vld [vmem:[%s3] sm:$0x7]
    %v2276 = vlaneseq
    %v2277 = vshrl.u32 %v2276, 7
    %v2278 = vsub.s32 0, %v2277
    %v2279 = vrot.slane %v2274, %v2278
    %v2280 = vlaneseq
    %v2281 = vshrl.u32 %v2280, 7
    %v2282 = vsub.s32 1, %v2281
    %v2283 = vrot.slane %v2274, %v2282
    %v2284 = vlaneseq
    %v2285 = vshrl.u32 %v2284, 7
    %v2286 = vsub.s32 2, %v2285
    %v2287 = vrot.slane %v2274, %v2286
    %v2323 = vunpack.c.l.b16 %v2242
    %v2324 = vunpack.c.h.b16 %v2242
    %v2325 = vunpack.c.l.b16 %v2243
    %v2326 = vunpack.c.l.b16 %v2244
    %v2327 = vunpack.c.h.b16 %v2244
    %v2328 = vunpack.c.l.b16 %v2245
    %v2329 = vunpack.c.l.b16 %v2246
    %v2330 = vunpack.c.h.b16 %v2246
    %v2331 = vunpack.c.l.b16 %v2247
    %v2332 = vunpack.c.l.b16 %v2248
    %v2333 = vunpack.c.h.b16 %v2248
    %v2334 = vunpack.c.l.b16 %v2249
    %v2335 = vunpack.c.l.b16 %v2250
    %v2336 = vunpack.c.h.b16 %v2250
    %v2337 = vunpack.c.l.b16 %v2251
    %v2338 = vunpack.c.l.b16 %v2252
    %v2339 = vunpack.c.h.b16 %v2252
    %v2340 = vunpack.c.l.b16 %v2253
    %v2341 = vunpack.c.l.b16 %v2254
    %v2342 = vunpack.c.h.b16 %v2254
    %v2343 = vunpack.c.l.b16 %v2255
    %v2344 = vunpack.c.l.b16 %v2256
    %v2345 = vunpack.c.h.b16 %v2256
    %v2346 = vunpack.c.l.b16 %v2257
    %v2347 = vunpack.c.l.b16 %v2258
    %v2348 = vunpack.c.h.b16 %v2258
    %v2349 = vunpack.c.l.b16 %v2259
    %v2350 = vunpack.c.l.b16 %v2260
    %v2351 = vunpack.c.h.b16 %v2260
    %v2352 = vunpack.c.l.b16 %v2261
    %v2353 = vunpack.c.l.b16 %v2262
    %v2354 = vunpack.c.h.b16 %v2262
    %v2355 = vunpack.c.l.b16 %v2263
    %v2356 = vunpack.c.l.b16 %v2264
    %v2357 = vunpack.c.h.b16 %v2264
    %v2358 = vunpack.c.l.b16 %v2265
    %v2359 = vunpack.c.l.b16 %v2266
    %v2360 = vunpack.c.h.b16 %v2266
    %v2361 = vunpack.c.l.b16 %v2267
    %v2362 = vunpack.c.l.b16 %v2268
    %v2363 = vunpack.c.h.b16 %v2268
    %v2364 = vunpack.c.l.b16 %v2269
    %v2365 = vunpack.c.l.b16 %v2270
    %v2366 = vunpack.c.h.b16 %v2270
    %v2367 = vunpack.c.l.b16 %v2271
    %v2368 = vunpack.c.l.b16 %v2272
    %v2369 = vunpack.c.h.b16 %v2272
    %v2370 = vunpack.c.l.b16 %v2273
    %v2371 = vpack.c.b16 %v2326, %v2323
    %v2372 = vpack.c.b16 %v2327, %v2324
    %v2373 = vpack.c.b16 %v2328, %v2325
    %v2374 = vpack.c.b16 %v2332, %v2329
    %v2375 = vpack.c.b16 %v2333, %v2330
    %v2376 = vpack.c.b16 %v2334, %v2331
    %v2377 = vpack.c.b16 %v2338, %v2335
    %v2378 = vpack.c.b16 %v2339, %v2336
    %v2379 = vpack.c.b16 %v2340, %v2337
    %v2380 = vpack.c.b16 %v2344, %v2341
    %v2381 = vpack.c.b16 %v2345, %v2342
    %v2382 = vpack.c.b16 %v2346, %v2343
    %v2383 = vpack.c.b16 %v2350, %v2347
    %v2384 = vpack.c.b16 %v2351, %v2348
    %v2385 = vpack.c.b16 %v2352, %v2349
    %v2386 = vpack.c.b16 %v2356, %v2353
    %v2387 = vpack.c.b16 %v2357, %v2354
    %v2388 = vpack.c.b16 %v2358, %v2355
    %v2389 = vpack.c.b16 %v2362, %v2359
    %v2390 = vpack.c.b16 %v2363, %v2360
    %v2391 = vpack.c.b16 %v2364, %v2361
    %v2392 = vpack.c.b16 %v2368, %v2365
    %v2393 = vpack.c.b16 %v2369, %v2366
    %v2394 = vpack.c.b16 %v2370, %v2367
    %2419 = vmatprep.subr.bf16.mxu0 %v2372
    %2420 = vmatpush1.bf16.msra.mxu0 %v2371
    %2421 = vmatprep.subr.bf16.mxu0 %v2375
    %2422 = vmatpush1.bf16.msra.mxu0 %v2374
    %2423 = vmatprep.subr.bf16.mxu0 %v2378
    %2424 = vmatpush1.bf16.msra.mxu0 %v2377
    %2425 = vmatprep.subr.bf16.mxu0 %v2381
    %2426 = vmatpush1.bf16.msra.mxu0 %v2380
    %2427 = vmatprep.subr.bf16.mxu0 %v2384
    %2428 = vmatpush1.bf16.msra.mxu0 %v2383
    %2429 = vmatprep.subr.bf16.mxu0 %v2387
    %2430 = vmatpush1.bf16.msra.mxu0 %v2386
    %2431 = vmatprep.subr.bf16.mxu0 %v2390
    %2432 = vmatpush1.bf16.msra.mxu0 %v2389
    %2433 = vmatprep.subr.bf16.mxu0 %v2393
    %2434 = vmatpush1.bf16.msra.mxu0 %v2392
    %2435 = vmatprep.subr.bf16.mxu0 0
    %2436 = vmatpush1.bf16.msra.mxu0 0
    %2437 = vmatprep.subr.bf16.mxu0 0
    %2438 = vmatpush1.bf16.msra.mxu0 0
    %2439 = vmatprep.subr.bf16.mxu0 0
    %2440 = vmatpush1.bf16.msra.mxu0 0
    %2441 = vmatprep.subr.bf16.mxu0 0
    %2442 = vmatpush1.bf16.msra.mxu0 0
    %2443 = vmatprep.subr.bf16.mxu0 0
    %2444 = vmatpush1.bf16.msra.mxu0 0
    %2445 = vmatprep.subr.bf16.mxu0 0
    %2446 = vmatpush1.bf16.msra.mxu0 0
    %2447 = vmatprep.subr.bf16.mxu0 0
    %2448 = vmatpush1.bf16.msra.mxu0 0
    %2449 = vmatprep.subr.bf16.mxu0 0
    %2450 = vmatpush1.bf16.msra.mxu0 0
    %2451 = vmatprep.mubr.bf16.mxu0 0
    %2452 = vmatmul.mubr.bf16.gmra.mrb[0].mxu0 %v2241
    %v2453 = vpop.f32.mrb[0].mxu0
    %v2454 = vadd.f32 %v2279, %v2453
    %v2455 = vpop.f32.mrb[0].mxu0
    %v2456 = vadd.f32 %v2283, %v2455
    %v2457 = vpop.f32.mrb[0].mxu0
    %v2458 = vpop.f32.mrb[0].mxu0
    %2459 = vdwg.mxu0
    %2460 = vmatprep.subr.bf16.mxu0 0
    %2461 = vmatpush1.bf16.msra.mxu0 %v2373
    %2462 = vmatprep.subr.bf16.mxu0 0
    %2463 = vmatpush1.bf16.msra.mxu0 %v2376
    %2464 = vmatprep.subr.bf16.mxu0 0
    %2465 = vmatpush1.bf16.msra.mxu0 %v2379
    %2466 = vmatprep.subr.bf16.mxu0 0
    %2467 = vmatpush1.bf16.msra.mxu0 %v2382
    %2468 = vmatprep.subr.bf16.mxu0 0
    %2469 = vmatpush1.bf16.msra.mxu0 %v2385
    %2470 = vmatprep.subr.bf16.mxu0 0
    %2471 = vmatpush1.bf16.msra.mxu0 %v2388
    %2472 = vmatprep.subr.bf16.mxu0 0
    %2473 = vmatpush1.bf16.msra.mxu0 %v2391
    %2474 = vmatprep.subr.bf16.mxu0 0
    %2475 = vmatpush1.bf16.msra.mxu0 %v2394
    %2476 = vmatprep.subr.bf16.mxu0 0
    %2477 = vmatpush1.bf16.msra.mxu0 0
    %2478 = vmatprep.subr.bf16.mxu0 0
    %2479 = vmatpush1.bf16.msra.mxu0 0
    %2480 = vmatprep.subr.bf16.mxu0 0
    %2481 = vmatpush1.bf16.msra.mxu0 0
    %2482 = vmatprep.subr.bf16.mxu0 0
    %2483 = vmatpush1.bf16.msra.mxu0 0
    %2484 = vmatprep.subr.bf16.mxu0 0
    %2485 = vmatpush1.bf16.msra.mxu0 0
    %2486 = vmatprep.subr.bf16.mxu0 0
    %2487 = vmatpush1.bf16.msra.mxu0 0
    %2488 = vmatprep.subr.bf16.mxu0 0
    %2489 = vmatpush1.bf16.msra.mxu0 0
    %2490 = vmatprep.subr.bf16.mxu0 0
    %2491 = vmatpush1.bf16.msra.mxu0 0
    %2492 = vmatprep.mubr.bf16.mxu0 0
    %2493 = vmatmul.mubr.bf16.gmra.mrb[0].mxu0 %v2241
    %v2494 = vpop.f32.mrb[0].mxu0
    %v2495 = vadd.f32 %v2287, %v2494
    %v2496 = vpop.f32.mrb[0].mxu0
    %v2497 = vpop.f32.mrb[0].mxu0
    %v2498 = vpop.f32.mrb[0].mxu0
    %2499 = vdwg.mxu0
    %v2500 = vadd.f32 %v2236, %v2454
    %v2501 = vxor.u32 %v2500, 2147483648
    %v2502 = vmul.f32 %v2501, 1.442695
    %v2503 = vpow.pop %v2502
    %v2504 = vadd.f32 %v2503, 1.0
    %v2505 = vrcp.pop %v2504
    %v2506 = vmul.f32 1.0, %v2505
    %v2507 = vadd.f32 %v2237, %v2456
    %v2508 = vxor.u32 %v2507, 2147483648
    %v2509 = vmul.f32 %v2508, 1.442695
    %v2510 = vpow.pop %v2509
    %v2511 = vadd.f32 %v2510, 1.0
    %v2512 = vrcp.pop %v2511
    %v2513 = vmul.f32 1.0, %v2512
    %v2514 = vmul.f32 %v2506, %v2495
    %v2515 = vadd.f32 %v2238, %v2514
    %v2516 = vtanh.pop %v2515
    %v2517 = vsub.f32 1.0, %v2513
    %v2518 = vmul.f32 %v2517, %v2516
    %v2519 = vmul.f32 %v2513, %v2166
    %v2520 = vadd.f32 %v2518, %v2519
    %2522 = vset.pattern.permute.xlu0 0
    %2523 = vperm.xlu0 %2522, %v2240
    %v2524 = vpop.permute.xlu0 %2523
    %v2526 = vmul.f32 %v2524, %v2520
    %v2527 = vsub.f32 1.0, %v2240
    %2529 = vset.pattern.permute.xlu0 0
    %2530 = vperm.xlu0 %2529, %v2527
    %v2531 = vpop.permute.xlu0 %2530
    %v2533 = vmul.f32 %v2531, %v2166
    %v2534 = vadd.f32 %v2526, %v2533
    %v2536 = vcombine.high %v2534, %v2534
    %v2538 = vunpack.c.l.s4 1966171168
    %v2539 = vunpack.c.0.s8 %v2538
    %v2540 = vlaneseq
    %v2541 = vshrl.u32 %v2540, 7
    %v2542 = vsub.s32 %v2539, %v2541
    %v2543 = vrot.slane %v2534, %v2542
    %v2545 = vunpack.c.l.s4 1966171168
    %v2546 = vunpack.c.0.s8 %v2545
    %v2547 = vlaneseq
    %v2548 = vshrl.u32 %v2547, 7
    %v2549 = vsub.s32 %v2546, %v2548
    %v2550 = vrot.slane %v2536, %v2549
    %v2551 = vcombine.high %v2543, %v2543
    %v2552 = vcombine.high %v2550, %v2550
    %v2554 = vunpack.c.l.s4 1966171168
    %v2555 = vunpack.c.0.s8 %v2554
    %v2556 = vlaneseq
    %v2557 = vshrl.u32 %v2556, 7
    %v2558 = vsub.s32 %v2555, %v2557
    %v2559 = vrot.slane %v2543, %v2558
    %v2561 = vunpack.c.l.s4 1966171168
    %v2562 = vunpack.c.0.s8 %v2561
    %v2563 = vlaneseq
    %v2564 = vshrl.u32 %v2563, 7
    %v2565 = vsub.s32 %v2562, %v2564
    %v2566 = vrot.slane %v2550, %v2565
    %v2568 = vunpack.c.l.s4 1966171168
    %v2569 = vunpack.c.0.s8 %v2568
    %v2570 = vlaneseq
    %v2571 = vshrl.u32 %v2570, 7
    %v2572 = vsub.s32 %v2569, %v2571
    %v2573 = vrot.slane %v2551, %v2572
    %v2575 = vunpack.c.l.s4 1966171168
    %v2576 = vunpack.c.0.s8 %v2575
    %v2577 = vlaneseq
    %v2578 = vshrl.u32 %v2577, 7
    %v2579 = vsub.s32 %v2576, %v2578
    %v2580 = vrot.slane %v2552, %v2579
    %v2581 = vcombine.high %v2559, %v2559
    %v2582 = vcombine.high %v2566, %v2566
    %v2583 = vcombine.high %v2573, %v2573
    %v2584 = vcombine.high %v2580, %v2580
    %2593 = vst [vmem:[#allocation2 + $0x6] sm:$0x1] %v2559
    %2594 = vst [vmem:[#allocation2 + $0x16] sm:$0x1] %v2573
    %2595 = vst [vmem:[#allocation2 + $0x26] sm:$0x1] %v2581
    %2596 = vst [vmem:[#allocation2 + $0x36] sm:$0x1] %v2583
    %2597 = vst [vmem:[#allocation2 + $0x46] sm:$0x1] %v2566
    %2598 = vst [vmem:[#allocation2 + $0x56] sm:$0x1] %v2580
    %2599 = vst [vmem:[#allocation2 + $0x66] sm:$0x1] %v2582
    %2600 = vst [vmem:[#allocation2 + $0x76] sm:$0x1] %v2584
    %s2601 = scalar_lea.vmem %s0, 84
    %v2602 = vld [vmem:[%s2601] sm:$0xff]
    %v2603 = vld [vmem:[%s2601 + $0x8] sm:$0xf]
    %v2604 = vunpack.c.l.bf16 %v2602
    %v2605 = vunpack.c.h.bf16 %v2602
    %v2606 = vunpack.c.l.bf16 %v2603
    %s2607 = scalar_lea.vmem %s1, 56
    %v2608 = vld [vmem:[%s2607] sm:$0xff]
    %v2609 = vpack.c.bf16 %v2534, %v2534
    %v2610 = vld [vmem:[%s2] sm:$0xff]
    %v2611 = vld [vmem:[%s2 + $0x8] sm:$0xf]
    %v2612 = vld [vmem:[%s2 + $0xc] sm:$0xff]
    %v2613 = vld [vmem:[%s2 + $0x14] sm:$0xf]
    %v2614 = vld [vmem:[%s2 + $0x18] sm:$0xff]
    %v2615 = vld [vmem:[%s2 + $0x20] sm:$0xf]
    %v2616 = vld [vmem:[%s2 + $0x24] sm:$0xff]
    %v2617 = vld [vmem:[%s2 + $0x2c] sm:$0xf]
    %v2618 = vld [vmem:[%s2 + $0x30] sm:$0xff]
    %v2619 = vld [vmem:[%s2 + $0x38] sm:$0xf]
    %v2620 = vld [vmem:[%s2 + $0x3c] sm:$0xff]
    %v2621 = vld [vmem:[%s2 + $0x44] sm:$0xf]
    %v2622 = vld [vmem:[%s2 + $0x48] sm:$0xff]
    %v2623 = vld [vmem:[%s2 + $0x50] sm:$0xf]
    %v2624 = vld [vmem:[%s2 + $0x54] sm:$0xff]
    %v2625 = vld [vmem:[%s2 + $0x5c] sm:$0xf]
    %v2626 = vld [vmem:[%s2 + $0x60] sm:$0xff]
    %v2627 = vld [vmem:[%s2 + $0x68] sm:$0xf]
    %v2628 = vld [vmem:[%s2 + $0x6c] sm:$0xff]
    %v2629 = vld [vmem:[%s2 + $0x74] sm:$0xf]
    %v2630 = vld [vmem:[%s2 + $0x78] sm:$0xff]
    %v2631 = vld [vmem:[%s2 + $0x80] sm:$0xf]
    %v2632 = vld [vmem:[%s2 + $0x84] sm:$0xff]
    %v2633 = vld [vmem:[%s2 + $0x8c] sm:$0xf]
    %v2634 = vld [vmem:[%s2 + $0x90] sm:$0xff]
    %v2635 = vld [vmem:[%s2 + $0x98] sm:$0xf]
    %v2636 = vld [vmem:[%s2 + $0x9c] sm:$0xff]
    %v2637 = vld [vmem:[%s2 + $0xa4] sm:$0xf]
    %v2638 = vld [vmem:[%s2 + $0xa8] sm:$0xff]
    %v2639 = vld [vmem:[%s2 + $0xb0] sm:$0xf]
    %v2640 = vld [vmem:[%s2 + $0xb4] sm:$0xff]
    %v2641 = vld [vmem:[%s2 + $0xbc] sm:$0xf]
    %v2642 = vld [vmem:[%s3] sm:$0x7]
    %v2644 = vlaneseq
    %v2645 = vshrl.u32 %v2644, 7
    %v2646 = vsub.s32 0, %v2645
    %v2647 = vrot.slane %v2642, %v2646
    %v2648 = vlaneseq
    %v2649 = vshrl.u32 %v2648, 7
    %v2650 = vsub.s32 1, %v2649
    %v2651 = vrot.slane %v2642, %v2650
    %v2652 = vlaneseq
    %v2653 = vshrl.u32 %v2652, 7
    %v2654 = vsub.s32 2, %v2653
    %v2655 = vrot.slane %v2642, %v2654
    %v2691 = vunpack.c.l.b16 %v2610
    %v2692 = vunpack.c.h.b16 %v2610
    %v2693 = vunpack.c.l.b16 %v2611
    %v2694 = vunpack.c.l.b16 %v2612
    %v2695 = vunpack.c.h.b16 %v2612
    %v2696 = vunpack.c.l.b16 %v2613
    %v2697 = vunpack.c.l.b16 %v2614
    %v2698 = vunpack.c.h.b16 %v2614
    %v2699 = vunpack.c.l.b16 %v2615
    %v2700 = vunpack.c.l.b16 %v2616
    %v2701 = vunpack.c.h.b16 %v2616
    %v2702 = vunpack.c.l.b16 %v2617
    %v2703 = vunpack.c.l.b16 %v2618
    %v2704 = vunpack.c.h.b16 %v2618
    %v2705 = vunpack.c.l.b16 %v2619
    %v2706 = vunpack.c.l.b16 %v2620
    %v2707 = vunpack.c.h.b16 %v2620
    %v2708 = vunpack.c.l.b16 %v2621
    %v2709 = vunpack.c.l.b16 %v2622
    %v2710 = vunpack.c.h.b16 %v2622
    %v2711 = vunpack.c.l.b16 %v2623
    %v2712 = vunpack.c.l.b16 %v2624
    %v2713 = vunpack.c.h.b16 %v2624
    %v2714 = vunpack.c.l.b16 %v2625
    %v2715 = vunpack.c.l.b16 %v2626
    %v2716 = vunpack.c.h.b16 %v2626
    %v2717 = vunpack.c.l.b16 %v2627
    %v2718 = vunpack.c.l.b16 %v2628
    %v2719 = vunpack.c.h.b16 %v2628
    %v2720 = vunpack.c.l.b16 %v2629
    %v2721 = vunpack.c.l.b16 %v2630
    %v2722 = vunpack.c.h.b16 %v2630
    %v2723 = vunpack.c.l.b16 %v2631
    %v2724 = vunpack.c.l.b16 %v2632
    %v2725 = vunpack.c.h.b16 %v2632
    %v2726 = vunpack.c.l.b16 %v2633
    %v2727 = vunpack.c.l.b16 %v2634
    %v2728 = vunpack.c.h.b16 %v2634
    %v2729 = vunpack.c.l.b16 %v2635
    %v2730 = vunpack.c.l.b16 %v2636
    %v2731 = vunpack.c.h.b16 %v2636
    %v2732 = vunpack.c.l.b16 %v2637
    %v2733 = vunpack.c.l.b16 %v2638
    %v2734 = vunpack.c.h.b16 %v2638
    %v2735 = vunpack.c.l.b16 %v2639
    %v2736 = vunpack.c.l.b16 %v2640
    %v2737 = vunpack.c.h.b16 %v2640
    %v2738 = vunpack.c.l.b16 %v2641
    %v2739 = vpack.c.b16 %v2694, %v2691
    %v2740 = vpack.c.b16 %v2695, %v2692
    %v2741 = vpack.c.b16 %v2696, %v2693
    %v2742 = vpack.c.b16 %v2700, %v2697
    %v2743 = vpack.c.b16 %v2701, %v2698
    %v2744 = vpack.c.b16 %v2702, %v2699
    %v2745 = vpack.c.b16 %v2706, %v2703
    %v2746 = vpack.c.b16 %v2707, %v2704
    %v2747 = vpack.c.b16 %v2708, %v2705
    %v2748 = vpack.c.b16 %v2712, %v2709
    %v2749 = vpack.c.b16 %v2713, %v2710
    %v2750 = vpack.c.b16 %v2714, %v2711
    %v2751 = vpack.c.b16 %v2718, %v2715
    %v2752 = vpack.c.b16 %v2719, %v2716
    %v2753 = vpack.c.b16 %v2720, %v2717
    %v2754 = vpack.c.b16 %v2724, %v2721
    %v2755 = vpack.c.b16 %v2725, %v2722
    %v2756 = vpack.c.b16 %v2726, %v2723
    %v2757 = vpack.c.b16 %v2730, %v2727
    %v2758 = vpack.c.b16 %v2731, %v2728
    %v2759 = vpack.c.b16 %v2732, %v2729
    %v2760 = vpack.c.b16 %v2736, %v2733
    %v2761 = vpack.c.b16 %v2737, %v2734
    %v2762 = vpack.c.b16 %v2738, %v2735
    %2787 = vmatprep.subr.bf16.mxu0 %v2740
    %2788 = vmatpush1.bf16.msra.mxu0 %v2739
    %2789 = vmatprep.subr.bf16.mxu0 %v2743
    %2790 = vmatpush1.bf16.msra.mxu0 %v2742
    %2791 = vmatprep.subr.bf16.mxu0 %v2746
    %2792 = vmatpush1.bf16.msra.mxu0 %v2745
    %2793 = vmatprep.subr.bf16.mxu0 %v2749
    %2794 = vmatpush1.bf16.msra.mxu0 %v2748
    %2795 = vmatprep.subr.bf16.mxu0 %v2752
    %2796 = vmatpush1.bf16.msra.mxu0 %v2751
    %2797 = vmatprep.subr.bf16.mxu0 %v2755
    %2798 = vmatpush1.bf16.msra.mxu0 %v2754
    %2799 = vmatprep.subr.bf16.mxu0 %v2758
    %2800 = vmatpush1.bf16.msra.mxu0 %v2757
    %2801 = vmatprep.subr.bf16.mxu0 %v2761
    %2802 = vmatpush1.bf16.msra.mxu0 %v2760
    %2803 = vmatprep.subr.bf16.mxu0 0
    %2804 = vmatpush1.bf16.msra.mxu0 0
    %2805 = vmatprep.subr.bf16.mxu0 0
    %2806 = vmatpush1.bf16.msra.mxu0 0
    %2807 = vmatprep.subr.bf16.mxu0 0
    %2808 = vmatpush1.bf16.msra.mxu0 0
    %2809 = vmatprep.subr.bf16.mxu0 0
    %2810 = vmatpush1.bf16.msra.mxu0 0
    %2811 = vmatprep.subr.bf16.mxu0 0
    %2812 = vmatpush1.bf16.msra.mxu0 0
    %2813 = vmatprep.subr.bf16.mxu0 0
    %2814 = vmatpush1.bf16.msra.mxu0 0
    %2815 = vmatprep.subr.bf16.mxu0 0
    %2816 = vmatpush1.bf16.msra.mxu0 0
    %2817 = vmatprep.subr.bf16.mxu0 0
    %2818 = vmatpush1.bf16.msra.mxu0 0
    %2819 = vmatprep.mubr.bf16.mxu0 0
    %2820 = vmatmul.mubr.bf16.gmra.mrb[0].mxu0 %v2609
    %v2821 = vpop.f32.mrb[0].mxu0
    %v2822 = vadd.f32 %v2647, %v2821
    %v2823 = vpop.f32.mrb[0].mxu0
    %v2824 = vadd.f32 %v2651, %v2823
    %v2825 = vpop.f32.mrb[0].mxu0
    %v2826 = vpop.f32.mrb[0].mxu0
    %2827 = vdwg.mxu0
    %2828 = vmatprep.subr.bf16.mxu0 0
    %2829 = vmatpush1.bf16.msra.mxu0 %v2741
    %2830 = vmatprep.subr.bf16.mxu0 0
    %2831 = vmatpush1.bf16.msra.mxu0 %v2744
    %2832 = vmatprep.subr.bf16.mxu0 0
    %2833 = vmatpush1.bf16.msra.mxu0 %v2747
    %2834 = vmatprep.subr.bf16.mxu0 0
    %2835 = vmatpush1.bf16.msra.mxu0 %v2750
    %2836 = vmatprep.subr.bf16.mxu0 0
    %2837 = vmatpush1.bf16.msra.mxu0 %v2753
    %2838 = vmatprep.subr.bf16.mxu0 0
    %2839 = vmatpush1.bf16.msra.mxu0 %v2756
    %2840 = vmatprep.subr.bf16.mxu0 0
    %2841 = vmatpush1.bf16.msra.mxu0 %v2759
    %2842 = vmatprep.subr.bf16.mxu0 0
    %2843 = vmatpush1.bf16.msra.mxu0 %v2762
    %2844 = vmatprep.subr.bf16.mxu0 0
    %2845 = vmatpush1.bf16.msra.mxu0 0
    %2846 = vmatprep.subr.bf16.mxu0 0
    %2847 = vmatpush1.bf16.msra.mxu0 0
    %2848 = vmatprep.subr.bf16.mxu0 0
    %2849 = vmatpush1.bf16.msra.mxu0 0
    %2850 = vmatprep.subr.bf16.mxu0 0
    %2851 = vmatpush1.bf16.msra.mxu0 0
    %2852 = vmatprep.subr.bf16.mxu0 0
    %2853 = vmatpush1.bf16.msra.mxu0 0
    %2854 = vmatprep.subr.bf16.mxu0 0
    %2855 = vmatpush1.bf16.msra.mxu0 0
    %2856 = vmatprep.subr.bf16.mxu0 0
    %2857 = vmatpush1.bf16.msra.mxu0 0
    %2858 = vmatprep.subr.bf16.mxu0 0
    %2859 = vmatpush1.bf16.msra.mxu0 0
    %2860 = vmatprep.mubr.bf16.mxu0 0
    %2861 = vmatmul.mubr.bf16.gmra.mrb[0].mxu0 %v2609
    %v2862 = vpop.f32.mrb[0].mxu0
    %v2863 = vadd.f32 %v2655, %v2862
    %v2864 = vpop.f32.mrb[0].mxu0
    %v2865 = vpop.f32.mrb[0].mxu0
    %v2866 = vpop.f32.mrb[0].mxu0
    %2867 = vdwg.mxu0
    %v2868 = vadd.f32 %v2604, %v2822
    %v2869 = vxor.u32 %v2868, 2147483648
    %v2870 = vmul.f32 %v2869, 1.442695
    %v2871 = vpow.pop %v2870
    %v2872 = vadd.f32 %v2871, 1.0
    %v2873 = vrcp.pop %v2872
    %v2874 = vmul.f32 1.0, %v2873
    %v2875 = vadd.f32 %v2605, %v2824
    %v2876 = vxor.u32 %v2875, 2147483648
    %v2877 = vmul.f32 %v2876, 1.442695
    %v2878 = vpow.pop %v2877
    %v2879 = vadd.f32 %v2878, 1.0
    %v2880 = vrcp.pop %v2879
    %v2881 = vmul.f32 1.0, %v2880
    %v2882 = vmul.f32 %v2874, %v2863
    %v2883 = vadd.f32 %v2606, %v2882
    %v2884 = vtanh.pop %v2883
    %v2885 = vsub.f32 1.0, %v2881
    %v2886 = vmul.f32 %v2885, %v2884
    %v2887 = vmul.f32 %v2881, %v2534
    %v2888 = vadd.f32 %v2886, %v2887
    %2890 = vset.pattern.permute.xlu0 0
    %2891 = vperm.xlu0 %2890, %v2608
    %v2892 = vpop.permute.xlu0 %2891
    %v2894 = vmul.f32 %v2892, %v2888
    %v2895 = vsub.f32 1.0, %v2608
    %2897 = vset.pattern.permute.xlu0 0
    %2898 = vperm.xlu0 %2897, %v2895
    %v2899 = vpop.permute.xlu0 %2898
    %v2901 = vmul.f32 %v2899, %v2534
    %v2902 = vadd.f32 %v2894, %v2901
    %v2904 = vcombine.high %v2902, %v2902
    %v2906 = vunpack.c.l.s4 1966171168
    %v2907 = vunpack.c.0.s8 %v2906
    %v2908 = vlaneseq
    %v2909 = vshrl.u32 %v2908, 7
    %v2910 = vsub.s32 %v2907, %v2909
    %v2911 = vrot.slane %v2902, %v2910
    %v2913 = vunpack.c.l.s4 1966171168
    %v2914 = vunpack.c.0.s8 %v2913
    %v2915 = vlaneseq
    %v2916 = vshrl.u32 %v2915, 7
    %v2917 = vsub.s32 %v2914, %v2916
    %v2918 = vrot.slane %v2904, %v2917
    %v2919 = vcombine.high %v2911, %v2911
    %v2920 = vcombine.high %v2918, %v2918
    %v2922 = vunpack.c.l.s4 1966171168
    %v2923 = vunpack.c.0.s8 %v2922
    %v2924 = vlaneseq
    %v2925 = vshrl.u32 %v2924, 7
    %v2926 = vsub.s32 %v2923, %v2925
    %v2927 = vrot.slane %v2911, %v2926
    %v2929 = vunpack.c.l.s4 1966171168
    %v2930 = vunpack.c.0.s8 %v2929
    %v2931 = vlaneseq
    %v2932 = vshrl.u32 %v2931, 7
    %v2933 = vsub.s32 %v2930, %v2932
    %v2934 = vrot.slane %v2918, %v2933
    %v2936 = vunpack.c.l.s4 1966171168
    %v2937 = vunpack.c.0.s8 %v2936
    %v2938 = vlaneseq
    %v2939 = vshrl.u32 %v2938, 7
    %v2940 = vsub.s32 %v2937, %v2939
    %v2941 = vrot.slane %v2919, %v2940
    %v2943 = vunpack.c.l.s4 1966171168
    %v2944 = vunpack.c.0.s8 %v2943
    %v2945 = vlaneseq
    %v2946 = vshrl.u32 %v2945, 7
    %v2947 = vsub.s32 %v2944, %v2946
    %v2948 = vrot.slane %v2920, %v2947
    %v2949 = vcombine.high %v2927, %v2927
    %v2950 = vcombine.high %v2934, %v2934
    %v2951 = vcombine.high %v2941, %v2941
    %v2952 = vcombine.high %v2948, %v2948
    %2961 = vst [vmem:[#allocation2 + $0x7] sm:$0x1] %v2927
    %2962 = vst [vmem:[#allocation2 + $0x17] sm:$0x1] %v2941
    %2963 = vst [vmem:[#allocation2 + $0x27] sm:$0x1] %v2949
    %2964 = vst [vmem:[#allocation2 + $0x37] sm:$0x1] %v2951
    %2965 = vst [vmem:[#allocation2 + $0x47] sm:$0x1] %v2934
    %2966 = vst [vmem:[#allocation2 + $0x57] sm:$0x1] %v2948
    %2967 = vst [vmem:[#allocation2 + $0x67] sm:$0x1] %v2950
    %2968 = vst [vmem:[#allocation2 + $0x77] sm:$0x1] %v2952
    %s2969 = scalar_lea.vmem %s0, 96
    %v2970 = vld [vmem:[%s2969] sm:$0xff]
    %v2971 = vld [vmem:[%s2969 + $0x8] sm:$0xf]
    %v2972 = vunpack.c.l.bf16 %v2970
    %v2973 = vunpack.c.h.bf16 %v2970
    %v2974 = vunpack.c.l.bf16 %v2971
    %s2975 = scalar_lea.vmem %s1, 64
    %v2976 = vld [vmem:[%s2975] sm:$0xff]
    %v2977 = vpack.c.bf16 %v2902, %v2902
    %v2978 = vld [vmem:[%s2] sm:$0xff]
    %v2979 = vld [vmem:[%s2 + $0x8] sm:$0xf]
    %v2980 = vld [vmem:[%s2 + $0xc] sm:$0xff]
    %v2981 = vld [vmem:[%s2 + $0x14] sm:$0xf]
    %v2982 = vld [vmem:[%s2 + $0x18] sm:$0xff]
    %v2983 = vld [vmem:[%s2 + $0x20] sm:$0xf]
    %v2984 = vld [vmem:[%s2 + $0x24] sm:$0xff]
    %v2985 = vld [vmem:[%s2 + $0x2c] sm:$0xf]
    %v2986 = vld [vmem:[%s2 + $0x30] sm:$0xff]
    %v2987 = vld [vmem:[%s2 + $0x38] sm:$0xf]
    %v2988 = vld [vmem:[%s2 + $0x3c] sm:$0xff]
    %v2989 = vld [vmem:[%s2 + $0x44] sm:$0xf]
    %v2990 = vld [vmem:[%s2 + $0x48] sm:$0xff]
    %v2991 = vld [vmem:[%s2 + $0x50] sm:$0xf]
    %v2992 = vld [vmem:[%s2 + $0x54] sm:$0xff]
    %v2993 = vld [vmem:[%s2 + $0x5c] sm:$0xf]
    %v2994 = vld [vmem:[%s2 + $0x60] sm:$0xff]
    %v2995 = vld [vmem:[%s2 + $0x68] sm:$0xf]
    %v2996 = vld [vmem:[%s2 + $0x6c] sm:$0xff]
    %v2997 = vld [vmem:[%s2 + $0x74] sm:$0xf]
    %v2998 = vld [vmem:[%s2 + $0x78] sm:$0xff]
    %v2999 = vld [vmem:[%s2 + $0x80] sm:$0xf]
    %v3000 = vld [vmem:[%s2 + $0x84] sm:$0xff]
    %v3001 = vld [vmem:[%s2 + $0x8c] sm:$0xf]
    %v3002 = vld [vmem:[%s2 + $0x90] sm:$0xff]
    %v3003 = vld [vmem:[%s2 + $0x98] sm:$0xf]
    %v3004 = vld [vmem:[%s2 + $0x9c] sm:$0xff]
    %v3005 = vld [vmem:[%s2 + $0xa4] sm:$0xf]
    %v3006 = vld [vmem:[%s2 + $0xa8] sm:$0xff]
    %v3007 = vld [vmem:[%s2 + $0xb0] sm:$0xf]
    %v3008 = vld [vmem:[%s2 + $0xb4] sm:$0xff]
    %v3009 = vld [vmem:[%s2 + $0xbc] sm:$0xf]
    %v3010 = vld [vmem:[%s3] sm:$0x7]
    %v3012 = vlaneseq
    %v3013 = vshrl.u32 %v3012, 7
    %v3014 = vsub.s32 0, %v3013
    %v3015 = vrot.slane %v3010, %v3014
    %v3016 = vlaneseq
    %v3017 = vshrl.u32 %v3016, 7
    %v3018 = vsub.s32 1, %v3017
    %v3019 = vrot.slane %v3010, %v3018
    %v3020 = vlaneseq
    %v3021 = vshrl.u32 %v3020, 7
    %v3022 = vsub.s32 2, %v3021
    %v3023 = vrot.slane %v3010, %v3022
    %v3059 = vunpack.c.l.b16 %v2978
    %v3060 = vunpack.c.h.b16 %v2978
    %v3061 = vunpack.c.l.b16 %v2979
    %v3062 = vunpack.c.l.b16 %v2980
    %v3063 = vunpack.c.h.b16 %v2980
    %v3064 = vunpack.c.l.b16 %v2981
    %v3065 = vunpack.c.l.b16 %v2982
    %v3066 = vunpack.c.h.b16 %v2982
    %v3067 = vunpack.c.l.b16 %v2983
    %v3068 = vunpack.c.l.b16 %v2984
    %v3069 = vunpack.c.h.b16 %v2984
    %v3070 = vunpack.c.l.b16 %v2985
    %v3071 = vunpack.c.l.b16 %v2986
    %v3072 = vunpack.c.h.b16 %v2986
    %v3073 = vunpack.c.l.b16 %v2987
    %v3074 = vunpack.c.l.b16 %v2988
    %v3075 = vunpack.c.h.b16 %v2988
    %v3076 = vunpack.c.l.b16 %v2989
    %v3077 = vunpack.c.l.b16 %v2990
    %v3078 = vunpack.c.h.b16 %v2990
    %v3079 = vunpack.c.l.b16 %v2991
    %v3080 = vunpack.c.l.b16 %v2992
    %v3081 = vunpack.c.h.b16 %v2992
    %v3082 = vunpack.c.l.b16 %v2993
    %v3083 = vunpack.c.l.b16 %v2994
    %v3084 = vunpack.c.h.b16 %v2994
    %v3085 = vunpack.c.l.b16 %v2995
    %v3086 = vunpack.c.l.b16 %v2996
    %v3087 = vunpack.c.h.b16 %v2996
    %v3088 = vunpack.c.l.b16 %v2997
    %v3089 = vunpack.c.l.b16 %v2998
    %v3090 = vunpack.c.h.b16 %v2998
    %v3091 = vunpack.c.l.b16 %v2999
    %v3092 = vunpack.c.l.b16 %v3000
    %v3093 = vunpack.c.h.b16 %v3000
    %v3094 = vunpack.c.l.b16 %v3001
    %v3095 = vunpack.c.l.b16 %v3002
    %v3096 = vunpack.c.h.b16 %v3002
    %v3097 = vunpack.c.l.b16 %v3003
    %v3098 = vunpack.c.l.b16 %v3004
    %v3099 = vunpack.c.h.b16 %v3004
    %v3100 = vunpack.c.l.b16 %v3005
    %v3101 = vunpack.c.l.b16 %v3006
    %v3102 = vunpack.c.h.b16 %v3006
    %v3103 = vunpack.c.l.b16 %v3007
    %v3104 = vunpack.c.l.b16 %v3008
    %v3105 = vunpack.c.h.b16 %v3008
    %v3106 = vunpack.c.l.b16 %v3009
    %v3107 = vpack.c.b16 %v3062, %v3059
    %v3108 = vpack.c.b16 %v3063, %v3060
    %v3109 = vpack.c.b16 %v3064, %v3061
    %v3110 = vpack.c.b16 %v3068, %v3065
    %v3111 = vpack.c.b16 %v3069, %v3066
    %v3112 = vpack.c.b16 %v3070, %v3067
    %v3113 = vpack.c.b16 %v3074, %v3071
    %v3114 = vpack.c.b16 %v3075, %v3072
    %v3115 = vpack.c.b16 %v3076, %v3073
    %v3116 = vpack.c.b16 %v3080, %v3077
    %v3117 = vpack.c.b16 %v3081, %v3078
    %v3118 = vpack.c.b16 %v3082, %v3079
    %v3119 = vpack.c.b16 %v3086, %v3083
    %v3120 = vpack.c.b16 %v3087, %v3084
    %v3121 = vpack.c.b16 %v3088, %v3085
    %v3122 = vpack.c.b16 %v3092, %v3089
    %v3123 = vpack.c.b16 %v3093, %v3090
    %v3124 = vpack.c.b16 %v3094, %v3091
    %v3125 = vpack.c.b16 %v3098, %v3095
    %v3126 = vpack.c.b16 %v3099, %v3096
    %v3127 = vpack.c.b16 %v3100, %v3097
    %v3128 = vpack.c.b16 %v3104, %v3101
    %v3129 = vpack.c.b16 %v3105, %v3102
    %v3130 = vpack.c.b16 %v3106, %v3103
    %3155 = vmatprep.subr.bf16.mxu0 %v3108
    %3156 = vmatpush1.bf16.msra.mxu0 %v3107
    %3157 = vmatprep.subr.bf16.mxu0 %v3111
    %3158 = vmatpush1.bf16.msra.mxu0 %v3110
    %3159 = vmatprep.subr.bf16.mxu0 %v3114
    %3160 = vmatpush1.bf16.msra.mxu0 %v3113
    %3161 = vmatprep.subr.bf16.mxu0 %v3117
    %3162 = vmatpush1.bf16.msra.mxu0 %v3116
    %3163 = vmatprep.subr.bf16.mxu0 %v3120
    %3164 = vmatpush1.bf16.msra.mxu0 %v3119
    %3165 = vmatprep.subr.bf16.mxu0 %v3123
    %3166 = vmatpush1.bf16.msra.mxu0 %v3122
    %3167 = vmatprep.subr.bf16.mxu0 %v3126
    %3168 = vmatpush1.bf16.msra.mxu0 %v3125
    %3169 = vmatprep.subr.bf16.mxu0 %v3129
    %3170 = vmatpush1.bf16.msra.mxu0 %v3128
    %3171 = vmatprep.subr.bf16.mxu0 0
    %3172 = vmatpush1.bf16.msra.mxu0 0
    %3173 = vmatprep.subr.bf16.mxu0 0
    %3174 = vmatpush1.bf16.msra.mxu0 0
    %3175 = vmatprep.subr.bf16.mxu0 0
    %3176 = vmatpush1.bf16.msra.mxu0 0
    %3177 = vmatprep.subr.bf16.mxu0 0
    %3178 = vmatpush1.bf16.msra.mxu0 0
    %3179 = vmatprep.subr.bf16.mxu0 0
    %3180 = vmatpush1.bf16.msra.mxu0 0
    %3181 = vmatprep.subr.bf16.mxu0 0
    %3182 = vmatpush1.bf16.msra.mxu0 0
    %3183 = vmatprep.subr.bf16.mxu0 0
    %3184 = vmatpush1.bf16.msra.mxu0 0
    %3185 = vmatprep.subr.bf16.mxu0 0
    %3186 = vmatpush1.bf16.msra.mxu0 0
    %3187 = vmatprep.mubr.bf16.mxu0 0
    %3188 = vmatmul.mubr.bf16.gmra.mrb[0].mxu0 %v2977
    %v3189 = vpop.f32.mrb[0].mxu0
    %v3190 = vadd.f32 %v3015, %v3189
    %v3191 = vpop.f32.mrb[0].mxu0
    %v3192 = vadd.f32 %v3019, %v3191
    %v3193 = vpop.f32.mrb[0].mxu0
    %v3194 = vpop.f32.mrb[0].mxu0
    %3195 = vdwg.mxu0
    %3196 = vmatprep.subr.bf16.mxu0 0
    %3197 = vmatpush1.bf16.msra.mxu0 %v3109
    %3198 = vmatprep.subr.bf16.mxu0 0
    %3199 = vmatpush1.bf16.msra.mxu0 %v3112
    %3200 = vmatprep.subr.bf16.mxu0 0
    %3201 = vmatpush1.bf16.msra.mxu0 %v3115
    %3202 = vmatprep.subr.bf16.mxu0 0
    %3203 = vmatpush1.bf16.msra.mxu0 %v3118
    %3204 = vmatprep.subr.bf16.mxu0 0
    %3205 = vmatpush1.bf16.msra.mxu0 %v3121
    %3206 = vmatprep.subr.bf16.mxu0 0
    %3207 = vmatpush1.bf16.msra.mxu0 %v3124
    %3208 = vmatprep.subr.bf16.mxu0 0
    %3209 = vmatpush1.bf16.msra.mxu0 %v3127
    %3210 = vmatprep.subr.bf16.mxu0 0
    %3211 = vmatpush1.bf16.msra.mxu0 %v3130
    %3212 = vmatprep.subr.bf16.mxu0 0
    %3213 = vmatpush1.bf16.msra.mxu0 0
    %3214 = vmatprep.subr.bf16.mxu0 0
    %3215 = vmatpush1.bf16.msra.mxu0 0
    %3216 = vmatprep.subr.bf16.mxu0 0
    %3217 = vmatpush1.bf16.msra.mxu0 0
    %3218 = vmatprep.subr.bf16.mxu0 0
    %3219 = vmatpush1.bf16.msra.mxu0 0
    %3220 = vmatprep.subr.bf16.mxu0 0
    %3221 = vmatpush1.bf16.msra.mxu0 0
    %3222 = vmatprep.subr.bf16.mxu0 0
    %3223 = vmatpush1.bf16.msra.mxu0 0
    %3224 = vmatprep.subr.bf16.mxu0 0
    %3225 = vmatpush1.bf16.msra.mxu0 0
    %3226 = vmatprep.subr.bf16.mxu0 0
    %3227 = vmatpush1.bf16.msra.mxu0 0
    %3228 = vmatprep.mubr.bf16.mxu0 0
    %3229 = vmatmul.mubr.bf16.gmra.mrb[0].mxu0 %v2977
    %v3230 = vpop.f32.mrb[0].mxu0
    %v3231 = vadd.f32 %v3023, %v3230
    %v3232 = vpop.f32.mrb[0].mxu0
    %v3233 = vpop.f32.mrb[0].mxu0
    %v3234 = vpop.f32.mrb[0].mxu0
    %3235 = vdwg.mxu0
    %v3236 = vadd.f32 %v2972, %v3190
    %v3237 = vxor.u32 %v3236, 2147483648
    %v3238 = vmul.f32 %v3237, 1.442695
    %v3239 = vpow.pop %v3238
    %v3240 = vadd.f32 %v3239, 1.0
    %v3241 = vrcp.pop %v3240
    %v3242 = vmul.f32 1.0, %v3241
    %v3243 = vadd.f32 %v2973, %v3192
    %v3244 = vxor.u32 %v3243, 2147483648
    %v3245 = vmul.f32 %v3244, 1.442695
    %v3246 = vpow.pop %v3245
    %v3247 = vadd.f32 %v3246, 1.0
    %v3248 = vrcp.pop %v3247
    %v3249 = vmul.f32 1.0, %v3248
    %v3250 = vmul.f32 %v3242, %v3231
    %v3251 = vadd.f32 %v2974, %v3250
    %v3252 = vtanh.pop %v3251
    %v3253 = vsub.f32 1.0, %v3249
    %v3254 = vmul.f32 %v3253, %v3252
    %v3255 = vmul.f32 %v3249, %v2902
    %v3256 = vadd.f32 %v3254, %v3255
    %3258 = vset.pattern.permute.xlu0 0
    %3259 = vperm.xlu0 %3258, %v2976
    %v3260 = vpop.permute.xlu0 %3259
    %v3262 = vmul.f32 %v3260, %v3256
    %v3263 = vsub.f32 1.0, %v2976
    %3265 = vset.pattern.permute.xlu0 0
    %3266 = vperm.xlu0 %3265, %v3263
    %v3267 = vpop.permute.xlu0 %3266
    %v3269 = vmul.f32 %v3267, %v2902
    %v3270 = vadd.f32 %v3262, %v3269
    %v3272 = vcombine.high %v3270, %v3270
    %v3274 = vunpack.c.l.s4 1966171168
    %v3275 = vunpack.c.0.s8 %v3274
    %v3276 = vlaneseq
    %v3277 = vshrl.u32 %v3276, 7
    %v3278 = vsub.s32 %v3275, %v3277
    %v3279 = vrot.slane %v3270, %v3278
    %v3281 = vunpack.c.l.s4 1966171168
    %v3282 = vunpack.c.0.s8 %v3281
    %v3283 = vlaneseq
    %v3284 = vshrl.u32 %v3283, 7
    %v3285 = vsub.s32 %v3282, %v3284
    %v3286 = vrot.slane %v3272, %v3285
    %v3287 = vcombine.high %v3279, %v3279
    %v3288 = vcombine.high %v3286, %v3286
    %v3290 = vunpack.c.l.s4 1966171168
    %v3291 = vunpack.c.0.s8 %v3290
    %v3292 = vlaneseq
    %v3293 = vshrl.u32 %v3292, 7
    %v3294 = vsub.s32 %v3291, %v3293
    %v3295 = vrot.slane %v3279, %v3294
    %v3297 = vunpack.c.l.s4 1966171168
    %v3298 = vunpack.c.0.s8 %v3297
    %v3299 = vlaneseq
    %v3300 = vshrl.u32 %v3299, 7
    %v3301 = vsub.s32 %v3298, %v3300
    %v3302 = vrot.slane %v3286, %v3301
    %v3304 = vunpack.c.l.s4 1966171168
    %v3305 = vunpack.c.0.s8 %v3304
    %v3306 = vlaneseq
    %v3307 = vshrl.u32 %v3306, 7
    %v3308 = vsub.s32 %v3305, %v3307
    %v3309 = vrot.slane %v3287, %v3308
    %v3311 = vunpack.c.l.s4 1966171168
    %v3312 = vunpack.c.0.s8 %v3311
    %v3313 = vlaneseq
    %v3314 = vshrl.u32 %v3313, 7
    %v3315 = vsub.s32 %v3312, %v3314
    %v3316 = vrot.slane %v3288, %v3315
    %v3317 = vcombine.high %v3295, %v3295
    %v3318 = vcombine.high %v3302, %v3302
    %v3319 = vcombine.high %v3309, %v3309
    %v3320 = vcombine.high %v3316, %v3316
    %3329 = vst [vmem:[#allocation2 + $0x8] sm:$0x1] %v3295
    %3330 = vst [vmem:[#allocation2 + $0x18] sm:$0x1] %v3309
    %3331 = vst [vmem:[#allocation2 + $0x28] sm:$0x1] %v3317
    %3332 = vst [vmem:[#allocation2 + $0x38] sm:$0x1] %v3319
    %3333 = vst [vmem:[#allocation2 + $0x48] sm:$0x1] %v3302
    %3334 = vst [vmem:[#allocation2 + $0x58] sm:$0x1] %v3316
    %3335 = vst [vmem:[#allocation2 + $0x68] sm:$0x1] %v3318
    %3336 = vst [vmem:[#allocation2 + $0x78] sm:$0x1] %v3320
    %s3337 = scalar_lea.vmem %s0, 108
    %v3338 = vld [vmem:[%s3337] sm:$0xff]
    %v3339 = vld [vmem:[%s3337 + $0x8] sm:$0xf]
    %v3340 = vunpack.c.l.bf16 %v3338
    %v3341 = vunpack.c.h.bf16 %v3338
    %v3342 = vunpack.c.l.bf16 %v3339
    %s3343 = scalar_lea.vmem %s1, 72
    %v3344 = vld [vmem:[%s3343] sm:$0xff]
    %v3345 = vpack.c.bf16 %v3270, %v3270
    %v3346 = vld [vmem:[%s2] sm:$0xff]
    %v3347 = vld [vmem:[%s2 + $0x8] sm:$0xf]
    %v3348 = vld [vmem:[%s2 + $0xc] sm:$0xff]
    %v3349 = vld [vmem:[%s2 + $0x14] sm:$0xf]
    %v3350 = vld [vmem:[%s2 + $0x18] sm:$0xff]
    %v3351 = vld [vmem:[%s2 + $0x20] sm:$0xf]
    %v3352 = vld [vmem:[%s2 + $0x24] sm:$0xff]
    %v3353 = vld [vmem:[%s2 + $0x2c] sm:$0xf]
    %v3354 = vld [vmem:[%s2 + $0x30] sm:$0xff]
    %v3355 = vld [vmem:[%s2 + $0x38] sm:$0xf]
    %v3356 = vld [vmem:[%s2 + $0x3c] sm:$0xff]
    %v3357 = vld [vmem:[%s2 + $0x44] sm:$0xf]
    %v3358 = vld [vmem:[%s2 + $0x48] sm:$0xff]
    %v3359 = vld [vmem:[%s2 + $0x50] sm:$0xf]
    %v3360 = vld [vmem:[%s2 + $0x54] sm:$0xff]
    %v3361 = vld [vmem:[%s2 + $0x5c] sm:$0xf]
    %v3362 = vld [vmem:[%s2 + $0x60] sm:$0xff]
    %v3363 = vld [vmem:[%s2 + $0x68] sm:$0xf]
    %v3364 = vld [vmem:[%s2 + $0x6c] sm:$0xff]
    %v3365 = vld [vmem:[%s2 + $0x74] sm:$0xf]
    %v3366 = vld [vmem:[%s2 + $0x78] sm:$0xff]
    %v3367 = vld [vmem:[%s2 + $0x80] sm:$0xf]
    %v3368 = vld [vmem:[%s2 + $0x84] sm:$0xff]
    %v3369 = vld [vmem:[%s2 + $0x8c] sm:$0xf]
    %v3370 = vld [vmem:[%s2 + $0x90] sm:$0xff]
    %v3371 = vld [vmem:[%s2 + $0x98] sm:$0xf]
    %v3372 = vld [vmem:[%s2 + $0x9c] sm:$0xff]
    %v3373 = vld [vmem:[%s2 + $0xa4] sm:$0xf]
    %v3374 = vld [vmem:[%s2 + $0xa8] sm:$0xff]
    %v3375 = vld [vmem:[%s2 + $0xb0] sm:$0xf]
    %v3376 = vld [vmem:[%s2 + $0xb4] sm:$0xff]
    %v3377 = vld [vmem:[%s2 + $0xbc] sm:$0xf]
    %v3378 = vld [vmem:[%s3] sm:$0x7]
    %v3380 = vlaneseq
    %v3381 = vshrl.u32 %v3380, 7
    %v3382 = vsub.s32 0, %v3381
    %v3383 = vrot.slane %v3378, %v3382
    %v3384 = vlaneseq
    %v3385 = vshrl.u32 %v3384, 7
    %v3386 = vsub.s32 1, %v3385
    %v3387 = vrot.slane %v3378, %v3386
    %v3388 = vlaneseq
    %v3389 = vshrl.u32 %v3388, 7
    %v3390 = vsub.s32 2, %v3389
    %v3391 = vrot.slane %v3378, %v3390
    %v3427 = vunpack.c.l.b16 %v3346
    %v3428 = vunpack.c.h.b16 %v3346
    %v3429 = vunpack.c.l.b16 %v3347
    %v3430 = vunpack.c.l.b16 %v3348
    %v3431 = vunpack.c.h.b16 %v3348
    %v3432 = vunpack.c.l.b16 %v3349
    %v3433 = vunpack.c.l.b16 %v3350
    %v3434 = vunpack.c.h.b16 %v3350
    %v3435 = vunpack.c.l.b16 %v3351
    %v3436 = vunpack.c.l.b16 %v3352
    %v3437 = vunpack.c.h.b16 %v3352
    %v3438 = vunpack.c.l.b16 %v3353
    %v3439 = vunpack.c.l.b16 %v3354
    %v3440 = vunpack.c.h.b16 %v3354
    %v3441 = vunpack.c.l.b16 %v3355
    %v3442 = vunpack.c.l.b16 %v3356
    %v3443 = vunpack.c.h.b16 %v3356
    %v3444 = vunpack.c.l.b16 %v3357
    %v3445 = vunpack.c.l.b16 %v3358
    %v3446 = vunpack.c.h.b16 %v3358
    %v3447 = vunpack.c.l.b16 %v3359
    %v3448 = vunpack.c.l.b16 %v3360
    %v3449 = vunpack.c.h.b16 %v3360
    %v3450 = vunpack.c.l.b16 %v3361
    %v3451 = vunpack.c.l.b16 %v3362
    %v3452 = vunpack.c.h.b16 %v3362
    %v3453 = vunpack.c.l.b16 %v3363
    %v3454 = vunpack.c.l.b16 %v3364
    %v3455 = vunpack.c.h.b16 %v3364
    %v3456 = vunpack.c.l.b16 %v3365
    %v3457 = vunpack.c.l.b16 %v3366
    %v3458 = vunpack.c.h.b16 %v3366
    %v3459 = vunpack.c.l.b16 %v3367
    %v3460 = vunpack.c.l.b16 %v3368
    %v3461 = vunpack.c.h.b16 %v3368
    %v3462 = vunpack.c.l.b16 %v3369
    %v3463 = vunpack.c.l.b16 %v3370
    %v3464 = vunpack.c.h.b16 %v3370
    %v3465 = vunpack.c.l.b16 %v3371
    %v3466 = vunpack.c.l.b16 %v3372
    %v3467 = vunpack.c.h.b16 %v3372
    %v3468 = vunpack.c.l.b16 %v3373
    %v3469 = vunpack.c.l.b16 %v3374
    %v3470 = vunpack.c.h.b16 %v3374
    %v3471 = vunpack.c.l.b16 %v3375
    %v3472 = vunpack.c.l.b16 %v3376
    %v3473 = vunpack.c.h.b16 %v3376
    %v3474 = vunpack.c.l.b16 %v3377
    %v3475 = vpack.c.b16 %v3430, %v3427
    %v3476 = vpack.c.b16 %v3431, %v3428
    %v3477 = vpack.c.b16 %v3432, %v3429
    %v3478 = vpack.c.b16 %v3436, %v3433
    %v3479 = vpack.c.b16 %v3437, %v3434
    %v3480 = vpack.c.b16 %v3438, %v3435
    %v3481 = vpack.c.b16 %v3442, %v3439
    %v3482 = vpack.c.b16 %v3443, %v3440
    %v3483 = vpack.c.b16 %v3444, %v3441
    %v3484 = vpack.c.b16 %v3448, %v3445
    %v3485 = vpack.c.b16 %v3449, %v3446
    %v3486 = vpack.c.b16 %v3450, %v3447
    %v3487 = vpack.c.b16 %v3454, %v3451
    %v3488 = vpack.c.b16 %v3455, %v3452
    %v3489 = vpack.c.b16 %v3456, %v3453
    %v3490 = vpack.c.b16 %v3460, %v3457
    %v3491 = vpack.c.b16 %v3461, %v3458
    %v3492 = vpack.c.b16 %v3462, %v3459
    %v3493 = vpack.c.b16 %v3466, %v3463
    %v3494 = vpack.c.b16 %v3467, %v3464
    %v3495 = vpack.c.b16 %v3468, %v3465
    %v3496 = vpack.c.b16 %v3472, %v3469
    %v3497 = vpack.c.b16 %v3473, %v3470
    %v3498 = vpack.c.b16 %v3474, %v3471
    %3523 = vmatprep.subr.bf16.mxu0 %v3476
    %3524 = vmatpush1.bf16.msra.mxu0 %v3475
    %3525 = vmatprep.subr.bf16.mxu0 %v3479
    %3526 = vmatpush1.bf16.msra.mxu0 %v3478
    %3527 = vmatprep.subr.bf16.mxu0 %v3482
    %3528 = vmatpush1.bf16.msra.mxu0 %v3481
    %3529 = vmatprep.subr.bf16.mxu0 %v3485
    %3530 = vmatpush1.bf16.msra.mxu0 %v3484
    %3531 = vmatprep.subr.bf16.mxu0 %v3488
    %3532 = vmatpush1.bf16.msra.mxu0 %v3487
    %3533 = vmatprep.subr.bf16.mxu0 %v3491
    %3534 = vmatpush1.bf16.msra.mxu0 %v3490
    %3535 = vmatprep.subr.bf16.mxu0 %v3494
    %3536 = vmatpush1.bf16.msra.mxu0 %v3493
    %3537 = vmatprep.subr.bf16.mxu0 %v3497
    %3538 = vmatpush1.bf16.msra.mxu0 %v3496
    %3539 = vmatprep.subr.bf16.mxu0 0
    %3540 = vmatpush1.bf16.msra.mxu0 0
    %3541 = vmatprep.subr.bf16.mxu0 0
    %3542 = vmatpush1.bf16.msra.mxu0 0
    %3543 = vmatprep.subr.bf16.mxu0 0
    %3544 = vmatpush1.bf16.msra.mxu0 0
    %3545 = vmatprep.subr.bf16.mxu0 0
    %3546 = vmatpush1.bf16.msra.mxu0 0
    %3547 = vmatprep.subr.bf16.mxu0 0
    %3548 = vmatpush1.bf16.msra.mxu0 0
    %3549 = vmatprep.subr.bf16.mxu0 0
    %3550 = vmatpush1.bf16.msra.mxu0 0
    %3551 = vmatprep.subr.bf16.mxu0 0
    %3552 = vmatpush1.bf16.msra.mxu0 0
    %3553 = vmatprep.subr.bf16.mxu0 0
    %3554 = vmatpush1.bf16.msra.mxu0 0
    %3555 = vmatprep.mubr.bf16.mxu0 0
    %3556 = vmatmul.mubr.bf16.gmra.mrb[0].mxu0 %v3345
    %v3557 = vpop.f32.mrb[0].mxu0
    %v3558 = vadd.f32 %v3383, %v3557
    %v3559 = vpop.f32.mrb[0].mxu0
    %v3560 = vadd.f32 %v3387, %v3559
    %v3561 = vpop.f32.mrb[0].mxu0
    %v3562 = vpop.f32.mrb[0].mxu0
    %3563 = vdwg.mxu0
    %3564 = vmatprep.subr.bf16.mxu0 0
    %3565 = vmatpush1.bf16.msra.mxu0 %v3477
    %3566 = vmatprep.subr.bf16.mxu0 0
    %3567 = vmatpush1.bf16.msra.mxu0 %v3480
    %3568 = vmatprep.subr.bf16.mxu0 0
    %3569 = vmatpush1.bf16.msra.mxu0 %v3483
    %3570 = vmatprep.subr.bf16.mxu0 0
    %3571 = vmatpush1.bf16.msra.mxu0 %v3486
    %3572 = vmatprep.subr.bf16.mxu0 0
    %3573 = vmatpush1.bf16.msra.mxu0 %v3489
    %3574 = vmatprep.subr.bf16.mxu0 0
    %3575 = vmatpush1.bf16.msra.mxu0 %v3492
    %3576 = vmatprep.subr.bf16.mxu0 0
    %3577 = vmatpush1.bf16.msra.mxu0 %v3495
    %3578 = vmatprep.subr.bf16.mxu0 0
    %3579 = vmatpush1.bf16.msra.mxu0 %v3498
    %3580 = vmatprep.subr.bf16.mxu0 0
    %3581 = vmatpush1.bf16.msra.mxu0 0
    %3582 = vmatprep.subr.bf16.mxu0 0
    %3583 = vmatpush1.bf16.msra.mxu0 0
    %3584 = vmatprep.subr.bf16.mxu0 0
    %3585 = vmatpush1.bf16.msra.mxu0 0
    %3586 = vmatprep.subr.bf16.mxu0 0
    %3587 = vmatpush1.bf16.msra.mxu0 0
    %3588 = vmatprep.subr.bf16.mxu0 0
    %3589 = vmatpush1.bf16.msra.mxu0 0
    %3590 = vmatprep.subr.bf16.mxu0 0
    %3591 = vmatpush1.bf16.msra.mxu0 0
    %3592 = vmatprep.subr.bf16.mxu0 0
    %3593 = vmatpush1.bf16.msra.mxu0 0
    %3594 = vmatprep.subr.bf16.mxu0 0
    %3595 = vmatpush1.bf16.msra.mxu0 0
    %3596 = vmatprep.mubr.bf16.mxu0 0
    %3597 = vmatmul.mubr.bf16.gmra.mrb[0].mxu0 %v3345
    %v3598 = vpop.f32.mrb[0].mxu0
    %v3599 = vadd.f32 %v3391, %v3598
    %v3600 = vpop.f32.mrb[0].mxu0
    %v3601 = vpop.f32.mrb[0].mxu0
    %v3602 = vpop.f32.mrb[0].mxu0
    %3603 = vdwg.mxu0
    %v3604 = vadd.f32 %v3340, %v3558
    %v3605 = vxor.u32 %v3604, 2147483648
    %v3606 = vmul.f32 %v3605, 1.442695
    %v3607 = vpow.pop %v3606
    %v3608 = vadd.f32 %v3607, 1.0
    %v3609 = vrcp.pop %v3608
    %v3610 = vmul.f32 1.0, %v3609
    %v3611 = vadd.f32 %v3341, %v3560
    %v3612 = vxor.u32 %v3611, 2147483648
    %v3613 = vmul.f32 %v3612, 1.442695
    %v3614 = vpow.pop %v3613
    %v3615 = vadd.f32 %v3614, 1.0
    %v3616 = vrcp.pop %v3615
    %v3617 = vmul.f32 1.0, %v3616
    %v3618 = vmul.f32 %v3610, %v3599
    %v3619 = vadd.f32 %v3342, %v3618
    %v3620 = vtanh.pop %v3619
    %v3621 = vsub.f32 1.0, %v3617
    %v3622 = vmul.f32 %v3621, %v3620
    %v3623 = vmul.f32 %v3617, %v3270
    %v3624 = vadd.f32 %v3622, %v3623
    %3626 = vset.pattern.permute.xlu0 0
    %3627 = vperm.xlu0 %3626, %v3344
    %v3628 = vpop.permute.xlu0 %3627
    %v3630 = vmul.f32 %v3628, %v3624
    %v3631 = vsub.f32 1.0, %v3344
    %3633 = vset.pattern.permute.xlu0 0
    %3634 = vperm.xlu0 %3633, %v3631
    %v3635 = vpop.permute.xlu0 %3634
    %v3637 = vmul.f32 %v3635, %v3270
    %v3638 = vadd.f32 %v3630, %v3637
    %v3640 = vcombine.high %v3638, %v3638
    %v3642 = vunpack.c.l.s4 1966171168
    %v3643 = vunpack.c.0.s8 %v3642
    %v3644 = vlaneseq
    %v3645 = vshrl.u32 %v3644, 7
    %v3646 = vsub.s32 %v3643, %v3645
    %v3647 = vrot.slane %v3638, %v3646
    %v3649 = vunpack.c.l.s4 1966171168
    %v3650 = vunpack.c.0.s8 %v3649
    %v3651 = vlaneseq
    %v3652 = vshrl.u32 %v3651, 7
    %v3653 = vsub.s32 %v3650, %v3652
    %v3654 = vrot.slane %v3640, %v3653
    %v3655 = vcombine.high %v3647, %v3647
    %v3656 = vcombine.high %v3654, %v3654
    %v3658 = vunpack.c.l.s4 1966171168
    %v3659 = vunpack.c.0.s8 %v3658
    %v3660 = vlaneseq
    %v3661 = vshrl.u32 %v3660, 7
    %v3662 = vsub.s32 %v3659, %v3661
    %v3663 = vrot.slane %v3647, %v3662
    %v3665 = vunpack.c.l.s4 1966171168
    %v3666 = vunpack.c.0.s8 %v3665
    %v3667 = vlaneseq
    %v3668 = vshrl.u32 %v3667, 7
    %v3669 = vsub.s32 %v3666, %v3668
    %v3670 = vrot.slane %v3654, %v3669
    %v3672 = vunpack.c.l.s4 1966171168
    %v3673 = vunpack.c.0.s8 %v3672
    %v3674 = vlaneseq
    %v3675 = vshrl.u32 %v3674, 7
    %v3676 = vsub.s32 %v3673, %v3675
    %v3677 = vrot.slane %v3655, %v3676
    %v3679 = vunpack.c.l.s4 1966171168
    %v3680 = vunpack.c.0.s8 %v3679
    %v3681 = vlaneseq
    %v3682 = vshrl.u32 %v3681, 7
    %v3683 = vsub.s32 %v3680, %v3682
    %v3684 = vrot.slane %v3656, %v3683
    %v3685 = vcombine.high %v3663, %v3663
    %v3686 = vcombine.high %v3670, %v3670
    %v3687 = vcombine.high %v3677, %v3677
    %v3688 = vcombine.high %v3684, %v3684
    %3697 = vst [vmem:[#allocation2 + $0x9] sm:$0x1] %v3663
    %3698 = vst [vmem:[#allocation2 + $0x19] sm:$0x1] %v3677
    %3699 = vst [vmem:[#allocation2 + $0x29] sm:$0x1] %v3685
    %3700 = vst [vmem:[#allocation2 + $0x39] sm:$0x1] %v3687
    %3701 = vst [vmem:[#allocation2 + $0x49] sm:$0x1] %v3670
    %3702 = vst [vmem:[#allocation2 + $0x59] sm:$0x1] %v3684
    %3703 = vst [vmem:[#allocation2 + $0x69] sm:$0x1] %v3686
    %3704 = vst [vmem:[#allocation2 + $0x79] sm:$0x1] %v3688
    %s3705 = scalar_lea.vmem %s0, 120
    %v3706 = vld [vmem:[%s3705] sm:$0xff]
    %v3707 = vld [vmem:[%s3705 + $0x8] sm:$0xf]
    %v3708 = vunpack.c.l.bf16 %v3706
    %v3709 = vunpack.c.h.bf16 %v3706
    %v3710 = vunpack.c.l.bf16 %v3707
    %s3711 = scalar_lea.vmem %s1, 80
    %v3712 = vld [vmem:[%s3711] sm:$0xff]
    %v3713 = vpack.c.bf16 %v3638, %v3638
    %v3714 = vld [vmem:[%s2] sm:$0xff]
    %v3715 = vld [vmem:[%s2 + $0x8] sm:$0xf]
    %v3716 = vld [vmem:[%s2 + $0xc] sm:$0xff]
    %v3717 = vld [vmem:[%s2 + $0x14] sm:$0xf]
    %v3718 = vld [vmem:[%s2 + $0x18] sm:$0xff]
    %v3719 = vld [vmem:[%s2 + $0x20] sm:$0xf]
    %v3720 = vld [vmem:[%s2 + $0x24] sm:$0xff]
    %v3721 = vld [vmem:[%s2 + $0x2c] sm:$0xf]
    %v3722 = vld [vmem:[%s2 + $0x30] sm:$0xff]
    %v3723 = vld [vmem:[%s2 + $0x38] sm:$0xf]
    %v3724 = vld [vmem:[%s2 + $0x3c] sm:$0xff]
    %v3725 = vld [vmem:[%s2 + $0x44] sm:$0xf]
    %v3726 = vld [vmem:[%s2 + $0x48] sm:$0xff]
    %v3727 = vld [vmem:[%s2 + $0x50] sm:$0xf]
    %v3728 = vld [vmem:[%s2 + $0x54] sm:$0xff]
    %v3729 = vld [vmem:[%s2 + $0x5c] sm:$0xf]
    %v3730 = vld [vmem:[%s2 + $0x60] sm:$0xff]
    %v3731 = vld [vmem:[%s2 + $0x68] sm:$0xf]
    %v3732 = vld [vmem:[%s2 + $0x6c] sm:$0xff]
    %v3733 = vld [vmem:[%s2 + $0x74] sm:$0xf]
    %v3734 = vld [vmem:[%s2 + $0x78] sm:$0xff]
    %v3735 = vld [vmem:[%s2 + $0x80] sm:$0xf]
    %v3736 = vld [vmem:[%s2 + $0x84] sm:$0xff]
    %v3737 = vld [vmem:[%s2 + $0x8c] sm:$0xf]
    %v3738 = vld [vmem:[%s2 + $0x90] sm:$0xff]
    %v3739 = vld [vmem:[%s2 + $0x98] sm:$0xf]
    %v3740 = vld [vmem:[%s2 + $0x9c] sm:$0xff]
    %v3741 = vld [vmem:[%s2 + $0xa4] sm:$0xf]
    %v3742 = vld [vmem:[%s2 + $0xa8] sm:$0xff]
    %v3743 = vld [vmem:[%s2 + $0xb0] sm:$0xf]
    %v3744 = vld [vmem:[%s2 + $0xb4] sm:$0xff]
    %v3745 = vld [vmem:[%s2 + $0xbc] sm:$0xf]
    %v3746 = vld [vmem:[%s3] sm:$0x7]
    %v3748 = vlaneseq
    %v3749 = vshrl.u32 %v3748, 7
    %v3750 = vsub.s32 0, %v3749
    %v3751 = vrot.slane %v3746, %v3750
    %v3752 = vlaneseq
    %v3753 = vshrl.u32 %v3752, 7
    %v3754 = vsub.s32 1, %v3753
    %v3755 = vrot.slane %v3746, %v3754
    %v3756 = vlaneseq
    %v3757 = vshrl.u32 %v3756, 7
    %v3758 = vsub.s32 2, %v3757
    %v3759 = vrot.slane %v3746, %v3758
    %v3795 = vunpack.c.l.b16 %v3714
    %v3796 = vunpack.c.h.b16 %v3714
    %v3797 = vunpack.c.l.b16 %v3715
    %v3798 = vunpack.c.l.b16 %v3716
    %v3799 = vunpack.c.h.b16 %v3716
    %v3800 = vunpack.c.l.b16 %v3717
    %v3801 = vunpack.c.l.b16 %v3718
    %v3802 = vunpack.c.h.b16 %v3718
    %v3803 = vunpack.c.l.b16 %v3719
    %v3804 = vunpack.c.l.b16 %v3720
    %v3805 = vunpack.c.h.b16 %v3720
    %v3806 = vunpack.c.l.b16 %v3721
    %v3807 = vunpack.c.l.b16 %v3722
    %v3808 = vunpack.c.h.b16 %v3722
    %v3809 = vunpack.c.l.b16 %v3723
    %v3810 = vunpack.c.l.b16 %v3724
    %v3811 = vunpack.c.h.b16 %v3724
    %v3812 = vunpack.c.l.b16 %v3725
    %v3813 = vunpack.c.l.b16 %v3726
    %v3814 = vunpack.c.h.b16 %v3726
    %v3815 = vunpack.c.l.b16 %v3727
    %v3816 = vunpack.c.l.b16 %v3728
    %v3817 = vunpack.c.h.b16 %v3728
    %v3818 = vunpack.c.l.b16 %v3729
    %v3819 = vunpack.c.l.b16 %v3730
    %v3820 = vunpack.c.h.b16 %v3730
    %v3821 = vunpack.c.l.b16 %v3731
    %v3822 = vunpack.c.l.b16 %v3732
    %v3823 = vunpack.c.h.b16 %v3732
    %v3824 = vunpack.c.l.b16 %v3733
    %v3825 = vunpack.c.l.b16 %v3734
    %v3826 = vunpack.c.h.b16 %v3734
    %v3827 = vunpack.c.l.b16 %v3735
    %v3828 = vunpack.c.l.b16 %v3736
    %v3829 = vunpack.c.h.b16 %v3736
    %v3830 = vunpack.c.l.b16 %v3737
    %v3831 = vunpack.c.l.b16 %v3738
    %v3832 = vunpack.c.h.b16 %v3738
    %v3833 = vunpack.c.l.b16 %v3739
    %v3834 = vunpack.c.l.b16 %v3740
    %v3835 = vunpack.c.h.b16 %v3740
    %v3836 = vunpack.c.l.b16 %v3741
    %v3837 = vunpack.c.l.b16 %v3742
    %v3838 = vunpack.c.h.b16 %v3742
    %v3839 = vunpack.c.l.b16 %v3743
    %v3840 = vunpack.c.l.b16 %v3744
    %v3841 = vunpack.c.h.b16 %v3744
    %v3842 = vunpack.c.l.b16 %v3745
    %v3843 = vpack.c.b16 %v3798, %v3795
    %v3844 = vpack.c.b16 %v3799, %v3796
    %v3845 = vpack.c.b16 %v3800, %v3797
    %v3846 = vpack.c.b16 %v3804, %v3801
    %v3847 = vpack.c.b16 %v3805, %v3802
    %v3848 = vpack.c.b16 %v3806, %v3803
    %v3849 = vpack.c.b16 %v3810, %v3807
    %v3850 = vpack.c.b16 %v3811, %v3808
    %v3851 = vpack.c.b16 %v3812, %v3809
    %v3852 = vpack.c.b16 %v3816, %v3813
    %v3853 = vpack.c.b16 %v3817, %v3814
    %v3854 = vpack.c.b16 %v3818, %v3815
    %v3855 = vpack.c.b16 %v3822, %v3819
    %v3856 = vpack.c.b16 %v3823, %v3820
    %v3857 = vpack.c.b16 %v3824, %v3821
    %v3858 = vpack.c.b16 %v3828, %v3825
    %v3859 = vpack.c.b16 %v3829, %v3826
    %v3860 = vpack.c.b16 %v3830, %v3827
    %v3861 = vpack.c.b16 %v3834, %v3831
    %v3862 = vpack.c.b16 %v3835, %v3832
    %v3863 = vpack.c.b16 %v3836, %v3833
    %v3864 = vpack.c.b16 %v3840, %v3837
    %v3865 = vpack.c.b16 %v3841, %v3838
    %v3866 = vpack.c.b16 %v3842, %v3839
    %3891 = vmatprep.subr.bf16.mxu0 %v3844
    %3892 = vmatpush1.bf16.msra.mxu0 %v3843
    %3893 = vmatprep.subr.bf16.mxu0 %v3847
    %3894 = vmatpush1.bf16.msra.mxu0 %v3846
    %3895 = vmatprep.subr.bf16.mxu0 %v3850
    %3896 = vmatpush1.bf16.msra.mxu0 %v3849
    %3897 = vmatprep.subr.bf16.mxu0 %v3853
    %3898 = vmatpush1.bf16.msra.mxu0 %v3852
    %3899 = vmatprep.subr.bf16.mxu0 %v3856
    %3900 = vmatpush1.bf16.msra.mxu0 %v3855
    %3901 = vmatprep.subr.bf16.mxu0 %v3859
    %3902 = vmatpush1.bf16.msra.mxu0 %v3858
    %3903 = vmatprep.subr.bf16.mxu0 %v3862
    %3904 = vmatpush1.bf16.msra.mxu0 %v3861
    %3905 = vmatprep.subr.bf16.mxu0 %v3865
    %3906 = vmatpush1.bf16.msra.mxu0 %v3864
    %3907 = vmatprep.subr.bf16.mxu0 0
    %3908 = vmatpush1.bf16.msra.mxu0 0
    %3909 = vmatprep.subr.bf16.mxu0 0
    %3910 = vmatpush1.bf16.msra.mxu0 0
    %3911 = vmatprep.subr.bf16.mxu0 0
    %3912 = vmatpush1.bf16.msra.mxu0 0
    %3913 = vmatprep.subr.bf16.mxu0 0
    %3914 = vmatpush1.bf16.msra.mxu0 0
    %3915 = vmatprep.subr.bf16.mxu0 0
    %3916 = vmatpush1.bf16.msra.mxu0 0
    %3917 = vmatprep.subr.bf16.mxu0 0
    %3918 = vmatpush1.bf16.msra.mxu0 0
    %3919 = vmatprep.subr.bf16.mxu0 0
    %3920 = vmatpush1.bf16.msra.mxu0 0
    %3921 = vmatprep.subr.bf16.mxu0 0
    %3922 = vmatpush1.bf16.msra.mxu0 0
    %3923 = vmatprep.mubr.bf16.mxu0 0
    %3924 = vmatmul.mubr.bf16.gmra.mrb[0].mxu0 %v3713
    %v3925 = vpop.f32.mrb[0].mxu0
    %v3926 = vadd.f32 %v3751, %v3925
    %v3927 = vpop.f32.mrb[0].mxu0
    %v3928 = vadd.f32 %v3755, %v3927
    %v3929 = vpop.f32.mrb[0].mxu0
    %v3930 = vpop.f32.mrb[0].mxu0
    %3931 = vdwg.mxu0
    %3932 = vmatprep.subr.bf16.mxu0 0
    %3933 = vmatpush1.bf16.msra.mxu0 %v3845
    %3934 = vmatprep.subr.bf16.mxu0 0
    %3935 = vmatpush1.bf16.msra.mxu0 %v3848
    %3936 = vmatprep.subr.bf16.mxu0 0
    %3937 = vmatpush1.bf16.msra.mxu0 %v3851
    %3938 = vmatprep.subr.bf16.mxu0 0
    %3939 = vmatpush1.bf16.msra.mxu0 %v3854
    %3940 = vmatprep.subr.bf16.mxu0 0
    %3941 = vmatpush1.bf16.msra.mxu0 %v3857
    %3942 = vmatprep.subr.bf16.mxu0 0
    %3943 = vmatpush1.bf16.msra.mxu0 %v3860
    %3944 = vmatprep.subr.bf16.mxu0 0
    %3945 = vmatpush1.bf16.msra.mxu0 %v3863
    %3946 = vmatprep.subr.bf16.mxu0 0
    %3947 = vmatpush1.bf16.msra.mxu0 %v3866
    %3948 = vmatprep.subr.bf16.mxu0 0
    %3949 = vmatpush1.bf16.msra.mxu0 0
    %3950 = vmatprep.subr.bf16.mxu0 0
    %3951 = vmatpush1.bf16.msra.mxu0 0
    %3952 = vmatprep.subr.bf16.mxu0 0
    %3953 = vmatpush1.bf16.msra.mxu0 0
    %3954 = vmatprep.subr.bf16.mxu0 0
    %3955 = vmatpush1.bf16.msra.mxu0 0
    %3956 = vmatprep.subr.bf16.mxu0 0
    %3957 = vmatpush1.bf16.msra.mxu0 0
    %3958 = vmatprep.subr.bf16.mxu0 0
    %3959 = vmatpush1.bf16.msra.mxu0 0
    %3960 = vmatprep.subr.bf16.mxu0 0
    %3961 = vmatpush1.bf16.msra.mxu0 0
    %3962 = vmatprep.subr.bf16.mxu0 0
    %3963 = vmatpush1.bf16.msra.mxu0 0
    %3964 = vmatprep.mubr.bf16.mxu0 0
    %3965 = vmatmul.mubr.bf16.gmra.mrb[0].mxu0 %v3713
    %v3966 = vpop.f32.mrb[0].mxu0
    %v3967 = vadd.f32 %v3759, %v3966
    %v3968 = vpop.f32.mrb[0].mxu0
    %v3969 = vpop.f32.mrb[0].mxu0
    %v3970 = vpop.f32.mrb[0].mxu0
    %3971 = vdwg.mxu0
    %v3972 = vadd.f32 %v3708, %v3926
    %v3973 = vxor.u32 %v3972, 2147483648
    %v3974 = vmul.f32 %v3973, 1.442695
    %v3975 = vpow.pop %v3974
    %v3976 = vadd.f32 %v3975, 1.0
    %v3977 = vrcp.pop %v3976
    %v3978 = vmul.f32 1.0, %v3977
    %v3979 = vadd.f32 %v3709, %v3928
    %v3980 = vxor.u32 %v3979, 2147483648
    %v3981 = vmul.f32 %v3980, 1.442695
    %v3982 = vpow.pop %v3981
    %v3983 = vadd.f32 %v3982, 1.0
    %v3984 = vrcp.pop %v3983
    %v3985 = vmul.f32 1.0, %v3984
    %v3986 = vmul.f32 %v3978, %v3967
    %v3987 = vadd.f32 %v3710, %v3986
    %v3988 = vtanh.pop %v3987
    %v3989 = vsub.f32 1.0, %v3985
    %v3990 = vmul.f32 %v3989, %v3988
    %v3991 = vmul.f32 %v3985, %v3638
    %v3992 = vadd.f32 %v3990, %v3991
    %3994 = vset.pattern.permute.xlu0 0
    %3995 = vperm.xlu0 %3994, %v3712
    %v3996 = vpop.permute.xlu0 %3995
    %v3998 = vmul.f32 %v3996, %v3992
    %v3999 = vsub.f32 1.0, %v3712
    %4001 = vset.pattern.permute.xlu0 0
    %4002 = vperm.xlu0 %4001, %v3999
    %v4003 = vpop.permute.xlu0 %4002
    %v4005 = vmul.f32 %v4003, %v3638
    %v4006 = vadd.f32 %v3998, %v4005
    %v4008 = vcombine.high %v4006, %v4006
    %v4010 = vunpack.c.l.s4 1966171168
    %v4011 = vunpack.c.0.s8 %v4010
    %v4012 = vlaneseq
    %v4013 = vshrl.u32 %v4012, 7
    %v4014 = vsub.s32 %v4011, %v4013
    %v4015 = vrot.slane %v4006, %v4014
    %v4017 = vunpack.c.l.s4 1966171168
    %v4018 = vunpack.c.0.s8 %v4017
    %v4019 = vlaneseq
    %v4020 = vshrl.u32 %v4019, 7
    %v4021 = vsub.s32 %v4018, %v4020
    %v4022 = vrot.slane %v4008, %v4021
    %v4023 = vcombine.high %v4015, %v4015
    %v4024 = vcombine.high %v4022, %v4022
    %v4026 = vunpack.c.l.s4 1966171168
    %v4027 = vunpack.c.0.s8 %v4026
    %v4028 = vlaneseq
    %v4029 = vshrl.u32 %v4028, 7
    %v4030 = vsub.s32 %v4027, %v4029
    %v4031 = vrot.slane %v4015, %v4030
    %v4033 = vunpack.c.l.s4 1966171168
    %v4034 = vunpack.c.0.s8 %v4033
    %v4035 = vlaneseq
    %v4036 = vshrl.u32 %v4035, 7
    %v4037 = vsub.s32 %v4034, %v4036
    %v4038 = vrot.slane %v4022, %v4037
    %v4040 = vunpack.c.l.s4 1966171168
    %v4041 = vunpack.c.0.s8 %v4040
    %v4042 = vlaneseq
    %v4043 = vshrl.u32 %v4042, 7
    %v4044 = vsub.s32 %v4041, %v4043
    %v4045 = vrot.slane %v4023, %v4044
    %v4047 = vunpack.c.l.s4 1966171168
    %v4048 = vunpack.c.0.s8 %v4047
    %v4049 = vlaneseq
    %v4050 = vshrl.u32 %v4049, 7
    %v4051 = vsub.s32 %v4048, %v4050
    %v4052 = vrot.slane %v4024, %v4051
    %v4053 = vcombine.high %v4031, %v4031
    %v4054 = vcombine.high %v4038, %v4038
    %v4055 = vcombine.high %v4045, %v4045
    %v4056 = vcombine.high %v4052, %v4052
    %4065 = vst [vmem:[#allocation2 + $0xa] sm:$0x1] %v4031
    %4066 = vst [vmem:[#allocation2 + $0x1a] sm:$0x1] %v4045
    %4067 = vst [vmem:[#allocation2 + $0x2a] sm:$0x1] %v4053
    %4068 = vst [vmem:[#allocation2 + $0x3a] sm:$0x1] %v4055
    %4069 = vst [vmem:[#allocation2 + $0x4a] sm:$0x1] %v4038
    %4070 = vst [vmem:[#allocation2 + $0x5a] sm:$0x1] %v4052
    %4071 = vst [vmem:[#allocation2 + $0x6a] sm:$0x1] %v4054
    %4072 = vst [vmem:[#allocation2 + $0x7a] sm:$0x1] %v4056
    %s4073 = scalar_lea.vmem %s0, 132
    %v4074 = vld [vmem:[%s4073] sm:$0xff]
    %v4075 = vld [vmem:[%s4073 + $0x8] sm:$0xf]
    %v4076 = vunpack.c.l.bf16 %v4074
    %v4077 = vunpack.c.h.bf16 %v4074
    %v4078 = vunpack.c.l.bf16 %v4075
    %s4079 = scalar_lea.vmem %s1, 88
    %v4080 = vld [vmem:[%s4079] sm:$0xff]
    %v4081 = vpack.c.bf16 %v4006, %v4006
    %v4082 = vld [vmem:[%s2] sm:$0xff]
    %v4083 = vld [vmem:[%s2 + $0x8] sm:$0xf]
    %v4084 = vld [vmem:[%s2 + $0xc] sm:$0xff]
    %v4085 = vld [vmem:[%s2 + $0x14] sm:$0xf]
    %v4086 = vld [vmem:[%s2 + $0x18] sm:$0xff]
    %v4087 = vld [vmem:[%s2 + $0x20] sm:$0xf]
    %v4088 = vld [vmem:[%s2 + $0x24] sm:$0xff]
    %v4089 = vld [vmem:[%s2 + $0x2c] sm:$0xf]
    %v4090 = vld [vmem:[%s2 + $0x30] sm:$0xff]
    %v4091 = vld [vmem:[%s2 + $0x38] sm:$0xf]
    %v4092 = vld [vmem:[%s2 + $0x3c] sm:$0xff]
    %v4093 = vld [vmem:[%s2 + $0x44] sm:$0xf]
    %v4094 = vld [vmem:[%s2 + $0x48] sm:$0xff]
    %v4095 = vld [vmem:[%s2 + $0x50] sm:$0xf]
    %v4096 = vld [vmem:[%s2 + $0x54] sm:$0xff]
    %v4097 = vld [vmem:[%s2 + $0x5c] sm:$0xf]
    %v4098 = vld [vmem:[%s2 + $0x60] sm:$0xff]
    %v4099 = vld [vmem:[%s2 + $0x68] sm:$0xf]
    %v4100 = vld [vmem:[%s2 + $0x6c] sm:$0xff]
    %v4101 = vld [vmem:[%s2 + $0x74] sm:$0xf]
    %v4102 = vld [vmem:[%s2 + $0x78] sm:$0xff]
    %v4103 = vld [vmem:[%s2 + $0x80] sm:$0xf]
    %v4104 = vld [vmem:[%s2 + $0x84] sm:$0xff]
    %v4105 = vld [vmem:[%s2 + $0x8c] sm:$0xf]
    %v4106 = vld [vmem:[%s2 + $0x90] sm:$0xff]
    %v4107 = vld [vmem:[%s2 + $0x98] sm:$0xf]
    %v4108 = vld [vmem:[%s2 + $0x9c] sm:$0xff]
    %v4109 = vld [vmem:[%s2 + $0xa4] sm:$0xf]
    %v4110 = vld [vmem:[%s2 + $0xa8] sm:$0xff]
    %v4111 = vld [vmem:[%s2 + $0xb0] sm:$0xf]
    %v4112 = vld [vmem:[%s2 + $0xb4] sm:$0xff]
    %v4113 = vld [vmem:[%s2 + $0xbc] sm:$0xf]
    %v4114 = vld [vmem:[%s3] sm:$0x7]
    %v4116 = vlaneseq
    %v4117 = vshrl.u32 %v4116, 7
    %v4118 = vsub.s32 0, %v4117
    %v4119 = vrot.slane %v4114, %v4118
    %v4120 = vlaneseq
    %v4121 = vshrl.u32 %v4120, 7
    %v4122 = vsub.s32 1, %v4121
    %v4123 = vrot.slane %v4114, %v4122
    %v4124 = vlaneseq
    %v4125 = vshrl.u32 %v4124, 7
    %v4126 = vsub.s32 2, %v4125
    %v4127 = vrot.slane %v4114, %v4126
    %v4163 = vunpack.c.l.b16 %v4082
    %v4164 = vunpack.c.h.b16 %v4082
    %v4165 = vunpack.c.l.b16 %v4083
    %v4166 = vunpack.c.l.b16 %v4084
    %v4167 = vunpack.c.h.b16 %v4084
    %v4168 = vunpack.c.l.b16 %v4085
    %v4169 = vunpack.c.l.b16 %v4086
    %v4170 = vunpack.c.h.b16 %v4086
    %v4171 = vunpack.c.l.b16 %v4087
    %v4172 = vunpack.c.l.b16 %v4088
    %v4173 = vunpack.c.h.b16 %v4088
    %v4174 = vunpack.c.l.b16 %v4089
    %v4175 = vunpack.c.l.b16 %v4090
    %v4176 = vunpack.c.h.b16 %v4090
    %v4177 = vunpack.c.l.b16 %v4091
    %v4178 = vunpack.c.l.b16 %v4092
    %v4179 = vunpack.c.h.b16 %v4092
    %v4180 = vunpack.c.l.b16 %v4093
    %v4181 = vunpack.c.l.b16 %v4094
    %v4182 = vunpack.c.h.b16 %v4094
    %v4183 = vunpack.c.l.b16 %v4095
    %v4184 = vunpack.c.l.b16 %v4096
    %v4185 = vunpack.c.h.b16 %v4096
    %v4186 = vunpack.c.l.b16 %v4097
    %v4187 = vunpack.c.l.b16 %v4098
    %v4188 = vunpack.c.h.b16 %v4098
    %v4189 = vunpack.c.l.b16 %v4099
    %v4190 = vunpack.c.l.b16 %v4100
    %v4191 = vunpack.c.h.b16 %v4100
    %v4192 = vunpack.c.l.b16 %v4101
    %v4193 = vunpack.c.l.b16 %v4102
    %v4194 = vunpack.c.h.b16 %v4102
    %v4195 = vunpack.c.l.b16 %v4103
    %v4196 = vunpack.c.l.b16 %v4104
    %v4197 = vunpack.c.h.b16 %v4104
    %v4198 = vunpack.c.l.b16 %v4105
    %v4199 = vunpack.c.l.b16 %v4106
    %v4200 = vunpack.c.h.b16 %v4106
    %v4201 = vunpack.c.l.b16 %v4107
    %v4202 = vunpack.c.l.b16 %v4108
    %v4203 = vunpack.c.h.b16 %v4108
    %v4204 = vunpack.c.l.b16 %v4109
    %v4205 = vunpack.c.l.b16 %v4110
    %v4206 = vunpack.c.h.b16 %v4110
    %v4207 = vunpack.c.l.b16 %v4111
    %v4208 = vunpack.c.l.b16 %v4112
    %v4209 = vunpack.c.h.b16 %v4112
    %v4210 = vunpack.c.l.b16 %v4113
    %v4211 = vpack.c.b16 %v4166, %v4163
    %v4212 = vpack.c.b16 %v4167, %v4164
    %v4213 = vpack.c.b16 %v4168, %v4165
    %v4214 = vpack.c.b16 %v4172, %v4169
    %v4215 = vpack.c.b16 %v4173, %v4170
    %v4216 = vpack.c.b16 %v4174, %v4171
    %v4217 = vpack.c.b16 %v4178, %v4175
    %v4218 = vpack.c.b16 %v4179, %v4176
    %v4219 = vpack.c.b16 %v4180, %v4177
    %v4220 = vpack.c.b16 %v4184, %v4181
    %v4221 = vpack.c.b16 %v4185, %v4182
    %v4222 = vpack.c.b16 %v4186, %v4183
    %v4223 = vpack.c.b16 %v4190, %v4187
    %v4224 = vpack.c.b16 %v4191, %v4188
    %v4225 = vpack.c.b16 %v4192, %v4189
    %v4226 = vpack.c.b16 %v4196, %v4193
    %v4227 = vpack.c.b16 %v4197, %v4194
    %v4228 = vpack.c.b16 %v4198, %v4195
    %v4229 = vpack.c.b16 %v4202, %v4199
    %v4230 = vpack.c.b16 %v4203, %v4200
    %v4231 = vpack.c.b16 %v4204, %v4201
    %v4232 = vpack.c.b16 %v4208, %v4205
    %v4233 = vpack.c.b16 %v4209, %v4206
    %v4234 = vpack.c.b16 %v4210, %v4207
    %4259 = vmatprep.subr.bf16.mxu0 %v4212
    %4260 = vmatpush1.bf16.msra.mxu0 %v4211
    %4261 = vmatprep.subr.bf16.mxu0 %v4215
    %4262 = vmatpush1.bf16.msra.mxu0 %v4214
    %4263 = vmatprep.subr.bf16.mxu0 %v4218
    %4264 = vmatpush1.bf16.msra.mxu0 %v4217
    %4265 = vmatprep.subr.bf16.mxu0 %v4221
    %4266 = vmatpush1.bf16.msra.mxu0 %v4220
    %4267 = vmatprep.subr.bf16.mxu0 %v4224
    %4268 = vmatpush1.bf16.msra.mxu0 %v4223
    %4269 = vmatprep.subr.bf16.mxu0 %v4227
    %4270 = vmatpush1.bf16.msra.mxu0 %v4226
    %4271 = vmatprep.subr.bf16.mxu0 %v4230
    %4272 = vmatpush1.bf16.msra.mxu0 %v4229
    %4273 = vmatprep.subr.bf16.mxu0 %v4233
    %4274 = vmatpush1.bf16.msra.mxu0 %v4232
    %4275 = vmatprep.subr.bf16.mxu0 0
    %4276 = vmatpush1.bf16.msra.mxu0 0
    %4277 = vmatprep.subr.bf16.mxu0 0
    %4278 = vmatpush1.bf16.msra.mxu0 0
    %4279 = vmatprep.subr.bf16.mxu0 0
    %4280 = vmatpush1.bf16.msra.mxu0 0
    %4281 = vmatprep.subr.bf16.mxu0 0
    %4282 = vmatpush1.bf16.msra.mxu0 0
    %4283 = vmatprep.subr.bf16.mxu0 0
    %4284 = vmatpush1.bf16.msra.mxu0 0
    %4285 = vmatprep.subr.bf16.mxu0 0
    %4286 = vmatpush1.bf16.msra.mxu0 0
    %4287 = vmatprep.subr.bf16.mxu0 0
    %4288 = vmatpush1.bf16.msra.mxu0 0
    %4289 = vmatprep.subr.bf16.mxu0 0
    %4290 = vmatpush1.bf16.msra.mxu0 0
    %4291 = vmatprep.mubr.bf16.mxu0 0
    %4292 = vmatmul.mubr.bf16.gmra.mrb[0].mxu0 %v4081
    %v4293 = vpop.f32.mrb[0].mxu0
    %v4294 = vadd.f32 %v4119, %v4293
    %v4295 = vpop.f32.mrb[0].mxu0
    %v4296 = vadd.f32 %v4123, %v4295
    %v4297 = vpop.f32.mrb[0].mxu0
    %v4298 = vpop.f32.mrb[0].mxu0
    %4299 = vdwg.mxu0
    %4300 = vmatprep.subr.bf16.mxu0 0
    %4301 = vmatpush1.bf16.msra.mxu0 %v4213
    %4302 = vmatprep.subr.bf16.mxu0 0
    %4303 = vmatpush1.bf16.msra.mxu0 %v4216
    %4304 = vmatprep.subr.bf16.mxu0 0
    %4305 = vmatpush1.bf16.msra.mxu0 %v4219
    %4306 = vmatprep.subr.bf16.mxu0 0
    %4307 = vmatpush1.bf16.msra.mxu0 %v4222
    %4308 = vmatprep.subr.bf16.mxu0 0
    %4309 = vmatpush1.bf16.msra.mxu0 %v4225
    %4310 = vmatprep.subr.bf16.mxu0 0
    %4311 = vmatpush1.bf16.msra.mxu0 %v4228
    %4312 = vmatprep.subr.bf16.mxu0 0
    %4313 = vmatpush1.bf16.msra.mxu0 %v4231
    %4314 = vmatprep.subr.bf16.mxu0 0
    %4315 = vmatpush1.bf16.msra.mxu0 %v4234
    %4316 = vmatprep.subr.bf16.mxu0 0
    %4317 = vmatpush1.bf16.msra.mxu0 0
    %4318 = vmatprep.subr.bf16.mxu0 0
    %4319 = vmatpush1.bf16.msra.mxu0 0
    %4320 = vmatprep.subr.bf16.mxu0 0
    %4321 = vmatpush1.bf16.msra.mxu0 0
    %4322 = vmatprep.subr.bf16.mxu0 0
    %4323 = vmatpush1.bf16.msra.mxu0 0
    %4324 = vmatprep.subr.bf16.mxu0 0
    %4325 = vmatpush1.bf16.msra.mxu0 0
    %4326 = vmatprep.subr.bf16.mxu0 0
    %4327 = vmatpush1.bf16.msra.mxu0 0
    %4328 = vmatprep.subr.bf16.mxu0 0
    %4329 = vmatpush1.bf16.msra.mxu0 0
    %4330 = vmatprep.subr.bf16.mxu0 0
    %4331 = vmatpush1.bf16.msra.mxu0 0
    %4332 = vmatprep.mubr.bf16.mxu0 0
    %4333 = vmatmul.mubr.bf16.gmra.mrb[0].mxu0 %v4081
    %v4334 = vpop.f32.mrb[0].mxu0
    %v4335 = vadd.f32 %v4127, %v4334
    %v4336 = vpop.f32.mrb[0].mxu0
    %v4337 = vpop.f32.mrb[0].mxu0
    %v4338 = vpop.f32.mrb[0].mxu0
    %4339 = vdwg.mxu0
    %v4340 = vadd.f32 %v4076, %v4294
    %v4341 = vxor.u32 %v4340, 2147483648
    %v4342 = vmul.f32 %v4341, 1.442695
    %v4343 = vpow.pop %v4342
    %v4344 = vadd.f32 %v4343, 1.0
    %v4345 = vrcp.pop %v4344
    %v4346 = vmul.f32 1.0, %v4345
    %v4347 = vadd.f32 %v4077, %v4296
    %v4348 = vxor.u32 %v4347, 2147483648
    %v4349 = vmul.f32 %v4348, 1.442695
    %v4350 = vpow.pop %v4349
    %v4351 = vadd.f32 %v4350, 1.0
    %v4352 = vrcp.pop %v4351
    %v4353 = vmul.f32 1.0, %v4352
    %v4354 = vmul.f32 %v4346, %v4335
    %v4355 = vadd.f32 %v4078, %v4354
    %v4356 = vtanh.pop %v4355
    %v4357 = vsub.f32 1.0, %v4353
    %v4358 = vmul.f32 %v4357, %v4356
    %v4359 = vmul.f32 %v4353, %v4006
    %v4360 = vadd.f32 %v4358, %v4359
    %4362 = vset.pattern.permute.xlu0 0
    %4363 = vperm.xlu0 %4362, %v4080
    %v4364 = vpop.permute.xlu0 %4363
    %v4366 = vmul.f32 %v4364, %v4360
    %v4367 = vsub.f32 1.0, %v4080
    %4369 = vset.pattern.permute.xlu0 0
    %4370 = vperm.xlu0 %4369, %v4367
    %v4371 = vpop.permute.xlu0 %4370
    %v4373 = vmul.f32 %v4371, %v4006
    %v4374 = vadd.f32 %v4366, %v4373
    %v4376 = vcombine.high %v4374, %v4374
    %v4378 = vunpack.c.l.s4 1966171168
    %v4379 = vunpack.c.0.s8 %v4378
    %v4380 = vlaneseq
    %v4381 = vshrl.u32 %v4380, 7
    %v4382 = vsub.s32 %v4379, %v4381
    %v4383 = vrot.slane %v4374, %v4382
    %v4385 = vunpack.c.l.s4 1966171168
    %v4386 = vunpack.c.0.s8 %v4385
    %v4387 = vlaneseq
    %v4388 = vshrl.u32 %v4387, 7
    %v4389 = vsub.s32 %v4386, %v4388
    %v4390 = vrot.slane %v4376, %v4389
    %v4391 = vcombine.high %v4383, %v4383
    %v4392 = vcombine.high %v4390, %v4390
    %v4394 = vunpack.c.l.s4 1966171168
    %v4395 = vunpack.c.0.s8 %v4394
    %v4396 = vlaneseq
    %v4397 = vshrl.u32 %v4396, 7
    %v4398 = vsub.s32 %v4395, %v4397
    %v4399 = vrot.slane %v4383, %v4398
    %v4401 = vunpack.c.l.s4 1966171168
    %v4402 = vunpack.c.0.s8 %v4401
    %v4403 = vlaneseq
    %v4404 = vshrl.u32 %v4403, 7
    %v4405 = vsub.s32 %v4402, %v4404
    %v4406 = vrot.slane %v4390, %v4405
    %v4408 = vunpack.c.l.s4 1966171168
    %v4409 = vunpack.c.0.s8 %v4408
    %v4410 = vlaneseq
    %v4411 = vshrl.u32 %v4410, 7
    %v4412 = vsub.s32 %v4409, %v4411
    %v4413 = vrot.slane %v4391, %v4412
    %v4415 = vunpack.c.l.s4 1966171168
    %v4416 = vunpack.c.0.s8 %v4415
    %v4417 = vlaneseq
    %v4418 = vshrl.u32 %v4417, 7
    %v4419 = vsub.s32 %v4416, %v4418
    %v4420 = vrot.slane %v4392, %v4419
    %v4421 = vcombine.high %v4399, %v4399
    %v4422 = vcombine.high %v4406, %v4406
    %v4423 = vcombine.high %v4413, %v4413
    %v4424 = vcombine.high %v4420, %v4420
    %4433 = vst [vmem:[#allocation2 + $0xb] sm:$0x1] %v4399
    %4434 = vst [vmem:[#allocation2 + $0x1b] sm:$0x1] %v4413
    %4435 = vst [vmem:[#allocation2 + $0x2b] sm:$0x1] %v4421
    %4436 = vst [vmem:[#allocation2 + $0x3b] sm:$0x1] %v4423
    %4437 = vst [vmem:[#allocation2 + $0x4b] sm:$0x1] %v4406
    %4438 = vst [vmem:[#allocation2 + $0x5b] sm:$0x1] %v4420
    %4439 = vst [vmem:[#allocation2 + $0x6b] sm:$0x1] %v4422
    %4440 = vst [vmem:[#allocation2 + $0x7b] sm:$0x1] %v4424
    %s4441 = scalar_lea.vmem %s0, 144
    %v4442 = vld [vmem:[%s4441] sm:$0xff]
    %v4443 = vld [vmem:[%s4441 + $0x8] sm:$0xf]
    %v4444 = vunpack.c.l.bf16 %v4442
    %v4445 = vunpack.c.h.bf16 %v4442
    %v4446 = vunpack.c.l.bf16 %v4443
    %s4447 = scalar_lea.vmem %s1, 96
    %v4448 = vld [vmem:[%s4447] sm:$0xff]
    %v4449 = vpack.c.bf16 %v4374, %v4374
    %v4450 = vld [vmem:[%s2] sm:$0xff]
    %v4451 = vld [vmem:[%s2 + $0x8] sm:$0xf]
    %v4452 = vld [vmem:[%s2 + $0xc] sm:$0xff]
    %v4453 = vld [vmem:[%s2 + $0x14] sm:$0xf]
    %v4454 = vld [vmem:[%s2 + $0x18] sm:$0xff]
    %v4455 = vld [vmem:[%s2 + $0x20] sm:$0xf]
    %v4456 = vld [vmem:[%s2 + $0x24] sm:$0xff]
    %v4457 = vld [vmem:[%s2 + $0x2c] sm:$0xf]
    %v4458 = vld [vmem:[%s2 + $0x30] sm:$0xff]
    %v4459 = vld [vmem:[%s2 + $0x38] sm:$0xf]
    %v4460 = vld [vmem:[%s2 + $0x3c] sm:$0xff]
    %v4461 = vld [vmem:[%s2 + $0x44] sm:$0xf]
    %v4462 = vld [vmem:[%s2 + $0x48] sm:$0xff]
    %v4463 = vld [vmem:[%s2 + $0x50] sm:$0xf]
    %v4464 = vld [vmem:[%s2 + $0x54] sm:$0xff]
    %v4465 = vld [vmem:[%s2 + $0x5c] sm:$0xf]
    %v4466 = vld [vmem:[%s2 + $0x60] sm:$0xff]
    %v4467 = vld [vmem:[%s2 + $0x68] sm:$0xf]
    %v4468 = vld [vmem:[%s2 + $0x6c] sm:$0xff]
    %v4469 = vld [vmem:[%s2 + $0x74] sm:$0xf]
    %v4470 = vld [vmem:[%s2 + $0x78] sm:$0xff]
    %v4471 = vld [vmem:[%s2 + $0x80] sm:$0xf]
    %v4472 = vld [vmem:[%s2 + $0x84] sm:$0xff]
    %v4473 = vld [vmem:[%s2 + $0x8c] sm:$0xf]
    %v4474 = vld [vmem:[%s2 + $0x90] sm:$0xff]
    %v4475 = vld [vmem:[%s2 + $0x98] sm:$0xf]
    %v4476 = vld [vmem:[%s2 + $0x9c] sm:$0xff]
    %v4477 = vld [vmem:[%s2 + $0xa4] sm:$0xf]
    %v4478 = vld [vmem:[%s2 + $0xa8] sm:$0xff]
    %v4479 = vld [vmem:[%s2 + $0xb0] sm:$0xf]
    %v4480 = vld [vmem:[%s2 + $0xb4] sm:$0xff]
    %v4481 = vld [vmem:[%s2 + $0xbc] sm:$0xf]
    %v4482 = vld [vmem:[%s3] sm:$0x7]
    %v4484 = vlaneseq
    %v4485 = vshrl.u32 %v4484, 7
    %v4486 = vsub.s32 0, %v4485
    %v4487 = vrot.slane %v4482, %v4486
    %v4488 = vlaneseq
    %v4489 = vshrl.u32 %v4488, 7
    %v4490 = vsub.s32 1, %v4489
    %v4491 = vrot.slane %v4482, %v4490
    %v4492 = vlaneseq
    %v4493 = vshrl.u32 %v4492, 7
    %v4494 = vsub.s32 2, %v4493
    %v4495 = vrot.slane %v4482, %v4494
    %v4531 = vunpack.c.l.b16 %v4450
    %v4532 = vunpack.c.h.b16 %v4450
    %v4533 = vunpack.c.l.b16 %v4451
    %v4534 = vunpack.c.l.b16 %v4452
    %v4535 = vunpack.c.h.b16 %v4452
    %v4536 = vunpack.c.l.b16 %v4453
    %v4537 = vunpack.c.l.b16 %v4454
    %v4538 = vunpack.c.h.b16 %v4454
    %v4539 = vunpack.c.l.b16 %v4455
    %v4540 = vunpack.c.l.b16 %v4456
    %v4541 = vunpack.c.h.b16 %v4456
    %v4542 = vunpack.c.l.b16 %v4457
    %v4543 = vunpack.c.l.b16 %v4458
    %v4544 = vunpack.c.h.b16 %v4458
    %v4545 = vunpack.c.l.b16 %v4459
    %v4546 = vunpack.c.l.b16 %v4460
    %v4547 = vunpack.c.h.b16 %v4460
    %v4548 = vunpack.c.l.b16 %v4461
    %v4549 = vunpack.c.l.b16 %v4462
    %v4550 = vunpack.c.h.b16 %v4462
    %v4551 = vunpack.c.l.b16 %v4463
    %v4552 = vunpack.c.l.b16 %v4464
    %v4553 = vunpack.c.h.b16 %v4464
    %v4554 = vunpack.c.l.b16 %v4465
    %v4555 = vunpack.c.l.b16 %v4466
    %v4556 = vunpack.c.h.b16 %v4466
    %v4557 = vunpack.c.l.b16 %v4467
    %v4558 = vunpack.c.l.b16 %v4468
    %v4559 = vunpack.c.h.b16 %v4468
    %v4560 = vunpack.c.l.b16 %v4469
    %v4561 = vunpack.c.l.b16 %v4470
    %v4562 = vunpack.c.h.b16 %v4470
    %v4563 = vunpack.c.l.b16 %v4471
    %v4564 = vunpack.c.l.b16 %v4472
    %v4565 = vunpack.c.h.b16 %v4472
    %v4566 = vunpack.c.l.b16 %v4473
    %v4567 = vunpack.c.l.b16 %v4474
    %v4568 = vunpack.c.h.b16 %v4474
    %v4569 = vunpack.c.l.b16 %v4475
    %v4570 = vunpack.c.l.b16 %v4476
    %v4571 = vunpack.c.h.b16 %v4476
    %v4572 = vunpack.c.l.b16 %v4477
    %v4573 = vunpack.c.l.b16 %v4478
    %v4574 = vunpack.c.h.b16 %v4478
    %v4575 = vunpack.c.l.b16 %v4479
    %v4576 = vunpack.c.l.b16 %v4480
    %v4577 = vunpack.c.h.b16 %v4480
    %v4578 = vunpack.c.l.b16 %v4481
    %v4579 = vpack.c.b16 %v4534, %v4531
    %v4580 = vpack.c.b16 %v4535, %v4532
    %v4581 = vpack.c.b16 %v4536, %v4533
    %v4582 = vpack.c.b16 %v4540, %v4537
    %v4583 = vpack.c.b16 %v4541, %v4538
    %v4584 = vpack.c.b16 %v4542, %v4539
    %v4585 = vpack.c.b16 %v4546, %v4543
    %v4586 = vpack.c.b16 %v4547, %v4544
    %v4587 = vpack.c.b16 %v4548, %v4545
    %v4588 = vpack.c.b16 %v4552, %v4549
    %v4589 = vpack.c.b16 %v4553, %v4550
    %v4590 = vpack.c.b16 %v4554, %v4551
    %v4591 = vpack.c.b16 %v4558, %v4555
    %v4592 = vpack.c.b16 %v4559, %v4556
    %v4593 = vpack.c.b16 %v4560, %v4557
    %v4594 = vpack.c.b16 %v4564, %v4561
    %v4595 = vpack.c.b16 %v4565, %v4562
    %v4596 = vpack.c.b16 %v4566, %v4563
    %v4597 = vpack.c.b16 %v4570, %v4567
    %v4598 = vpack.c.b16 %v4571, %v4568
    %v4599 = vpack.c.b16 %v4572, %v4569
    %v4600 = vpack.c.b16 %v4576, %v4573
    %v4601 = vpack.c.b16 %v4577, %v4574
    %v4602 = vpack.c.b16 %v4578, %v4575
    %4627 = vmatprep.subr.bf16.mxu0 %v4580
    %4628 = vmatpush1.bf16.msra.mxu0 %v4579
    %4629 = vmatprep.subr.bf16.mxu0 %v4583
    %4630 = vmatpush1.bf16.msra.mxu0 %v4582
    %4631 = vmatprep.subr.bf16.mxu0 %v4586
    %4632 = vmatpush1.bf16.msra.mxu0 %v4585
    %4633 = vmatprep.subr.bf16.mxu0 %v4589
    %4634 = vmatpush1.bf16.msra.mxu0 %v4588
    %4635 = vmatprep.subr.bf16.mxu0 %v4592
    %4636 = vmatpush1.bf16.msra.mxu0 %v4591
    %4637 = vmatprep.subr.bf16.mxu0 %v4595
    %4638 = vmatpush1.bf16.msra.mxu0 %v4594
    %4639 = vmatprep.subr.bf16.mxu0 %v4598
    %4640 = vmatpush1.bf16.msra.mxu0 %v4597
    %4641 = vmatprep.subr.bf16.mxu0 %v4601
    %4642 = vmatpush1.bf16.msra.mxu0 %v4600
    %4643 = vmatprep.subr.bf16.mxu0 0
    %4644 = vmatpush1.bf16.msra.mxu0 0
    %4645 = vmatprep.subr.bf16.mxu0 0
    %4646 = vmatpush1.bf16.msra.mxu0 0
    %4647 = vmatprep.subr.bf16.mxu0 0
    %4648 = vmatpush1.bf16.msra.mxu0 0
    %4649 = vmatprep.subr.bf16.mxu0 0
    %4650 = vmatpush1.bf16.msra.mxu0 0
    %4651 = vmatprep.subr.bf16.mxu0 0
    %4652 = vmatpush1.bf16.msra.mxu0 0
    %4653 = vmatprep.subr.bf16.mxu0 0
    %4654 = vmatpush1.bf16.msra.mxu0 0
    %4655 = vmatprep.subr.bf16.mxu0 0
    %4656 = vmatpush1.bf16.msra.mxu0 0
    %4657 = vmatprep.subr.bf16.mxu0 0
    %4658 = vmatpush1.bf16.msra.mxu0 0
    %4659 = vmatprep.mubr.bf16.mxu0 0
    %4660 = vmatmul.mubr.bf16.gmra.mrb[0].mxu0 %v4449
    %v4661 = vpop.f32.mrb[0].mxu0
    %v4662 = vadd.f32 %v4487, %v4661
    %v4663 = vpop.f32.mrb[0].mxu0
    %v4664 = vadd.f32 %v4491, %v4663
    %v4665 = vpop.f32.mrb[0].mxu0
    %v4666 = vpop.f32.mrb[0].mxu0
    %4667 = vdwg.mxu0
    %4668 = vmatprep.subr.bf16.mxu0 0
    %4669 = vmatpush1.bf16.msra.mxu0 %v4581
    %4670 = vmatprep.subr.bf16.mxu0 0
    %4671 = vmatpush1.bf16.msra.mxu0 %v4584
    %4672 = vmatprep.subr.bf16.mxu0 0
    %4673 = vmatpush1.bf16.msra.mxu0 %v4587
    %4674 = vmatprep.subr.bf16.mxu0 0
    %4675 = vmatpush1.bf16.msra.mxu0 %v4590
    %4676 = vmatprep.subr.bf16.mxu0 0
    %4677 = vmatpush1.bf16.msra.mxu0 %v4593
    %4678 = vmatprep.subr.bf16.mxu0 0
    %4679 = vmatpush1.bf16.msra.mxu0 %v4596
    %4680 = vmatprep.subr.bf16.mxu0 0
    %4681 = vmatpush1.bf16.msra.mxu0 %v4599
    %4682 = vmatprep.subr.bf16.mxu0 0
    %4683 = vmatpush1.bf16.msra.mxu0 %v4602
    %4684 = vmatprep.subr.bf16.mxu0 0
    %4685 = vmatpush1.bf16.msra.mxu0 0
    %4686 = vmatprep.subr.bf16.mxu0 0
    %4687 = vmatpush1.bf16.msra.mxu0 0
    %4688 = vmatprep.subr.bf16.mxu0 0
    %4689 = vmatpush1.bf16.msra.mxu0 0
    %4690 = vmatprep.subr.bf16.mxu0 0
    %4691 = vmatpush1.bf16.msra.mxu0 0
    %4692 = vmatprep.subr.bf16.mxu0 0
    %4693 = vmatpush1.bf16.msra.mxu0 0
    %4694 = vmatprep.subr.bf16.mxu0 0
    %4695 = vmatpush1.bf16.msra.mxu0 0
    %4696 = vmatprep.subr.bf16.mxu0 0
    %4697 = vmatpush1.bf16.msra.mxu0 0
    %4698 = vmatprep.subr.bf16.mxu0 0
    %4699 = vmatpush1.bf16.msra.mxu0 0
    %4700 = vmatprep.mubr.bf16.mxu0 0
    %4701 = vmatmul.mubr.bf16.gmra.mrb[0].mxu0 %v4449
    %v4702 = vpop.f32.mrb[0].mxu0
    %v4703 = vadd.f32 %v4495, %v4702
    %v4704 = vpop.f32.mrb[0].mxu0
    %v4705 = vpop.f32.mrb[0].mxu0
    %v4706 = vpop.f32.mrb[0].mxu0
    %4707 = vdwg.mxu0
    %v4708 = vadd.f32 %v4444, %v4662
    %v4709 = vxor.u32 %v4708, 2147483648
    %v4710 = vmul.f32 %v4709, 1.442695
    %v4711 = vpow.pop %v4710
    %v4712 = vadd.f32 %v4711, 1.0
    %v4713 = vrcp.pop %v4712
    %v4714 = vmul.f32 1.0, %v4713
    %v4715 = vadd.f32 %v4445, %v4664
    %v4716 = vxor.u32 %v4715, 2147483648
    %v4717 = vmul.f32 %v4716, 1.442695
    %v4718 = vpow.pop %v4717
    %v4719 = vadd.f32 %v4718, 1.0
    %v4720 = vrcp.pop %v4719
    %v4721 = vmul.f32 1.0, %v4720
    %v4722 = vmul.f32 %v4714, %v4703
    %v4723 = vadd.f32 %v4446, %v4722
    %v4724 = vtanh.pop %v4723
    %v4725 = vsub.f32 1.0, %v4721
    %v4726 = vmul.f32 %v4725, %v4724
    %v4727 = vmul.f32 %v4721, %v4374
    %v4728 = vadd.f32 %v4726, %v4727
    %4730 = vset.pattern.permute.xlu0 0
    %4731 = vperm.xlu0 %4730, %v4448
    %v4732 = vpop.permute.xlu0 %4731
    %v4734 = vmul.f32 %v4732, %v4728
    %v4735 = vsub.f32 1.0, %v4448
    %4737 = vset.pattern.permute.xlu0 0
    %4738 = vperm.xlu0 %4737, %v4735
    %v4739 = vpop.permute.xlu0 %4738
    %v4741 = vmul.f32 %v4739, %v4374
    %v4742 = vadd.f32 %v4734, %v4741
    %v4744 = vcombine.high %v4742, %v4742
    %v4746 = vunpack.c.l.s4 1966171168
    %v4747 = vunpack.c.0.s8 %v4746
    %v4748 = vlaneseq
    %v4749 = vshrl.u32 %v4748, 7
    %v4750 = vsub.s32 %v4747, %v4749
    %v4751 = vrot.slane %v4742, %v4750
    %v4753 = vunpack.c.l.s4 1966171168
    %v4754 = vunpack.c.0.s8 %v4753
    %v4755 = vlaneseq
    %v4756 = vshrl.u32 %v4755, 7
    %v4757 = vsub.s32 %v4754, %v4756
    %v4758 = vrot.slane %v4744, %v4757
    %v4759 = vcombine.high %v4751, %v4751
    %v4760 = vcombine.high %v4758, %v4758
    %v4762 = vunpack.c.l.s4 1966171168
    %v4763 = vunpack.c.0.s8 %v4762
    %v4764 = vlaneseq
    %v4765 = vshrl.u32 %v4764, 7
    %v4766 = vsub.s32 %v4763, %v4765
    %v4767 = vrot.slane %v4751, %v4766
    %v4769 = vunpack.c.l.s4 1966171168
    %v4770 = vunpack.c.0.s8 %v4769
    %v4771 = vlaneseq
    %v4772 = vshrl.u32 %v4771, 7
    %v4773 = vsub.s32 %v4770, %v4772
    %v4774 = vrot.slane %v4758, %v4773
    %v4776 = vunpack.c.l.s4 1966171168
    %v4777 = vunpack.c.0.s8 %v4776
    %v4778 = vlaneseq
    %v4779 = vshrl.u32 %v4778, 7
    %v4780 = vsub.s32 %v4777, %v4779
    %v4781 = vrot.slane %v4759, %v4780
    %v4783 = vunpack.c.l.s4 1966171168
    %v4784 = vunpack.c.0.s8 %v4783
    %v4785 = vlaneseq
    %v4786 = vshrl.u32 %v4785, 7
    %v4787 = vsub.s32 %v4784, %v4786
    %v4788 = vrot.slane %v4760, %v4787
    %v4789 = vcombine.high %v4767, %v4767
    %v4790 = vcombine.high %v4774, %v4774
    %v4791 = vcombine.high %v4781, %v4781
    %v4792 = vcombine.high %v4788, %v4788
    %4801 = vst [vmem:[#allocation2 + $0xc] sm:$0x1] %v4767
    %4802 = vst [vmem:[#allocation2 + $0x1c] sm:$0x1] %v4781
    %4803 = vst [vmem:[#allocation2 + $0x2c] sm:$0x1] %v4789
    %4804 = vst [vmem:[#allocation2 + $0x3c] sm:$0x1] %v4791
    %4805 = vst [vmem:[#allocation2 + $0x4c] sm:$0x1] %v4774
    %4806 = vst [vmem:[#allocation2 + $0x5c] sm:$0x1] %v4788
    %4807 = vst [vmem:[#allocation2 + $0x6c] sm:$0x1] %v4790
    %4808 = vst [vmem:[#allocation2 + $0x7c] sm:$0x1] %v4792
    %s4809 = scalar_lea.vmem %s0, 156
    %v4810 = vld [vmem:[%s4809] sm:$0xff]
    %v4811 = vld [vmem:[%s4809 + $0x8] sm:$0xf]
    %v4812 = vunpack.c.l.bf16 %v4810
    %v4813 = vunpack.c.h.bf16 %v4810
    %v4814 = vunpack.c.l.bf16 %v4811
    %s4815 = scalar_lea.vmem %s1, 104
    %v4816 = vld [vmem:[%s4815] sm:$0xff]
    %v4817 = vpack.c.bf16 %v4742, %v4742
    %v4818 = vld [vmem:[%s2] sm:$0xff]
    %v4819 = vld [vmem:[%s2 + $0x8] sm:$0xf]
    %v4820 = vld [vmem:[%s2 + $0xc] sm:$0xff]
    %v4821 = vld [vmem:[%s2 + $0x14] sm:$0xf]
    %v4822 = vld [vmem:[%s2 + $0x18] sm:$0xff]
    %v4823 = vld [vmem:[%s2 + $0x20] sm:$0xf]
    %v4824 = vld [vmem:[%s2 + $0x24] sm:$0xff]
    %v4825 = vld [vmem:[%s2 + $0x2c] sm:$0xf]
    %v4826 = vld [vmem:[%s2 + $0x30] sm:$0xff]
    %v4827 = vld [vmem:[%s2 + $0x38] sm:$0xf]
    %v4828 = vld [vmem:[%s2 + $0x3c] sm:$0xff]
    %v4829 = vld [vmem:[%s2 + $0x44] sm:$0xf]
    %v4830 = vld [vmem:[%s2 + $0x48] sm:$0xff]
    %v4831 = vld [vmem:[%s2 + $0x50] sm:$0xf]
    %v4832 = vld [vmem:[%s2 + $0x54] sm:$0xff]
    %v4833 = vld [vmem:[%s2 + $0x5c] sm:$0xf]
    %v4834 = vld [vmem:[%s2 + $0x60] sm:$0xff]
    %v4835 = vld [vmem:[%s2 + $0x68] sm:$0xf]
    %v4836 = vld [vmem:[%s2 + $0x6c] sm:$0xff]
    %v4837 = vld [vmem:[%s2 + $0x74] sm:$0xf]
    %v4838 = vld [vmem:[%s2 + $0x78] sm:$0xff]
    %v4839 = vld [vmem:[%s2 + $0x80] sm:$0xf]
    %v4840 = vld [vmem:[%s2 + $0x84] sm:$0xff]
    %v4841 = vld [vmem:[%s2 + $0x8c] sm:$0xf]
    %v4842 = vld [vmem:[%s2 + $0x90] sm:$0xff]
    %v4843 = vld [vmem:[%s2 + $0x98] sm:$0xf]
    %v4844 = vld [vmem:[%s2 + $0x9c] sm:$0xff]
    %v4845 = vld [vmem:[%s2 + $0xa4] sm:$0xf]
    %v4846 = vld [vmem:[%s2 + $0xa8] sm:$0xff]
    %v4847 = vld [vmem:[%s2 + $0xb0] sm:$0xf]
    %v4848 = vld [vmem:[%s2 + $0xb4] sm:$0xff]
    %v4849 = vld [vmem:[%s2 + $0xbc] sm:$0xf]
    %v4850 = vld [vmem:[%s3] sm:$0x7]
    %v4852 = vlaneseq
    %v4853 = vshrl.u32 %v4852, 7
    %v4854 = vsub.s32 0, %v4853
    %v4855 = vrot.slane %v4850, %v4854
    %v4856 = vlaneseq
    %v4857 = vshrl.u32 %v4856, 7
    %v4858 = vsub.s32 1, %v4857
    %v4859 = vrot.slane %v4850, %v4858
    %v4860 = vlaneseq
    %v4861 = vshrl.u32 %v4860, 7
    %v4862 = vsub.s32 2, %v4861
    %v4863 = vrot.slane %v4850, %v4862
    %v4899 = vunpack.c.l.b16 %v4818
    %v4900 = vunpack.c.h.b16 %v4818
    %v4901 = vunpack.c.l.b16 %v4819
    %v4902 = vunpack.c.l.b16 %v4820
    %v4903 = vunpack.c.h.b16 %v4820
    %v4904 = vunpack.c.l.b16 %v4821
    %v4905 = vunpack.c.l.b16 %v4822
    %v4906 = vunpack.c.h.b16 %v4822
    %v4907 = vunpack.c.l.b16 %v4823
    %v4908 = vunpack.c.l.b16 %v4824
    %v4909 = vunpack.c.h.b16 %v4824
    %v4910 = vunpack.c.l.b16 %v4825
    %v4911 = vunpack.c.l.b16 %v4826
    %v4912 = vunpack.c.h.b16 %v4826
    %v4913 = vunpack.c.l.b16 %v4827
    %v4914 = vunpack.c.l.b16 %v4828
    %v4915 = vunpack.c.h.b16 %v4828
    %v4916 = vunpack.c.l.b16 %v4829
    %v4917 = vunpack.c.l.b16 %v4830
    %v4918 = vunpack.c.h.b16 %v4830
    %v4919 = vunpack.c.l.b16 %v4831
    %v4920 = vunpack.c.l.b16 %v4832
    %v4921 = vunpack.c.h.b16 %v4832
    %v4922 = vunpack.c.l.b16 %v4833
    %v4923 = vunpack.c.l.b16 %v4834
    %v4924 = vunpack.c.h.b16 %v4834
    %v4925 = vunpack.c.l.b16 %v4835
    %v4926 = vunpack.c.l.b16 %v4836
    %v4927 = vunpack.c.h.b16 %v4836
    %v4928 = vunpack.c.l.b16 %v4837
    %v4929 = vunpack.c.l.b16 %v4838
    %v4930 = vunpack.c.h.b16 %v4838
    %v4931 = vunpack.c.l.b16 %v4839
    %v4932 = vunpack.c.l.b16 %v4840
    %v4933 = vunpack.c.h.b16 %v4840
    %v4934 = vunpack.c.l.b16 %v4841
    %v4935 = vunpack.c.l.b16 %v4842
    %v4936 = vunpack.c.h.b16 %v4842
    %v4937 = vunpack.c.l.b16 %v4843
    %v4938 = vunpack.c.l.b16 %v4844
    %v4939 = vunpack.c.h.b16 %v4844
    %v4940 = vunpack.c.l.b16 %v4845
    %v4941 = vunpack.c.l.b16 %v4846
    %v4942 = vunpack.c.h.b16 %v4846
    %v4943 = vunpack.c.l.b16 %v4847
    %v4944 = vunpack.c.l.b16 %v4848
    %v4945 = vunpack.c.h.b16 %v4848
    %v4946 = vunpack.c.l.b16 %v4849
    %v4947 = vpack.c.b16 %v4902, %v4899
    %v4948 = vpack.c.b16 %v4903, %v4900
    %v4949 = vpack.c.b16 %v4904, %v4901
    %v4950 = vpack.c.b16 %v4908, %v4905
    %v4951 = vpack.c.b16 %v4909, %v4906
    %v4952 = vpack.c.b16 %v4910, %v4907
    %v4953 = vpack.c.b16 %v4914, %v4911
    %v4954 = vpack.c.b16 %v4915, %v4912
    %v4955 = vpack.c.b16 %v4916, %v4913
    %v4956 = vpack.c.b16 %v4920, %v4917
    %v4957 = vpack.c.b16 %v4921, %v4918
    %v4958 = vpack.c.b16 %v4922, %v4919
    %v4959 = vpack.c.b16 %v4926, %v4923
    %v4960 = vpack.c.b16 %v4927, %v4924
    %v4961 = vpack.c.b16 %v4928, %v4925
    %v4962 = vpack.c.b16 %v4932, %v4929
    %v4963 = vpack.c.b16 %v4933, %v4930
    %v4964 = vpack.c.b16 %v4934, %v4931
    %v4965 = vpack.c.b16 %v4938, %v4935
    %v4966 = vpack.c.b16 %v4939, %v4936
    %v4967 = vpack.c.b16 %v4940, %v4937
    %v4968 = vpack.c.b16 %v4944, %v4941
    %v4969 = vpack.c.b16 %v4945, %v4942
    %v4970 = vpack.c.b16 %v4946, %v4943
    %4995 = vmatprep.subr.bf16.mxu0 %v4948
    %4996 = vmatpush1.bf16.msra.mxu0 %v4947
    %4997 = vmatprep.subr.bf16.mxu0 %v4951
    %4998 = vmatpush1.bf16.msra.mxu0 %v4950
    %4999 = vmatprep.subr.bf16.mxu0 %v4954
    %5000 = vmatpush1.bf16.msra.mxu0 %v4953
    %5001 = vmatprep.subr.bf16.mxu0 %v4957
    %5002 = vmatpush1.bf16.msra.mxu0 %v4956
    %5003 = vmatprep.subr.bf16.mxu0 %v4960
    %5004 = vmatpush1.bf16.msra.mxu0 %v4959
    %5005 = vmatprep.subr.bf16.mxu0 %v4963
    %5006 = vmatpush1.bf16.msra.mxu0 %v4962
    %5007 = vmatprep.subr.bf16.mxu0 %v4966
    %5008 = vmatpush1.bf16.msra.mxu0 %v4965
    %5009 = vmatprep.subr.bf16.mxu0 %v4969
    %5010 = vmatpush1.bf16.msra.mxu0 %v4968
    %5011 = vmatprep.subr.bf16.mxu0 0
    %5012 = vmatpush1.bf16.msra.mxu0 0
    %5013 = vmatprep.subr.bf16.mxu0 0
    %5014 = vmatpush1.bf16.msra.mxu0 0
    %5015 = vmatprep.subr.bf16.mxu0 0
    %5016 = vmatpush1.bf16.msra.mxu0 0
    %5017 = vmatprep.subr.bf16.mxu0 0
    %5018 = vmatpush1.bf16.msra.mxu0 0
    %5019 = vmatprep.subr.bf16.mxu0 0
    %5020 = vmatpush1.bf16.msra.mxu0 0
    %5021 = vmatprep.subr.bf16.mxu0 0
    %5022 = vmatpush1.bf16.msra.mxu0 0
    %5023 = vmatprep.subr.bf16.mxu0 0
    %5024 = vmatpush1.bf16.msra.mxu0 0
    %5025 = vmatprep.subr.bf16.mxu0 0
    %5026 = vmatpush1.bf16.msra.mxu0 0
    %5027 = vmatprep.mubr.bf16.mxu0 0
    %5028 = vmatmul.mubr.bf16.gmra.mrb[0].mxu0 %v4817
    %v5029 = vpop.f32.mrb[0].mxu0
    %v5030 = vadd.f32 %v4855, %v5029
    %v5031 = vpop.f32.mrb[0].mxu0
    %v5032 = vadd.f32 %v4859, %v5031
    %v5033 = vpop.f32.mrb[0].mxu0
    %v5034 = vpop.f32.mrb[0].mxu0
    %5035 = vdwg.mxu0
    %5036 = vmatprep.subr.bf16.mxu0 0
    %5037 = vmatpush1.bf16.msra.mxu0 %v4949
    %5038 = vmatprep.subr.bf16.mxu0 0
    %5039 = vmatpush1.bf16.msra.mxu0 %v4952
    %5040 = vmatprep.subr.bf16.mxu0 0
    %5041 = vmatpush1.bf16.msra.mxu0 %v4955
    %5042 = vmatprep.subr.bf16.mxu0 0
    %5043 = vmatpush1.bf16.msra.mxu0 %v4958
    %5044 = vmatprep.subr.bf16.mxu0 0
    %5045 = vmatpush1.bf16.msra.mxu0 %v4961
    %5046 = vmatprep.subr.bf16.mxu0 0
    %5047 = vmatpush1.bf16.msra.mxu0 %v4964
    %5048 = vmatprep.subr.bf16.mxu0 0
    %5049 = vmatpush1.bf16.msra.mxu0 %v4967
    %5050 = vmatprep.subr.bf16.mxu0 0
    %5051 = vmatpush1.bf16.msra.mxu0 %v4970
    %5052 = vmatprep.subr.bf16.mxu0 0
    %5053 = vmatpush1.bf16.msra.mxu0 0
    %5054 = vmatprep.subr.bf16.mxu0 0
    %5055 = vmatpush1.bf16.msra.mxu0 0
    %5056 = vmatprep.subr.bf16.mxu0 0
    %5057 = vmatpush1.bf16.msra.mxu0 0
    %5058 = vmatprep.subr.bf16.mxu0 0
    %5059 = vmatpush1.bf16.msra.mxu0 0
    %5060 = vmatprep.subr.bf16.mxu0 0
    %5061 = vmatpush1.bf16.msra.mxu0 0
    %5062 = vmatprep.subr.bf16.mxu0 0
    %5063 = vmatpush1.bf16.msra.mxu0 0
    %5064 = vmatprep.subr.bf16.mxu0 0
    %5065 = vmatpush1.bf16.msra.mxu0 0
    %5066 = vmatprep.subr.bf16.mxu0 0
    %5067 = vmatpush1.bf16.msra.mxu0 0
    %5068 = vmatprep.mubr.bf16.mxu0 0
    %5069 = vmatmul.mubr.bf16.gmra.mrb[0].mxu0 %v4817
    %v5070 = vpop.f32.mrb[0].mxu0
    %v5071 = vadd.f32 %v4863, %v5070
    %v5072 = vpop.f32.mrb[0].mxu0
    %v5073 = vpop.f32.mrb[0].mxu0
    %v5074 = vpop.f32.mrb[0].mxu0
    %5075 = vdwg.mxu0
    %v5076 = vadd.f32 %v4812, %v5030
    %v5077 = vxor.u32 %v5076, 2147483648
    %v5078 = vmul.f32 %v5077, 1.442695
    %v5079 = vpow.pop %v5078
    %v5080 = vadd.f32 %v5079, 1.0
    %v5081 = vrcp.pop %v5080
    %v5082 = vmul.f32 1.0, %v5081
    %v5083 = vadd.f32 %v4813, %v5032
    %v5084 = vxor.u32 %v5083, 2147483648
    %v5085 = vmul.f32 %v5084, 1.442695
    %v5086 = vpow.pop %v5085
    %v5087 = vadd.f32 %v5086, 1.0
    %v5088 = vrcp.pop %v5087
    %v5089 = vmul.f32 1.0, %v5088
    %v5090 = vmul.f32 %v5082, %v5071
    %v5091 = vadd.f32 %v4814, %v5090
    %v5092 = vtanh.pop %v5091
    %v5093 = vsub.f32 1.0, %v5089
    %v5094 = vmul.f32 %v5093, %v5092
    %v5095 = vmul.f32 %v5089, %v4742
    %v5096 = vadd.f32 %v5094, %v5095
    %5098 = vset.pattern.permute.xlu0 0
    %5099 = vperm.xlu0 %5098, %v4816
    %v5100 = vpop.permute.xlu0 %5099
    %v5102 = vmul.f32 %v5100, %v5096
    %v5103 = vsub.f32 1.0, %v4816
    %5105 = vset.pattern.permute.xlu0 0
    %5106 = vperm.xlu0 %5105, %v5103
    %v5107 = vpop.permute.xlu0 %5106
    %v5109 = vmul.f32 %v5107, %v4742
    %v5110 = vadd.f32 %v5102, %v5109
    %v5112 = vcombine.high %v5110, %v5110
    %v5114 = vunpack.c.l.s4 1966171168
    %v5115 = vunpack.c.0.s8 %v5114
    %v5116 = vlaneseq
    %v5117 = vshrl.u32 %v5116, 7
    %v5118 = vsub.s32 %v5115, %v5117
    %v5119 = vrot.slane %v5110, %v5118
    %v5121 = vunpack.c.l.s4 1966171168
    %v5122 = vunpack.c.0.s8 %v5121
    %v5123 = vlaneseq
    %v5124 = vshrl.u32 %v5123, 7
    %v5125 = vsub.s32 %v5122, %v5124
    %v5126 = vrot.slane %v5112, %v5125
    %v5127 = vcombine.high %v5119, %v5119
    %v5128 = vcombine.high %v5126, %v5126
    %v5130 = vunpack.c.l.s4 1966171168
    %v5131 = vunpack.c.0.s8 %v5130
    %v5132 = vlaneseq
    %v5133 = vshrl.u32 %v5132, 7
    %v5134 = vsub.s32 %v5131, %v5133
    %v5135 = vrot.slane %v5119, %v5134
    %v5137 = vunpack.c.l.s4 1966171168
    %v5138 = vunpack.c.0.s8 %v5137
    %v5139 = vlaneseq
    %v5140 = vshrl.u32 %v5139, 7
    %v5141 = vsub.s32 %v5138, %v5140
    %v5142 = vrot.slane %v5126, %v5141
    %v5144 = vunpack.c.l.s4 1966171168
    %v5145 = vunpack.c.0.s8 %v5144
    %v5146 = vlaneseq
    %v5147 = vshrl.u32 %v5146, 7
    %v5148 = vsub.s32 %v5145, %v5147
    %v5149 = vrot.slane %v5127, %v5148
    %v5151 = vunpack.c.l.s4 1966171168
    %v5152 = vunpack.c.0.s8 %v5151
    %v5153 = vlaneseq
    %v5154 = vshrl.u32 %v5153, 7
    %v5155 = vsub.s32 %v5152, %v5154
    %v5156 = vrot.slane %v5128, %v5155
    %v5157 = vcombine.high %v5135, %v5135
    %v5158 = vcombine.high %v5142, %v5142
    %v5159 = vcombine.high %v5149, %v5149
    %v5160 = vcombine.high %v5156, %v5156
    %5169 = vst [vmem:[#allocation2 + $0xd] sm:$0x1] %v5135
    %5170 = vst [vmem:[#allocation2 + $0x1d] sm:$0x1] %v5149
    %5171 = vst [vmem:[#allocation2 + $0x2d] sm:$0x1] %v5157
    %5172 = vst [vmem:[#allocation2 + $0x3d] sm:$0x1] %v5159
    %5173 = vst [vmem:[#allocation2 + $0x4d] sm:$0x1] %v5142
    %5174 = vst [vmem:[#allocation2 + $0x5d] sm:$0x1] %v5156
    %5175 = vst [vmem:[#allocation2 + $0x6d] sm:$0x1] %v5158
    %5176 = vst [vmem:[#allocation2 + $0x7d] sm:$0x1] %v5160
    %s5177 = scalar_lea.vmem %s0, 168
    %v5178 = vld [vmem:[%s5177] sm:$0xff]
    %v5179 = vld [vmem:[%s5177 + $0x8] sm:$0xf]
    %v5180 = vunpack.c.l.bf16 %v5178
    %v5181 = vunpack.c.h.bf16 %v5178
    %v5182 = vunpack.c.l.bf16 %v5179
    %s5183 = scalar_lea.vmem %s1, 112
    %v5184 = vld [vmem:[%s5183] sm:$0xff]
    %v5185 = vpack.c.bf16 %v5110, %v5110
    %v5186 = vld [vmem:[%s2] sm:$0xff]
    %v5187 = vld [vmem:[%s2 + $0x8] sm:$0xf]
    %v5188 = vld [vmem:[%s2 + $0xc] sm:$0xff]
    %v5189 = vld [vmem:[%s2 + $0x14] sm:$0xf]
    %v5190 = vld [vmem:[%s2 + $0x18] sm:$0xff]
    %v5191 = vld [vmem:[%s2 + $0x20] sm:$0xf]
    %v5192 = vld [vmem:[%s2 + $0x24] sm:$0xff]
    %v5193 = vld [vmem:[%s2 + $0x2c] sm:$0xf]
    %v5194 = vld [vmem:[%s2 + $0x30] sm:$0xff]
    %v5195 = vld [vmem:[%s2 + $0x38] sm:$0xf]
    %v5196 = vld [vmem:[%s2 + $0x3c] sm:$0xff]
    %v5197 = vld [vmem:[%s2 + $0x44] sm:$0xf]
    %v5198 = vld [vmem:[%s2 + $0x48] sm:$0xff]
    %v5199 = vld [vmem:[%s2 + $0x50] sm:$0xf]
    %v5200 = vld [vmem:[%s2 + $0x54] sm:$0xff]
    %v5201 = vld [vmem:[%s2 + $0x5c] sm:$0xf]
    %v5202 = vld [vmem:[%s2 + $0x60] sm:$0xff]
    %v5203 = vld [vmem:[%s2 + $0x68] sm:$0xf]
    %v5204 = vld [vmem:[%s2 + $0x6c] sm:$0xff]
    %v5205 = vld [vmem:[%s2 + $0x74] sm:$0xf]
    %v5206 = vld [vmem:[%s2 + $0x78] sm:$0xff]
    %v5207 = vld [vmem:[%s2 + $0x80] sm:$0xf]
    %v5208 = vld [vmem:[%s2 + $0x84] sm:$0xff]
    %v5209 = vld [vmem:[%s2 + $0x8c] sm:$0xf]
    %v5210 = vld [vmem:[%s2 + $0x90] sm:$0xff]
    %v5211 = vld [vmem:[%s2 + $0x98] sm:$0xf]
    %v5212 = vld [vmem:[%s2 + $0x9c] sm:$0xff]
    %v5213 = vld [vmem:[%s2 + $0xa4] sm:$0xf]
    %v5214 = vld [vmem:[%s2 + $0xa8] sm:$0xff]
    %v5215 = vld [vmem:[%s2 + $0xb0] sm:$0xf]
    %v5216 = vld [vmem:[%s2 + $0xb4] sm:$0xff]
    %v5217 = vld [vmem:[%s2 + $0xbc] sm:$0xf]
    %v5218 = vld [vmem:[%s3] sm:$0x7]
    %v5220 = vlaneseq
    %v5221 = vshrl.u32 %v5220, 7
    %v5222 = vsub.s32 0, %v5221
    %v5223 = vrot.slane %v5218, %v5222
    %v5224 = vlaneseq
    %v5225 = vshrl.u32 %v5224, 7
    %v5226 = vsub.s32 1, %v5225
    %v5227 = vrot.slane %v5218, %v5226
    %v5228 = vlaneseq
    %v5229 = vshrl.u32 %v5228, 7
    %v5230 = vsub.s32 2, %v5229
    %v5231 = vrot.slane %v5218, %v5230
    %v5267 = vunpack.c.l.b16 %v5186
    %v5268 = vunpack.c.h.b16 %v5186
    %v5269 = vunpack.c.l.b16 %v5187
    %v5270 = vunpack.c.l.b16 %v5188
    %v5271 = vunpack.c.h.b16 %v5188
    %v5272 = vunpack.c.l.b16 %v5189
    %v5273 = vunpack.c.l.b16 %v5190
    %v5274 = vunpack.c.h.b16 %v5190
    %v5275 = vunpack.c.l.b16 %v5191
    %v5276 = vunpack.c.l.b16 %v5192
    %v5277 = vunpack.c.h.b16 %v5192
    %v5278 = vunpack.c.l.b16 %v5193
    %v5279 = vunpack.c.l.b16 %v5194
    %v5280 = vunpack.c.h.b16 %v5194
    %v5281 = vunpack.c.l.b16 %v5195
    %v5282 = vunpack.c.l.b16 %v5196
    %v5283 = vunpack.c.h.b16 %v5196
    %v5284 = vunpack.c.l.b16 %v5197
    %v5285 = vunpack.c.l.b16 %v5198
    %v5286 = vunpack.c.h.b16 %v5198
    %v5287 = vunpack.c.l.b16 %v5199
    %v5288 = vunpack.c.l.b16 %v5200
    %v5289 = vunpack.c.h.b16 %v5200
    %v5290 = vunpack.c.l.b16 %v5201
    %v5291 = vunpack.c.l.b16 %v5202
    %v5292 = vunpack.c.h.b16 %v5202
    %v5293 = vunpack.c.l.b16 %v5203
    %v5294 = vunpack.c.l.b16 %v5204
    %v5295 = vunpack.c.h.b16 %v5204
    %v5296 = vunpack.c.l.b16 %v5205
    %v5297 = vunpack.c.l.b16 %v5206
    %v5298 = vunpack.c.h.b16 %v5206
    %v5299 = vunpack.c.l.b16 %v5207
    %v5300 = vunpack.c.l.b16 %v5208
    %v5301 = vunpack.c.h.b16 %v5208
    %v5302 = vunpack.c.l.b16 %v5209
    %v5303 = vunpack.c.l.b16 %v5210
    %v5304 = vunpack.c.h.b16 %v5210
    %v5305 = vunpack.c.l.b16 %v5211
    %v5306 = vunpack.c.l.b16 %v5212
    %v5307 = vunpack.c.h.b16 %v5212
    %v5308 = vunpack.c.l.b16 %v5213
    %v5309 = vunpack.c.l.b16 %v5214
    %v5310 = vunpack.c.h.b16 %v5214
    %v5311 = vunpack.c.l.b16 %v5215
    %v5312 = vunpack.c.l.b16 %v5216
    %v5313 = vunpack.c.h.b16 %v5216
    %v5314 = vunpack.c.l.b16 %v5217
    %v5315 = vpack.c.b16 %v5270, %v5267
    %v5316 = vpack.c.b16 %v5271, %v5268
    %v5317 = vpack.c.b16 %v5272, %v5269
    %v5318 = vpack.c.b16 %v5276, %v5273
    %v5319 = vpack.c.b16 %v5277, %v5274
    %v5320 = vpack.c.b16 %v5278, %v5275
    %v5321 = vpack.c.b16 %v5282, %v5279
    %v5322 = vpack.c.b16 %v5283, %v5280
    %v5323 = vpack.c.b16 %v5284, %v5281
    %v5324 = vpack.c.b16 %v5288, %v5285
    %v5325 = vpack.c.b16 %v5289, %v5286
    %v5326 = vpack.c.b16 %v5290, %v5287
    %v5327 = vpack.c.b16 %v5294, %v5291
    %v5328 = vpack.c.b16 %v5295, %v5292
    %v5329 = vpack.c.b16 %v5296, %v5293
    %v5330 = vpack.c.b16 %v5300, %v5297
    %v5331 = vpack.c.b16 %v5301, %v5298
    %v5332 = vpack.c.b16 %v5302, %v5299
    %v5333 = vpack.c.b16 %v5306, %v5303
    %v5334 = vpack.c.b16 %v5307, %v5304
    %v5335 = vpack.c.b16 %v5308, %v5305
    %v5336 = vpack.c.b16 %v5312, %v5309
    %v5337 = vpack.c.b16 %v5313, %v5310
    %v5338 = vpack.c.b16 %v5314, %v5311
    %5363 = vmatprep.subr.bf16.mxu0 %v5316
    %5364 = vmatpush1.bf16.msra.mxu0 %v5315
    %5365 = vmatprep.subr.bf16.mxu0 %v5319
    %5366 = vmatpush1.bf16.msra.mxu0 %v5318
    %5367 = vmatprep.subr.bf16.mxu0 %v5322
    %5368 = vmatpush1.bf16.msra.mxu0 %v5321
    %5369 = vmatprep.subr.bf16.mxu0 %v5325
    %5370 = vmatpush1.bf16.msra.mxu0 %v5324
    %5371 = vmatprep.subr.bf16.mxu0 %v5328
    %5372 = vmatpush1.bf16.msra.mxu0 %v5327
    %5373 = vmatprep.subr.bf16.mxu0 %v5331
    %5374 = vmatpush1.bf16.msra.mxu0 %v5330
    %5375 = vmatprep.subr.bf16.mxu0 %v5334
    %5376 = vmatpush1.bf16.msra.mxu0 %v5333
    %5377 = vmatprep.subr.bf16.mxu0 %v5337
    %5378 = vmatpush1.bf16.msra.mxu0 %v5336
    %5379 = vmatprep.subr.bf16.mxu0 0
    %5380 = vmatpush1.bf16.msra.mxu0 0
    %5381 = vmatprep.subr.bf16.mxu0 0
    %5382 = vmatpush1.bf16.msra.mxu0 0
    %5383 = vmatprep.subr.bf16.mxu0 0
    %5384 = vmatpush1.bf16.msra.mxu0 0
    %5385 = vmatprep.subr.bf16.mxu0 0
    %5386 = vmatpush1.bf16.msra.mxu0 0
    %5387 = vmatprep.subr.bf16.mxu0 0
    %5388 = vmatpush1.bf16.msra.mxu0 0
    %5389 = vmatprep.subr.bf16.mxu0 0
    %5390 = vmatpush1.bf16.msra.mxu0 0
    %5391 = vmatprep.subr.bf16.mxu0 0
    %5392 = vmatpush1.bf16.msra.mxu0 0
    %5393 = vmatprep.subr.bf16.mxu0 0
    %5394 = vmatpush1.bf16.msra.mxu0 0
    %5395 = vmatprep.mubr.bf16.mxu0 0
    %5396 = vmatmul.mubr.bf16.gmra.mrb[0].mxu0 %v5185
    %v5397 = vpop.f32.mrb[0].mxu0
    %v5398 = vadd.f32 %v5223, %v5397
    %v5399 = vpop.f32.mrb[0].mxu0
    %v5400 = vadd.f32 %v5227, %v5399
    %v5401 = vpop.f32.mrb[0].mxu0
    %v5402 = vpop.f32.mrb[0].mxu0
    %5403 = vdwg.mxu0
    %5404 = vmatprep.subr.bf16.mxu0 0
    %5405 = vmatpush1.bf16.msra.mxu0 %v5317
    %5406 = vmatprep.subr.bf16.mxu0 0
    %5407 = vmatpush1.bf16.msra.mxu0 %v5320
    %5408 = vmatprep.subr.bf16.mxu0 0
    %5409 = vmatpush1.bf16.msra.mxu0 %v5323
    %5410 = vmatprep.subr.bf16.mxu0 0
    %5411 = vmatpush1.bf16.msra.mxu0 %v5326
    %5412 = vmatprep.subr.bf16.mxu0 0
    %5413 = vmatpush1.bf16.msra.mxu0 %v5329
    %5414 = vmatprep.subr.bf16.mxu0 0
    %5415 = vmatpush1.bf16.msra.mxu0 %v5332
    %5416 = vmatprep.subr.bf16.mxu0 0
    %5417 = vmatpush1.bf16.msra.mxu0 %v5335
    %5418 = vmatprep.subr.bf16.mxu0 0
    %5419 = vmatpush1.bf16.msra.mxu0 %v5338
    %5420 = vmatprep.subr.bf16.mxu0 0
    %5421 = vmatpush1.bf16.msra.mxu0 0
    %5422 = vmatprep.subr.bf16.mxu0 0
    %5423 = vmatpush1.bf16.msra.mxu0 0
    %5424 = vmatprep.subr.bf16.mxu0 0
    %5425 = vmatpush1.bf16.msra.mxu0 0
    %5426 = vmatprep.subr.bf16.mxu0 0
    %5427 = vmatpush1.bf16.msra.mxu0 0
    %5428 = vmatprep.subr.bf16.mxu0 0
    %5429 = vmatpush1.bf16.msra.mxu0 0
    %5430 = vmatprep.subr.bf16.mxu0 0
    %5431 = vmatpush1.bf16.msra.mxu0 0
    %5432 = vmatprep.subr.bf16.mxu0 0
    %5433 = vmatpush1.bf16.msra.mxu0 0
    %5434 = vmatprep.subr.bf16.mxu0 0
    %5435 = vmatpush1.bf16.msra.mxu0 0
    %5436 = vmatprep.mubr.bf16.mxu0 0
    %5437 = vmatmul.mubr.bf16.gmra.mrb[0].mxu0 %v5185
    %v5438 = vpop.f32.mrb[0].mxu0
    %v5439 = vadd.f32 %v5231, %v5438
    %v5440 = vpop.f32.mrb[0].mxu0
    %v5441 = vpop.f32.mrb[0].mxu0
    %v5442 = vpop.f32.mrb[0].mxu0
    %5443 = vdwg.mxu0
    %v5444 = vadd.f32 %v5180, %v5398
    %v5445 = vxor.u32 %v5444, 2147483648
    %v5446 = vmul.f32 %v5445, 1.442695
    %v5447 = vpow.pop %v5446
    %v5448 = vadd.f32 %v5447, 1.0
    %v5449 = vrcp.pop %v5448
    %v5450 = vmul.f32 1.0, %v5449
    %v5451 = vadd.f32 %v5181, %v5400
    %v5452 = vxor.u32 %v5451, 2147483648
    %v5453 = vmul.f32 %v5452, 1.442695
    %v5454 = vpow.pop %v5453
    %v5455 = vadd.f32 %v5454, 1.0
    %v5456 = vrcp.pop %v5455
    %v5457 = vmul.f32 1.0, %v5456
    %v5458 = vmul.f32 %v5450, %v5439
    %v5459 = vadd.f32 %v5182, %v5458
    %v5460 = vtanh.pop %v5459
    %v5461 = vsub.f32 1.0, %v5457
    %v5462 = vmul.f32 %v5461, %v5460
    %v5463 = vmul.f32 %v5457, %v5110
    %v5464 = vadd.f32 %v5462, %v5463
    %5466 = vset.pattern.permute.xlu0 0
    %5467 = vperm.xlu0 %5466, %v5184
    %v5468 = vpop.permute.xlu0 %5467
    %v5470 = vmul.f32 %v5468, %v5464
    %v5471 = vsub.f32 1.0, %v5184
    %5473 = vset.pattern.permute.xlu0 0
    %5474 = vperm.xlu0 %5473, %v5471
    %v5475 = vpop.permute.xlu0 %5474
    %v5477 = vmul.f32 %v5475, %v5110
    %v5478 = vadd.f32 %v5470, %v5477
    %v5480 = vcombine.high %v5478, %v5478
    %v5482 = vunpack.c.l.s4 1966171168
    %v5483 = vunpack.c.0.s8 %v5482
    %v5484 = vlaneseq
    %v5485 = vshrl.u32 %v5484, 7
    %v5486 = vsub.s32 %v5483, %v5485
    %v5487 = vrot.slane %v5478, %v5486
    %v5489 = vunpack.c.l.s4 1966171168
    %v5490 = vunpack.c.0.s8 %v5489
    %v5491 = vlaneseq
    %v5492 = vshrl.u32 %v5491, 7
    %v5493 = vsub.s32 %v5490, %v5492
    %v5494 = vrot.slane %v5480, %v5493
    %v5495 = vcombine.high %v5487, %v5487
    %v5496 = vcombine.high %v5494, %v5494
    %v5498 = vunpack.c.l.s4 1966171168
    %v5499 = vunpack.c.0.s8 %v5498
    %v5500 = vlaneseq
    %v5501 = vshrl.u32 %v5500, 7
    %v5502 = vsub.s32 %v5499, %v5501
    %v5503 = vrot.slane %v5487, %v5502
    %v5505 = vunpack.c.l.s4 1966171168
    %v5506 = vunpack.c.0.s8 %v5505
    %v5507 = vlaneseq
    %v5508 = vshrl.u32 %v5507, 7
    %v5509 = vsub.s32 %v5506, %v5508
    %v5510 = vrot.slane %v5494, %v5509
    %v5512 = vunpack.c.l.s4 1966171168
    %v5513 = vunpack.c.0.s8 %v5512
    %v5514 = vlaneseq
    %v5515 = vshrl.u32 %v5514, 7
    %v5516 = vsub.s32 %v5513, %v5515
    %v5517 = vrot.slane %v5495, %v5516
    %v5519 = vunpack.c.l.s4 1966171168
    %v5520 = vunpack.c.0.s8 %v5519
    %v5521 = vlaneseq
    %v5522 = vshrl.u32 %v5521, 7
    %v5523 = vsub.s32 %v5520, %v5522
    %v5524 = vrot.slane %v5496, %v5523
    %v5525 = vcombine.high %v5503, %v5503
    %v5526 = vcombine.high %v5510, %v5510
    %v5527 = vcombine.high %v5517, %v5517
    %v5528 = vcombine.high %v5524, %v5524
    %5537 = vst [vmem:[#allocation2 + $0xe] sm:$0x1] %v5503
    %5538 = vst [vmem:[#allocation2 + $0x1e] sm:$0x1] %v5517
    %5539 = vst [vmem:[#allocation2 + $0x2e] sm:$0x1] %v5525
    %5540 = vst [vmem:[#allocation2 + $0x3e] sm:$0x1] %v5527
    %5541 = vst [vmem:[#allocation2 + $0x4e] sm:$0x1] %v5510
    %5542 = vst [vmem:[#allocation2 + $0x5e] sm:$0x1] %v5524
    %5543 = vst [vmem:[#allocation2 + $0x6e] sm:$0x1] %v5526
    %5544 = vst [vmem:[#allocation2 + $0x7e] sm:$0x1] %v5528
    %s5545 = scalar_lea.vmem %s0, 180
    %v5546 = vld [vmem:[%s5545] sm:$0xff]
    %v5547 = vld [vmem:[%s5545 + $0x8] sm:$0xf]
    %v5548 = vunpack.c.l.bf16 %v5546
    %v5549 = vunpack.c.h.bf16 %v5546
    %v5550 = vunpack.c.l.bf16 %v5547
    %s5551 = scalar_lea.vmem %s1, 120
    %v5552 = vld [vmem:[%s5551] sm:$0xff]
    %v5553 = vpack.c.bf16 %v5478, %v5478
    %v5554 = vld [vmem:[%s2] sm:$0xff]
    %v5555 = vld [vmem:[%s2 + $0x8] sm:$0xf]
    %v5556 = vld [vmem:[%s2 + $0xc] sm:$0xff]
    %v5557 = vld [vmem:[%s2 + $0x14] sm:$0xf]
    %v5558 = vld [vmem:[%s2 + $0x18] sm:$0xff]
    %v5559 = vld [vmem:[%s2 + $0x20] sm:$0xf]
    %v5560 = vld [vmem:[%s2 + $0x24] sm:$0xff]
    %v5561 = vld [vmem:[%s2 + $0x2c] sm:$0xf]
    %v5562 = vld [vmem:[%s2 + $0x30] sm:$0xff]
    %v5563 = vld [vmem:[%s2 + $0x38] sm:$0xf]
    %v5564 = vld [vmem:[%s2 + $0x3c] sm:$0xff]
    %v5565 = vld [vmem:[%s2 + $0x44] sm:$0xf]
    %v5566 = vld [vmem:[%s2 + $0x48] sm:$0xff]
    %v5567 = vld [vmem:[%s2 + $0x50] sm:$0xf]
    %v5568 = vld [vmem:[%s2 + $0x54] sm:$0xff]
    %v5569 = vld [vmem:[%s2 + $0x5c] sm:$0xf]
    %v5570 = vld [vmem:[%s2 + $0x60] sm:$0xff]
    %v5571 = vld [vmem:[%s2 + $0x68] sm:$0xf]
    %v5572 = vld [vmem:[%s2 + $0x6c] sm:$0xff]
    %v5573 = vld [vmem:[%s2 + $0x74] sm:$0xf]
    %v5574 = vld [vmem:[%s2 + $0x78] sm:$0xff]
    %v5575 = vld [vmem:[%s2 + $0x80] sm:$0xf]
    %v5576 = vld [vmem:[%s2 + $0x84] sm:$0xff]
    %v5577 = vld [vmem:[%s2 + $0x8c] sm:$0xf]
    %v5578 = vld [vmem:[%s2 + $0x90] sm:$0xff]
    %v5579 = vld [vmem:[%s2 + $0x98] sm:$0xf]
    %v5580 = vld [vmem:[%s2 + $0x9c] sm:$0xff]
    %v5581 = vld [vmem:[%s2 + $0xa4] sm:$0xf]
    %v5582 = vld [vmem:[%s2 + $0xa8] sm:$0xff]
    %v5583 = vld [vmem:[%s2 + $0xb0] sm:$0xf]
    %v5584 = vld [vmem:[%s2 + $0xb4] sm:$0xff]
    %v5585 = vld [vmem:[%s2 + $0xbc] sm:$0xf]
    %v5586 = vld [vmem:[%s3] sm:$0x7]
    %v5588 = vlaneseq
    %v5589 = vshrl.u32 %v5588, 7
    %v5590 = vsub.s32 0, %v5589
    %v5591 = vrot.slane %v5586, %v5590
    %v5592 = vlaneseq
    %v5593 = vshrl.u32 %v5592, 7
    %v5594 = vsub.s32 1, %v5593
    %v5595 = vrot.slane %v5586, %v5594
    %v5596 = vlaneseq
    %v5597 = vshrl.u32 %v5596, 7
    %v5598 = vsub.s32 2, %v5597
    %v5599 = vrot.slane %v5586, %v5598
    %v5635 = vunpack.c.l.b16 %v5554
    %v5636 = vunpack.c.h.b16 %v5554
    %v5637 = vunpack.c.l.b16 %v5555
    %v5638 = vunpack.c.l.b16 %v5556
    %v5639 = vunpack.c.h.b16 %v5556
    %v5640 = vunpack.c.l.b16 %v5557
    %v5641 = vunpack.c.l.b16 %v5558
    %v5642 = vunpack.c.h.b16 %v5558
    %v5643 = vunpack.c.l.b16 %v5559
    %v5644 = vunpack.c.l.b16 %v5560
    %v5645 = vunpack.c.h.b16 %v5560
    %v5646 = vunpack.c.l.b16 %v5561
    %v5647 = vunpack.c.l.b16 %v5562
    %v5648 = vunpack.c.h.b16 %v5562
    %v5649 = vunpack.c.l.b16 %v5563
    %v5650 = vunpack.c.l.b16 %v5564
    %v5651 = vunpack.c.h.b16 %v5564
    %v5652 = vunpack.c.l.b16 %v5565
    %v5653 = vunpack.c.l.b16 %v5566
    %v5654 = vunpack.c.h.b16 %v5566
    %v5655 = vunpack.c.l.b16 %v5567
    %v5656 = vunpack.c.l.b16 %v5568
    %v5657 = vunpack.c.h.b16 %v5568
    %v5658 = vunpack.c.l.b16 %v5569
    %v5659 = vunpack.c.l.b16 %v5570
    %v5660 = vunpack.c.h.b16 %v5570
    %v5661 = vunpack.c.l.b16 %v5571
    %v5662 = vunpack.c.l.b16 %v5572
    %v5663 = vunpack.c.h.b16 %v5572
    %v5664 = vunpack.c.l.b16 %v5573
    %v5665 = vunpack.c.l.b16 %v5574
    %v5666 = vunpack.c.h.b16 %v5574
    %v5667 = vunpack.c.l.b16 %v5575
    %v5668 = vunpack.c.l.b16 %v5576
    %v5669 = vunpack.c.h.b16 %v5576
    %v5670 = vunpack.c.l.b16 %v5577
    %v5671 = vunpack.c.l.b16 %v5578
    %v5672 = vunpack.c.h.b16 %v5578
    %v5673 = vunpack.c.l.b16 %v5579
    %v5674 = vunpack.c.l.b16 %v5580
    %v5675 = vunpack.c.h.b16 %v5580
    %v5676 = vunpack.c.l.b16 %v5581
    %v5677 = vunpack.c.l.b16 %v5582
    %v5678 = vunpack.c.h.b16 %v5582
    %v5679 = vunpack.c.l.b16 %v5583
    %v5680 = vunpack.c.l.b16 %v5584
    %v5681 = vunpack.c.h.b16 %v5584
    %v5682 = vunpack.c.l.b16 %v5585
    %v5683 = vpack.c.b16 %v5638, %v5635
    %v5684 = vpack.c.b16 %v5639, %v5636
    %v5685 = vpack.c.b16 %v5640, %v5637
    %v5686 = vpack.c.b16 %v5644, %v5641
    %v5687 = vpack.c.b16 %v5645, %v5642
    %v5688 = vpack.c.b16 %v5646, %v5643
    %v5689 = vpack.c.b16 %v5650, %v5647
    %v5690 = vpack.c.b16 %v5651, %v5648
    %v5691 = vpack.c.b16 %v5652, %v5649
    %v5692 = vpack.c.b16 %v5656, %v5653
    %v5693 = vpack.c.b16 %v5657, %v5654
    %v5694 = vpack.c.b16 %v5658, %v5655
    %v5695 = vpack.c.b16 %v5662, %v5659
    %v5696 = vpack.c.b16 %v5663, %v5660
    %v5697 = vpack.c.b16 %v5664, %v5661
    %v5698 = vpack.c.b16 %v5668, %v5665
    %v5699 = vpack.c.b16 %v5669, %v5666
    %v5700 = vpack.c.b16 %v5670, %v5667
    %v5701 = vpack.c.b16 %v5674, %v5671
    %v5702 = vpack.c.b16 %v5675, %v5672
    %v5703 = vpack.c.b16 %v5676, %v5673
    %v5704 = vpack.c.b16 %v5680, %v5677
    %v5705 = vpack.c.b16 %v5681, %v5678
    %v5706 = vpack.c.b16 %v5682, %v5679
    %5731 = vmatprep.subr.bf16.mxu0 %v5684
    %5732 = vmatpush1.bf16.msra.mxu0 %v5683
    %5733 = vmatprep.subr.bf16.mxu0 %v5687
    %5734 = vmatpush1.bf16.msra.mxu0 %v5686
    %5735 = vmatprep.subr.bf16.mxu0 %v5690
    %5736 = vmatpush1.bf16.msra.mxu0 %v5689
    %5737 = vmatprep.subr.bf16.mxu0 %v5693
    %5738 = vmatpush1.bf16.msra.mxu0 %v5692
    %5739 = vmatprep.subr.bf16.mxu0 %v5696
    %5740 = vmatpush1.bf16.msra.mxu0 %v5695
    %5741 = vmatprep.subr.bf16.mxu0 %v5699
    %5742 = vmatpush1.bf16.msra.mxu0 %v5698
    %5743 = vmatprep.subr.bf16.mxu0 %v5702
    %5744 = vmatpush1.bf16.msra.mxu0 %v5701
    %5745 = vmatprep.subr.bf16.mxu0 %v5705
    %5746 = vmatpush1.bf16.msra.mxu0 %v5704
    %5747 = vmatprep.subr.bf16.mxu0 0
    %5748 = vmatpush1.bf16.msra.mxu0 0
    %5749 = vmatprep.subr.bf16.mxu0 0
    %5750 = vmatpush1.bf16.msra.mxu0 0
    %5751 = vmatprep.subr.bf16.mxu0 0
    %5752 = vmatpush1.bf16.msra.mxu0 0
    %5753 = vmatprep.subr.bf16.mxu0 0
    %5754 = vmatpush1.bf16.msra.mxu0 0
    %5755 = vmatprep.subr.bf16.mxu0 0
    %5756 = vmatpush1.bf16.msra.mxu0 0
    %5757 = vmatprep.subr.bf16.mxu0 0
    %5758 = vmatpush1.bf16.msra.mxu0 0
    %5759 = vmatprep.subr.bf16.mxu0 0
    %5760 = vmatpush1.bf16.msra.mxu0 0
    %5761 = vmatprep.subr.bf16.mxu0 0
    %5762 = vmatpush1.bf16.msra.mxu0 0
    %5763 = vmatprep.mubr.bf16.mxu0 0
    %5764 = vmatmul.mubr.bf16.gmra.mrb[0].mxu0 %v5553
    %v5765 = vpop.f32.mrb[0].mxu0
    %v5766 = vadd.f32 %v5591, %v5765
    %v5767 = vpop.f32.mrb[0].mxu0
    %v5768 = vadd.f32 %v5595, %v5767
    %v5769 = vpop.f32.mrb[0].mxu0
    %v5770 = vpop.f32.mrb[0].mxu0
    %5771 = vdwg.mxu0
    %5772 = vmatprep.subr.bf16.mxu0 0
    %5773 = vmatpush1.bf16.msra.mxu0 %v5685
    %5774 = vmatprep.subr.bf16.mxu0 0
    %5775 = vmatpush1.bf16.msra.mxu0 %v5688
    %5776 = vmatprep.subr.bf16.mxu0 0
    %5777 = vmatpush1.bf16.msra.mxu0 %v5691
    %5778 = vmatprep.subr.bf16.mxu0 0
    %5779 = vmatpush1.bf16.msra.mxu0 %v5694
    %5780 = vmatprep.subr.bf16.mxu0 0
    %5781 = vmatpush1.bf16.msra.mxu0 %v5697
    %5782 = vmatprep.subr.bf16.mxu0 0
    %5783 = vmatpush1.bf16.msra.mxu0 %v5700
    %5784 = vmatprep.subr.bf16.mxu0 0
    %5785 = vmatpush1.bf16.msra.mxu0 %v5703
    %5786 = vmatprep.subr.bf16.mxu0 0
    %5787 = vmatpush1.bf16.msra.mxu0 %v5706
    %5788 = vmatprep.subr.bf16.mxu0 0
    %5789 = vmatpush1.bf16.msra.mxu0 0
    %5790 = vmatprep.subr.bf16.mxu0 0
    %5791 = vmatpush1.bf16.msra.mxu0 0
    %5792 = vmatprep.subr.bf16.mxu0 0
    %5793 = vmatpush1.bf16.msra.mxu0 0
    %5794 = vmatprep.subr.bf16.mxu0 0
    %5795 = vmatpush1.bf16.msra.mxu0 0
    %5796 = vmatprep.subr.bf16.mxu0 0
    %5797 = vmatpush1.bf16.msra.mxu0 0
    %5798 = vmatprep.subr.bf16.mxu0 0
    %5799 = vmatpush1.bf16.msra.mxu0 0
    %5800 = vmatprep.subr.bf16.mxu0 0
    %5801 = vmatpush1.bf16.msra.mxu0 0
    %5802 = vmatprep.subr.bf16.mxu0 0
    %5803 = vmatpush1.bf16.msra.mxu0 0
    %5804 = vmatprep.mubr.bf16.mxu0 0
    %5805 = vmatmul.mubr.bf16.gmra.mrb[0].mxu0 %v5553
    %v5806 = vpop.f32.mrb[0].mxu0
    %v5807 = vadd.f32 %v5599, %v5806
    %v5808 = vpop.f32.mrb[0].mxu0
    %v5809 = vpop.f32.mrb[0].mxu0
    %v5810 = vpop.f32.mrb[0].mxu0
    %5811 = vdwg.mxu0
    %v5812 = vadd.f32 %v5548, %v5766
    %v5813 = vxor.u32 %v5812, 2147483648
    %v5814 = vmul.f32 %v5813, 1.442695
    %v5815 = vpow.pop %v5814
    %v5816 = vadd.f32 %v5815, 1.0
    %v5817 = vrcp.pop %v5816
    %v5818 = vmul.f32 1.0, %v5817
    %v5819 = vadd.f32 %v5549, %v5768
    %v5820 = vxor.u32 %v5819, 2147483648
    %v5821 = vmul.f32 %v5820, 1.442695
    %v5822 = vpow.pop %v5821
    %v5823 = vadd.f32 %v5822, 1.0
    %v5824 = vrcp.pop %v5823
    %v5825 = vmul.f32 1.0, %v5824
    %v5826 = vmul.f32 %v5818, %v5807
    %v5827 = vadd.f32 %v5550, %v5826
    %v5828 = vtanh.pop %v5827
    %v5829 = vsub.f32 1.0, %v5825
    %v5830 = vmul.f32 %v5829, %v5828
    %v5831 = vmul.f32 %v5825, %v5478
    %v5832 = vadd.f32 %v5830, %v5831
    %5834 = vset.pattern.permute.xlu0 0
    %5835 = vperm.xlu0 %5834, %v5552
    %v5836 = vpop.permute.xlu0 %5835
    %v5838 = vmul.f32 %v5836, %v5832
    %v5839 = vsub.f32 1.0, %v5552
    %5841 = vset.pattern.permute.xlu0 0
    %5842 = vperm.xlu0 %5841, %v5839
    %v5843 = vpop.permute.xlu0 %5842
    %v5845 = vmul.f32 %v5843, %v5478
    %v5846 = vadd.f32 %v5838, %v5845
    %v5848 = vcombine.high %v5846, %v5846
    %v5850 = vunpack.c.l.s4 1966171168
    %v5851 = vunpack.c.0.s8 %v5850
    %v5852 = vlaneseq
    %v5853 = vshrl.u32 %v5852, 7
    %v5854 = vsub.s32 %v5851, %v5853
    %v5855 = vrot.slane %v5846, %v5854
    %v5857 = vunpack.c.l.s4 1966171168
    %v5858 = vunpack.c.0.s8 %v5857
    %v5859 = vlaneseq
    %v5860 = vshrl.u32 %v5859, 7
    %v5861 = vsub.s32 %v5858, %v5860
    %v5862 = vrot.slane %v5848, %v5861
    %v5863 = vcombine.high %v5855, %v5855
    %v5864 = vcombine.high %v5862, %v5862
    %v5866 = vunpack.c.l.s4 1966171168
    %v5867 = vunpack.c.0.s8 %v5866
    %v5868 = vlaneseq
    %v5869 = vshrl.u32 %v5868, 7
    %v5870 = vsub.s32 %v5867, %v5869
    %v5871 = vrot.slane %v5855, %v5870
    %v5873 = vunpack.c.l.s4 1966171168
    %v5874 = vunpack.c.0.s8 %v5873
    %v5875 = vlaneseq
    %v5876 = vshrl.u32 %v5875, 7
    %v5877 = vsub.s32 %v5874, %v5876
    %v5878 = vrot.slane %v5862, %v5877
    %v5880 = vunpack.c.l.s4 1966171168
    %v5881 = vunpack.c.0.s8 %v5880
    %v5882 = vlaneseq
    %v5883 = vshrl.u32 %v5882, 7
    %v5884 = vsub.s32 %v5881, %v5883
    %v5885 = vrot.slane %v5863, %v5884
    %v5887 = vunpack.c.l.s4 1966171168
    %v5888 = vunpack.c.0.s8 %v5887
    %v5889 = vlaneseq
    %v5890 = vshrl.u32 %v5889, 7
    %v5891 = vsub.s32 %v5888, %v5890
    %v5892 = vrot.slane %v5864, %v5891
    %v5893 = vcombine.high %v5871, %v5871
    %v5894 = vcombine.high %v5878, %v5878
    %v5895 = vcombine.high %v5885, %v5885
    %v5896 = vcombine.high %v5892, %v5892
    %5905 = vst [vmem:[#allocation2 + $0xf] sm:$0x1] %v5871
    %5906 = vst [vmem:[#allocation2 + $0x1f] sm:$0x1] %v5885
    %5907 = vst [vmem:[#allocation2 + $0x2f] sm:$0x1] %v5893
    %5908 = vst [vmem:[#allocation2 + $0x3f] sm:$0x1] %v5895
    %5909 = vst [vmem:[#allocation2 + $0x4f] sm:$0x1] %v5878
    %5910 = vst [vmem:[#allocation2 + $0x5f] sm:$0x1] %v5892
    %5911 = vst [vmem:[#allocation2 + $0x6f] sm:$0x1] %v5894
    %5912 = vst [vmem:[#allocation2 + $0x7f] sm:$0x1] %v5896
    %5913 = vst [vmem:[#allocation3] sm:$0xff] %v5846
    %v5914 = vld [vmem:[#allocation2] sm:$0xff]
    %v5915 = vld [vmem:[#allocation2 + $0x8] sm:$0xff]
    %v5916 = vld [vmem:[#allocation2 + $0x10] sm:$0xff]
    %v5917 = vld [vmem:[#allocation2 + $0x18] sm:$0xff]
    %v5918 = vld [vmem:[#allocation2 + $0x20] sm:$0xff]
    %v5919 = vld [vmem:[#allocation2 + $0x28] sm:$0xff]
    %v5920 = vld [vmem:[#allocation2 + $0x30] sm:$0xff]
    %v5921 = vld [vmem:[#allocation2 + $0x38] sm:$0xff]
    %v5922 = vld [vmem:[#allocation2 + $0x40] sm:$0xff]
    %v5923 = vld [vmem:[#allocation2 + $0x48] sm:$0xff]
    %v5924 = vld [vmem:[#allocation2 + $0x50] sm:$0xff]
    %v5925 = vld [vmem:[#allocation2 + $0x58] sm:$0xff]
    %v5926 = vld [vmem:[#allocation2 + $0x60] sm:$0xff]
    %v5927 = vld [vmem:[#allocation2 + $0x68] sm:$0xff]
    %v5928 = vld [vmem:[#allocation2 + $0x70] sm:$0xff]
    %v5929 = vld [vmem:[#allocation2 + $0x78] sm:$0xff]
    %v5930 = vpack.c.bf16 %v5915, %v5914
    %v5931 = vpack.c.bf16 %v5917, %v5916
    %v5932 = vpack.c.bf16 %v5919, %v5918
    %v5933 = vpack.c.bf16 %v5921, %v5920
    %v5934 = vpack.c.bf16 %v5923, %v5922
    %v5935 = vpack.c.bf16 %v5925, %v5924
    %v5936 = vpack.c.bf16 %v5927, %v5926
    %v5937 = vpack.c.bf16 %v5929, %v5928
    %v5946 = vunpack.c.l.b16 %v5930
    %v5947 = vunpack.c.h.b16 %v5930
    %v5948 = vunpack.c.l.b16 %v5931
    %v5949 = vunpack.c.h.b16 %v5931
    %v5950 = vunpack.c.l.b16 %v5932
    %v5951 = vunpack.c.h.b16 %v5932
    %v5952 = vunpack.c.l.b16 %v5933
    %v5953 = vunpack.c.h.b16 %v5933
    %v5954 = vunpack.c.l.b16 %v5934
    %v5955 = vunpack.c.h.b16 %v5934
    %v5956 = vunpack.c.l.b16 %v5935
    %v5957 = vunpack.c.h.b16 %v5935
    %v5958 = vunpack.c.l.b16 %v5936
    %v5959 = vunpack.c.h.b16 %v5936
    %v5960 = vunpack.c.l.b16 %v5937
    %v5961 = vunpack.c.h.b16 %v5937
    %v5962 = vpack.c.b16 %v5946, %v5946
    %v5963 = vpack.c.b16 %v5947, %v5947
    %v5964 = vpack.c.b16 %v5948, %v5948
    %v5965 = vpack.c.b16 %v5949, %v5949
    %v5966 = vpack.c.b16 %v5950, %v5950
    %v5967 = vpack.c.b16 %v5951, %v5951
    %v5968 = vpack.c.b16 %v5952, %v5952
    %v5969 = vpack.c.b16 %v5953, %v5953
    %v5970 = vpack.c.b16 %v5954, %v5954
    %v5971 = vpack.c.b16 %v5955, %v5955
    %v5972 = vpack.c.b16 %v5956, %v5956
    %v5973 = vpack.c.b16 %v5957, %v5957
    %v5974 = vpack.c.b16 %v5958, %v5958
    %v5975 = vpack.c.b16 %v5959, %v5959
    %v5976 = vpack.c.b16 %v5960, %v5960
    %v5977 = vpack.c.b16 %v5961, %v5961
    %5994 = vst [vmem:[%s4] sm:$0xf] %v5962
    %5995 = vst [vmem:[%s4 + $0x4] sm:$0xf] %v5963
    %5996 = vst [vmem:[%s4 + $0x8] sm:$0xf] %v5964
    %5997 = vst [vmem:[%s4 + $0xc] sm:$0xf] %v5965
    %5998 = vst [vmem:[%s4 + $0x10] sm:$0xf] %v5966
    %5999 = vst [vmem:[%s4 + $0x14] sm:$0xf] %v5967
    %6000 = vst [vmem:[%s4 + $0x18] sm:$0xf] %v5968
    %6001 = vst [vmem:[%s4 + $0x1c] sm:$0xf] %v5969
    %6002 = vst [vmem:[%s4 + $0x20] sm:$0xf] %v5970
    %6003 = vst [vmem:[%s4 + $0x24] sm:$0xf] %v5971
    %6004 = vst [vmem:[%s4 + $0x28] sm:$0xf] %v5972
    %6005 = vst [vmem:[%s4 + $0x2c] sm:$0xf] %v5973
    %6006 = vst [vmem:[%s4 + $0x30] sm:$0xf] %v5974
    %6007 = vst [vmem:[%s4 + $0x34] sm:$0xf] %v5975
    %6008 = vst [vmem:[%s4 + $0x38] sm:$0xf] %v5976
    %6009 = vst [vmem:[%s4 + $0x3c] sm:$0xf] %v5977
    // Predicated region
    $region22: #{seq2seq_forward.5} parent=1 // pred_check
      _
    $region23: #{seq2seq_forward.5} parent=1 // pred_check_branch
      %6011 = sbr.rel (0) target = $region25
    $region24: #{seq2seq_forward.5} parent=1 // pred_region
      _
    $region25: #{seq2seq_forward.5} parent=1 // pred_fallthru
      _
    // Predicated region
    $region26: #{seq2seq_forward.5} parent=1 // pred_check
      _
    $region27: #{seq2seq_forward.5} parent=1 // pred_check_branch
      %6013 = sbr.rel (0) target = $region29
    $region28: #{seq2seq_forward.5} parent=1 // pred_region
      %s6015 = ssub.s32 128, 128
      %6016 = vsyncadd [#allocation4], %s6015
      %s6018 = sshll.u32 [#allocation3], 4
      %s6019 = int_to_ptr.vmem [resolvable:$true] %s6018
      %6021 = dma.vmem_to_hbm [thread:$0]  %s6019, 128, %s5, [#allocation4]
    $region29: #{seq2seq_forward.5} parent=1 // pred_fallthru
      _
    // Predicated region
    $region30: #{seq2seq_forward.5} parent=1 // pred_check
      _
    $region31: #{seq2seq_forward.5} parent=1 // pred_check_branch
      %6023 = sbr.rel (0) target = $region33
    $region32: #{seq2seq_forward.5} parent=1 // pred_region
      _
    $region33: #{seq2seq_forward.5} parent=1 // pred_fallthru
      _
    // Predicated region
    $region34: #{seq2seq_forward.5} parent=1 // pred_check
      _
    $region35: #{seq2seq_forward.5} parent=1 // pred_check_branch
      %6025 = sbr.rel (0) target = $region37
    $region36: #{seq2seq_forward.5} parent=1 // pred_region
      %6026 = dma.done [#allocation4], 128
    $region37: #{seq2seq_forward.5} parent=1 // pred_fallthru
      _
    %6027 = vsyncpa [#allocation4], 1

</llo_original>
